<compile_context>
chip_gen: v6e
topology: v6e:2x2x1
jax: 0.10.0
libtpu: 0.0.40
codegen_flags: <defaults>
</compile_context>

<pallas_src>
import functools

import jax
import jax.numpy as jnp
from jax import lax
from jax.experimental import pallas as pl
from jax.experimental.pallas import tpu as pltpu


# ----------------------------------------------------------------------------
# Fused kernel: one batch tile of B samples per grid step.
# ----------------------------------------------------------------------------
def _fused_forward_kernel(patches_ref, wconv_ref, bconv_ref, fcw_ref, fcb_ref,
                          out_ref, pf32_ref, feat_ref, *, c_mid, k_patch, hw):
    """Refs:
      patches_ref : [k_patch, B, hw]  bf16 im2col taps (tap k -> [B, hw] slab)
      wconv_ref   : SMEM [c_mid, k_patch] f32   conv weights (scalars)
      bconv_ref   : SMEM [c_mid]          f32   conv bias (scalars)
      fcw_ref     : [NUM_CLASSES, c_mid*hw] f32 fc weight, torch layout (K lane-dense)
      fcb_ref     : [1, NUM_CLASSES] f32
      out_ref     : [B, NUM_CLASSES] f32        logits for this batch tile
      pf32_ref    : VMEM scratch [k_patch, B, hw] f32  (patches upcast once)
      feat_ref    : VMEM scratch [B, c_mid*hw] f32     (flattened NCHW features)
    """
    # 1) Upcast the bf16 patch taps to f32 exactly once per step (v5e-safe:
    #    only this convert touches bf16; all arithmetic below is f32).
    for k in range(k_patch):
        pf32_ref[k] = patches_ref[k].astype(jnp.float32)

    # 2) Conv + bias + ReLU, written channel-major straight into the
    #    classifier's [B, c_mid*hw] layout (batch on sublanes, lane-dense
    #    256-wide column stores; hw is a multiple of 128).
    for c in range(c_mid):
        acc = pf32_ref[0] * wconv_ref[c, 0]
        for k in range(1, k_patch):
            acc = acc + pf32_ref[k] * wconv_ref[c, k]
        feat_ref[:, c * hw:(c + 1) * hw] = jnp.maximum(acc + bconv_ref[c], 0.0)

    # 3) Classifier: one [B, F] x [NUM_CLASSES, F] matmul contracted on the
    #    last dims (fc_w used in its native torch layout, K = 2048 lane-dense).
    logits = lax.dot_general(
        feat_ref[...], fcw_ref[...],
        dimension_numbers=(((1,), (1,)), ((), ())),
        preferred_element_type=jnp.float32)            # [B, NUM_CLASSES]
    out_ref[...] = (logits + fcb_ref[...]).astype(out_ref.dtype)


# ----------------------------------------------------------------------------
# Forward wrapper: im2col glue + single fused, batch-tiled pallas_call.
# ----------------------------------------------------------------------------
def pretrained_model_forward(x_nchw, params, *, batch_tile=64):
    """x_nchw: [N, C, H, W] (PyTorch conv layout). Returns logits [N, num_classes]."""
    N, C, H, W = x_nchw.shape
    conv_w, conv_b = params["conv_w"], params["conv_b"]
    fc_w, fc_b = params["fc_w"], params["fc_b"]
    c_mid = conv_w.shape[0]
    kh, kw = conv_w.shape[2], conv_w.shape[3]
    hw = H * W
    feat_dim = c_mid * hw
    num_classes = fc_w.shape[0]
    k_patch = kh * kw * C

    # Batch tile: whole batch if small, else 64 samples/step (pad up if needed).
    if N <= batch_tile:
        B, Np = N, N
    else:
        B = batch_tile
        Np = ((N + B - 1) // B) * B

    # --- XLA glue: im2col, built directly in the layout the kernel wants:
    # [k_patch, N, H*W] with tap order (dy, dx, ci), so tap k -> [B, hw] slab.
    xp = jnp.pad(x_nchw, ((0, 0), (0, 0), (1, 1), (1, 1)))
    windows = [xp[:, :, dy:dy + H, dx:dx + W]           # each [N, C, H, W]
               for dy in range(kh) for dx in range(kw)]
    patches = jnp.stack(windows, axis=0)                # [9, N, C, H, W]
    patches = patches.transpose(0, 2, 1, 3, 4)          # [9, C, N, H, W]
    patches = patches.reshape(k_patch, N, hw)           # [9*C, N, H*W]
    if Np != N:
        patches = jnp.pad(patches, ((0, 0), (0, Np - N), (0, 0)))
    patches = patches.astype(jnp.bfloat16)              # halve HBM traffic

    # Conv weight -> [C_mid, (dy, dx, ci)] matching the patch tap order.
    w_mat = conv_w.transpose(0, 2, 3, 1).reshape(c_mid, k_patch).astype(jnp.float32)
    b_vec = conv_b.astype(jnp.float32)
    fcw = fc_w.astype(jnp.float32)                       # loaded once (constant block)
    fcb_row = fc_b.reshape(1, num_classes).astype(jnp.float32)

    kernel = functools.partial(_fused_forward_kernel,
                               c_mid=c_mid, k_patch=k_patch, hw=hw)
    out = pl.pallas_call(
        kernel,
        out_shape=jax.ShapeDtypeStruct((Np, num_classes), jnp.float32),
        grid_spec=pltpu.PrefetchScalarGridSpec(
            num_scalar_prefetch=0,
            grid=(Np // B,),
            in_specs=[
                pl.BlockSpec((k_patch, B, hw), lambda n: (0, n, 0)),
                pl.BlockSpec(memory_space=pltpu.MemorySpace.SMEM),   # conv weights
                pl.BlockSpec(memory_space=pltpu.MemorySpace.SMEM),   # conv bias
                pl.BlockSpec((num_classes, feat_dim), lambda n: (0, 0)),
                pl.BlockSpec((1, num_classes), lambda n: (0, 0)),
            ],
            out_specs=pl.BlockSpec((B, num_classes), lambda n: (n, 0)),
            scratch_shapes=[
                pltpu.VMEM((k_patch, B, hw), jnp.float32),   # f32 patch taps
                pltpu.VMEM((B, feat_dim), jnp.float32),      # flattened features
            ],
        ),
        compiler_params=pltpu.CompilerParams(
            dimension_semantics=("parallel",)),
    )(patches, w_mat, b_vec, fcw, fcb_row)
    return out[:N]


# ----------------------------------------------------------------------------
# Parameters & pure-JAX reference (for a sanity check).
# ----------------------------------------------------------------------------
def init_params(key, c_in=4, c_mid=8, h=16, w=16, num_classes=10):
    k1, k2, k3, k4 = jax.random.split(key, 4)
    conv_w = jax.random.normal(k1, (c_mid, c_in, 3, 3), jnp.float32) * 0.1
    conv_b = jax.random.normal(k2, (c_mid,), jnp.float32) * 0.1
    fc_w = jax.random.normal(k3, (num_classes, c_mid * h * w), jnp.float32) * 0.02
    fc_b = jax.random.normal(k4, (num_classes,), jnp.float32) * 0.02
    return {"conv_w": conv_w, "conv_b": conv_b, "fc_w": fc_w, "fc_b": fc_b}


def reference_forward(x, params):
    y = jax.lax.conv_general_dilated(
        x, params["conv_w"], window_strides=(1, 1), padding=((1, 1), (1, 1)),
        dimension_numbers=("NCHW", "OIHW", "NCHW"))
    y = jax.nn.relu(y + params["conv_b"][None, :, None, None])
    feat = y.reshape(x.shape[0], -1)
    return feat @ params["fc_w"].T + params["fc_b"]


if __name__ == "__main__":
    key = jax.random.PRNGKey(0)
    kx, kp = jax.random.split(key)

    N, C, H, W = 2, 4, 16, 16
    x = jax.random.normal(kx, (N, C, H, W), jnp.float32)      # NCHW, like PyTorch
    params = init_params(kp, c_in=C, c_mid=8, h=H, w=W, num_classes=10)

    logits = jax.jit(pretrained_model_forward)(x, params)
    jax.block_until_ready(logits)
    assert logits.shape == (N, 10), logits.shape

    ref = jax.jit(reference_forward)(x, params)
    max_diff = float(jnp.max(jnp.abs(logits - ref)))
    # Loose tolerance: bf16 patch storage + default TPU matmul precision in the
    # XLA reference conv/dot; a layout bug would be O(0.3+).
    assert max_diff < 5e-2, f"mismatch vs reference: {max_diff}"

    print("KERNEL_OK")
</pallas_src>

<mosaic_0001>
module attributes {stable_mosaic.version = 11 : i64} {
  func.func @_fused_forward_kernel(%arg0: i32, %arg1: memref<36x2x256xbf16, #tpu.memory_space<vmem>>, %arg2: memref<8x36xf32, #tpu.memory_space<smem>>, %arg3: memref<8xf32, #tpu.memory_space<smem>>, %arg4: memref<10x2048xf32, #tpu.memory_space<vmem>>, %arg5: memref<1x10xf32, #tpu.memory_space<vmem>>, %arg6: memref<2x10xf32, #tpu.memory_space<vmem>>, %arg7: memref<36x2x256xf32, #tpu.memory_space<vmem>>, %arg8: memref<2x2048xf32, #tpu.memory_space<vmem>>) attributes {dimension_semantics = [#tpu.dimension_semantics<parallel>], iteration_bounds = array<i64: 1>, scalar_prefetch = 0 : i64, scratch_operands = 2 : i64, tpu.core_type = #tpu.core_type<tc>, window_params = [{transform_indices = @transform_0, window_bounds = array<i64: 36, 2, 256>}, {transform_indices = @transform_1, window_bounds = array<i64: 8, 36>}, {transform_indices = @transform_2, window_bounds = array<i64: 8>}, {pipeline_mode = #tpu.pipeline_mode<synchronous>, transform_indices = @transform_3, window_bounds = array<i64: 10, 2048>}, {pipeline_mode = #tpu.pipeline_mode<synchronous>, transform_indices = @transform_4, window_bounds = array<i64: 1, 10>}, {transform_indices = @transform_5, window_bounds = array<i64: 2, 10>}]} {
    %c0 = arith.constant 0 : index
    %c0_0 = arith.constant 0 : index
    %c0_1 = arith.constant 0 : index
    %0 = vector.load %arg1[%c0, %c0_0, %c0_1] : memref<36x2x256xbf16, #tpu.memory_space<vmem>>, vector<1x2x256xbf16>
    %1 = vector.shape_cast %0 : vector<1x2x256xbf16> to vector<2x256xbf16>
    %2 = arith.extf %1 : vector<2x256xbf16> to vector<2x256xf32>
    %c0_2 = arith.constant 0 : index
    %c0_3 = arith.constant 0 : index
    %c0_4 = arith.constant 0 : index
    %3 = vector.load %arg7[%c0_2, %c0_3, %c0_4] : memref<36x2x256xf32, #tpu.memory_space<vmem>>, vector<1x2x256xf32>
    %4 = vector.shape_cast %3 : vector<1x2x256xf32> to vector<2x256xf32>
    %5 = vector.shape_cast %2 : vector<2x256xf32> to vector<1x2x256xf32>
    tpu.vector_store %arg7[%c0_2, %c0_3, %c0_4], %5 {strides = array<i32>} : memref<36x2x256xf32, #tpu.memory_space<vmem>>, vector<1x2x256xf32>,
    %c1 = arith.constant 1 : index
    %c0_5 = arith.constant 0 : index
    %c0_6 = arith.constant 0 : index
    %6 = vector.load %arg1[%c1, %c0_5, %c0_6] : memref<36x2x256xbf16, #tpu.memory_space<vmem>>, vector<1x2x256xbf16>
    %7 = vector.shape_cast %6 : vector<1x2x256xbf16> to vector<2x256xbf16>
    %8 = arith.extf %7 : vector<2x256xbf16> to vector<2x256xf32>
    %c1_7 = arith.constant 1 : index
    %c0_8 = arith.constant 0 : index
    %c0_9 = arith.constant 0 : index
    %9 = vector.load %arg7[%c1_7, %c0_8, %c0_9] : memref<36x2x256xf32, #tpu.memory_space<vmem>>, vector<1x2x256xf32>
    %10 = vector.shape_cast %9 : vector<1x2x256xf32> to vector<2x256xf32>
    %11 = vector.shape_cast %8 : vector<2x256xf32> to vector<1x2x256xf32>
    tpu.vector_store %arg7[%c1_7, %c0_8, %c0_9], %11 {strides = array<i32>} : memref<36x2x256xf32, #tpu.memory_space<vmem>>, vector<1x2x256xf32>,
    %c2 = arith.constant 2 : index
    %c0_10 = arith.constant 0 : index
    %c0_11 = arith.constant 0 : index
    %12 = vector.load %arg1[%c2, %c0_10, %c0_11] : memref<36x2x256xbf16, #tpu.memory_space<vmem>>, vector<1x2x256xbf16>
    %13 = vector.shape_cast %12 : vector<1x2x256xbf16> to vector<2x256xbf16>
    %14 = arith.extf %13 : vector<2x256xbf16> to vector<2x256xf32>
    %c2_12 = arith.constant 2 : index
    %c0_13 = arith.constant 0 : index
    %c0_14 = arith.constant 0 : index
    %15 = vector.load %arg7[%c2_12, %c0_13, %c0_14] : memref<36x2x256xf32, #tpu.memory_space<vmem>>, vector<1x2x256xf32>
    %16 = vector.shape_cast %15 : vector<1x2x256xf32> to vector<2x256xf32>
    %17 = vector.shape_cast %14 : vector<2x256xf32> to vector<1x2x256xf32>
    tpu.vector_store %arg7[%c2_12, %c0_13, %c0_14], %17 {strides = array<i32>} : memref<36x2x256xf32, #tpu.memory_space<vmem>>, vector<1x2x256xf32>,
    %c3 = arith.constant 3 : index
    %c0_15 = arith.constant 0 : index
    %c0_16 = arith.constant 0 : index
    %18 = vector.load %arg1[%c3, %c0_15, %c0_16] : memref<36x2x256xbf16, #tpu.memory_space<vmem>>, vector<1x2x256xbf16>
    %19 = vector.shape_cast %18 : vector<1x2x256xbf16> to vector<2x256xbf16>
    %20 = arith.extf %19 : vector<2x256xbf16> to vector<2x256xf32>
    %c3_17 = arith.constant 3 : index
    %c0_18 = arith.constant 0 : index
    %c0_19 = arith.constant 0 : index
    %21 = vector.load %arg7[%c3_17, %c0_18, %c0_19] : memref<36x2x256xf32, #tpu.memory_space<vmem>>, vector<1x2x256xf32>
    %22 = vector.shape_cast %21 : vector<1x2x256xf32> to vector<2x256xf32>
    %23 = vector.shape_cast %20 : vector<2x256xf32> to vector<1x2x256xf32>
    tpu.vector_store %arg7[%c3_17, %c0_18, %c0_19], %23 {strides = array<i32>} : memref<36x2x256xf32, #tpu.memory_space<vmem>>, vector<1x2x256xf32>,
    %c4 = arith.constant 4 : index
    %c0_20 = arith.constant 0 : index
    %c0_21 = arith.constant 0 : index
    %24 = vector.load %arg1[%c4, %c0_20, %c0_21] : memref<36x2x256xbf16, #tpu.memory_space<vmem>>, vector<1x2x256xbf16>
    %25 = vector.shape_cast %24 : vector<1x2x256xbf16> to vector<2x256xbf16>
    %26 = arith.extf %25 : vector<2x256xbf16> to vector<2x256xf32>
    %c4_22 = arith.constant 4 : index
    %c0_23 = arith.constant 0 : index
    %c0_24 = arith.constant 0 : index
    %27 = vector.load %arg7[%c4_22, %c0_23, %c0_24] : memref<36x2x256xf32, #tpu.memory_space<vmem>>, vector<1x2x256xf32>
    %28 = vector.shape_cast %27 : vector<1x2x256xf32> to vector<2x256xf32>
    %29 = vector.shape_cast %26 : vector<2x256xf32> to vector<1x2x256xf32>
    tpu.vector_store %arg7[%c4_22, %c0_23, %c0_24], %29 {strides = array<i32>} : memref<36x2x256xf32, #tpu.memory_space<vmem>>, vector<1x2x256xf32>,
    %c5 = arith.constant 5 : index
    %c0_25 = arith.constant 0 : index
    %c0_26 = arith.constant 0 : index
    %30 = vector.load %arg1[%c5, %c0_25, %c0_26] : memref<36x2x256xbf16, #tpu.memory_space<vmem>>, vector<1x2x256xbf16>
    %31 = vector.shape_cast %30 : vector<1x2x256xbf16> to vector<2x256xbf16>
    %32 = arith.extf %31 : vector<2x256xbf16> to vector<2x256xf32>
    %c5_27 = arith.constant 5 : index
    %c0_28 = arith.constant 0 : index
    %c0_29 = arith.constant 0 : index
    %33 = vector.load %arg7[%c5_27, %c0_28, %c0_29] : memref<36x2x256xf32, #tpu.memory_space<vmem>>, vector<1x2x256xf32>
    %34 = vector.shape_cast %33 : vector<1x2x256xf32> to vector<2x256xf32>
    %35 = vector.shape_cast %32 : vector<2x256xf32> to vector<1x2x256xf32>
    tpu.vector_store %arg7[%c5_27, %c0_28, %c0_29], %35 {strides = array<i32>} : memref<36x2x256xf32, #tpu.memory_space<vmem>>, vector<1x2x256xf32>,
    %c6 = arith.constant 6 : index
    %c0_30 = arith.constant 0 : index
    %c0_31 = arith.constant 0 : index
    %36 = vector.load %arg1[%c6, %c0_30, %c0_31] : memref<36x2x256xbf16, #tpu.memory_space<vmem>>, vector<1x2x256xbf16>
    %37 = vector.shape_cast %36 : vector<1x2x256xbf16> to vector<2x256xbf16>
    %38 = arith.extf %37 : vector<2x256xbf16> to vector<2x256xf32>
    %c6_32 = arith.constant 6 : index
    %c0_33 = arith.constant 0 : index
    %c0_34 = arith.constant 0 : index
    %39 = vector.load %arg7[%c6_32, %c0_33, %c0_34] : memref<36x2x256xf32, #tpu.memory_space<vmem>>, vector<1x2x256xf32>
    %40 = vector.shape_cast %39 : vector<1x2x256xf32> to vector<2x256xf32>
    %41 = vector.shape_cast %38 : vector<2x256xf32> to vector<1x2x256xf32>
    tpu.vector_store %arg7[%c6_32, %c0_33, %c0_34], %41 {strides = array<i32>} : memref<36x2x256xf32, #tpu.memory_space<vmem>>, vector<1x2x256xf32>,
    %c7 = arith.constant 7 : index
    %c0_35 = arith.constant 0 : index
    %c0_36 = arith.constant 0 : index
    %42 = vector.load %arg1[%c7, %c0_35, %c0_36] : memref<36x2x256xbf16, #tpu.memory_space<vmem>>, vector<1x2x256xbf16>
    %43 = vector.shape_cast %42 : vector<1x2x256xbf16> to vector<2x256xbf16>
    %44 = arith.extf %43 : vector<2x256xbf16> to vector<2x256xf32>
    %c7_37 = arith.constant 7 : index
    %c0_38 = arith.constant 0 : index
    %c0_39 = arith.constant 0 : index
    %45 = vector.load %arg7[%c7_37, %c0_38, %c0_39] : memref<36x2x256xf32, #tpu.memory_space<vmem>>, vector<1x2x256xf32>
    %46 = vector.shape_cast %45 : vector<1x2x256xf32> to vector<2x256xf32>
    %47 = vector.shape_cast %44 : vector<2x256xf32> to vector<1x2x256xf32>
    tpu.vector_store %arg7[%c7_37, %c0_38, %c0_39], %47 {strides = array<i32>} : memref<36x2x256xf32, #tpu.memory_space<vmem>>, vector<1x2x256xf32>,
    %c8 = arith.constant 8 : index
    %c0_40 = arith.constant 0 : index
    %c0_41 = arith.constant 0 : index
    %48 = vector.load %arg1[%c8, %c0_40, %c0_41] : memref<36x2x256xbf16, #tpu.memory_space<vmem>>, vector<1x2x256xbf16>
    %49 = vector.shape_cast %48 : vector<1x2x256xbf16> to vector<2x256xbf16>
    %50 = arith.extf %49 : vector<2x256xbf16> to vector<2x256xf32>
    %c8_42 = arith.constant 8 : index
    %c0_43 = arith.constant 0 : index
    %c0_44 = arith.constant 0 : index
    %51 = vector.load %arg7[%c8_42, %c0_43, %c0_44] : memref<36x2x256xf32, #tpu.memory_space<vmem>>, vector<1x2x256xf32>
    %52 = vector.shape_cast %51 : vector<1x2x256xf32> to vector<2x256xf32>
    %53 = vector.shape_cast %50 : vector<2x256xf32> to vector<1x2x256xf32>
    tpu.vector_store %arg7[%c8_42, %c0_43, %c0_44], %53 {strides = array<i32>} : memref<36x2x256xf32, #tpu.memory_space<vmem>>, vector<1x2x256xf32>,
    %c9 = arith.constant 9 : index
    %c0_45 = arith.constant 0 : index
    %c0_46 = arith.constant 0 : index
    %54 = vector.load %arg1[%c9, %c0_45, %c0_46] : memref<36x2x256xbf16, #tpu.memory_space<vmem>>, vector<1x2x256xbf16>
    %55 = vector.shape_cast %54 : vector<1x2x256xbf16> to vector<2x256xbf16>
    %56 = arith.extf %55 : vector<2x256xbf16> to vector<2x256xf32>
    %c9_47 = arith.constant 9 : index
    %c0_48 = arith.constant 0 : index
    %c0_49 = arith.constant 0 : index
    %57 = vector.load %arg7[%c9_47, %c0_48, %c0_49] : memref<36x2x256xf32, #tpu.memory_space<vmem>>, vector<1x2x256xf32>
    %58 = vector.shape_cast %57 : vector<1x2x256xf32> to vector<2x256xf32>
    %59 = vector.shape_cast %56 : vector<2x256xf32> to vector<1x2x256xf32>
    tpu.vector_store %arg7[%c9_47, %c0_48, %c0_49], %59 {strides = array<i32>} : memref<36x2x256xf32, #tpu.memory_space<vmem>>, vector<1x2x256xf32>,
    %c10 = arith.constant 10 : index
    %c0_50 = arith.constant 0 : index
    %c0_51 = arith.constant 0 : index
    %60 = vector.load %arg1[%c10, %c0_50, %c0_51] : memref<36x2x256xbf16, #tpu.memory_space<vmem>>, vector<1x2x256xbf16>
    %61 = vector.shape_cast %60 : vector<1x2x256xbf16> to vector<2x256xbf16>
    %62 = arith.extf %61 : vector<2x256xbf16> to vector<2x256xf32>
    %c10_52 = arith.constant 10 : index
    %c0_53 = arith.constant 0 : index
    %c0_54 = arith.constant 0 : index
    %63 = vector.load %arg7[%c10_52, %c0_53, %c0_54] : memref<36x2x256xf32, #tpu.memory_space<vmem>>, vector<1x2x256xf32>
    %64 = vector.shape_cast %63 : vector<1x2x256xf32> to vector<2x256xf32>
    %65 = vector.shape_cast %62 : vector<2x256xf32> to vector<1x2x256xf32>
    tpu.vector_store %arg7[%c10_52, %c0_53, %c0_54], %65 {strides = array<i32>} : memref<36x2x256xf32, #tpu.memory_space<vmem>>, vector<1x2x256xf32>,
    %c11 = arith.constant 11 : index
    %c0_55 = arith.constant 0 : index
    %c0_56 = arith.constant 0 : index
    %66 = vector.load %arg1[%c11, %c0_55, %c0_56] : memref<36x2x256xbf16, #tpu.memory_space<vmem>>, vector<1x2x256xbf16>
    %67 = vector.shape_cast %66 : vector<1x2x256xbf16> to vector<2x256xbf16>
    %68 = arith.extf %67 : vector<2x256xbf16> to vector<2x256xf32>
    %c11_57 = arith.constant 11 : index
    %c0_58 = arith.constant 0 : index
    %c0_59 = arith.constant 0 : index
    %69 = vector.load %arg7[%c11_57, %c0_58, %c0_59] : memref<36x2x256xf32, #tpu.memory_space<vmem>>, vector<1x2x256xf32>
    %70 = vector.shape_cast %69 : vector<1x2x256xf32> to vector<2x256xf32>
    %71 = vector.shape_cast %68 : vector<2x256xf32> to vector<1x2x256xf32>
    tpu.vector_store %arg7[%c11_57, %c0_58, %c0_59], %71 {strides = array<i32>} : memref<36x2x256xf32, #tpu.memory_space<vmem>>, vector<1x2x256xf32>,
    %c12 = arith.constant 12 : index
    %c0_60 = arith.constant 0 : index
    %c0_61 = arith.constant 0 : index
    %72 = vector.load %arg1[%c12, %c0_60, %c0_61] : memref<36x2x256xbf16, #tpu.memory_space<vmem>>, vector<1x2x256xbf16>
    %73 = vector.shape_cast %72 : vector<1x2x256xbf16> to vector<2x256xbf16>
    %74 = arith.extf %73 : vector<2x256xbf16> to vector<2x256xf32>
    %c12_62 = arith.constant 12 : index
    %c0_63 = arith.constant 0 : index
    %c0_64 = arith.constant 0 : index
    %75 = vector.load %arg7[%c12_62, %c0_63, %c0_64] : memref<36x2x256xf32, #tpu.memory_space<vmem>>, vector<1x2x256xf32>
    %76 = vector.shape_cast %75 : vector<1x2x256xf32> to vector<2x256xf32>
    %77 = vector.shape_cast %74 : vector<2x256xf32> to vector<1x2x256xf32>
    tpu.vector_store %arg7[%c12_62, %c0_63, %c0_64], %77 {strides = array<i32>} : memref<36x2x256xf32, #tpu.memory_space<vmem>>, vector<1x2x256xf32>,
    %c13 = arith.constant 13 : index
    %c0_65 = arith.constant 0 : index
    %c0_66 = arith.constant 0 : index
    %78 = vector.load %arg1[%c13, %c0_65, %c0_66] : memref<36x2x256xbf16, #tpu.memory_space<vmem>>, vector<1x2x256xbf16>
    %79 = vector.shape_cast %78 : vector<1x2x256xbf16> to vector<2x256xbf16>
    %80 = arith.extf %79 : vector<2x256xbf16> to vector<2x256xf32>
    %c13_67 = arith.constant 13 : index
    %c0_68 = arith.constant 0 : index
    %c0_69 = arith.constant 0 : index
    %81 = vector.load %arg7[%c13_67, %c0_68, %c0_69] : memref<36x2x256xf32, #tpu.memory_space<vmem>>, vector<1x2x256xf32>
    %82 = vector.shape_cast %81 : vector<1x2x256xf32> to vector<2x256xf32>
    %83 = vector.shape_cast %80 : vector<2x256xf32> to vector<1x2x256xf32>
    tpu.vector_store %arg7[%c13_67, %c0_68, %c0_69], %83 {strides = array<i32>} : memref<36x2x256xf32, #tpu.memory_space<vmem>>, vector<1x2x256xf32>,
    %c14 = arith.constant 14 : index
    %c0_70 = arith.constant 0 : index
    %c0_71 = arith.constant 0 : index
    %84 = vector.load %arg1[%c14, %c0_70, %c0_71] : memref<36x2x256xbf16, #tpu.memory_space<vmem>>, vector<1x2x256xbf16>
    %85 = vector.shape_cast %84 : vector<1x2x256xbf16> to vector<2x256xbf16>
    %86 = arith.extf %85 : vector<2x256xbf16> to vector<2x256xf32>
    %c14_72 = arith.constant 14 : index
    %c0_73 = arith.constant 0 : index
    %c0_74 = arith.constant 0 : index
    %87 = vector.load %arg7[%c14_72, %c0_73, %c0_74] : memref<36x2x256xf32, #tpu.memory_space<vmem>>, vector<1x2x256xf32>
    %88 = vector.shape_cast %87 : vector<1x2x256xf32> to vector<2x256xf32>
    %89 = vector.shape_cast %86 : vector<2x256xf32> to vector<1x2x256xf32>
    tpu.vector_store %arg7[%c14_72, %c0_73, %c0_74], %89 {strides = array<i32>} : memref<36x2x256xf32, #tpu.memory_space<vmem>>, vector<1x2x256xf32>,
    %c15 = arith.constant 15 : index
    %c0_75 = arith.constant 0 : index
    %c0_76 = arith.constant 0 : index
    %90 = vector.load %arg1[%c15, %c0_75, %c0_76] : memref<36x2x256xbf16, #tpu.memory_space<vmem>>, vector<1x2x256xbf16>
    %91 = vector.shape_cast %90 : vector<1x2x256xbf16> to vector<2x256xbf16>
    %92 = arith.extf %91 : vector<2x256xbf16> to vector<2x256xf32>
    %c15_77 = arith.constant 15 : index
    %c0_78 = arith.constant 0 : index
    %c0_79 = arith.constant 0 : index
    %93 = vector.load %arg7[%c15_77, %c0_78, %c0_79] : memref<36x2x256xf32, #tpu.memory_space<vmem>>, vector<1x2x256xf32>
    %94 = vector.shape_cast %93 : vector<1x2x256xf32> to vector<2x256xf32>
    %95 = vector.shape_cast %92 : vector<2x256xf32> to vector<1x2x256xf32>
    tpu.vector_store %arg7[%c15_77, %c0_78, %c0_79], %95 {strides = array<i32>} : memref<36x2x256xf32, #tpu.memory_space<vmem>>, vector<1x2x256xf32>,
    %c16 = arith.constant 16 : index
    %c0_80 = arith.constant 0 : index
    %c0_81 = arith.constant 0 : index
    %96 = vector.load %arg1[%c16, %c0_80, %c0_81] : memref<36x2x256xbf16, #tpu.memory_space<vmem>>, vector<1x2x256xbf16>
    %97 = vector.shape_cast %96 : vector<1x2x256xbf16> to vector<2x256xbf16>
    %98 = arith.extf %97 : vector<2x256xbf16> to vector<2x256xf32>
    %c16_82 = arith.constant 16 : index
    %c0_83 = arith.constant 0 : index
    %c0_84 = arith.constant 0 : index
    %99 = vector.load %arg7[%c16_82, %c0_83, %c0_84] : memref<36x2x256xf32, #tpu.memory_space<vmem>>, vector<1x2x256xf32>
    %100 = vector.shape_cast %99 : vector<1x2x256xf32> to vector<2x256xf32>
    %101 = vector.shape_cast %98 : vector<2x256xf32> to vector<1x2x256xf32>
    tpu.vector_store %arg7[%c16_82, %c0_83, %c0_84], %101 {strides = array<i32>} : memref<36x2x256xf32, #tpu.memory_space<vmem>>, vector<1x2x256xf32>,
    %c17 = arith.constant 17 : index
    %c0_85 = arith.constant 0 : index
    %c0_86 = arith.constant 0 : index
    %102 = vector.load %arg1[%c17, %c0_85, %c0_86] : memref<36x2x256xbf16, #tpu.memory_space<vmem>>, vector<1x2x256xbf16>
    %103 = vector.shape_cast %102 : vector<1x2x256xbf16> to vector<2x256xbf16>
    %104 = arith.extf %103 : vector<2x256xbf16> to vector<2x256xf32>
    %c17_87 = arith.constant 17 : index
    %c0_88 = arith.constant 0 : index
    %c0_89 = arith.constant 0 : index
    %105 = vector.load %arg7[%c17_87, %c0_88, %c0_89] : memref<36x2x256xf32, #tpu.memory_space<vmem>>, vector<1x2x256xf32>
    %106 = vector.shape_cast %105 : vector<1x2x256xf32> to vector<2x256xf32>
    %107 = vector.shape_cast %104 : vector<2x256xf32> to vector<1x2x256xf32>
    tpu.vector_store %arg7[%c17_87, %c0_88, %c0_89], %107 {strides = array<i32>} : memref<36x2x256xf32, #tpu.memory_space<vmem>>, vector<1x2x256xf32>,
    %c18 = arith.constant 18 : index
    %c0_90 = arith.constant 0 : index
    %c0_91 = arith.constant 0 : index
    %108 = vector.load %arg1[%c18, %c0_90, %c0_91] : memref<36x2x256xbf16, #tpu.memory_space<vmem>>, vector<1x2x256xbf16>
    %109 = vector.shape_cast %108 : vector<1x2x256xbf16> to vector<2x256xbf16>
    %110 = arith.extf %109 : vector<2x256xbf16> to vector<2x256xf32>
    %c18_92 = arith.constant 18 : index
    %c0_93 = arith.constant 0 : index
    %c0_94 = arith.constant 0 : index
    %111 = vector.load %arg7[%c18_92, %c0_93, %c0_94] : memref<36x2x256xf32, #tpu.memory_space<vmem>>, vector<1x2x256xf32>
    %112 = vector.shape_cast %111 : vector<1x2x256xf32> to vector<2x256xf32>
    %113 = vector.shape_cast %110 : vector<2x256xf32> to vector<1x2x256xf32>
    tpu.vector_store %arg7[%c18_92, %c0_93, %c0_94], %113 {strides = array<i32>} : memref<36x2x256xf32, #tpu.memory_space<vmem>>, vector<1x2x256xf32>,
    %c19 = arith.constant 19 : index
    %c0_95 = arith.constant 0 : index
    %c0_96 = arith.constant 0 : index
    %114 = vector.load %arg1[%c19, %c0_95, %c0_96] : memref<36x2x256xbf16, #tpu.memory_space<vmem>>, vector<1x2x256xbf16>
    %115 = vector.shape_cast %114 : vector<1x2x256xbf16> to vector<2x256xbf16>
    %116 = arith.extf %115 : vector<2x256xbf16> to vector<2x256xf32>
    %c19_97 = arith.constant 19 : index
    %c0_98 = arith.constant 0 : index
    %c0_99 = arith.constant 0 : index
    %117 = vector.load %arg7[%c19_97, %c0_98, %c0_99] : memref<36x2x256xf32, #tpu.memory_space<vmem>>, vector<1x2x256xf32>
    %118 = vector.shape_cast %117 : vector<1x2x256xf32> to vector<2x256xf32>
    %119 = vector.shape_cast %116 : vector<2x256xf32> to vector<1x2x256xf32>
    tpu.vector_store %arg7[%c19_97, %c0_98, %c0_99], %119 {strides = array<i32>} : memref<36x2x256xf32, #tpu.memory_space<vmem>>, vector<1x2x256xf32>,
    %c20 = arith.constant 20 : index
    %c0_100 = arith.constant 0 : index
    %c0_101 = arith.constant 0 : index
    %120 = vector.load %arg1[%c20, %c0_100, %c0_101] : memref<36x2x256xbf16, #tpu.memory_space<vmem>>, vector<1x2x256xbf16>
    %121 = vector.shape_cast %120 : vector<1x2x256xbf16> to vector<2x256xbf16>
    %122 = arith.extf %121 : vector<2x256xbf16> to vector<2x256xf32>
    %c20_102 = arith.constant 20 : index
    %c0_103 = arith.constant 0 : index
    %c0_104 = arith.constant 0 : index
    %123 = vector.load %arg7[%c20_102, %c0_103, %c0_104] : memref<36x2x256xf32, #tpu.memory_space<vmem>>, vector<1x2x256xf32>
    %124 = vector.shape_cast %123 : vector<1x2x256xf32> to vector<2x256xf32>
    %125 = vector.shape_cast %122 : vector<2x256xf32> to vector<1x2x256xf32>
    tpu.vector_store %arg7[%c20_102, %c0_103, %c0_104], %125 {strides = array<i32>} : memref<36x2x256xf32, #tpu.memory_space<vmem>>, vector<1x2x256xf32>,
    %c21 = arith.constant 21 : index
    %c0_105 = arith.constant 0 : index
    %c0_106 = arith.constant 0 : index
    %126 = vector.load %arg1[%c21, %c0_105, %c0_106] : memref<36x2x256xbf16, #tpu.memory_space<vmem>>, vector<1x2x256xbf16>
    %127 = vector.shape_cast %126 : vector<1x2x256xbf16> to vector<2x256xbf16>
    %128 = arith.extf %127 : vector<2x256xbf16> to vector<2x256xf32>
    %c21_107 = arith.constant 21 : index
    %c0_108 = arith.constant 0 : index
    %c0_109 = arith.constant 0 : index
    %129 = vector.load %arg7[%c21_107, %c0_108, %c0_109] : memref<36x2x256xf32, #tpu.memory_space<vmem>>, vector<1x2x256xf32>
    %130 = vector.shape_cast %129 : vector<1x2x256xf32> to vector<2x256xf32>
    %131 = vector.shape_cast %128 : vector<2x256xf32> to vector<1x2x256xf32>
    tpu.vector_store %arg7[%c21_107, %c0_108, %c0_109], %131 {strides = array<i32>} : memref<36x2x256xf32, #tpu.memory_space<vmem>>, vector<1x2x256xf32>,
    %c22 = arith.constant 22 : index
    %c0_110 = arith.constant 0 : index
    %c0_111 = arith.constant 0 : index
    %132 = vector.load %arg1[%c22, %c0_110, %c0_111] : memref<36x2x256xbf16, #tpu.memory_space<vmem>>, vector<1x2x256xbf16>
    %133 = vector.shape_cast %132 : vector<1x2x256xbf16> to vector<2x256xbf16>
    %134 = arith.extf %133 : vector<2x256xbf16> to vector<2x256xf32>
    %c22_112 = arith.constant 22 : index
    %c0_113 = arith.constant 0 : index
    %c0_114 = arith.constant 0 : index
    %135 = vector.load %arg7[%c22_112, %c0_113, %c0_114] : memref<36x2x256xf32, #tpu.memory_space<vmem>>, vector<1x2x256xf32>
    %136 = vector.shape_cast %135 : vector<1x2x256xf32> to vector<2x256xf32>
    %137 = vector.shape_cast %134 : vector<2x256xf32> to vector<1x2x256xf32>
    tpu.vector_store %arg7[%c22_112, %c0_113, %c0_114], %137 {strides = array<i32>} : memref<36x2x256xf32, #tpu.memory_space<vmem>>, vector<1x2x256xf32>,
    %c23 = arith.constant 23 : index
    %c0_115 = arith.constant 0 : index
    %c0_116 = arith.constant 0 : index
    %138 = vector.load %arg1[%c23, %c0_115, %c0_116] : memref<36x2x256xbf16, #tpu.memory_space<vmem>>, vector<1x2x256xbf16>
    %139 = vector.shape_cast %138 : vector<1x2x256xbf16> to vector<2x256xbf16>
    %140 = arith.extf %139 : vector<2x256xbf16> to vector<2x256xf32>
    %c23_117 = arith.constant 23 : index
    %c0_118 = arith.constant 0 : index
    %c0_119 = arith.constant 0 : index
    %141 = vector.load %arg7[%c23_117, %c0_118, %c0_119] : memref<36x2x256xf32, #tpu.memory_space<vmem>>, vector<1x2x256xf32>
    %142 = vector.shape_cast %141 : vector<1x2x256xf32> to vector<2x256xf32>
    %143 = vector.shape_cast %140 : vector<2x256xf32> to vector<1x2x256xf32>
    tpu.vector_store %arg7[%c23_117, %c0_118, %c0_119], %143 {strides = array<i32>} : memref<36x2x256xf32, #tpu.memory_space<vmem>>, vector<1x2x256xf32>,
    %c24 = arith.constant 24 : index
    %c0_120 = arith.constant 0 : index
    %c0_121 = arith.constant 0 : index
    %144 = vector.load %arg1[%c24, %c0_120, %c0_121] : memref<36x2x256xbf16, #tpu.memory_space<vmem>>, vector<1x2x256xbf16>
    %145 = vector.shape_cast %144 : vector<1x2x256xbf16> to vector<2x256xbf16>
    %146 = arith.extf %145 : vector<2x256xbf16> to vector<2x256xf32>
    %c24_122 = arith.constant 24 : index
    %c0_123 = arith.constant 0 : index
    %c0_124 = arith.constant 0 : index
    %147 = vector.load %arg7[%c24_122, %c0_123, %c0_124] : memref<36x2x256xf32, #tpu.memory_space<vmem>>, vector<1x2x256xf32>
    %148 = vector.shape_cast %147 : vector<1x2x256xf32> to vector<2x256xf32>
    %149 = vector.shape_cast %146 : vector<2x256xf32> to vector<1x2x256xf32>
    tpu.vector_store %arg7[%c24_122, %c0_123, %c0_124], %149 {strides = array<i32>} : memref<36x2x256xf32, #tpu.memory_space<vmem>>, vector<1x2x256xf32>,
    %c25 = arith.constant 25 : index
    %c0_125 = arith.constant 0 : index
    %c0_126 = arith.constant 0 : index
    %150 = vector.load %arg1[%c25, %c0_125, %c0_126] : memref<36x2x256xbf16, #tpu.memory_space<vmem>>, vector<1x2x256xbf16>
    %151 = vector.shape_cast %150 : vector<1x2x256xbf16> to vector<2x256xbf16>
    %152 = arith.extf %151 : vector<2x256xbf16> to vector<2x256xf32>
    %c25_127 = arith.constant 25 : index
    %c0_128 = arith.constant 0 : index
    %c0_129 = arith.constant 0 : index
    %153 = vector.load %arg7[%c25_127, %c0_128, %c0_129] : memref<36x2x256xf32, #tpu.memory_space<vmem>>, vector<1x2x256xf32>
    %154 = vector.shape_cast %153 : vector<1x2x256xf32> to vector<2x256xf32>
    %155 = vector.shape_cast %152 : vector<2x256xf32> to vector<1x2x256xf32>
    tpu.vector_store %arg7[%c25_127, %c0_128, %c0_129], %155 {strides = array<i32>} : memref<36x2x256xf32, #tpu.memory_space<vmem>>, vector<1x2x256xf32>,
    %c26 = arith.constant 26 : index
    %c0_130 = arith.constant 0 : index
    %c0_131 = arith.constant 0 : index
    %156 = vector.load %arg1[%c26, %c0_130, %c0_131] : memref<36x2x256xbf16, #tpu.memory_space<vmem>>, vector<1x2x256xbf16>
    %157 = vector.shape_cast %156 : vector<1x2x256xbf16> to vector<2x256xbf16>
    %158 = arith.extf %157 : vector<2x256xbf16> to vector<2x256xf32>
    %c26_132 = arith.constant 26 : index
    %c0_133 = arith.constant 0 : index
    %c0_134 = arith.constant 0 : index
    %159 = vector.load %arg7[%c26_132, %c0_133, %c0_134] : memref<36x2x256xf32, #tpu.memory_space<vmem>>, vector<1x2x256xf32>
    %160 = vector.shape_cast %159 : vector<1x2x256xf32> to vector<2x256xf32>
    %161 = vector.shape_cast %158 : vector<2x256xf32> to vector<1x2x256xf32>
    tpu.vector_store %arg7[%c26_132, %c0_133, %c0_134], %161 {strides = array<i32>} : memref<36x2x256xf32, #tpu.memory_space<vmem>>, vector<1x2x256xf32>,
    %c27 = arith.constant 27 : index
    %c0_135 = arith.constant 0 : index
    %c0_136 = arith.constant 0 : index
    %162 = vector.load %arg1[%c27, %c0_135, %c0_136] : memref<36x2x256xbf16, #tpu.memory_space<vmem>>, vector<1x2x256xbf16>
    %163 = vector.shape_cast %162 : vector<1x2x256xbf16> to vector<2x256xbf16>
    %164 = arith.extf %163 : vector<2x256xbf16> to vector<2x256xf32>
    %c27_137 = arith.constant 27 : index
    %c0_138 = arith.constant 0 : index
    %c0_139 = arith.constant 0 : index
    %165 = vector.load %arg7[%c27_137, %c0_138, %c0_139] : memref<36x2x256xf32, #tpu.memory_space<vmem>>, vector<1x2x256xf32>
    %166 = vector.shape_cast %165 : vector<1x2x256xf32> to vector<2x256xf32>
    %167 = vector.shape_cast %164 : vector<2x256xf32> to vector<1x2x256xf32>
    tpu.vector_store %arg7[%c27_137, %c0_138, %c0_139], %167 {strides = array<i32>} : memref<36x2x256xf32, #tpu.memory_space<vmem>>, vector<1x2x256xf32>,
    %c28 = arith.constant 28 : index
    %c0_140 = arith.constant 0 : index
    %c0_141 = arith.constant 0 : index
    %168 = vector.load %arg1[%c28, %c0_140, %c0_141] : memref<36x2x256xbf16, #tpu.memory_space<vmem>>, vector<1x2x256xbf16>
    %169 = vector.shape_cast %168 : vector<1x2x256xbf16> to vector<2x256xbf16>
    %170 = arith.extf %169 : vector<2x256xbf16> to vector<2x256xf32>
    %c28_142 = arith.constant 28 : index
    %c0_143 = arith.constant 0 : index
    %c0_144 = arith.constant 0 : index
    %171 = vector.load %arg7[%c28_142, %c0_143, %c0_144] : memref<36x2x256xf32, #tpu.memory_space<vmem>>, vector<1x2x256xf32>
    %172 = vector.shape_cast %171 : vector<1x2x256xf32> to vector<2x256xf32>
    %173 = vector.shape_cast %170 : vector<2x256xf32> to vector<1x2x256xf32>
    tpu.vector_store %arg7[%c28_142, %c0_143, %c0_144], %173 {strides = array<i32>} : memref<36x2x256xf32, #tpu.memory_space<vmem>>, vector<1x2x256xf32>,
    %c29 = arith.constant 29 : index
    %c0_145 = arith.constant 0 : index
    %c0_146 = arith.constant 0 : index
    %174 = vector.load %arg1[%c29, %c0_145, %c0_146] : memref<36x2x256xbf16, #tpu.memory_space<vmem>>, vector<1x2x256xbf16>
    %175 = vector.shape_cast %174 : vector<1x2x256xbf16> to vector<2x256xbf16>
    %176 = arith.extf %175 : vector<2x256xbf16> to vector<2x256xf32>
    %c29_147 = arith.constant 29 : index
    %c0_148 = arith.constant 0 : index
    %c0_149 = arith.constant 0 : index
    %177 = vector.load %arg7[%c29_147, %c0_148, %c0_149] : memref<36x2x256xf32, #tpu.memory_space<vmem>>, vector<1x2x256xf32>
    %178 = vector.shape_cast %177 : vector<1x2x256xf32> to vector<2x256xf32>
    %179 = vector.shape_cast %176 : vector<2x256xf32> to vector<1x2x256xf32>
    tpu.vector_store %arg7[%c29_147, %c0_148, %c0_149], %179 {strides = array<i32>} : memref<36x2x256xf32, #tpu.memory_space<vmem>>, vector<1x2x256xf32>,
    %c30 = arith.constant 30 : index
    %c0_150 = arith.constant 0 : index
    %c0_151 = arith.constant 0 : index
    %180 = vector.load %arg1[%c30, %c0_150, %c0_151] : memref<36x2x256xbf16, #tpu.memory_space<vmem>>, vector<1x2x256xbf16>
    %181 = vector.shape_cast %180 : vector<1x2x256xbf16> to vector<2x256xbf16>
    %182 = arith.extf %181 : vector<2x256xbf16> to vector<2x256xf32>
    %c30_152 = arith.constant 30 : index
    %c0_153 = arith.constant 0 : index
    %c0_154 = arith.constant 0 : index
    %183 = vector.load %arg7[%c30_152, %c0_153, %c0_154] : memref<36x2x256xf32, #tpu.memory_space<vmem>>, vector<1x2x256xf32>
    %184 = vector.shape_cast %183 : vector<1x2x256xf32> to vector<2x256xf32>
    %185 = vector.shape_cast %182 : vector<2x256xf32> to vector<1x2x256xf32>
    tpu.vector_store %arg7[%c30_152, %c0_153, %c0_154], %185 {strides = array<i32>} : memref<36x2x256xf32, #tpu.memory_space<vmem>>, vector<1x2x256xf32>,
    %c31 = arith.constant 31 : index
    %c0_155 = arith.constant 0 : index
    %c0_156 = arith.constant 0 : index
    %186 = vector.load %arg1[%c31, %c0_155, %c0_156] : memref<36x2x256xbf16, #tpu.memory_space<vmem>>, vector<1x2x256xbf16>
    %187 = vector.shape_cast %186 : vector<1x2x256xbf16> to vector<2x256xbf16>
    %188 = arith.extf %187 : vector<2x256xbf16> to vector<2x256xf32>
    %c31_157 = arith.constant 31 : index
    %c0_158 = arith.constant 0 : index
    %c0_159 = arith.constant 0 : index
    %189 = vector.load %arg7[%c31_157, %c0_158, %c0_159] : memref<36x2x256xf32, #tpu.memory_space<vmem>>, vector<1x2x256xf32>
    %190 = vector.shape_cast %189 : vector<1x2x256xf32> to vector<2x256xf32>
    %191 = vector.shape_cast %188 : vector<2x256xf32> to vector<1x2x256xf32>
    tpu.vector_store %arg7[%c31_157, %c0_158, %c0_159], %191 {strides = array<i32>} : memref<36x2x256xf32, #tpu.memory_space<vmem>>, vector<1x2x256xf32>,
    %c32 = arith.constant 32 : index
    %c0_160 = arith.constant 0 : index
    %c0_161 = arith.constant 0 : index
    %192 = vector.load %arg1[%c32, %c0_160, %c0_161] : memref<36x2x256xbf16, #tpu.memory_space<vmem>>, vector<1x2x256xbf16>
    %193 = vector.shape_cast %192 : vector<1x2x256xbf16> to vector<2x256xbf16>
    %194 = arith.extf %193 : vector<2x256xbf16> to vector<2x256xf32>
    %c32_162 = arith.constant 32 : index
    %c0_163 = arith.constant 0 : index
    %c0_164 = arith.constant 0 : index
    %195 = vector.load %arg7[%c32_162, %c0_163, %c0_164] : memref<36x2x256xf32, #tpu.memory_space<vmem>>, vector<1x2x256xf32>
    %196 = vector.shape_cast %195 : vector<1x2x256xf32> to vector<2x256xf32>
    %197 = vector.shape_cast %194 : vector<2x256xf32> to vector<1x2x256xf32>
    tpu.vector_store %arg7[%c32_162, %c0_163, %c0_164], %197 {strides = array<i32>} : memref<36x2x256xf32, #tpu.memory_space<vmem>>, vector<1x2x256xf32>,
    %c33 = arith.constant 33 : index
    %c0_165 = arith.constant 0 : index
    %c0_166 = arith.constant 0 : index
    %198 = vector.load %arg1[%c33, %c0_165, %c0_166] : memref<36x2x256xbf16, #tpu.memory_space<vmem>>, vector<1x2x256xbf16>
    %199 = vector.shape_cast %198 : vector<1x2x256xbf16> to vector<2x256xbf16>
    %200 = arith.extf %199 : vector<2x256xbf16> to vector<2x256xf32>
    %c33_167 = arith.constant 33 : index
    %c0_168 = arith.constant 0 : index
    %c0_169 = arith.constant 0 : index
    %201 = vector.load %arg7[%c33_167, %c0_168, %c0_169] : memref<36x2x256xf32, #tpu.memory_space<vmem>>, vector<1x2x256xf32>
    %202 = vector.shape_cast %201 : vector<1x2x256xf32> to vector<2x256xf32>
    %203 = vector.shape_cast %200 : vector<2x256xf32> to vector<1x2x256xf32>
    tpu.vector_store %arg7[%c33_167, %c0_168, %c0_169], %203 {strides = array<i32>} : memref<36x2x256xf32, #tpu.memory_space<vmem>>, vector<1x2x256xf32>,
    %c34 = arith.constant 34 : index
    %c0_170 = arith.constant 0 : index
    %c0_171 = arith.constant 0 : index
    %204 = vector.load %arg1[%c34, %c0_170, %c0_171] : memref<36x2x256xbf16, #tpu.memory_space<vmem>>, vector<1x2x256xbf16>
    %205 = vector.shape_cast %204 : vector<1x2x256xbf16> to vector<2x256xbf16>
    %206 = arith.extf %205 : vector<2x256xbf16> to vector<2x256xf32>
    %c34_172 = arith.constant 34 : index
    %c0_173 = arith.constant 0 : index
    %c0_174 = arith.constant 0 : index
    %207 = vector.load %arg7[%c34_172, %c0_173, %c0_174] : memref<36x2x256xf32, #tpu.memory_space<vmem>>, vector<1x2x256xf32>
    %208 = vector.shape_cast %207 : vector<1x2x256xf32> to vector<2x256xf32>
    %209 = vector.shape_cast %206 : vector<2x256xf32> to vector<1x2x256xf32>
    tpu.vector_store %arg7[%c34_172, %c0_173, %c0_174], %209 {strides = array<i32>} : memref<36x2x256xf32, #tpu.memory_space<vmem>>, vector<1x2x256xf32>,
    %c35 = arith.constant 35 : index
    %c0_175 = arith.constant 0 : index
    %c0_176 = arith.constant 0 : index
    %210 = vector.load %arg1[%c35, %c0_175, %c0_176] : memref<36x2x256xbf16, #tpu.memory_space<vmem>>, vector<1x2x256xbf16>
    %211 = vector.shape_cast %210 : vector<1x2x256xbf16> to vector<2x256xbf16>
    %212 = arith.extf %211 : vector<2x256xbf16> to vector<2x256xf32>
    %c35_177 = arith.constant 35 : index
    %c0_178 = arith.constant 0 : index
    %c0_179 = arith.constant 0 : index
    %213 = vector.load %arg7[%c35_177, %c0_178, %c0_179] : memref<36x2x256xf32, #tpu.memory_space<vmem>>, vector<1x2x256xf32>
    %214 = vector.shape_cast %213 : vector<1x2x256xf32> to vector<2x256xf32>
    %215 = vector.shape_cast %212 : vector<2x256xf32> to vector<1x2x256xf32>
    tpu.vector_store %arg7[%c35_177, %c0_178, %c0_179], %215 {strides = array<i32>} : memref<36x2x256xf32, #tpu.memory_space<vmem>>, vector<1x2x256xf32>,
    %c0_180 = arith.constant 0 : index
    %c0_181 = arith.constant 0 : index
    %c0_182 = arith.constant 0 : index
    %216 = vector.load %arg7[%c0_180, %c0_181, %c0_182] : memref<36x2x256xf32, #tpu.memory_space<vmem>>, vector<1x2x256xf32>
    %217 = vector.shape_cast %216 : vector<1x2x256xf32> to vector<2x256xf32>
    %c0_183 = arith.constant 0 : index
    %c0_184 = arith.constant 0 : index
    %218 = memref.load %arg2[%c0_183, %c0_184] : memref<8x36xf32, #tpu.memory_space<smem>>
    %219 = vector.broadcast %218 : f32 to vector<2x256xf32>
    %220 = arith.mulf %217, %219 : vector<2x256xf32>
    %c1_185 = arith.constant 1 : index
    %c0_186 = arith.constant 0 : index
    %c0_187 = arith.constant 0 : index
    %221 = vector.load %arg7[%c1_185, %c0_186, %c0_187] : memref<36x2x256xf32, #tpu.memory_space<vmem>>, vector<1x2x256xf32>
    %222 = vector.shape_cast %221 : vector<1x2x256xf32> to vector<2x256xf32>
    %c0_188 = arith.constant 0 : index
    %c1_189 = arith.constant 1 : index
    %223 = memref.load %arg2[%c0_188, %c1_189] : memref<8x36xf32, #tpu.memory_space<smem>>
    %224 = vector.broadcast %223 : f32 to vector<2x256xf32>
    %225 = arith.mulf %222, %224 : vector<2x256xf32>
    %226 = arith.addf %220, %225 : vector<2x256xf32>
    %c2_190 = arith.constant 2 : index
    %c0_191 = arith.constant 0 : index
    %c0_192 = arith.constant 0 : index
    %227 = vector.load %arg7[%c2_190, %c0_191, %c0_192] : memref<36x2x256xf32, #tpu.memory_space<vmem>>, vector<1x2x256xf32>
    %228 = vector.shape_cast %227 : vector<1x2x256xf32> to vector<2x256xf32>
    %c0_193 = arith.constant 0 : index
    %c2_194 = arith.constant 2 : index
    %229 = memref.load %arg2[%c0_193, %c2_194] : memref<8x36xf32, #tpu.memory_space<smem>>
    %230 = vector.broadcast %229 : f32 to vector<2x256xf32>
    %231 = arith.mulf %228, %230 : vector<2x256xf32>
    %232 = arith.addf %226, %231 : vector<2x256xf32>
    %c3_195 = arith.constant 3 : index
    %c0_196 = arith.constant 0 : index
    %c0_197 = arith.constant 0 : index
    %233 = vector.load %arg7[%c3_195, %c0_196, %c0_197] : memref<36x2x256xf32, #tpu.memory_space<vmem>>, vector<1x2x256xf32>
    %234 = vector.shape_cast %233 : vector<1x2x256xf32> to vector<2x256xf32>
    %c0_198 = arith.constant 0 : index
    %c3_199 = arith.constant 3 : index
    %235 = memref.load %arg2[%c0_198, %c3_199] : memref<8x36xf32, #tpu.memory_space<smem>>
    %236 = vector.broadcast %235 : f32 to vector<2x256xf32>
    %237 = arith.mulf %234, %236 : vector<2x256xf32>
    %238 = arith.addf %232, %237 : vector<2x256xf32>
    %c4_200 = arith.constant 4 : index
    %c0_201 = arith.constant 0 : index
    %c0_202 = arith.constant 0 : index
    %239 = vector.load %arg7[%c4_200, %c0_201, %c0_202] : memref<36x2x256xf32, #tpu.memory_space<vmem>>, vector<1x2x256xf32>
    %240 = vector.shape_cast %239 : vector<1x2x256xf32> to vector<2x256xf32>
    %c0_203 = arith.constant 0 : index
    %c4_204 = arith.constant 4 : index
    %241 = memref.load %arg2[%c0_203, %c4_204] : memref<8x36xf32, #tpu.memory_space<smem>>
    %242 = vector.broadcast %241 : f32 to vector<2x256xf32>
    %243 = arith.mulf %240, %242 : vector<2x256xf32>
    %244 = arith.addf %238, %243 : vector<2x256xf32>
    %c5_205 = arith.constant 5 : index
    %c0_206 = arith.constant 0 : index
    %c0_207 = arith.constant 0 : index
    %245 = vector.load %arg7[%c5_205, %c0_206, %c0_207] : memref<36x2x256xf32, #tpu.memory_space<vmem>>, vector<1x2x256xf32>
    %246 = vector.shape_cast %245 : vector<1x2x256xf32> to vector<2x256xf32>
    %c0_208 = arith.constant 0 : index
    %c5_209 = arith.constant 5 : index
    %247 = memref.load %arg2[%c0_208, %c5_209] : memref<8x36xf32, #tpu.memory_space<smem>>
    %248 = vector.broadcast %247 : f32 to vector<2x256xf32>
    %249 = arith.mulf %246, %248 : vector<2x256xf32>
    %250 = arith.addf %244, %249 : vector<2x256xf32>
    %c6_210 = arith.constant 6 : index
    %c0_211 = arith.constant 0 : index
    %c0_212 = arith.constant 0 : index
    %251 = vector.load %arg7[%c6_210, %c0_211, %c0_212] : memref<36x2x256xf32, #tpu.memory_space<vmem>>, vector<1x2x256xf32>
    %252 = vector.shape_cast %251 : vector<1x2x256xf32> to vector<2x256xf32>
    %c0_213 = arith.constant 0 : index
    %c6_214 = arith.constant 6 : index
    %253 = memref.load %arg2[%c0_213, %c6_214] : memref<8x36xf32, #tpu.memory_space<smem>>
    %254 = vector.broadcast %253 : f32 to vector<2x256xf32>
    %255 = arith.mulf %252, %254 : vector<2x256xf32>
    %256 = arith.addf %250, %255 : vector<2x256xf32>
    %c7_215 = arith.constant 7 : index
    %c0_216 = arith.constant 0 : index
    %c0_217 = arith.constant 0 : index
    %257 = vector.load %arg7[%c7_215, %c0_216, %c0_217] : memref<36x2x256xf32, #tpu.memory_space<vmem>>, vector<1x2x256xf32>
    %258 = vector.shape_cast %257 : vector<1x2x256xf32> to vector<2x256xf32>
    %c0_218 = arith.constant 0 : index
    %c7_219 = arith.constant 7 : index
    %259 = memref.load %arg2[%c0_218, %c7_219] : memref<8x36xf32, #tpu.memory_space<smem>>
    %260 = vector.broadcast %259 : f32 to vector<2x256xf32>
    %261 = arith.mulf %258, %260 : vector<2x256xf32>
    %262 = arith.addf %256, %261 : vector<2x256xf32>
    %c8_220 = arith.constant 8 : index
    %c0_221 = arith.constant 0 : index
    %c0_222 = arith.constant 0 : index
    %263 = vector.load %arg7[%c8_220, %c0_221, %c0_222] : memref<36x2x256xf32, #tpu.memory_space<vmem>>, vector<1x2x256xf32>
    %264 = vector.shape_cast %263 : vector<1x2x256xf32> to vector<2x256xf32>
    %c0_223 = arith.constant 0 : index
    %c8_224 = arith.constant 8 : index
    %265 = memref.load %arg2[%c0_223, %c8_224] : memref<8x36xf32, #tpu.memory_space<smem>>
    %266 = vector.broadcast %265 : f32 to vector<2x256xf32>
    %267 = arith.mulf %264, %266 : vector<2x256xf32>
    %268 = arith.addf %262, %267 : vector<2x256xf32>
    %c9_225 = arith.constant 9 : index
    %c0_226 = arith.constant 0 : index
    %c0_227 = arith.constant 0 : index
    %269 = vector.load %arg7[%c9_225, %c0_226, %c0_227] : memref<36x2x256xf32, #tpu.memory_space<vmem>>, vector<1x2x256xf32>
    %270 = vector.shape_cast %269 : vector<1x2x256xf32> to vector<2x256xf32>
    %c0_228 = arith.constant 0 : index
    %c9_229 = arith.constant 9 : index
    %271 = memref.load %arg2[%c0_228, %c9_229] : memref<8x36xf32, #tpu.memory_space<smem>>
    %272 = vector.broadcast %271 : f32 to vector<2x256xf32>
    %273 = arith.mulf %270, %272 : vector<2x256xf32>
    %274 = arith.addf %268, %273 : vector<2x256xf32>
    %c10_230 = arith.constant 10 : index
    %c0_231 = arith.constant 0 : index
    %c0_232 = arith.constant 0 : index
    %275 = vector.load %arg7[%c10_230, %c0_231, %c0_232] : memref<36x2x256xf32, #tpu.memory_space<vmem>>, vector<1x2x256xf32>
    %276 = vector.shape_cast %275 : vector<1x2x256xf32> to vector<2x256xf32>
    %c0_233 = arith.constant 0 : index
    %c10_234 = arith.constant 10 : index
    %277 = memref.load %arg2[%c0_233, %c10_234] : memref<8x36xf32, #tpu.memory_space<smem>>
    %278 = vector.broadcast %277 : f32 to vector<2x256xf32>
    %279 = arith.mulf %276, %278 : vector<2x256xf32>
    %280 = arith.addf %274, %279 : vector<2x256xf32>
    %c11_235 = arith.constant 11 : index
    %c0_236 = arith.constant 0 : index
    %c0_237 = arith.constant 0 : index
    %281 = vector.load %arg7[%c11_235, %c0_236, %c0_237] : memref<36x2x256xf32, #tpu.memory_space<vmem>>, vector<1x2x256xf32>
    %282 = vector.shape_cast %281 : vector<1x2x256xf32> to vector<2x256xf32>
    %c0_238 = arith.constant 0 : index
    %c11_239 = arith.constant 11 : index
    %283 = memref.load %arg2[%c0_238, %c11_239] : memref<8x36xf32, #tpu.memory_space<smem>>
    %284 = vector.broadcast %283 : f32 to vector<2x256xf32>
    %285 = arith.mulf %282, %284 : vector<2x256xf32>
    %286 = arith.addf %280, %285 : vector<2x256xf32>
    %c12_240 = arith.constant 12 : index
    %c0_241 = arith.constant 0 : index
    %c0_242 = arith.constant 0 : index
    %287 = vector.load %arg7[%c12_240, %c0_241, %c0_242] : memref<36x2x256xf32, #tpu.memory_space<vmem>>, vector<1x2x256xf32>
    %288 = vector.shape_cast %287 : vector<1x2x256xf32> to vector<2x256xf32>
    %c0_243 = arith.constant 0 : index
    %c12_244 = arith.constant 12 : index
    %289 = memref.load %arg2[%c0_243, %c12_244] : memref<8x36xf32, #tpu.memory_space<smem>>
    %290 = vector.broadcast %289 : f32 to vector<2x256xf32>
    %291 = arith.mulf %288, %290 : vector<2x256xf32>
    %292 = arith.addf %286, %291 : vector<2x256xf32>
    %c13_245 = arith.constant 13 : index
    %c0_246 = arith.constant 0 : index
    %c0_247 = arith.constant 0 : index
    %293 = vector.load %arg7[%c13_245, %c0_246, %c0_247] : memref<36x2x256xf32, #tpu.memory_space<vmem>>, vector<1x2x256xf32>
    %294 = vector.shape_cast %293 : vector<1x2x256xf32> to vector<2x256xf32>
    %c0_248 = arith.constant 0 : index
    %c13_249 = arith.constant 13 : index
    %295 = memref.load %arg2[%c0_248, %c13_249] : memref<8x36xf32, #tpu.memory_space<smem>>
    %296 = vector.broadcast %295 : f32 to vector<2x256xf32>
    %297 = arith.mulf %294, %296 : vector<2x256xf32>
    %298 = arith.addf %292, %297 : vector<2x256xf32>
    %c14_250 = arith.constant 14 : index
    %c0_251 = arith.constant 0 : index
    %c0_252 = arith.constant 0 : index
    %299 = vector.load %arg7[%c14_250, %c0_251, %c0_252] : memref<36x2x256xf32, #tpu.memory_space<vmem>>, vector<1x2x256xf32>
    %300 = vector.shape_cast %299 : vector<1x2x256xf32> to vector<2x256xf32>
    %c0_253 = arith.constant 0 : index
    %c14_254 = arith.constant 14 : index
    %301 = memref.load %arg2[%c0_253, %c14_254] : memref<8x36xf32, #tpu.memory_space<smem>>
    %302 = vector.broadcast %301 : f32 to vector<2x256xf32>
    %303 = arith.mulf %300, %302 : vector<2x256xf32>
    %304 = arith.addf %298, %303 : vector<2x256xf32>
    %c15_255 = arith.constant 15 : index
    %c0_256 = arith.constant 0 : index
    %c0_257 = arith.constant 0 : index
    %305 = vector.load %arg7[%c15_255, %c0_256, %c0_257] : memref<36x2x256xf32, #tpu.memory_space<vmem>>, vector<1x2x256xf32>
    %306 = vector.shape_cast %305 : vector<1x2x256xf32> to vector<2x256xf32>
    %c0_258 = arith.constant 0 : index
    %c15_259 = arith.constant 15 : index
    %307 = memref.load %arg2[%c0_258, %c15_259] : memref<8x36xf32, #tpu.memory_space<smem>>
    %308 = vector.broadcast %307 : f32 to vector<2x256xf32>
    %309 = arith.mulf %306, %308 : vector<2x256xf32>
    %310 = arith.addf %304, %309 : vector<2x256xf32>
    %c16_260 = arith.constant 16 : index
    %c0_261 = arith.constant 0 : index
    %c0_262 = arith.constant 0 : index
    %311 = vector.load %arg7[%c16_260, %c0_261, %c0_262] : memref<36x2x256xf32, #tpu.memory_space<vmem>>, vector<1x2x256xf32>
    %312 = vector.shape_cast %311 : vector<1x2x256xf32> to vector<2x256xf32>
    %c0_263 = arith.constant 0 : index
    %c16_264 = arith.constant 16 : index
    %313 = memref.load %arg2[%c0_263, %c16_264] : memref<8x36xf32, #tpu.memory_space<smem>>
    %314 = vector.broadcast %313 : f32 to vector<2x256xf32>
    %315 = arith.mulf %312, %314 : vector<2x256xf32>
    %316 = arith.addf %310, %315 : vector<2x256xf32>
    %c17_265 = arith.constant 17 : index
    %c0_266 = arith.constant 0 : index
    %c0_267 = arith.constant 0 : index
    %317 = vector.load %arg7[%c17_265, %c0_266, %c0_267] : memref<36x2x256xf32, #tpu.memory_space<vmem>>, vector<1x2x256xf32>
    %318 = vector.shape_cast %317 : vector<1x2x256xf32> to vector<2x256xf32>
    %c0_268 = arith.constant 0 : index
    %c17_269 = arith.constant 17 : index
    %319 = memref.load %arg2[%c0_268, %c17_269] : memref<8x36xf32, #tpu.memory_space<smem>>
    %320 = vector.broadcast %319 : f32 to vector<2x256xf32>
    %321 = arith.mulf %318, %320 : vector<2x256xf32>
    %322 = arith.addf %316, %321 : vector<2x256xf32>
    %c18_270 = arith.constant 18 : index
    %c0_271 = arith.constant 0 : index
    %c0_272 = arith.constant 0 : index
    %323 = vector.load %arg7[%c18_270, %c0_271, %c0_272] : memref<36x2x256xf32, #tpu.memory_space<vmem>>, vector<1x2x256xf32>
    %324 = vector.shape_cast %323 : vector<1x2x256xf32> to vector<2x256xf32>
    %c0_273 = arith.constant 0 : index
    %c18_274 = arith.constant 18 : index
    %325 = memref.load %arg2[%c0_273, %c18_274] : memref<8x36xf32, #tpu.memory_space<smem>>
    %326 = vector.broadcast %325 : f32 to vector<2x256xf32>
    %327 = arith.mulf %324, %326 : vector<2x256xf32>
    %328 = arith.addf %322, %327 : vector<2x256xf32>
    %c19_275 = arith.constant 19 : index
    %c0_276 = arith.constant 0 : index
    %c0_277 = arith.constant 0 : index
    %329 = vector.load %arg7[%c19_275, %c0_276, %c0_277] : memref<36x2x256xf32, #tpu.memory_space<vmem>>, vector<1x2x256xf32>
    %330 = vector.shape_cast %329 : vector<1x2x256xf32> to vector<2x256xf32>
    %c0_278 = arith.constant 0 : index
    %c19_279 = arith.constant 19 : index
    %331 = memref.load %arg2[%c0_278, %c19_279] : memref<8x36xf32, #tpu.memory_space<smem>>
    %332 = vector.broadcast %331 : f32 to vector<2x256xf32>
    %333 = arith.mulf %330, %332 : vector<2x256xf32>
    %334 = arith.addf %328, %333 : vector<2x256xf32>
    %c20_280 = arith.constant 20 : index
    %c0_281 = arith.constant 0 : index
    %c0_282 = arith.constant 0 : index
    %335 = vector.load %arg7[%c20_280, %c0_281, %c0_282] : memref<36x2x256xf32, #tpu.memory_space<vmem>>, vector<1x2x256xf32>
    %336 = vector.shape_cast %335 : vector<1x2x256xf32> to vector<2x256xf32>
    %c0_283 = arith.constant 0 : index
    %c20_284 = arith.constant 20 : index
    %337 = memref.load %arg2[%c0_283, %c20_284] : memref<8x36xf32, #tpu.memory_space<smem>>
    %338 = vector.broadcast %337 : f32 to vector<2x256xf32>
    %339 = arith.mulf %336, %338 : vector<2x256xf32>
    %340 = arith.addf %334, %339 : vector<2x256xf32>
    %c21_285 = arith.constant 21 : index
    %c0_286 = arith.constant 0 : index
    %c0_287 = arith.constant 0 : index
    %341 = vector.load %arg7[%c21_285, %c0_286, %c0_287] : memref<36x2x256xf32, #tpu.memory_space<vmem>>, vector<1x2x256xf32>
    %342 = vector.shape_cast %341 : vector<1x2x256xf32> to vector<2x256xf32>
    %c0_288 = arith.constant 0 : index
    %c21_289 = arith.constant 21 : index
    %343 = memref.load %arg2[%c0_288, %c21_289] : memref<8x36xf32, #tpu.memory_space<smem>>
    %344 = vector.broadcast %343 : f32 to vector<2x256xf32>
    %345 = arith.mulf %342, %344 : vector<2x256xf32>
    %346 = arith.addf %340, %345 : vector<2x256xf32>
    %c22_290 = arith.constant 22 : index
    %c0_291 = arith.constant 0 : index
    %c0_292 = arith.constant 0 : index
    %347 = vector.load %arg7[%c22_290, %c0_291, %c0_292] : memref<36x2x256xf32, #tpu.memory_space<vmem>>, vector<1x2x256xf32>
    %348 = vector.shape_cast %347 : vector<1x2x256xf32> to vector<2x256xf32>
    %c0_293 = arith.constant 0 : index
    %c22_294 = arith.constant 22 : index
    %349 = memref.load %arg2[%c0_293, %c22_294] : memref<8x36xf32, #tpu.memory_space<smem>>
    %350 = vector.broadcast %349 : f32 to vector<2x256xf32>
    %351 = arith.mulf %348, %350 : vector<2x256xf32>
    %352 = arith.addf %346, %351 : vector<2x256xf32>
    %c23_295 = arith.constant 23 : index
    %c0_296 = arith.constant 0 : index
    %c0_297 = arith.constant 0 : index
    %353 = vector.load %arg7[%c23_295, %c0_296, %c0_297] : memref<36x2x256xf32, #tpu.memory_space<vmem>>, vector<1x2x256xf32>
    %354 = vector.shape_cast %353 : vector<1x2x256xf32> to vector<2x256xf32>
    %c0_298 = arith.constant 0 : index
    %c23_299 = arith.constant 23 : index
    %355 = memref.load %arg2[%c0_298, %c23_299] : memref<8x36xf32, #tpu.memory_space<smem>>
    %356 = vector.broadcast %355 : f32 to vector<2x256xf32>
    %357 = arith.mulf %354, %356 : vector<2x256xf32>
    %358 = arith.addf %352, %357 : vector<2x256xf32>
    %c24_300 = arith.constant 24 : index
    %c0_301 = arith.constant 0 : index
    %c0_302 = arith.constant 0 : index
    %359 = vector.load %arg7[%c24_300, %c0_301, %c0_302] : memref<36x2x256xf32, #tpu.memory_space<vmem>>, vector<1x2x256xf32>
    %360 = vector.shape_cast %359 : vector<1x2x256xf32> to vector<2x256xf32>
    %c0_303 = arith.constant 0 : index
    %c24_304 = arith.constant 24 : index
    %361 = memref.load %arg2[%c0_303, %c24_304] : memref<8x36xf32, #tpu.memory_space<smem>>
    %362 = vector.broadcast %361 : f32 to vector<2x256xf32>
    %363 = arith.mulf %360, %362 : vector<2x256xf32>
    %364 = arith.addf %358, %363 : vector<2x256xf32>
    %c25_305 = arith.constant 25 : index
    %c0_306 = arith.constant 0 : index
    %c0_307 = arith.constant 0 : index
    %365 = vector.load %arg7[%c25_305, %c0_306, %c0_307] : memref<36x2x256xf32, #tpu.memory_space<vmem>>, vector<1x2x256xf32>
    %366 = vector.shape_cast %365 : vector<1x2x256xf32> to vector<2x256xf32>
    %c0_308 = arith.constant 0 : index
    %c25_309 = arith.constant 25 : index
    %367 = memref.load %arg2[%c0_308, %c25_309] : memref<8x36xf32, #tpu.memory_space<smem>>
    %368 = vector.broadcast %367 : f32 to vector<2x256xf32>
    %369 = arith.mulf %366, %368 : vector<2x256xf32>
    %370 = arith.addf %364, %369 : vector<2x256xf32>
    %c26_310 = arith.constant 26 : index
    %c0_311 = arith.constant 0 : index
    %c0_312 = arith.constant 0 : index
    %371 = vector.load %arg7[%c26_310, %c0_311, %c0_312] : memref<36x2x256xf32, #tpu.memory_space<vmem>>, vector<1x2x256xf32>
    %372 = vector.shape_cast %371 : vector<1x2x256xf32> to vector<2x256xf32>
    %c0_313 = arith.constant 0 : index
    %c26_314 = arith.constant 26 : index
    %373 = memref.load %arg2[%c0_313, %c26_314] : memref<8x36xf32, #tpu.memory_space<smem>>
    %374 = vector.broadcast %373 : f32 to vector<2x256xf32>
    %375 = arith.mulf %372, %374 : vector<2x256xf32>
    %376 = arith.addf %370, %375 : vector<2x256xf32>
    %c27_315 = arith.constant 27 : index
    %c0_316 = arith.constant 0 : index
    %c0_317 = arith.constant 0 : index
    %377 = vector.load %arg7[%c27_315, %c0_316, %c0_317] : memref<36x2x256xf32, #tpu.memory_space<vmem>>, vector<1x2x256xf32>
    %378 = vector.shape_cast %377 : vector<1x2x256xf32> to vector<2x256xf32>
    %c0_318 = arith.constant 0 : index
    %c27_319 = arith.constant 27 : index
    %379 = memref.load %arg2[%c0_318, %c27_319] : memref<8x36xf32, #tpu.memory_space<smem>>
    %380 = vector.broadcast %379 : f32 to vector<2x256xf32>
    %381 = arith.mulf %378, %380 : vector<2x256xf32>
    %382 = arith.addf %376, %381 : vector<2x256xf32>
    %c28_320 = arith.constant 28 : index
    %c0_321 = arith.constant 0 : index
    %c0_322 = arith.constant 0 : index
    %383 = vector.load %arg7[%c28_320, %c0_321, %c0_322] : memref<36x2x256xf32, #tpu.memory_space<vmem>>, vector<1x2x256xf32>
    %384 = vector.shape_cast %383 : vector<1x2x256xf32> to vector<2x256xf32>
    %c0_323 = arith.constant 0 : index
    %c28_324 = arith.constant 28 : index
    %385 = memref.load %arg2[%c0_323, %c28_324] : memref<8x36xf32, #tpu.memory_space<smem>>
    %386 = vector.broadcast %385 : f32 to vector<2x256xf32>
    %387 = arith.mulf %384, %386 : vector<2x256xf32>
    %388 = arith.addf %382, %387 : vector<2x256xf32>
    %c29_325 = arith.constant 29 : index
    %c0_326 = arith.constant 0 : index
    %c0_327 = arith.constant 0 : index
    %389 = vector.load %arg7[%c29_325, %c0_326, %c0_327] : memref<36x2x256xf32, #tpu.memory_space<vmem>>, vector<1x2x256xf32>
    %390 = vector.shape_cast %389 : vector<1x2x256xf32> to vector<2x256xf32>
    %c0_328 = arith.constant 0 : index
    %c29_329 = arith.constant 29 : index
    %391 = memref.load %arg2[%c0_328, %c29_329] : memref<8x36xf32, #tpu.memory_space<smem>>
    %392 = vector.broadcast %391 : f32 to vector<2x256xf32>
    %393 = arith.mulf %390, %392 : vector<2x256xf32>
    %394 = arith.addf %388, %393 : vector<2x256xf32>
    %c30_330 = arith.constant 30 : index
    %c0_331 = arith.constant 0 : index
    %c0_332 = arith.constant 0 : index
    %395 = vector.load %arg7[%c30_330, %c0_331, %c0_332] : memref<36x2x256xf32, #tpu.memory_space<vmem>>, vector<1x2x256xf32>
    %396 = vector.shape_cast %395 : vector<1x2x256xf32> to vector<2x256xf32>
    %c0_333 = arith.constant 0 : index
    %c30_334 = arith.constant 30 : index
    %397 = memref.load %arg2[%c0_333, %c30_334] : memref<8x36xf32, #tpu.memory_space<smem>>
    %398 = vector.broadcast %397 : f32 to vector<2x256xf32>
    %399 = arith.mulf %396, %398 : vector<2x256xf32>
    %400 = arith.addf %394, %399 : vector<2x256xf32>
    %c31_335 = arith.constant 31 : index
    %c0_336 = arith.constant 0 : index
    %c0_337 = arith.constant 0 : index
    %401 = vector.load %arg7[%c31_335, %c0_336, %c0_337] : memref<36x2x256xf32, #tpu.memory_space<vmem>>, vector<1x2x256xf32>
    %402 = vector.shape_cast %401 : vector<1x2x256xf32> to vector<2x256xf32>
    %c0_338 = arith.constant 0 : index
    %c31_339 = arith.constant 31 : index
    %403 = memref.load %arg2[%c0_338, %c31_339] : memref<8x36xf32, #tpu.memory_space<smem>>
    %404 = vector.broadcast %403 : f32 to vector<2x256xf32>
    %405 = arith.mulf %402, %404 : vector<2x256xf32>
    %406 = arith.addf %400, %405 : vector<2x256xf32>
    %c32_340 = arith.constant 32 : index
    %c0_341 = arith.constant 0 : index
    %c0_342 = arith.constant 0 : index
    %407 = vector.load %arg7[%c32_340, %c0_341, %c0_342] : memref<36x2x256xf32, #tpu.memory_space<vmem>>, vector<1x2x256xf32>
    %408 = vector.shape_cast %407 : vector<1x2x256xf32> to vector<2x256xf32>
    %c0_343 = arith.constant 0 : index
    %c32_344 = arith.constant 32 : index
    %409 = memref.load %arg2[%c0_343, %c32_344] : memref<8x36xf32, #tpu.memory_space<smem>>
    %410 = vector.broadcast %409 : f32 to vector<2x256xf32>
    %411 = arith.mulf %408, %410 : vector<2x256xf32>
    %412 = arith.addf %406, %411 : vector<2x256xf32>
    %c33_345 = arith.constant 33 : index
    %c0_346 = arith.constant 0 : index
    %c0_347 = arith.constant 0 : index
    %413 = vector.load %arg7[%c33_345, %c0_346, %c0_347] : memref<36x2x256xf32, #tpu.memory_space<vmem>>, vector<1x2x256xf32>
    %414 = vector.shape_cast %413 : vector<1x2x256xf32> to vector<2x256xf32>
    %c0_348 = arith.constant 0 : index
    %c33_349 = arith.constant 33 : index
    %415 = memref.load %arg2[%c0_348, %c33_349] : memref<8x36xf32, #tpu.memory_space<smem>>
    %416 = vector.broadcast %415 : f32 to vector<2x256xf32>
    %417 = arith.mulf %414, %416 : vector<2x256xf32>
    %418 = arith.addf %412, %417 : vector<2x256xf32>
    %c34_350 = arith.constant 34 : index
    %c0_351 = arith.constant 0 : index
    %c0_352 = arith.constant 0 : index
    %419 = vector.load %arg7[%c34_350, %c0_351, %c0_352] : memref<36x2x256xf32, #tpu.memory_space<vmem>>, vector<1x2x256xf32>
    %420 = vector.shape_cast %419 : vector<1x2x256xf32> to vector<2x256xf32>
    %c0_353 = arith.constant 0 : index
    %c34_354 = arith.constant 34 : index
    %421 = memref.load %arg2[%c0_353, %c34_354] : memref<8x36xf32, #tpu.memory_space<smem>>
    %422 = vector.broadcast %421 : f32 to vector<2x256xf32>
    %423 = arith.mulf %420, %422 : vector<2x256xf32>
    %424 = arith.addf %418, %423 : vector<2x256xf32>
    %c35_355 = arith.constant 35 : index
    %c0_356 = arith.constant 0 : index
    %c0_357 = arith.constant 0 : index
    %425 = vector.load %arg7[%c35_355, %c0_356, %c0_357] : memref<36x2x256xf32, #tpu.memory_space<vmem>>, vector<1x2x256xf32>
    %426 = vector.shape_cast %425 : vector<1x2x256xf32> to vector<2x256xf32>
    %c0_358 = arith.constant 0 : index
    %c35_359 = arith.constant 35 : index
    %427 = memref.load %arg2[%c0_358, %c35_359] : memref<8x36xf32, #tpu.memory_space<smem>>
    %428 = vector.broadcast %427 : f32 to vector<2x256xf32>
    %429 = arith.mulf %426, %428 : vector<2x256xf32>
    %430 = arith.addf %424, %429 : vector<2x256xf32>
    %c0_360 = arith.constant 0 : index
    %431 = memref.load %arg3[%c0_360] : memref<8xf32, #tpu.memory_space<smem>>
    %432 = vector.broadcast %431 : f32 to vector<2x256xf32>
    %433 = arith.addf %430, %432 : vector<2x256xf32>
    %cst = arith.constant 0.000000e+00 : f32
    %434 = vector.broadcast %cst : f32 to vector<2x256xf32>
    %435 = arith.maximumf %433, %434 : vector<2x256xf32>
    %c0_361 = arith.constant 0 : index
    %c0_362 = arith.constant 0 : index
    %436 = vector.load %arg8[%c0_361, %c0_362] : memref<2x2048xf32, #tpu.memory_space<vmem>>, vector<2x256xf32>
    tpu.vector_store %arg8[%c0_361, %c0_362], %435 {strides = array<i32>} : memref<2x2048xf32, #tpu.memory_space<vmem>>, vector<2x256xf32>,
    %c0_363 = arith.constant 0 : index
    %c0_364 = arith.constant 0 : index
    %c0_365 = arith.constant 0 : index
    %437 = vector.load %arg7[%c0_363, %c0_364, %c0_365] : memref<36x2x256xf32, #tpu.memory_space<vmem>>, vector<1x2x256xf32>
    %438 = vector.shape_cast %437 : vector<1x2x256xf32> to vector<2x256xf32>
    %c1_366 = arith.constant 1 : index
    %c0_367 = arith.constant 0 : index
    %439 = memref.load %arg2[%c1_366, %c0_367] : memref<8x36xf32, #tpu.memory_space<smem>>
    %440 = vector.broadcast %439 : f32 to vector<2x256xf32>
    %441 = arith.mulf %438, %440 : vector<2x256xf32>
    %c1_368 = arith.constant 1 : index
    %c0_369 = arith.constant 0 : index
    %c0_370 = arith.constant 0 : index
    %442 = vector.load %arg7[%c1_368, %c0_369, %c0_370] : memref<36x2x256xf32, #tpu.memory_space<vmem>>, vector<1x2x256xf32>
    %443 = vector.shape_cast %442 : vector<1x2x256xf32> to vector<2x256xf32>
    %c1_371 = arith.constant 1 : index
    %c1_372 = arith.constant 1 : index
    %444 = memref.load %arg2[%c1_371, %c1_372] : memref<8x36xf32, #tpu.memory_space<smem>>
    %445 = vector.broadcast %444 : f32 to vector<2x256xf32>
    %446 = arith.mulf %443, %445 : vector<2x256xf32>
    %447 = arith.addf %441, %446 : vector<2x256xf32>
    %c2_373 = arith.constant 2 : index
    %c0_374 = arith.constant 0 : index
    %c0_375 = arith.constant 0 : index
    %448 = vector.load %arg7[%c2_373, %c0_374, %c0_375] : memref<36x2x256xf32, #tpu.memory_space<vmem>>, vector<1x2x256xf32>
    %449 = vector.shape_cast %448 : vector<1x2x256xf32> to vector<2x256xf32>
    %c1_376 = arith.constant 1 : index
    %c2_377 = arith.constant 2 : index
    %450 = memref.load %arg2[%c1_376, %c2_377] : memref<8x36xf32, #tpu.memory_space<smem>>
    %451 = vector.broadcast %450 : f32 to vector<2x256xf32>
    %452 = arith.mulf %449, %451 : vector<2x256xf32>
    %453 = arith.addf %447, %452 : vector<2x256xf32>
    %c3_378 = arith.constant 3 : index
    %c0_379 = arith.constant 0 : index
    %c0_380 = arith.constant 0 : index
    %454 = vector.load %arg7[%c3_378, %c0_379, %c0_380] : memref<36x2x256xf32, #tpu.memory_space<vmem>>, vector<1x2x256xf32>
    %455 = vector.shape_cast %454 : vector<1x2x256xf32> to vector<2x256xf32>
    %c1_381 = arith.constant 1 : index
    %c3_382 = arith.constant 3 : index
    %456 = memref.load %arg2[%c1_381, %c3_382] : memref<8x36xf32, #tpu.memory_space<smem>>
    %457 = vector.broadcast %456 : f32 to vector<2x256xf32>
    %458 = arith.mulf %455, %457 : vector<2x256xf32>
    %459 = arith.addf %453, %458 : vector<2x256xf32>
    %c4_383 = arith.constant 4 : index
    %c0_384 = arith.constant 0 : index
    %c0_385 = arith.constant 0 : index
    %460 = vector.load %arg7[%c4_383, %c0_384, %c0_385] : memref<36x2x256xf32, #tpu.memory_space<vmem>>, vector<1x2x256xf32>
    %461 = vector.shape_cast %460 : vector<1x2x256xf32> to vector<2x256xf32>
    %c1_386 = arith.constant 1 : index
    %c4_387 = arith.constant 4 : index
    %462 = memref.load %arg2[%c1_386, %c4_387] : memref<8x36xf32, #tpu.memory_space<smem>>
    %463 = vector.broadcast %462 : f32 to vector<2x256xf32>
    %464 = arith.mulf %461, %463 : vector<2x256xf32>
    %465 = arith.addf %459, %464 : vector<2x256xf32>
    %c5_388 = arith.constant 5 : index
    %c0_389 = arith.constant 0 : index
    %c0_390 = arith.constant 0 : index
    %466 = vector.load %arg7[%c5_388, %c0_389, %c0_390] : memref<36x2x256xf32, #tpu.memory_space<vmem>>, vector<1x2x256xf32>
    %467 = vector.shape_cast %466 : vector<1x2x256xf32> to vector<2x256xf32>
    %c1_391 = arith.constant 1 : index
    %c5_392 = arith.constant 5 : index
    %468 = memref.load %arg2[%c1_391, %c5_392] : memref<8x36xf32, #tpu.memory_space<smem>>
    %469 = vector.broadcast %468 : f32 to vector<2x256xf32>
    %470 = arith.mulf %467, %469 : vector<2x256xf32>
    %471 = arith.addf %465, %470 : vector<2x256xf32>
    %c6_393 = arith.constant 6 : index
    %c0_394 = arith.constant 0 : index
    %c0_395 = arith.constant 0 : index
    %472 = vector.load %arg7[%c6_393, %c0_394, %c0_395] : memref<36x2x256xf32, #tpu.memory_space<vmem>>, vector<1x2x256xf32>
    %473 = vector.shape_cast %472 : vector<1x2x256xf32> to vector<2x256xf32>
    %c1_396 = arith.constant 1 : index
    %c6_397 = arith.constant 6 : index
    %474 = memref.load %arg2[%c1_396, %c6_397] : memref<8x36xf32, #tpu.memory_space<smem>>
    %475 = vector.broadcast %474 : f32 to vector<2x256xf32>
    %476 = arith.mulf %473, %475 : vector<2x256xf32>
    %477 = arith.addf %471, %476 : vector<2x256xf32>
    %c7_398 = arith.constant 7 : index
    %c0_399 = arith.constant 0 : index
    %c0_400 = arith.constant 0 : index
    %478 = vector.load %arg7[%c7_398, %c0_399, %c0_400] : memref<36x2x256xf32, #tpu.memory_space<vmem>>, vector<1x2x256xf32>
    %479 = vector.shape_cast %478 : vector<1x2x256xf32> to vector<2x256xf32>
    %c1_401 = arith.constant 1 : index
    %c7_402 = arith.constant 7 : index
    %480 = memref.load %arg2[%c1_401, %c7_402] : memref<8x36xf32, #tpu.memory_space<smem>>
    %481 = vector.broadcast %480 : f32 to vector<2x256xf32>
    %482 = arith.mulf %479, %481 : vector<2x256xf32>
    %483 = arith.addf %477, %482 : vector<2x256xf32>
    %c8_403 = arith.constant 8 : index
    %c0_404 = arith.constant 0 : index
    %c0_405 = arith.constant 0 : index
    %484 = vector.load %arg7[%c8_403, %c0_404, %c0_405] : memref<36x2x256xf32, #tpu.memory_space<vmem>>, vector<1x2x256xf32>
    %485 = vector.shape_cast %484 : vector<1x2x256xf32> to vector<2x256xf32>
    %c1_406 = arith.constant 1 : index
    %c8_407 = arith.constant 8 : index
    %486 = memref.load %arg2[%c1_406, %c8_407] : memref<8x36xf32, #tpu.memory_space<smem>>
    %487 = vector.broadcast %486 : f32 to vector<2x256xf32>
    %488 = arith.mulf %485, %487 : vector<2x256xf32>
    %489 = arith.addf %483, %488 : vector<2x256xf32>
    %c9_408 = arith.constant 9 : index
    %c0_409 = arith.constant 0 : index
    %c0_410 = arith.constant 0 : index
    %490 = vector.load %arg7[%c9_408, %c0_409, %c0_410] : memref<36x2x256xf32, #tpu.memory_space<vmem>>, vector<1x2x256xf32>
    %491 = vector.shape_cast %490 : vector<1x2x256xf32> to vector<2x256xf32>
    %c1_411 = arith.constant 1 : index
    %c9_412 = arith.constant 9 : index
    %492 = memref.load %arg2[%c1_411, %c9_412] : memref<8x36xf32, #tpu.memory_space<smem>>
    %493 = vector.broadcast %492 : f32 to vector<2x256xf32>
    %494 = arith.mulf %491, %493 : vector<2x256xf32>
    %495 = arith.addf %489, %494 : vector<2x256xf32>
    %c10_413 = arith.constant 10 : index
    %c0_414 = arith.constant 0 : index
    %c0_415 = arith.constant 0 : index
    %496 = vector.load %arg7[%c10_413, %c0_414, %c0_415] : memref<36x2x256xf32, #tpu.memory_space<vmem>>, vector<1x2x256xf32>
    %497 = vector.shape_cast %496 : vector<1x2x256xf32> to vector<2x256xf32>
    %c1_416 = arith.constant 1 : index
    %c10_417 = arith.constant 10 : index
    %498 = memref.load %arg2[%c1_416, %c10_417] : memref<8x36xf32, #tpu.memory_space<smem>>
    %499 = vector.broadcast %498 : f32 to vector<2x256xf32>
    %500 = arith.mulf %497, %499 : vector<2x256xf32>
    %501 = arith.addf %495, %500 : vector<2x256xf32>
    %c11_418 = arith.constant 11 : index
    %c0_419 = arith.constant 0 : index
    %c0_420 = arith.constant 0 : index
    %502 = vector.load %arg7[%c11_418, %c0_419, %c0_420] : memref<36x2x256xf32, #tpu.memory_space<vmem>>, vector<1x2x256xf32>
    %503 = vector.shape_cast %502 : vector<1x2x256xf32> to vector<2x256xf32>
    %c1_421 = arith.constant 1 : index
    %c11_422 = arith.constant 11 : index
    %504 = memref.load %arg2[%c1_421, %c11_422] : memref<8x36xf32, #tpu.memory_space<smem>>
    %505 = vector.broadcast %504 : f32 to vector<2x256xf32>
    %506 = arith.mulf %503, %505 : vector<2x256xf32>
    %507 = arith.addf %501, %506 : vector<2x256xf32>
    %c12_423 = arith.constant 12 : index
    %c0_424 = arith.constant 0 : index
    %c0_425 = arith.constant 0 : index
    %508 = vector.load %arg7[%c12_423, %c0_424, %c0_425] : memref<36x2x256xf32, #tpu.memory_space<vmem>>, vector<1x2x256xf32>
    %509 = vector.shape_cast %508 : vector<1x2x256xf32> to vector<2x256xf32>
    %c1_426 = arith.constant 1 : index
    %c12_427 = arith.constant 12 : index
    %510 = memref.load %arg2[%c1_426, %c12_427] : memref<8x36xf32, #tpu.memory_space<smem>>
    %511 = vector.broadcast %510 : f32 to vector<2x256xf32>
    %512 = arith.mulf %509, %511 : vector<2x256xf32>
    %513 = arith.addf %507, %512 : vector<2x256xf32>
    %c13_428 = arith.constant 13 : index
    %c0_429 = arith.constant 0 : index
    %c0_430 = arith.constant 0 : index
    %514 = vector.load %arg7[%c13_428, %c0_429, %c0_430] : memref<36x2x256xf32, #tpu.memory_space<vmem>>, vector<1x2x256xf32>
    %515 = vector.shape_cast %514 : vector<1x2x256xf32> to vector<2x256xf32>
    %c1_431 = arith.constant 1 : index
    %c13_432 = arith.constant 13 : index
    %516 = memref.load %arg2[%c1_431, %c13_432] : memref<8x36xf32, #tpu.memory_space<smem>>
    %517 = vector.broadcast %516 : f32 to vector<2x256xf32>
    %518 = arith.mulf %515, %517 : vector<2x256xf32>
    %519 = arith.addf %513, %518 : vector<2x256xf32>
    %c14_433 = arith.constant 14 : index
    %c0_434 = arith.constant 0 : index
    %c0_435 = arith.constant 0 : index
    %520 = vector.load %arg7[%c14_433, %c0_434, %c0_435] : memref<36x2x256xf32, #tpu.memory_space<vmem>>, vector<1x2x256xf32>
    %521 = vector.shape_cast %520 : vector<1x2x256xf32> to vector<2x256xf32>
    %c1_436 = arith.constant 1 : index
    %c14_437 = arith.constant 14 : index
    %522 = memref.load %arg2[%c1_436, %c14_437] : memref<8x36xf32, #tpu.memory_space<smem>>
    %523 = vector.broadcast %522 : f32 to vector<2x256xf32>
    %524 = arith.mulf %521, %523 : vector<2x256xf32>
    %525 = arith.addf %519, %524 : vector<2x256xf32>
    %c15_438 = arith.constant 15 : index
    %c0_439 = arith.constant 0 : index
    %c0_440 = arith.constant 0 : index
    %526 = vector.load %arg7[%c15_438, %c0_439, %c0_440] : memref<36x2x256xf32, #tpu.memory_space<vmem>>, vector<1x2x256xf32>
    %527 = vector.shape_cast %526 : vector<1x2x256xf32> to vector<2x256xf32>
    %c1_441 = arith.constant 1 : index
    %c15_442 = arith.constant 15 : index
    %528 = memref.load %arg2[%c1_441, %c15_442] : memref<8x36xf32, #tpu.memory_space<smem>>
    %529 = vector.broadcast %528 : f32 to vector<2x256xf32>
    %530 = arith.mulf %527, %529 : vector<2x256xf32>
    %531 = arith.addf %525, %530 : vector<2x256xf32>
    %c16_443 = arith.constant 16 : index
    %c0_444 = arith.constant 0 : index
    %c0_445 = arith.constant 0 : index
    %532 = vector.load %arg7[%c16_443, %c0_444, %c0_445] : memref<36x2x256xf32, #tpu.memory_space<vmem>>, vector<1x2x256xf32>
    %533 = vector.shape_cast %532 : vector<1x2x256xf32> to vector<2x256xf32>
    %c1_446 = arith.constant 1 : index
    %c16_447 = arith.constant 16 : index
    %534 = memref.load %arg2[%c1_446, %c16_447] : memref<8x36xf32, #tpu.memory_space<smem>>
    %535 = vector.broadcast %534 : f32 to vector<2x256xf32>
    %536 = arith.mulf %533, %535 : vector<2x256xf32>
    %537 = arith.addf %531, %536 : vector<2x256xf32>
    %c17_448 = arith.constant 17 : index
    %c0_449 = arith.constant 0 : index
    %c0_450 = arith.constant 0 : index
    %538 = vector.load %arg7[%c17_448, %c0_449, %c0_450] : memref<36x2x256xf32, #tpu.memory_space<vmem>>, vector<1x2x256xf32>
    %539 = vector.shape_cast %538 : vector<1x2x256xf32> to vector<2x256xf32>
    %c1_451 = arith.constant 1 : index
    %c17_452 = arith.constant 17 : index
    %540 = memref.load %arg2[%c1_451, %c17_452] : memref<8x36xf32, #tpu.memory_space<smem>>
    %541 = vector.broadcast %540 : f32 to vector<2x256xf32>
    %542 = arith.mulf %539, %541 : vector<2x256xf32>
    %543 = arith.addf %537, %542 : vector<2x256xf32>
    %c18_453 = arith.constant 18 : index
    %c0_454 = arith.constant 0 : index
    %c0_455 = arith.constant 0 : index
    %544 = vector.load %arg7[%c18_453, %c0_454, %c0_455] : memref<36x2x256xf32, #tpu.memory_space<vmem>>, vector<1x2x256xf32>
    %545 = vector.shape_cast %544 : vector<1x2x256xf32> to vector<2x256xf32>
    %c1_456 = arith.constant 1 : index
    %c18_457 = arith.constant 18 : index
    %546 = memref.load %arg2[%c1_456, %c18_457] : memref<8x36xf32, #tpu.memory_space<smem>>
    %547 = vector.broadcast %546 : f32 to vector<2x256xf32>
    %548 = arith.mulf %545, %547 : vector<2x256xf32>
    %549 = arith.addf %543, %548 : vector<2x256xf32>
    %c19_458 = arith.constant 19 : index
    %c0_459 = arith.constant 0 : index
    %c0_460 = arith.constant 0 : index
    %550 = vector.load %arg7[%c19_458, %c0_459, %c0_460] : memref<36x2x256xf32, #tpu.memory_space<vmem>>, vector<1x2x256xf32>
    %551 = vector.shape_cast %550 : vector<1x2x256xf32> to vector<2x256xf32>
    %c1_461 = arith.constant 1 : index
    %c19_462 = arith.constant 19 : index
    %552 = memref.load %arg2[%c1_461, %c19_462] : memref<8x36xf32, #tpu.memory_space<smem>>
    %553 = vector.broadcast %552 : f32 to vector<2x256xf32>
    %554 = arith.mulf %551, %553 : vector<2x256xf32>
    %555 = arith.addf %549, %554 : vector<2x256xf32>
    %c20_463 = arith.constant 20 : index
    %c0_464 = arith.constant 0 : index
    %c0_465 = arith.constant 0 : index
    %556 = vector.load %arg7[%c20_463, %c0_464, %c0_465] : memref<36x2x256xf32, #tpu.memory_space<vmem>>, vector<1x2x256xf32>
    %557 = vector.shape_cast %556 : vector<1x2x256xf32> to vector<2x256xf32>
    %c1_466 = arith.constant 1 : index
    %c20_467 = arith.constant 20 : index
    %558 = memref.load %arg2[%c1_466, %c20_467] : memref<8x36xf32, #tpu.memory_space<smem>>
    %559 = vector.broadcast %558 : f32 to vector<2x256xf32>
    %560 = arith.mulf %557, %559 : vector<2x256xf32>
    %561 = arith.addf %555, %560 : vector<2x256xf32>
    %c21_468 = arith.constant 21 : index
    %c0_469 = arith.constant 0 : index
    %c0_470 = arith.constant 0 : index
    %562 = vector.load %arg7[%c21_468, %c0_469, %c0_470] : memref<36x2x256xf32, #tpu.memory_space<vmem>>, vector<1x2x256xf32>
    %563 = vector.shape_cast %562 : vector<1x2x256xf32> to vector<2x256xf32>
    %c1_471 = arith.constant 1 : index
    %c21_472 = arith.constant 21 : index
    %564 = memref.load %arg2[%c1_471, %c21_472] : memref<8x36xf32, #tpu.memory_space<smem>>
    %565 = vector.broadcast %564 : f32 to vector<2x256xf32>
    %566 = arith.mulf %563, %565 : vector<2x256xf32>
    %567 = arith.addf %561, %566 : vector<2x256xf32>
    %c22_473 = arith.constant 22 : index
    %c0_474 = arith.constant 0 : index
    %c0_475 = arith.constant 0 : index
    %568 = vector.load %arg7[%c22_473, %c0_474, %c0_475] : memref<36x2x256xf32, #tpu.memory_space<vmem>>, vector<1x2x256xf32>
    %569 = vector.shape_cast %568 : vector<1x2x256xf32> to vector<2x256xf32>
    %c1_476 = arith.constant 1 : index
    %c22_477 = arith.constant 22 : index
    %570 = memref.load %arg2[%c1_476, %c22_477] : memref<8x36xf32, #tpu.memory_space<smem>>
    %571 = vector.broadcast %570 : f32 to vector<2x256xf32>
    %572 = arith.mulf %569, %571 : vector<2x256xf32>
    %573 = arith.addf %567, %572 : vector<2x256xf32>
    %c23_478 = arith.constant 23 : index
    %c0_479 = arith.constant 0 : index
    %c0_480 = arith.constant 0 : index
    %574 = vector.load %arg7[%c23_478, %c0_479, %c0_480] : memref<36x2x256xf32, #tpu.memory_space<vmem>>, vector<1x2x256xf32>
    %575 = vector.shape_cast %574 : vector<1x2x256xf32> to vector<2x256xf32>
    %c1_481 = arith.constant 1 : index
    %c23_482 = arith.constant 23 : index
    %576 = memref.load %arg2[%c1_481, %c23_482] : memref<8x36xf32, #tpu.memory_space<smem>>
    %577 = vector.broadcast %576 : f32 to vector<2x256xf32>
    %578 = arith.mulf %575, %577 : vector<2x256xf32>
    %579 = arith.addf %573, %578 : vector<2x256xf32>
    %c24_483 = arith.constant 24 : index
    %c0_484 = arith.constant 0 : index
    %c0_485 = arith.constant 0 : index
    %580 = vector.load %arg7[%c24_483, %c0_484, %c0_485] : memref<36x2x256xf32, #tpu.memory_space<vmem>>, vector<1x2x256xf32>
    %581 = vector.shape_cast %580 : vector<1x2x256xf32> to vector<2x256xf32>
    %c1_486 = arith.constant 1 : index
    %c24_487 = arith.constant 24 : index
    %582 = memref.load %arg2[%c1_486, %c24_487] : memref<8x36xf32, #tpu.memory_space<smem>>
    %583 = vector.broadcast %582 : f32 to vector<2x256xf32>
    %584 = arith.mulf %581, %583 : vector<2x256xf32>
    %585 = arith.addf %579, %584 : vector<2x256xf32>
    %c25_488 = arith.constant 25 : index
    %c0_489 = arith.constant 0 : index
    %c0_490 = arith.constant 0 : index
    %586 = vector.load %arg7[%c25_488, %c0_489, %c0_490] : memref<36x2x256xf32, #tpu.memory_space<vmem>>, vector<1x2x256xf32>
    %587 = vector.shape_cast %586 : vector<1x2x256xf32> to vector<2x256xf32>
    %c1_491 = arith.constant 1 : index
    %c25_492 = arith.constant 25 : index
    %588 = memref.load %arg2[%c1_491, %c25_492] : memref<8x36xf32, #tpu.memory_space<smem>>
    %589 = vector.broadcast %588 : f32 to vector<2x256xf32>
    %590 = arith.mulf %587, %589 : vector<2x256xf32>
    %591 = arith.addf %585, %590 : vector<2x256xf32>
    %c26_493 = arith.constant 26 : index
    %c0_494 = arith.constant 0 : index
    %c0_495 = arith.constant 0 : index
    %592 = vector.load %arg7[%c26_493, %c0_494, %c0_495] : memref<36x2x256xf32, #tpu.memory_space<vmem>>, vector<1x2x256xf32>
    %593 = vector.shape_cast %592 : vector<1x2x256xf32> to vector<2x256xf32>
    %c1_496 = arith.constant 1 : index
    %c26_497 = arith.constant 26 : index
    %594 = memref.load %arg2[%c1_496, %c26_497] : memref<8x36xf32, #tpu.memory_space<smem>>
    %595 = vector.broadcast %594 : f32 to vector<2x256xf32>
    %596 = arith.mulf %593, %595 : vector<2x256xf32>
    %597 = arith.addf %591, %596 : vector<2x256xf32>
    %c27_498 = arith.constant 27 : index
    %c0_499 = arith.constant 0 : index
    %c0_500 = arith.constant 0 : index
    %598 = vector.load %arg7[%c27_498, %c0_499, %c0_500] : memref<36x2x256xf32, #tpu.memory_space<vmem>>, vector<1x2x256xf32>
    %599 = vector.shape_cast %598 : vector<1x2x256xf32> to vector<2x256xf32>
    %c1_501 = arith.constant 1 : index
    %c27_502 = arith.constant 27 : index
    %600 = memref.load %arg2[%c1_501, %c27_502] : memref<8x36xf32, #tpu.memory_space<smem>>
    %601 = vector.broadcast %600 : f32 to vector<2x256xf32>
    %602 = arith.mulf %599, %601 : vector<2x256xf32>
    %603 = arith.addf %597, %602 : vector<2x256xf32>
    %c28_503 = arith.constant 28 : index
    %c0_504 = arith.constant 0 : index
    %c0_505 = arith.constant 0 : index
    %604 = vector.load %arg7[%c28_503, %c0_504, %c0_505] : memref<36x2x256xf32, #tpu.memory_space<vmem>>, vector<1x2x256xf32>
    %605 = vector.shape_cast %604 : vector<1x2x256xf32> to vector<2x256xf32>
    %c1_506 = arith.constant 1 : index
    %c28_507 = arith.constant 28 : index
    %606 = memref.load %arg2[%c1_506, %c28_507] : memref<8x36xf32, #tpu.memory_space<smem>>
    %607 = vector.broadcast %606 : f32 to vector<2x256xf32>
    %608 = arith.mulf %605, %607 : vector<2x256xf32>
    %609 = arith.addf %603, %608 : vector<2x256xf32>
    %c29_508 = arith.constant 29 : index
    %c0_509 = arith.constant 0 : index
    %c0_510 = arith.constant 0 : index
    %610 = vector.load %arg7[%c29_508, %c0_509, %c0_510] : memref<36x2x256xf32, #tpu.memory_space<vmem>>, vector<1x2x256xf32>
    %611 = vector.shape_cast %610 : vector<1x2x256xf32> to vector<2x256xf32>
    %c1_511 = arith.constant 1 : index
    %c29_512 = arith.constant 29 : index
    %612 = memref.load %arg2[%c1_511, %c29_512] : memref<8x36xf32, #tpu.memory_space<smem>>
    %613 = vector.broadcast %612 : f32 to vector<2x256xf32>
    %614 = arith.mulf %611, %613 : vector<2x256xf32>
    %615 = arith.addf %609, %614 : vector<2x256xf32>
    %c30_513 = arith.constant 30 : index
    %c0_514 = arith.constant 0 : index
    %c0_515 = arith.constant 0 : index
    %616 = vector.load %arg7[%c30_513, %c0_514, %c0_515] : memref<36x2x256xf32, #tpu.memory_space<vmem>>, vector<1x2x256xf32>
    %617 = vector.shape_cast %616 : vector<1x2x256xf32> to vector<2x256xf32>
    %c1_516 = arith.constant 1 : index
    %c30_517 = arith.constant 30 : index
    %618 = memref.load %arg2[%c1_516, %c30_517] : memref<8x36xf32, #tpu.memory_space<smem>>
    %619 = vector.broadcast %618 : f32 to vector<2x256xf32>
    %620 = arith.mulf %617, %619 : vector<2x256xf32>
    %621 = arith.addf %615, %620 : vector<2x256xf32>
    %c31_518 = arith.constant 31 : index
    %c0_519 = arith.constant 0 : index
    %c0_520 = arith.constant 0 : index
    %622 = vector.load %arg7[%c31_518, %c0_519, %c0_520] : memref<36x2x256xf32, #tpu.memory_space<vmem>>, vector<1x2x256xf32>
    %623 = vector.shape_cast %622 : vector<1x2x256xf32> to vector<2x256xf32>
    %c1_521 = arith.constant 1 : index
    %c31_522 = arith.constant 31 : index
    %624 = memref.load %arg2[%c1_521, %c31_522] : memref<8x36xf32, #tpu.memory_space<smem>>
    %625 = vector.broadcast %624 : f32 to vector<2x256xf32>
    %626 = arith.mulf %623, %625 : vector<2x256xf32>
    %627 = arith.addf %621, %626 : vector<2x256xf32>
    %c32_523 = arith.constant 32 : index
    %c0_524 = arith.constant 0 : index
    %c0_525 = arith.constant 0 : index
    %628 = vector.load %arg7[%c32_523, %c0_524, %c0_525] : memref<36x2x256xf32, #tpu.memory_space<vmem>>, vector<1x2x256xf32>
    %629 = vector.shape_cast %628 : vector<1x2x256xf32> to vector<2x256xf32>
    %c1_526 = arith.constant 1 : index
    %c32_527 = arith.constant 32 : index
    %630 = memref.load %arg2[%c1_526, %c32_527] : memref<8x36xf32, #tpu.memory_space<smem>>
    %631 = vector.broadcast %630 : f32 to vector<2x256xf32>
    %632 = arith.mulf %629, %631 : vector<2x256xf32>
    %633 = arith.addf %627, %632 : vector<2x256xf32>
    %c33_528 = arith.constant 33 : index
    %c0_529 = arith.constant 0 : index
    %c0_530 = arith.constant 0 : index
    %634 = vector.load %arg7[%c33_528, %c0_529, %c0_530] : memref<36x2x256xf32, #tpu.memory_space<vmem>>, vector<1x2x256xf32>
    %635 = vector.shape_cast %634 : vector<1x2x256xf32> to vector<2x256xf32>
    %c1_531 = arith.constant 1 : index
    %c33_532 = arith.constant 33 : index
    %636 = memref.load %arg2[%c1_531, %c33_532] : memref<8x36xf32, #tpu.memory_space<smem>>
    %637 = vector.broadcast %636 : f32 to vector<2x256xf32>
    %638 = arith.mulf %635, %637 : vector<2x256xf32>
    %639 = arith.addf %633, %638 : vector<2x256xf32>
    %c34_533 = arith.constant 34 : index
    %c0_534 = arith.constant 0 : index
    %c0_535 = arith.constant 0 : index
    %640 = vector.load %arg7[%c34_533, %c0_534, %c0_535] : memref<36x2x256xf32, #tpu.memory_space<vmem>>, vector<1x2x256xf32>
    %641 = vector.shape_cast %640 : vector<1x2x256xf32> to vector<2x256xf32>
    %c1_536 = arith.constant 1 : index
    %c34_537 = arith.constant 34 : index
    %642 = memref.load %arg2[%c1_536, %c34_537] : memref<8x36xf32, #tpu.memory_space<smem>>
    %643 = vector.broadcast %642 : f32 to vector<2x256xf32>
    %644 = arith.mulf %641, %643 : vector<2x256xf32>
    %645 = arith.addf %639, %644 : vector<2x256xf32>
    %c35_538 = arith.constant 35 : index
    %c0_539 = arith.constant 0 : index
    %c0_540 = arith.constant 0 : index
    %646 = vector.load %arg7[%c35_538, %c0_539, %c0_540] : memref<36x2x256xf32, #tpu.memory_space<vmem>>, vector<1x2x256xf32>
    %647 = vector.shape_cast %646 : vector<1x2x256xf32> to vector<2x256xf32>
    %c1_541 = arith.constant 1 : index
    %c35_542 = arith.constant 35 : index
    %648 = memref.load %arg2[%c1_541, %c35_542] : memref<8x36xf32, #tpu.memory_space<smem>>
    %649 = vector.broadcast %648 : f32 to vector<2x256xf32>
    %650 = arith.mulf %647, %649 : vector<2x256xf32>
    %651 = arith.addf %645, %650 : vector<2x256xf32>
    %c1_543 = arith.constant 1 : index
    %652 = memref.load %arg3[%c1_543] : memref<8xf32, #tpu.memory_space<smem>>
    %653 = vector.broadcast %652 : f32 to vector<2x256xf32>
    %654 = arith.addf %651, %653 : vector<2x256xf32>
    %cst_544 = arith.constant 0.000000e+00 : f32
    %655 = vector.broadcast %cst_544 : f32 to vector<2x256xf32>
    %656 = arith.maximumf %654, %655 : vector<2x256xf32>
    %c0_545 = arith.constant 0 : index
    %c256 = arith.constant 256 : index
    %657 = vector.load %arg8[%c0_545, %c256] : memref<2x2048xf32, #tpu.memory_space<vmem>>, vector<2x256xf32>
    tpu.vector_store %arg8[%c0_545, %c256], %656 {strides = array<i32>} : memref<2x2048xf32, #tpu.memory_space<vmem>>, vector<2x256xf32>,
    %c0_546 = arith.constant 0 : index
    %c0_547 = arith.constant 0 : index
    %c0_548 = arith.constant 0 : index
    %658 = vector.load %arg7[%c0_546, %c0_547, %c0_548] : memref<36x2x256xf32, #tpu.memory_space<vmem>>, vector<1x2x256xf32>
    %659 = vector.shape_cast %658 : vector<1x2x256xf32> to vector<2x256xf32>
    %c2_549 = arith.constant 2 : index
    %c0_550 = arith.constant 0 : index
    %660 = memref.load %arg2[%c2_549, %c0_550] : memref<8x36xf32, #tpu.memory_space<smem>>
    %661 = vector.broadcast %660 : f32 to vector<2x256xf32>
    %662 = arith.mulf %659, %661 : vector<2x256xf32>
    %c1_551 = arith.constant 1 : index
    %c0_552 = arith.constant 0 : index
    %c0_553 = arith.constant 0 : index
    %663 = vector.load %arg7[%c1_551, %c0_552, %c0_553] : memref<36x2x256xf32, #tpu.memory_space<vmem>>, vector<1x2x256xf32>
    %664 = vector.shape_cast %663 : vector<1x2x256xf32> to vector<2x256xf32>
    %c2_554 = arith.constant 2 : index
    %c1_555 = arith.constant 1 : index
    %665 = memref.load %arg2[%c2_554, %c1_555] : memref<8x36xf32, #tpu.memory_space<smem>>
    %666 = vector.broadcast %665 : f32 to vector<2x256xf32>
    %667 = arith.mulf %664, %666 : vector<2x256xf32>
    %668 = arith.addf %662, %667 : vector<2x256xf32>
    %c2_556 = arith.constant 2 : index
    %c0_557 = arith.constant 0 : index
    %c0_558 = arith.constant 0 : index
    %669 = vector.load %arg7[%c2_556, %c0_557, %c0_558] : memref<36x2x256xf32, #tpu.memory_space<vmem>>, vector<1x2x256xf32>
    %670 = vector.shape_cast %669 : vector<1x2x256xf32> to vector<2x256xf32>
    %c2_559 = arith.constant 2 : index
    %c2_560 = arith.constant 2 : index
    %671 = memref.load %arg2[%c2_559, %c2_560] : memref<8x36xf32, #tpu.memory_space<smem>>
    %672 = vector.broadcast %671 : f32 to vector<2x256xf32>
    %673 = arith.mulf %670, %672 : vector<2x256xf32>
    %674 = arith.addf %668, %673 : vector<2x256xf32>
    %c3_561 = arith.constant 3 : index
    %c0_562 = arith.constant 0 : index
    %c0_563 = arith.constant 0 : index
    %675 = vector.load %arg7[%c3_561, %c0_562, %c0_563] : memref<36x2x256xf32, #tpu.memory_space<vmem>>, vector<1x2x256xf32>
    %676 = vector.shape_cast %675 : vector<1x2x256xf32> to vector<2x256xf32>
    %c2_564 = arith.constant 2 : index
    %c3_565 = arith.constant 3 : index
    %677 = memref.load %arg2[%c2_564, %c3_565] : memref<8x36xf32, #tpu.memory_space<smem>>
    %678 = vector.broadcast %677 : f32 to vector<2x256xf32>
    %679 = arith.mulf %676, %678 : vector<2x256xf32>
    %680 = arith.addf %674, %679 : vector<2x256xf32>
    %c4_566 = arith.constant 4 : index
    %c0_567 = arith.constant 0 : index
    %c0_568 = arith.constant 0 : index
    %681 = vector.load %arg7[%c4_566, %c0_567, %c0_568] : memref<36x2x256xf32, #tpu.memory_space<vmem>>, vector<1x2x256xf32>
    %682 = vector.shape_cast %681 : vector<1x2x256xf32> to vector<2x256xf32>
    %c2_569 = arith.constant 2 : index
    %c4_570 = arith.constant 4 : index
    %683 = memref.load %arg2[%c2_569, %c4_570] : memref<8x36xf32, #tpu.memory_space<smem>>
    %684 = vector.broadcast %683 : f32 to vector<2x256xf32>
    %685 = arith.mulf %682, %684 : vector<2x256xf32>
    %686 = arith.addf %680, %685 : vector<2x256xf32>
    %c5_571 = arith.constant 5 : index
    %c0_572 = arith.constant 0 : index
    %c0_573 = arith.constant 0 : index
    %687 = vector.load %arg7[%c5_571, %c0_572, %c0_573] : memref<36x2x256xf32, #tpu.memory_space<vmem>>, vector<1x2x256xf32>
    %688 = vector.shape_cast %687 : vector<1x2x256xf32> to vector<2x256xf32>
    %c2_574 = arith.constant 2 : index
    %c5_575 = arith.constant 5 : index
    %689 = memref.load %arg2[%c2_574, %c5_575] : memref<8x36xf32, #tpu.memory_space<smem>>
    %690 = vector.broadcast %689 : f32 to vector<2x256xf32>
    %691 = arith.mulf %688, %690 : vector<2x256xf32>
    %692 = arith.addf %686, %691 : vector<2x256xf32>
    %c6_576 = arith.constant 6 : index
    %c0_577 = arith.constant 0 : index
    %c0_578 = arith.constant 0 : index
    %693 = vector.load %arg7[%c6_576, %c0_577, %c0_578] : memref<36x2x256xf32, #tpu.memory_space<vmem>>, vector<1x2x256xf32>
    %694 = vector.shape_cast %693 : vector<1x2x256xf32> to vector<2x256xf32>
    %c2_579 = arith.constant 2 : index
    %c6_580 = arith.constant 6 : index
    %695 = memref.load %arg2[%c2_579, %c6_580] : memref<8x36xf32, #tpu.memory_space<smem>>
    %696 = vector.broadcast %695 : f32 to vector<2x256xf32>
    %697 = arith.mulf %694, %696 : vector<2x256xf32>
    %698 = arith.addf %692, %697 : vector<2x256xf32>
    %c7_581 = arith.constant 7 : index
    %c0_582 = arith.constant 0 : index
    %c0_583 = arith.constant 0 : index
    %699 = vector.load %arg7[%c7_581, %c0_582, %c0_583] : memref<36x2x256xf32, #tpu.memory_space<vmem>>, vector<1x2x256xf32>
    %700 = vector.shape_cast %699 : vector<1x2x256xf32> to vector<2x256xf32>
    %c2_584 = arith.constant 2 : index
    %c7_585 = arith.constant 7 : index
    %701 = memref.load %arg2[%c2_584, %c7_585] : memref<8x36xf32, #tpu.memory_space<smem>>
    %702 = vector.broadcast %701 : f32 to vector<2x256xf32>
    %703 = arith.mulf %700, %702 : vector<2x256xf32>
    %704 = arith.addf %698, %703 : vector<2x256xf32>
    %c8_586 = arith.constant 8 : index
    %c0_587 = arith.constant 0 : index
    %c0_588 = arith.constant 0 : index
    %705 = vector.load %arg7[%c8_586, %c0_587, %c0_588] : memref<36x2x256xf32, #tpu.memory_space<vmem>>, vector<1x2x256xf32>
    %706 = vector.shape_cast %705 : vector<1x2x256xf32> to vector<2x256xf32>
    %c2_589 = arith.constant 2 : index
    %c8_590 = arith.constant 8 : index
    %707 = memref.load %arg2[%c2_589, %c8_590] : memref<8x36xf32, #tpu.memory_space<smem>>
    %708 = vector.broadcast %707 : f32 to vector<2x256xf32>
    %709 = arith.mulf %706, %708 : vector<2x256xf32>
    %710 = arith.addf %704, %709 : vector<2x256xf32>
    %c9_591 = arith.constant 9 : index
    %c0_592 = arith.constant 0 : index
    %c0_593 = arith.constant 0 : index
    %711 = vector.load %arg7[%c9_591, %c0_592, %c0_593] : memref<36x2x256xf32, #tpu.memory_space<vmem>>, vector<1x2x256xf32>
    %712 = vector.shape_cast %711 : vector<1x2x256xf32> to vector<2x256xf32>
    %c2_594 = arith.constant 2 : index
    %c9_595 = arith.constant 9 : index
    %713 = memref.load %arg2[%c2_594, %c9_595] : memref<8x36xf32, #tpu.memory_space<smem>>
    %714 = vector.broadcast %713 : f32 to vector<2x256xf32>
    %715 = arith.mulf %712, %714 : vector<2x256xf32>
    %716 = arith.addf %710, %715 : vector<2x256xf32>
    %c10_596 = arith.constant 10 : index
    %c0_597 = arith.constant 0 : index
    %c0_598 = arith.constant 0 : index
    %717 = vector.load %arg7[%c10_596, %c0_597, %c0_598] : memref<36x2x256xf32, #tpu.memory_space<vmem>>, vector<1x2x256xf32>
    %718 = vector.shape_cast %717 : vector<1x2x256xf32> to vector<2x256xf32>
    %c2_599 = arith.constant 2 : index
    %c10_600 = arith.constant 10 : index
    %719 = memref.load %arg2[%c2_599, %c10_600] : memref<8x36xf32, #tpu.memory_space<smem>>
    %720 = vector.broadcast %719 : f32 to vector<2x256xf32>
    %721 = arith.mulf %718, %720 : vector<2x256xf32>
    %722 = arith.addf %716, %721 : vector<2x256xf32>
    %c11_601 = arith.constant 11 : index
    %c0_602 = arith.constant 0 : index
    %c0_603 = arith.constant 0 : index
    %723 = vector.load %arg7[%c11_601, %c0_602, %c0_603] : memref<36x2x256xf32, #tpu.memory_space<vmem>>, vector<1x2x256xf32>
    %724 = vector.shape_cast %723 : vector<1x2x256xf32> to vector<2x256xf32>
    %c2_604 = arith.constant 2 : index
    %c11_605 = arith.constant 11 : index
    %725 = memref.load %arg2[%c2_604, %c11_605] : memref<8x36xf32, #tpu.memory_space<smem>>
    %726 = vector.broadcast %725 : f32 to vector<2x256xf32>
    %727 = arith.mulf %724, %726 : vector<2x256xf32>
    %728 = arith.addf %722, %727 : vector<2x256xf32>
    %c12_606 = arith.constant 12 : index
    %c0_607 = arith.constant 0 : index
    %c0_608 = arith.constant 0 : index
    %729 = vector.load %arg7[%c12_606, %c0_607, %c0_608] : memref<36x2x256xf32, #tpu.memory_space<vmem>>, vector<1x2x256xf32>
    %730 = vector.shape_cast %729 : vector<1x2x256xf32> to vector<2x256xf32>
    %c2_609 = arith.constant 2 : index
    %c12_610 = arith.constant 12 : index
    %731 = memref.load %arg2[%c2_609, %c12_610] : memref<8x36xf32, #tpu.memory_space<smem>>
    %732 = vector.broadcast %731 : f32 to vector<2x256xf32>
    %733 = arith.mulf %730, %732 : vector<2x256xf32>
    %734 = arith.addf %728, %733 : vector<2x256xf32>
    %c13_611 = arith.constant 13 : index
    %c0_612 = arith.constant 0 : index
    %c0_613 = arith.constant 0 : index
    %735 = vector.load %arg7[%c13_611, %c0_612, %c0_613] : memref<36x2x256xf32, #tpu.memory_space<vmem>>, vector<1x2x256xf32>
    %736 = vector.shape_cast %735 : vector<1x2x256xf32> to vector<2x256xf32>
    %c2_614 = arith.constant 2 : index
    %c13_615 = arith.constant 13 : index
    %737 = memref.load %arg2[%c2_614, %c13_615] : memref<8x36xf32, #tpu.memory_space<smem>>
    %738 = vector.broadcast %737 : f32 to vector<2x256xf32>
    %739 = arith.mulf %736, %738 : vector<2x256xf32>
    %740 = arith.addf %734, %739 : vector<2x256xf32>
    %c14_616 = arith.constant 14 : index
    %c0_617 = arith.constant 0 : index
    %c0_618 = arith.constant 0 : index
    %741 = vector.load %arg7[%c14_616, %c0_617, %c0_618] : memref<36x2x256xf32, #tpu.memory_space<vmem>>, vector<1x2x256xf32>
    %742 = vector.shape_cast %741 : vector<1x2x256xf32> to vector<2x256xf32>
    %c2_619 = arith.constant 2 : index
    %c14_620 = arith.constant 14 : index
    %743 = memref.load %arg2[%c2_619, %c14_620] : memref<8x36xf32, #tpu.memory_space<smem>>
    %744 = vector.broadcast %743 : f32 to vector<2x256xf32>
    %745 = arith.mulf %742, %744 : vector<2x256xf32>
    %746 = arith.addf %740, %745 : vector<2x256xf32>
    %c15_621 = arith.constant 15 : index
    %c0_622 = arith.constant 0 : index
    %c0_623 = arith.constant 0 : index
    %747 = vector.load %arg7[%c15_621, %c0_622, %c0_623] : memref<36x2x256xf32, #tpu.memory_space<vmem>>, vector<1x2x256xf32>
    %748 = vector.shape_cast %747 : vector<1x2x256xf32> to vector<2x256xf32>
    %c2_624 = arith.constant 2 : index
    %c15_625 = arith.constant 15 : index
    %749 = memref.load %arg2[%c2_624, %c15_625] : memref<8x36xf32, #tpu.memory_space<smem>>
    %750 = vector.broadcast %749 : f32 to vector<2x256xf32>
    %751 = arith.mulf %748, %750 : vector<2x256xf32>
    %752 = arith.addf %746, %751 : vector<2x256xf32>
    %c16_626 = arith.constant 16 : index
    %c0_627 = arith.constant 0 : index
    %c0_628 = arith.constant 0 : index
    %753 = vector.load %arg7[%c16_626, %c0_627, %c0_628] : memref<36x2x256xf32, #tpu.memory_space<vmem>>, vector<1x2x256xf32>
    %754 = vector.shape_cast %753 : vector<1x2x256xf32> to vector<2x256xf32>
    %c2_629 = arith.constant 2 : index
    %c16_630 = arith.constant 16 : index
    %755 = memref.load %arg2[%c2_629, %c16_630] : memref<8x36xf32, #tpu.memory_space<smem>>
    %756 = vector.broadcast %755 : f32 to vector<2x256xf32>
    %757 = arith.mulf %754, %756 : vector<2x256xf32>
    %758 = arith.addf %752, %757 : vector<2x256xf32>
    %c17_631 = arith.constant 17 : index
    %c0_632 = arith.constant 0 : index
    %c0_633 = arith.constant 0 : index
    %759 = vector.load %arg7[%c17_631, %c0_632, %c0_633] : memref<36x2x256xf32, #tpu.memory_space<vmem>>, vector<1x2x256xf32>
    %760 = vector.shape_cast %759 : vector<1x2x256xf32> to vector<2x256xf32>
    %c2_634 = arith.constant 2 : index
    %c17_635 = arith.constant 17 : index
    %761 = memref.load %arg2[%c2_634, %c17_635] : memref<8x36xf32, #tpu.memory_space<smem>>
    %762 = vector.broadcast %761 : f32 to vector<2x256xf32>
    %763 = arith.mulf %760, %762 : vector<2x256xf32>
    %764 = arith.addf %758, %763 : vector<2x256xf32>
    %c18_636 = arith.constant 18 : index
    %c0_637 = arith.constant 0 : index
    %c0_638 = arith.constant 0 : index
    %765 = vector.load %arg7[%c18_636, %c0_637, %c0_638] : memref<36x2x256xf32, #tpu.memory_space<vmem>>, vector<1x2x256xf32>
    %766 = vector.shape_cast %765 : vector<1x2x256xf32> to vector<2x256xf32>
    %c2_639 = arith.constant 2 : index
    %c18_640 = arith.constant 18 : index
    %767 = memref.load %arg2[%c2_639, %c18_640] : memref<8x36xf32, #tpu.memory_space<smem>>
    %768 = vector.broadcast %767 : f32 to vector<2x256xf32>
    %769 = arith.mulf %766, %768 : vector<2x256xf32>
    %770 = arith.addf %764, %769 : vector<2x256xf32>
    %c19_641 = arith.constant 19 : index
    %c0_642 = arith.constant 0 : index
    %c0_643 = arith.constant 0 : index
    %771 = vector.load %arg7[%c19_641, %c0_642, %c0_643] : memref<36x2x256xf32, #tpu.memory_space<vmem>>, vector<1x2x256xf32>
    %772 = vector.shape_cast %771 : vector<1x2x256xf32> to vector<2x256xf32>
    %c2_644 = arith.constant 2 : index
    %c19_645 = arith.constant 19 : index
    %773 = memref.load %arg2[%c2_644, %c19_645] : memref<8x36xf32, #tpu.memory_space<smem>>
    %774 = vector.broadcast %773 : f32 to vector<2x256xf32>
    %775 = arith.mulf %772, %774 : vector<2x256xf32>
    %776 = arith.addf %770, %775 : vector<2x256xf32>
    %c20_646 = arith.constant 20 : index
    %c0_647 = arith.constant 0 : index
    %c0_648 = arith.constant 0 : index
    %777 = vector.load %arg7[%c20_646, %c0_647, %c0_648] : memref<36x2x256xf32, #tpu.memory_space<vmem>>, vector<1x2x256xf32>
    %778 = vector.shape_cast %777 : vector<1x2x256xf32> to vector<2x256xf32>
    %c2_649 = arith.constant 2 : index
    %c20_650 = arith.constant 20 : index
    %779 = memref.load %arg2[%c2_649, %c20_650] : memref<8x36xf32, #tpu.memory_space<smem>>
    %780 = vector.broadcast %779 : f32 to vector<2x256xf32>
    %781 = arith.mulf %778, %780 : vector<2x256xf32>
    %782 = arith.addf %776, %781 : vector<2x256xf32>
    %c21_651 = arith.constant 21 : index
    %c0_652 = arith.constant 0 : index
    %c0_653 = arith.constant 0 : index
    %783 = vector.load %arg7[%c21_651, %c0_652, %c0_653] : memref<36x2x256xf32, #tpu.memory_space<vmem>>, vector<1x2x256xf32>
    %784 = vector.shape_cast %783 : vector<1x2x256xf32> to vector<2x256xf32>
    %c2_654 = arith.constant 2 : index
    %c21_655 = arith.constant 21 : index
    %785 = memref.load %arg2[%c2_654, %c21_655] : memref<8x36xf32, #tpu.memory_space<smem>>
    %786 = vector.broadcast %785 : f32 to vector<2x256xf32>
    %787 = arith.mulf %784, %786 : vector<2x256xf32>
    %788 = arith.addf %782, %787 : vector<2x256xf32>
    %c22_656 = arith.constant 22 : index
    %c0_657 = arith.constant 0 : index
    %c0_658 = arith.constant 0 : index
    %789 = vector.load %arg7[%c22_656, %c0_657, %c0_658] : memref<36x2x256xf32, #tpu.memory_space<vmem>>, vector<1x2x256xf32>
    %790 = vector.shape_cast %789 : vector<1x2x256xf32> to vector<2x256xf32>
    %c2_659 = arith.constant 2 : index
    %c22_660 = arith.constant 22 : index
    %791 = memref.load %arg2[%c2_659, %c22_660] : memref<8x36xf32, #tpu.memory_space<smem>>
    %792 = vector.broadcast %791 : f32 to vector<2x256xf32>
    %793 = arith.mulf %790, %792 : vector<2x256xf32>
    %794 = arith.addf %788, %793 : vector<2x256xf32>
    %c23_661 = arith.constant 23 : index
    %c0_662 = arith.constant 0 : index
    %c0_663 = arith.constant 0 : index
    %795 = vector.load %arg7[%c23_661, %c0_662, %c0_663] : memref<36x2x256xf32, #tpu.memory_space<vmem>>, vector<1x2x256xf32>
    %796 = vector.shape_cast %795 : vector<1x2x256xf32> to vector<2x256xf32>
    %c2_664 = arith.constant 2 : index
    %c23_665 = arith.constant 23 : index
    %797 = memref.load %arg2[%c2_664, %c23_665] : memref<8x36xf32, #tpu.memory_space<smem>>
    %798 = vector.broadcast %797 : f32 to vector<2x256xf32>
    %799 = arith.mulf %796, %798 : vector<2x256xf32>
    %800 = arith.addf %794, %799 : vector<2x256xf32>
    %c24_666 = arith.constant 24 : index
    %c0_667 = arith.constant 0 : index
    %c0_668 = arith.constant 0 : index
    %801 = vector.load %arg7[%c24_666, %c0_667, %c0_668] : memref<36x2x256xf32, #tpu.memory_space<vmem>>, vector<1x2x256xf32>
    %802 = vector.shape_cast %801 : vector<1x2x256xf32> to vector<2x256xf32>
    %c2_669 = arith.constant 2 : index
    %c24_670 = arith.constant 24 : index
    %803 = memref.load %arg2[%c2_669, %c24_670] : memref<8x36xf32, #tpu.memory_space<smem>>
    %804 = vector.broadcast %803 : f32 to vector<2x256xf32>
    %805 = arith.mulf %802, %804 : vector<2x256xf32>
    %806 = arith.addf %800, %805 : vector<2x256xf32>
    %c25_671 = arith.constant 25 : index
    %c0_672 = arith.constant 0 : index
    %c0_673 = arith.constant 0 : index
    %807 = vector.load %arg7[%c25_671, %c0_672, %c0_673] : memref<36x2x256xf32, #tpu.memory_space<vmem>>, vector<1x2x256xf32>
    %808 = vector.shape_cast %807 : vector<1x2x256xf32> to vector<2x256xf32>
    %c2_674 = arith.constant 2 : index
    %c25_675 = arith.constant 25 : index
    %809 = memref.load %arg2[%c2_674, %c25_675] : memref<8x36xf32, #tpu.memory_space<smem>>
    %810 = vector.broadcast %809 : f32 to vector<2x256xf32>
    %811 = arith.mulf %808, %810 : vector<2x256xf32>
    %812 = arith.addf %806, %811 : vector<2x256xf32>
    %c26_676 = arith.constant 26 : index
    %c0_677 = arith.constant 0 : index
    %c0_678 = arith.constant 0 : index
    %813 = vector.load %arg7[%c26_676, %c0_677, %c0_678] : memref<36x2x256xf32, #tpu.memory_space<vmem>>, vector<1x2x256xf32>
    %814 = vector.shape_cast %813 : vector<1x2x256xf32> to vector<2x256xf32>
    %c2_679 = arith.constant 2 : index
    %c26_680 = arith.constant 26 : index
    %815 = memref.load %arg2[%c2_679, %c26_680] : memref<8x36xf32, #tpu.memory_space<smem>>
    %816 = vector.broadcast %815 : f32 to vector<2x256xf32>
    %817 = arith.mulf %814, %816 : vector<2x256xf32>
    %818 = arith.addf %812, %817 : vector<2x256xf32>
    %c27_681 = arith.constant 27 : index
    %c0_682 = arith.constant 0 : index
    %c0_683 = arith.constant 0 : index
    %819 = vector.load %arg7[%c27_681, %c0_682, %c0_683] : memref<36x2x256xf32, #tpu.memory_space<vmem>>, vector<1x2x256xf32>
    %820 = vector.shape_cast %819 : vector<1x2x256xf32> to vector<2x256xf32>
    %c2_684 = arith.constant 2 : index
    %c27_685 = arith.constant 27 : index
    %821 = memref.load %arg2[%c2_684, %c27_685] : memref<8x36xf32, #tpu.memory_space<smem>>
    %822 = vector.broadcast %821 : f32 to vector<2x256xf32>
    %823 = arith.mulf %820, %822 : vector<2x256xf32>
    %824 = arith.addf %818, %823 : vector<2x256xf32>
    %c28_686 = arith.constant 28 : index
    %c0_687 = arith.constant 0 : index
    %c0_688 = arith.constant 0 : index
    %825 = vector.load %arg7[%c28_686, %c0_687, %c0_688] : memref<36x2x256xf32, #tpu.memory_space<vmem>>, vector<1x2x256xf32>
    %826 = vector.shape_cast %825 : vector<1x2x256xf32> to vector<2x256xf32>
    %c2_689 = arith.constant 2 : index
    %c28_690 = arith.constant 28 : index
    %827 = memref.load %arg2[%c2_689, %c28_690] : memref<8x36xf32, #tpu.memory_space<smem>>
    %828 = vector.broadcast %827 : f32 to vector<2x256xf32>
    %829 = arith.mulf %826, %828 : vector<2x256xf32>
    %830 = arith.addf %824, %829 : vector<2x256xf32>
    %c29_691 = arith.constant 29 : index
    %c0_692 = arith.constant 0 : index
    %c0_693 = arith.constant 0 : index
    %831 = vector.load %arg7[%c29_691, %c0_692, %c0_693] : memref<36x2x256xf32, #tpu.memory_space<vmem>>, vector<1x2x256xf32>
    %832 = vector.shape_cast %831 : vector<1x2x256xf32> to vector<2x256xf32>
    %c2_694 = arith.constant 2 : index
    %c29_695 = arith.constant 29 : index
    %833 = memref.load %arg2[%c2_694, %c29_695] : memref<8x36xf32, #tpu.memory_space<smem>>
    %834 = vector.broadcast %833 : f32 to vector<2x256xf32>
    %835 = arith.mulf %832, %834 : vector<2x256xf32>
    %836 = arith.addf %830, %835 : vector<2x256xf32>
    %c30_696 = arith.constant 30 : index
    %c0_697 = arith.constant 0 : index
    %c0_698 = arith.constant 0 : index
    %837 = vector.load %arg7[%c30_696, %c0_697, %c0_698] : memref<36x2x256xf32, #tpu.memory_space<vmem>>, vector<1x2x256xf32>
    %838 = vector.shape_cast %837 : vector<1x2x256xf32> to vector<2x256xf32>
    %c2_699 = arith.constant 2 : index
    %c30_700 = arith.constant 30 : index
    %839 = memref.load %arg2[%c2_699, %c30_700] : memref<8x36xf32, #tpu.memory_space<smem>>
    %840 = vector.broadcast %839 : f32 to vector<2x256xf32>
    %841 = arith.mulf %838, %840 : vector<2x256xf32>
    %842 = arith.addf %836, %841 : vector<2x256xf32>
    %c31_701 = arith.constant 31 : index
    %c0_702 = arith.constant 0 : index
    %c0_703 = arith.constant 0 : index
    %843 = vector.load %arg7[%c31_701, %c0_702, %c0_703] : memref<36x2x256xf32, #tpu.memory_space<vmem>>, vector<1x2x256xf32>
    %844 = vector.shape_cast %843 : vector<1x2x256xf32> to vector<2x256xf32>
    %c2_704 = arith.constant 2 : index
    %c31_705 = arith.constant 31 : index
    %845 = memref.load %arg2[%c2_704, %c31_705] : memref<8x36xf32, #tpu.memory_space<smem>>
    %846 = vector.broadcast %845 : f32 to vector<2x256xf32>
    %847 = arith.mulf %844, %846 : vector<2x256xf32>
    %848 = arith.addf %842, %847 : vector<2x256xf32>
    %c32_706 = arith.constant 32 : index
    %c0_707 = arith.constant 0 : index
    %c0_708 = arith.constant 0 : index
    %849 = vector.load %arg7[%c32_706, %c0_707, %c0_708] : memref<36x2x256xf32, #tpu.memory_space<vmem>>, vector<1x2x256xf32>
    %850 = vector.shape_cast %849 : vector<1x2x256xf32> to vector<2x256xf32>
    %c2_709 = arith.constant 2 : index
    %c32_710 = arith.constant 32 : index
    %851 = memref.load %arg2[%c2_709, %c32_710] : memref<8x36xf32, #tpu.memory_space<smem>>
    %852 = vector.broadcast %851 : f32 to vector<2x256xf32>
    %853 = arith.mulf %850, %852 : vector<2x256xf32>
    %854 = arith.addf %848, %853 : vector<2x256xf32>
    %c33_711 = arith.constant 33 : index
    %c0_712 = arith.constant 0 : index
    %c0_713 = arith.constant 0 : index
    %855 = vector.load %arg7[%c33_711, %c0_712, %c0_713] : memref<36x2x256xf32, #tpu.memory_space<vmem>>, vector<1x2x256xf32>
    %856 = vector.shape_cast %855 : vector<1x2x256xf32> to vector<2x256xf32>
    %c2_714 = arith.constant 2 : index
    %c33_715 = arith.constant 33 : index
    %857 = memref.load %arg2[%c2_714, %c33_715] : memref<8x36xf32, #tpu.memory_space<smem>>
    %858 = vector.broadcast %857 : f32 to vector<2x256xf32>
    %859 = arith.mulf %856, %858 : vector<2x256xf32>
    %860 = arith.addf %854, %859 : vector<2x256xf32>
    %c34_716 = arith.constant 34 : index
    %c0_717 = arith.constant 0 : index
    %c0_718 = arith.constant 0 : index
    %861 = vector.load %arg7[%c34_716, %c0_717, %c0_718] : memref<36x2x256xf32, #tpu.memory_space<vmem>>, vector<1x2x256xf32>
    %862 = vector.shape_cast %861 : vector<1x2x256xf32> to vector<2x256xf32>
    %c2_719 = arith.constant 2 : index
    %c34_720 = arith.constant 34 : index
    %863 = memref.load %arg2[%c2_719, %c34_720] : memref<8x36xf32, #tpu.memory_space<smem>>
    %864 = vector.broadcast %863 : f32 to vector<2x256xf32>
    %865 = arith.mulf %862, %864 : vector<2x256xf32>
    %866 = arith.addf %860, %865 : vector<2x256xf32>
    %c35_721 = arith.constant 35 : index
    %c0_722 = arith.constant 0 : index
    %c0_723 = arith.constant 0 : index
    %867 = vector.load %arg7[%c35_721, %c0_722, %c0_723] : memref<36x2x256xf32, #tpu.memory_space<vmem>>, vector<1x2x256xf32>
    %868 = vector.shape_cast %867 : vector<1x2x256xf32> to vector<2x256xf32>
    %c2_724 = arith.constant 2 : index
    %c35_725 = arith.constant 35 : index
    %869 = memref.load %arg2[%c2_724, %c35_725] : memref<8x36xf32, #tpu.memory_space<smem>>
    %870 = vector.broadcast %869 : f32 to vector<2x256xf32>
    %871 = arith.mulf %868, %870 : vector<2x256xf32>
    %872 = arith.addf %866, %871 : vector<2x256xf32>
    %c2_726 = arith.constant 2 : index
    %873 = memref.load %arg3[%c2_726] : memref<8xf32, #tpu.memory_space<smem>>
    %874 = vector.broadcast %873 : f32 to vector<2x256xf32>
    %875 = arith.addf %872, %874 : vector<2x256xf32>
    %cst_727 = arith.constant 0.000000e+00 : f32
    %876 = vector.broadcast %cst_727 : f32 to vector<2x256xf32>
    %877 = arith.maximumf %875, %876 : vector<2x256xf32>
    %c0_728 = arith.constant 0 : index
    %c512 = arith.constant 512 : index
    %878 = vector.load %arg8[%c0_728, %c512] : memref<2x2048xf32, #tpu.memory_space<vmem>>, vector<2x256xf32>
    tpu.vector_store %arg8[%c0_728, %c512], %877 {strides = array<i32>} : memref<2x2048xf32, #tpu.memory_space<vmem>>, vector<2x256xf32>,
    %c0_729 = arith.constant 0 : index
    %c0_730 = arith.constant 0 : index
    %c0_731 = arith.constant 0 : index
    %879 = vector.load %arg7[%c0_729, %c0_730, %c0_731] : memref<36x2x256xf32, #tpu.memory_space<vmem>>, vector<1x2x256xf32>
    %880 = vector.shape_cast %879 : vector<1x2x256xf32> to vector<2x256xf32>
    %c3_732 = arith.constant 3 : index
    %c0_733 = arith.constant 0 : index
    %881 = memref.load %arg2[%c3_732, %c0_733] : memref<8x36xf32, #tpu.memory_space<smem>>
    %882 = vector.broadcast %881 : f32 to vector<2x256xf32>
    %883 = arith.mulf %880, %882 : vector<2x256xf32>
    %c1_734 = arith.constant 1 : index
    %c0_735 = arith.constant 0 : index
    %c0_736 = arith.constant 0 : index
    %884 = vector.load %arg7[%c1_734, %c0_735, %c0_736] : memref<36x2x256xf32, #tpu.memory_space<vmem>>, vector<1x2x256xf32>
    %885 = vector.shape_cast %884 : vector<1x2x256xf32> to vector<2x256xf32>
    %c3_737 = arith.constant 3 : index
    %c1_738 = arith.constant 1 : index
    %886 = memref.load %arg2[%c3_737, %c1_738] : memref<8x36xf32, #tpu.memory_space<smem>>
    %887 = vector.broadcast %886 : f32 to vector<2x256xf32>
    %888 = arith.mulf %885, %887 : vector<2x256xf32>
    %889 = arith.addf %883, %888 : vector<2x256xf32>
    %c2_739 = arith.constant 2 : index
    %c0_740 = arith.constant 0 : index
    %c0_741 = arith.constant 0 : index
    %890 = vector.load %arg7[%c2_739, %c0_740, %c0_741] : memref<36x2x256xf32, #tpu.memory_space<vmem>>, vector<1x2x256xf32>
    %891 = vector.shape_cast %890 : vector<1x2x256xf32> to vector<2x256xf32>
    %c3_742 = arith.constant 3 : index
    %c2_743 = arith.constant 2 : index
    %892 = memref.load %arg2[%c3_742, %c2_743] : memref<8x36xf32, #tpu.memory_space<smem>>
    %893 = vector.broadcast %892 : f32 to vector<2x256xf32>
    %894 = arith.mulf %891, %893 : vector<2x256xf32>
    %895 = arith.addf %889, %894 : vector<2x256xf32>
    %c3_744 = arith.constant 3 : index
    %c0_745 = arith.constant 0 : index
    %c0_746 = arith.constant 0 : index
    %896 = vector.load %arg7[%c3_744, %c0_745, %c0_746] : memref<36x2x256xf32, #tpu.memory_space<vmem>>, vector<1x2x256xf32>
    %897 = vector.shape_cast %896 : vector<1x2x256xf32> to vector<2x256xf32>
    %c3_747 = arith.constant 3 : index
    %c3_748 = arith.constant 3 : index
    %898 = memref.load %arg2[%c3_747, %c3_748] : memref<8x36xf32, #tpu.memory_space<smem>>
    %899 = vector.broadcast %898 : f32 to vector<2x256xf32>
    %900 = arith.mulf %897, %899 : vector<2x256xf32>
    %901 = arith.addf %895, %900 : vector<2x256xf32>
    %c4_749 = arith.constant 4 : index
    %c0_750 = arith.constant 0 : index
    %c0_751 = arith.constant 0 : index
    %902 = vector.load %arg7[%c4_749, %c0_750, %c0_751] : memref<36x2x256xf32, #tpu.memory_space<vmem>>, vector<1x2x256xf32>
    %903 = vector.shape_cast %902 : vector<1x2x256xf32> to vector<2x256xf32>
    %c3_752 = arith.constant 3 : index
    %c4_753 = arith.constant 4 : index
    %904 = memref.load %arg2[%c3_752, %c4_753] : memref<8x36xf32, #tpu.memory_space<smem>>
    %905 = vector.broadcast %904 : f32 to vector<2x256xf32>
    %906 = arith.mulf %903, %905 : vector<2x256xf32>
    %907 = arith.addf %901, %906 : vector<2x256xf32>
    %c5_754 = arith.constant 5 : index
    %c0_755 = arith.constant 0 : index
    %c0_756 = arith.constant 0 : index
    %908 = vector.load %arg7[%c5_754, %c0_755, %c0_756] : memref<36x2x256xf32, #tpu.memory_space<vmem>>, vector<1x2x256xf32>
    %909 = vector.shape_cast %908 : vector<1x2x256xf32> to vector<2x256xf32>
    %c3_757 = arith.constant 3 : index
    %c5_758 = arith.constant 5 : index
    %910 = memref.load %arg2[%c3_757, %c5_758] : memref<8x36xf32, #tpu.memory_space<smem>>
    %911 = vector.broadcast %910 : f32 to vector<2x256xf32>
    %912 = arith.mulf %909, %911 : vector<2x256xf32>
    %913 = arith.addf %907, %912 : vector<2x256xf32>
    %c6_759 = arith.constant 6 : index
    %c0_760 = arith.constant 0 : index
    %c0_761 = arith.constant 0 : index
    %914 = vector.load %arg7[%c6_759, %c0_760, %c0_761] : memref<36x2x256xf32, #tpu.memory_space<vmem>>, vector<1x2x256xf32>
    %915 = vector.shape_cast %914 : vector<1x2x256xf32> to vector<2x256xf32>
    %c3_762 = arith.constant 3 : index
    %c6_763 = arith.constant 6 : index
    %916 = memref.load %arg2[%c3_762, %c6_763] : memref<8x36xf32, #tpu.memory_space<smem>>
    %917 = vector.broadcast %916 : f32 to vector<2x256xf32>
    %918 = arith.mulf %915, %917 : vector<2x256xf32>
    %919 = arith.addf %913, %918 : vector<2x256xf32>
    %c7_764 = arith.constant 7 : index
    %c0_765 = arith.constant 0 : index
    %c0_766 = arith.constant 0 : index
    %920 = vector.load %arg7[%c7_764, %c0_765, %c0_766] : memref<36x2x256xf32, #tpu.memory_space<vmem>>, vector<1x2x256xf32>
    %921 = vector.shape_cast %920 : vector<1x2x256xf32> to vector<2x256xf32>
    %c3_767 = arith.constant 3 : index
    %c7_768 = arith.constant 7 : index
    %922 = memref.load %arg2[%c3_767, %c7_768] : memref<8x36xf32, #tpu.memory_space<smem>>
    %923 = vector.broadcast %922 : f32 to vector<2x256xf32>
    %924 = arith.mulf %921, %923 : vector<2x256xf32>
    %925 = arith.addf %919, %924 : vector<2x256xf32>
    %c8_769 = arith.constant 8 : index
    %c0_770 = arith.constant 0 : index
    %c0_771 = arith.constant 0 : index
    %926 = vector.load %arg7[%c8_769, %c0_770, %c0_771] : memref<36x2x256xf32, #tpu.memory_space<vmem>>, vector<1x2x256xf32>
    %927 = vector.shape_cast %926 : vector<1x2x256xf32> to vector<2x256xf32>
    %c3_772 = arith.constant 3 : index
    %c8_773 = arith.constant 8 : index
    %928 = memref.load %arg2[%c3_772, %c8_773] : memref<8x36xf32, #tpu.memory_space<smem>>
    %929 = vector.broadcast %928 : f32 to vector<2x256xf32>
    %930 = arith.mulf %927, %929 : vector<2x256xf32>
    %931 = arith.addf %925, %930 : vector<2x256xf32>
    %c9_774 = arith.constant 9 : index
    %c0_775 = arith.constant 0 : index
    %c0_776 = arith.constant 0 : index
    %932 = vector.load %arg7[%c9_774, %c0_775, %c0_776] : memref<36x2x256xf32, #tpu.memory_space<vmem>>, vector<1x2x256xf32>
    %933 = vector.shape_cast %932 : vector<1x2x256xf32> to vector<2x256xf32>
    %c3_777 = arith.constant 3 : index
    %c9_778 = arith.constant 9 : index
    %934 = memref.load %arg2[%c3_777, %c9_778] : memref<8x36xf32, #tpu.memory_space<smem>>
    %935 = vector.broadcast %934 : f32 to vector<2x256xf32>
    %936 = arith.mulf %933, %935 : vector<2x256xf32>
    %937 = arith.addf %931, %936 : vector<2x256xf32>
    %c10_779 = arith.constant 10 : index
    %c0_780 = arith.constant 0 : index
    %c0_781 = arith.constant 0 : index
    %938 = vector.load %arg7[%c10_779, %c0_780, %c0_781] : memref<36x2x256xf32, #tpu.memory_space<vmem>>, vector<1x2x256xf32>
    %939 = vector.shape_cast %938 : vector<1x2x256xf32> to vector<2x256xf32>
    %c3_782 = arith.constant 3 : index
    %c10_783 = arith.constant 10 : index
    %940 = memref.load %arg2[%c3_782, %c10_783] : memref<8x36xf32, #tpu.memory_space<smem>>
    %941 = vector.broadcast %940 : f32 to vector<2x256xf32>
    %942 = arith.mulf %939, %941 : vector<2x256xf32>
    %943 = arith.addf %937, %942 : vector<2x256xf32>
    %c11_784 = arith.constant 11 : index
    %c0_785 = arith.constant 0 : index
    %c0_786 = arith.constant 0 : index
    %944 = vector.load %arg7[%c11_784, %c0_785, %c0_786] : memref<36x2x256xf32, #tpu.memory_space<vmem>>, vector<1x2x256xf32>
    %945 = vector.shape_cast %944 : vector<1x2x256xf32> to vector<2x256xf32>
    %c3_787 = arith.constant 3 : index
    %c11_788 = arith.constant 11 : index
    %946 = memref.load %arg2[%c3_787, %c11_788] : memref<8x36xf32, #tpu.memory_space<smem>>
    %947 = vector.broadcast %946 : f32 to vector<2x256xf32>
    %948 = arith.mulf %945, %947 : vector<2x256xf32>
    %949 = arith.addf %943, %948 : vector<2x256xf32>
    %c12_789 = arith.constant 12 : index
    %c0_790 = arith.constant 0 : index
    %c0_791 = arith.constant 0 : index
    %950 = vector.load %arg7[%c12_789, %c0_790, %c0_791] : memref<36x2x256xf32, #tpu.memory_space<vmem>>, vector<1x2x256xf32>
    %951 = vector.shape_cast %950 : vector<1x2x256xf32> to vector<2x256xf32>
    %c3_792 = arith.constant 3 : index
    %c12_793 = arith.constant 12 : index
    %952 = memref.load %arg2[%c3_792, %c12_793] : memref<8x36xf32, #tpu.memory_space<smem>>
    %953 = vector.broadcast %952 : f32 to vector<2x256xf32>
    %954 = arith.mulf %951, %953 : vector<2x256xf32>
    %955 = arith.addf %949, %954 : vector<2x256xf32>
    %c13_794 = arith.constant 13 : index
    %c0_795 = arith.constant 0 : index
    %c0_796 = arith.constant 0 : index
    %956 = vector.load %arg7[%c13_794, %c0_795, %c0_796] : memref<36x2x256xf32, #tpu.memory_space<vmem>>, vector<1x2x256xf32>
    %957 = vector.shape_cast %956 : vector<1x2x256xf32> to vector<2x256xf32>
    %c3_797 = arith.constant 3 : index
    %c13_798 = arith.constant 13 : index
    %958 = memref.load %arg2[%c3_797, %c13_798] : memref<8x36xf32, #tpu.memory_space<smem>>
    %959 = vector.broadcast %958 : f32 to vector<2x256xf32>
    %960 = arith.mulf %957, %959 : vector<2x256xf32>
    %961 = arith.addf %955, %960 : vector<2x256xf32>
    %c14_799 = arith.constant 14 : index
    %c0_800 = arith.constant 0 : index
    %c0_801 = arith.constant 0 : index
    %962 = vector.load %arg7[%c14_799, %c0_800, %c0_801] : memref<36x2x256xf32, #tpu.memory_space<vmem>>, vector<1x2x256xf32>
    %963 = vector.shape_cast %962 : vector<1x2x256xf32> to vector<2x256xf32>
    %c3_802 = arith.constant 3 : index
    %c14_803 = arith.constant 14 : index
    %964 = memref.load %arg2[%c3_802, %c14_803] : memref<8x36xf32, #tpu.memory_space<smem>>
    %965 = vector.broadcast %964 : f32 to vector<2x256xf32>
    %966 = arith.mulf %963, %965 : vector<2x256xf32>
    %967 = arith.addf %961, %966 : vector<2x256xf32>
    %c15_804 = arith.constant 15 : index
    %c0_805 = arith.constant 0 : index
    %c0_806 = arith.constant 0 : index
    %968 = vector.load %arg7[%c15_804, %c0_805, %c0_806] : memref<36x2x256xf32, #tpu.memory_space<vmem>>, vector<1x2x256xf32>
    %969 = vector.shape_cast %968 : vector<1x2x256xf32> to vector<2x256xf32>
    %c3_807 = arith.constant 3 : index
    %c15_808 = arith.constant 15 : index
    %970 = memref.load %arg2[%c3_807, %c15_808] : memref<8x36xf32, #tpu.memory_space<smem>>
    %971 = vector.broadcast %970 : f32 to vector<2x256xf32>
    %972 = arith.mulf %969, %971 : vector<2x256xf32>
    %973 = arith.addf %967, %972 : vector<2x256xf32>
    %c16_809 = arith.constant 16 : index
    %c0_810 = arith.constant 0 : index
    %c0_811 = arith.constant 0 : index
    %974 = vector.load %arg7[%c16_809, %c0_810, %c0_811] : memref<36x2x256xf32, #tpu.memory_space<vmem>>, vector<1x2x256xf32>
    %975 = vector.shape_cast %974 : vector<1x2x256xf32> to vector<2x256xf32>
    %c3_812 = arith.constant 3 : index
    %c16_813 = arith.constant 16 : index
    %976 = memref.load %arg2[%c3_812, %c16_813] : memref<8x36xf32, #tpu.memory_space<smem>>
    %977 = vector.broadcast %976 : f32 to vector<2x256xf32>
    %978 = arith.mulf %975, %977 : vector<2x256xf32>
    %979 = arith.addf %973, %978 : vector<2x256xf32>
    %c17_814 = arith.constant 17 : index
    %c0_815 = arith.constant 0 : index
    %c0_816 = arith.constant 0 : index
    %980 = vector.load %arg7[%c17_814, %c0_815, %c0_816] : memref<36x2x256xf32, #tpu.memory_space<vmem>>, vector<1x2x256xf32>
    %981 = vector.shape_cast %980 : vector<1x2x256xf32> to vector<2x256xf32>
    %c3_817 = arith.constant 3 : index
    %c17_818 = arith.constant 17 : index
    %982 = memref.load %arg2[%c3_817, %c17_818] : memref<8x36xf32, #tpu.memory_space<smem>>
    %983 = vector.broadcast %982 : f32 to vector<2x256xf32>
    %984 = arith.mulf %981, %983 : vector<2x256xf32>
    %985 = arith.addf %979, %984 : vector<2x256xf32>
    %c18_819 = arith.constant 18 : index
    %c0_820 = arith.constant 0 : index
    %c0_821 = arith.constant 0 : index
    %986 = vector.load %arg7[%c18_819, %c0_820, %c0_821] : memref<36x2x256xf32, #tpu.memory_space<vmem>>, vector<1x2x256xf32>
    %987 = vector.shape_cast %986 : vector<1x2x256xf32> to vector<2x256xf32>
    %c3_822 = arith.constant 3 : index
    %c18_823 = arith.constant 18 : index
    %988 = memref.load %arg2[%c3_822, %c18_823] : memref<8x36xf32, #tpu.memory_space<smem>>
    %989 = vector.broadcast %988 : f32 to vector<2x256xf32>
    %990 = arith.mulf %987, %989 : vector<2x256xf32>
    %991 = arith.addf %985, %990 : vector<2x256xf32>
    %c19_824 = arith.constant 19 : index
    %c0_825 = arith.constant 0 : index
    %c0_826 = arith.constant 0 : index
    %992 = vector.load %arg7[%c19_824, %c0_825, %c0_826] : memref<36x2x256xf32, #tpu.memory_space<vmem>>, vector<1x2x256xf32>
    %993 = vector.shape_cast %992 : vector<1x2x256xf32> to vector<2x256xf32>
    %c3_827 = arith.constant 3 : index
    %c19_828 = arith.constant 19 : index
    %994 = memref.load %arg2[%c3_827, %c19_828] : memref<8x36xf32, #tpu.memory_space<smem>>
    %995 = vector.broadcast %994 : f32 to vector<2x256xf32>
    %996 = arith.mulf %993, %995 : vector<2x256xf32>
    %997 = arith.addf %991, %996 : vector<2x256xf32>
    %c20_829 = arith.constant 20 : index
    %c0_830 = arith.constant 0 : index
    %c0_831 = arith.constant 0 : index
    %998 = vector.load %arg7[%c20_829, %c0_830, %c0_831] : memref<36x2x256xf32, #tpu.memory_space<vmem>>, vector<1x2x256xf32>
    %999 = vector.shape_cast %998 : vector<1x2x256xf32> to vector<2x256xf32>
    %c3_832 = arith.constant 3 : index
    %c20_833 = arith.constant 20 : index
    %1000 = memref.load %arg2[%c3_832, %c20_833] : memref<8x36xf32, #tpu.memory_space<smem>>
    %1001 = vector.broadcast %1000 : f32 to vector<2x256xf32>
    %1002 = arith.mulf %999, %1001 : vector<2x256xf32>
    %1003 = arith.addf %997, %1002 : vector<2x256xf32>
    %c21_834 = arith.constant 21 : index
    %c0_835 = arith.constant 0 : index
    %c0_836 = arith.constant 0 : index
    %1004 = vector.load %arg7[%c21_834, %c0_835, %c0_836] : memref<36x2x256xf32, #tpu.memory_space<vmem>>, vector<1x2x256xf32>
    %1005 = vector.shape_cast %1004 : vector<1x2x256xf32> to vector<2x256xf32>
    %c3_837 = arith.constant 3 : index
    %c21_838 = arith.constant 21 : index
    %1006 = memref.load %arg2[%c3_837, %c21_838] : memref<8x36xf32, #tpu.memory_space<smem>>
    %1007 = vector.broadcast %1006 : f32 to vector<2x256xf32>
    %1008 = arith.mulf %1005, %1007 : vector<2x256xf32>
    %1009 = arith.addf %1003, %1008 : vector<2x256xf32>
    %c22_839 = arith.constant 22 : index
    %c0_840 = arith.constant 0 : index
    %c0_841 = arith.constant 0 : index
    %1010 = vector.load %arg7[%c22_839, %c0_840, %c0_841] : memref<36x2x256xf32, #tpu.memory_space<vmem>>, vector<1x2x256xf32>
    %1011 = vector.shape_cast %1010 : vector<1x2x256xf32> to vector<2x256xf32>
    %c3_842 = arith.constant 3 : index
    %c22_843 = arith.constant 22 : index
    %1012 = memref.load %arg2[%c3_842, %c22_843] : memref<8x36xf32, #tpu.memory_space<smem>>
    %1013 = vector.broadcast %1012 : f32 to vector<2x256xf32>
    %1014 = arith.mulf %1011, %1013 : vector<2x256xf32>
    %1015 = arith.addf %1009, %1014 : vector<2x256xf32>
    %c23_844 = arith.constant 23 : index
    %c0_845 = arith.constant 0 : index
    %c0_846 = arith.constant 0 : index
    %1016 = vector.load %arg7[%c23_844, %c0_845, %c0_846] : memref<36x2x256xf32, #tpu.memory_space<vmem>>, vector<1x2x256xf32>
    %1017 = vector.shape_cast %1016 : vector<1x2x256xf32> to vector<2x256xf32>
    %c3_847 = arith.constant 3 : index
    %c23_848 = arith.constant 23 : index
    %1018 = memref.load %arg2[%c3_847, %c23_848] : memref<8x36xf32, #tpu.memory_space<smem>>
    %1019 = vector.broadcast %1018 : f32 to vector<2x256xf32>
    %1020 = arith.mulf %1017, %1019 : vector<2x256xf32>
    %1021 = arith.addf %1015, %1020 : vector<2x256xf32>
    %c24_849 = arith.constant 24 : index
    %c0_850 = arith.constant 0 : index
    %c0_851 = arith.constant 0 : index
    %1022 = vector.load %arg7[%c24_849, %c0_850, %c0_851] : memref<36x2x256xf32, #tpu.memory_space<vmem>>, vector<1x2x256xf32>
    %1023 = vector.shape_cast %1022 : vector<1x2x256xf32> to vector<2x256xf32>
    %c3_852 = arith.constant 3 : index
    %c24_853 = arith.constant 24 : index
    %1024 = memref.load %arg2[%c3_852, %c24_853] : memref<8x36xf32, #tpu.memory_space<smem>>
    %1025 = vector.broadcast %1024 : f32 to vector<2x256xf32>
    %1026 = arith.mulf %1023, %1025 : vector<2x256xf32>
    %1027 = arith.addf %1021, %1026 : vector<2x256xf32>
    %c25_854 = arith.constant 25 : index
    %c0_855 = arith.constant 0 : index
    %c0_856 = arith.constant 0 : index
    %1028 = vector.load %arg7[%c25_854, %c0_855, %c0_856] : memref<36x2x256xf32, #tpu.memory_space<vmem>>, vector<1x2x256xf32>
    %1029 = vector.shape_cast %1028 : vector<1x2x256xf32> to vector<2x256xf32>
    %c3_857 = arith.constant 3 : index
    %c25_858 = arith.constant 25 : index
    %1030 = memref.load %arg2[%c3_857, %c25_858] : memref<8x36xf32, #tpu.memory_space<smem>>
    %1031 = vector.broadcast %1030 : f32 to vector<2x256xf32>
    %1032 = arith.mulf %1029, %1031 : vector<2x256xf32>
    %1033 = arith.addf %1027, %1032 : vector<2x256xf32>
    %c26_859 = arith.constant 26 : index
    %c0_860 = arith.constant 0 : index
    %c0_861 = arith.constant 0 : index
    %1034 = vector.load %arg7[%c26_859, %c0_860, %c0_861] : memref<36x2x256xf32, #tpu.memory_space<vmem>>, vector<1x2x256xf32>
    %1035 = vector.shape_cast %1034 : vector<1x2x256xf32> to vector<2x256xf32>
    %c3_862 = arith.constant 3 : index
    %c26_863 = arith.constant 26 : index
    %1036 = memref.load %arg2[%c3_862, %c26_863] : memref<8x36xf32, #tpu.memory_space<smem>>
    %1037 = vector.broadcast %1036 : f32 to vector<2x256xf32>
    %1038 = arith.mulf %1035, %1037 : vector<2x256xf32>
    %1039 = arith.addf %1033, %1038 : vector<2x256xf32>
    %c27_864 = arith.constant 27 : index
    %c0_865 = arith.constant 0 : index
    %c0_866 = arith.constant 0 : index
    %1040 = vector.load %arg7[%c27_864, %c0_865, %c0_866] : memref<36x2x256xf32, #tpu.memory_space<vmem>>, vector<1x2x256xf32>
    %1041 = vector.shape_cast %1040 : vector<1x2x256xf32> to vector<2x256xf32>
    %c3_867 = arith.constant 3 : index
    %c27_868 = arith.constant 27 : index
    %1042 = memref.load %arg2[%c3_867, %c27_868] : memref<8x36xf32, #tpu.memory_space<smem>>
    %1043 = vector.broadcast %1042 : f32 to vector<2x256xf32>
    %1044 = arith.mulf %1041, %1043 : vector<2x256xf32>
    %1045 = arith.addf %1039, %1044 : vector<2x256xf32>
    %c28_869 = arith.constant 28 : index
    %c0_870 = arith.constant 0 : index
    %c0_871 = arith.constant 0 : index
    %1046 = vector.load %arg7[%c28_869, %c0_870, %c0_871] : memref<36x2x256xf32, #tpu.memory_space<vmem>>, vector<1x2x256xf32>
    %1047 = vector.shape_cast %1046 : vector<1x2x256xf32> to vector<2x256xf32>
    %c3_872 = arith.constant 3 : index
    %c28_873 = arith.constant 28 : index
    %1048 = memref.load %arg2[%c3_872, %c28_873] : memref<8x36xf32, #tpu.memory_space<smem>>
    %1049 = vector.broadcast %1048 : f32 to vector<2x256xf32>
    %1050 = arith.mulf %1047, %1049 : vector<2x256xf32>
    %1051 = arith.addf %1045, %1050 : vector<2x256xf32>
    %c29_874 = arith.constant 29 : index
    %c0_875 = arith.constant 0 : index
    %c0_876 = arith.constant 0 : index
    %1052 = vector.load %arg7[%c29_874, %c0_875, %c0_876] : memref<36x2x256xf32, #tpu.memory_space<vmem>>, vector<1x2x256xf32>
    %1053 = vector.shape_cast %1052 : vector<1x2x256xf32> to vector<2x256xf32>
    %c3_877 = arith.constant 3 : index
    %c29_878 = arith.constant 29 : index
    %1054 = memref.load %arg2[%c3_877, %c29_878] : memref<8x36xf32, #tpu.memory_space<smem>>
    %1055 = vector.broadcast %1054 : f32 to vector<2x256xf32>
    %1056 = arith.mulf %1053, %1055 : vector<2x256xf32>
    %1057 = arith.addf %1051, %1056 : vector<2x256xf32>
    %c30_879 = arith.constant 30 : index
    %c0_880 = arith.constant 0 : index
    %c0_881 = arith.constant 0 : index
    %1058 = vector.load %arg7[%c30_879, %c0_880, %c0_881] : memref<36x2x256xf32, #tpu.memory_space<vmem>>, vector<1x2x256xf32>
    %1059 = vector.shape_cast %1058 : vector<1x2x256xf32> to vector<2x256xf32>
    %c3_882 = arith.constant 3 : index
    %c30_883 = arith.constant 30 : index
    %1060 = memref.load %arg2[%c3_882, %c30_883] : memref<8x36xf32, #tpu.memory_space<smem>>
    %1061 = vector.broadcast %1060 : f32 to vector<2x256xf32>
    %1062 = arith.mulf %1059, %1061 : vector<2x256xf32>
    %1063 = arith.addf %1057, %1062 : vector<2x256xf32>
    %c31_884 = arith.constant 31 : index
    %c0_885 = arith.constant 0 : index
    %c0_886 = arith.constant 0 : index
    %1064 = vector.load %arg7[%c31_884, %c0_885, %c0_886] : memref<36x2x256xf32, #tpu.memory_space<vmem>>, vector<1x2x256xf32>
    %1065 = vector.shape_cast %1064 : vector<1x2x256xf32> to vector<2x256xf32>
    %c3_887 = arith.constant 3 : index
    %c31_888 = arith.constant 31 : index
    %1066 = memref.load %arg2[%c3_887, %c31_888] : memref<8x36xf32, #tpu.memory_space<smem>>
    %1067 = vector.broadcast %1066 : f32 to vector<2x256xf32>
    %1068 = arith.mulf %1065, %1067 : vector<2x256xf32>
    %1069 = arith.addf %1063, %1068 : vector<2x256xf32>
    %c32_889 = arith.constant 32 : index
    %c0_890 = arith.constant 0 : index
    %c0_891 = arith.constant 0 : index
    %1070 = vector.load %arg7[%c32_889, %c0_890, %c0_891] : memref<36x2x256xf32, #tpu.memory_space<vmem>>, vector<1x2x256xf32>
    %1071 = vector.shape_cast %1070 : vector<1x2x256xf32> to vector<2x256xf32>
    %c3_892 = arith.constant 3 : index
    %c32_893 = arith.constant 32 : index
    %1072 = memref.load %arg2[%c3_892, %c32_893] : memref<8x36xf32, #tpu.memory_space<smem>>
    %1073 = vector.broadcast %1072 : f32 to vector<2x256xf32>
    %1074 = arith.mulf %1071, %1073 : vector<2x256xf32>
    %1075 = arith.addf %1069, %1074 : vector<2x256xf32>
    %c33_894 = arith.constant 33 : index
    %c0_895 = arith.constant 0 : index
    %c0_896 = arith.constant 0 : index
    %1076 = vector.load %arg7[%c33_894, %c0_895, %c0_896] : memref<36x2x256xf32, #tpu.memory_space<vmem>>, vector<1x2x256xf32>
    %1077 = vector.shape_cast %1076 : vector<1x2x256xf32> to vector<2x256xf32>
    %c3_897 = arith.constant 3 : index
    %c33_898 = arith.constant 33 : index
    %1078 = memref.load %arg2[%c3_897, %c33_898] : memref<8x36xf32, #tpu.memory_space<smem>>
    %1079 = vector.broadcast %1078 : f32 to vector<2x256xf32>
    %1080 = arith.mulf %1077, %1079 : vector<2x256xf32>
    %1081 = arith.addf %1075, %1080 : vector<2x256xf32>
    %c34_899 = arith.constant 34 : index
    %c0_900 = arith.constant 0 : index
    %c0_901 = arith.constant 0 : index
    %1082 = vector.load %arg7[%c34_899, %c0_900, %c0_901] : memref<36x2x256xf32, #tpu.memory_space<vmem>>, vector<1x2x256xf32>
    %1083 = vector.shape_cast %1082 : vector<1x2x256xf32> to vector<2x256xf32>
    %c3_902 = arith.constant 3 : index
    %c34_903 = arith.constant 34 : index
    %1084 = memref.load %arg2[%c3_902, %c34_903] : memref<8x36xf32, #tpu.memory_space<smem>>
    %1085 = vector.broadcast %1084 : f32 to vector<2x256xf32>
    %1086 = arith.mulf %1083, %1085 : vector<2x256xf32>
    %1087 = arith.addf %1081, %1086 : vector<2x256xf32>
    %c35_904 = arith.constant 35 : index
    %c0_905 = arith.constant 0 : index
    %c0_906 = arith.constant 0 : index
    %1088 = vector.load %arg7[%c35_904, %c0_905, %c0_906] : memref<36x2x256xf32, #tpu.memory_space<vmem>>, vector<1x2x256xf32>
    %1089 = vector.shape_cast %1088 : vector<1x2x256xf32> to vector<2x256xf32>
    %c3_907 = arith.constant 3 : index
    %c35_908 = arith.constant 35 : index
    %1090 = memref.load %arg2[%c3_907, %c35_908] : memref<8x36xf32, #tpu.memory_space<smem>>
    %1091 = vector.broadcast %1090 : f32 to vector<2x256xf32>
    %1092 = arith.mulf %1089, %1091 : vector<2x256xf32>
    %1093 = arith.addf %1087, %1092 : vector<2x256xf32>
    %c3_909 = arith.constant 3 : index
    %1094 = memref.load %arg3[%c3_909] : memref<8xf32, #tpu.memory_space<smem>>
    %1095 = vector.broadcast %1094 : f32 to vector<2x256xf32>
    %1096 = arith.addf %1093, %1095 : vector<2x256xf32>
    %cst_910 = arith.constant 0.000000e+00 : f32
    %1097 = vector.broadcast %cst_910 : f32 to vector<2x256xf32>
    %1098 = arith.maximumf %1096, %1097 : vector<2x256xf32>
    %c0_911 = arith.constant 0 : index
    %c768 = arith.constant 768 : index
    %1099 = vector.load %arg8[%c0_911, %c768] : memref<2x2048xf32, #tpu.memory_space<vmem>>, vector<2x256xf32>
    tpu.vector_store %arg8[%c0_911, %c768], %1098 {strides = array<i32>} : memref<2x2048xf32, #tpu.memory_space<vmem>>, vector<2x256xf32>,
    %c0_912 = arith.constant 0 : index
    %c0_913 = arith.constant 0 : index
    %c0_914 = arith.constant 0 : index
    %1100 = vector.load %arg7[%c0_912, %c0_913, %c0_914] : memref<36x2x256xf32, #tpu.memory_space<vmem>>, vector<1x2x256xf32>
    %1101 = vector.shape_cast %1100 : vector<1x2x256xf32> to vector<2x256xf32>
    %c4_915 = arith.constant 4 : index
    %c0_916 = arith.constant 0 : index
    %1102 = memref.load %arg2[%c4_915, %c0_916] : memref<8x36xf32, #tpu.memory_space<smem>>
    %1103 = vector.broadcast %1102 : f32 to vector<2x256xf32>
    %1104 = arith.mulf %1101, %1103 : vector<2x256xf32>
    %c1_917 = arith.constant 1 : index
    %c0_918 = arith.constant 0 : index
    %c0_919 = arith.constant 0 : index
    %1105 = vector.load %arg7[%c1_917, %c0_918, %c0_919] : memref<36x2x256xf32, #tpu.memory_space<vmem>>, vector<1x2x256xf32>
    %1106 = vector.shape_cast %1105 : vector<1x2x256xf32> to vector<2x256xf32>
    %c4_920 = arith.constant 4 : index
    %c1_921 = arith.constant 1 : index
    %1107 = memref.load %arg2[%c4_920, %c1_921] : memref<8x36xf32, #tpu.memory_space<smem>>
    %1108 = vector.broadcast %1107 : f32 to vector<2x256xf32>
    %1109 = arith.mulf %1106, %1108 : vector<2x256xf32>
    %1110 = arith.addf %1104, %1109 : vector<2x256xf32>
    %c2_922 = arith.constant 2 : index
    %c0_923 = arith.constant 0 : index
    %c0_924 = arith.constant 0 : index
    %1111 = vector.load %arg7[%c2_922, %c0_923, %c0_924] : memref<36x2x256xf32, #tpu.memory_space<vmem>>, vector<1x2x256xf32>
    %1112 = vector.shape_cast %1111 : vector<1x2x256xf32> to vector<2x256xf32>
    %c4_925 = arith.constant 4 : index
    %c2_926 = arith.constant 2 : index
    %1113 = memref.load %arg2[%c4_925, %c2_926] : memref<8x36xf32, #tpu.memory_space<smem>>
    %1114 = vector.broadcast %1113 : f32 to vector<2x256xf32>
    %1115 = arith.mulf %1112, %1114 : vector<2x256xf32>
    %1116 = arith.addf %1110, %1115 : vector<2x256xf32>
    %c3_927 = arith.constant 3 : index
    %c0_928 = arith.constant 0 : index
    %c0_929 = arith.constant 0 : index
    %1117 = vector.load %arg7[%c3_927, %c0_928, %c0_929] : memref<36x2x256xf32, #tpu.memory_space<vmem>>, vector<1x2x256xf32>
    %1118 = vector.shape_cast %1117 : vector<1x2x256xf32> to vector<2x256xf32>
    %c4_930 = arith.constant 4 : index
    %c3_931 = arith.constant 3 : index
    %1119 = memref.load %arg2[%c4_930, %c3_931] : memref<8x36xf32, #tpu.memory_space<smem>>
    %1120 = vector.broadcast %1119 : f32 to vector<2x256xf32>
    %1121 = arith.mulf %1118, %1120 : vector<2x256xf32>
    %1122 = arith.addf %1116, %1121 : vector<2x256xf32>
    %c4_932 = arith.constant 4 : index
    %c0_933 = arith.constant 0 : index
    %c0_934 = arith.constant 0 : index
    %1123 = vector.load %arg7[%c4_932, %c0_933, %c0_934] : memref<36x2x256xf32, #tpu.memory_space<vmem>>, vector<1x2x256xf32>
    %1124 = vector.shape_cast %1123 : vector<1x2x256xf32> to vector<2x256xf32>
    %c4_935 = arith.constant 4 : index
    %c4_936 = arith.constant 4 : index
    %1125 = memref.load %arg2[%c4_935, %c4_936] : memref<8x36xf32, #tpu.memory_space<smem>>
    %1126 = vector.broadcast %1125 : f32 to vector<2x256xf32>
    %1127 = arith.mulf %1124, %1126 : vector<2x256xf32>
    %1128 = arith.addf %1122, %1127 : vector<2x256xf32>
    %c5_937 = arith.constant 5 : index
    %c0_938 = arith.constant 0 : index
    %c0_939 = arith.constant 0 : index
    %1129 = vector.load %arg7[%c5_937, %c0_938, %c0_939] : memref<36x2x256xf32, #tpu.memory_space<vmem>>, vector<1x2x256xf32>
    %1130 = vector.shape_cast %1129 : vector<1x2x256xf32> to vector<2x256xf32>
    %c4_940 = arith.constant 4 : index
    %c5_941 = arith.constant 5 : index
    %1131 = memref.load %arg2[%c4_940, %c5_941] : memref<8x36xf32, #tpu.memory_space<smem>>
    %1132 = vector.broadcast %1131 : f32 to vector<2x256xf32>
    %1133 = arith.mulf %1130, %1132 : vector<2x256xf32>
    %1134 = arith.addf %1128, %1133 : vector<2x256xf32>
    %c6_942 = arith.constant 6 : index
    %c0_943 = arith.constant 0 : index
    %c0_944 = arith.constant 0 : index
    %1135 = vector.load %arg7[%c6_942, %c0_943, %c0_944] : memref<36x2x256xf32, #tpu.memory_space<vmem>>, vector<1x2x256xf32>
    %1136 = vector.shape_cast %1135 : vector<1x2x256xf32> to vector<2x256xf32>
    %c4_945 = arith.constant 4 : index
    %c6_946 = arith.constant 6 : index
    %1137 = memref.load %arg2[%c4_945, %c6_946] : memref<8x36xf32, #tpu.memory_space<smem>>
    %1138 = vector.broadcast %1137 : f32 to vector<2x256xf32>
    %1139 = arith.mulf %1136, %1138 : vector<2x256xf32>
    %1140 = arith.addf %1134, %1139 : vector<2x256xf32>
    %c7_947 = arith.constant 7 : index
    %c0_948 = arith.constant 0 : index
    %c0_949 = arith.constant 0 : index
    %1141 = vector.load %arg7[%c7_947, %c0_948, %c0_949] : memref<36x2x256xf32, #tpu.memory_space<vmem>>, vector<1x2x256xf32>
    %1142 = vector.shape_cast %1141 : vector<1x2x256xf32> to vector<2x256xf32>
    %c4_950 = arith.constant 4 : index
    %c7_951 = arith.constant 7 : index
    %1143 = memref.load %arg2[%c4_950, %c7_951] : memref<8x36xf32, #tpu.memory_space<smem>>
    %1144 = vector.broadcast %1143 : f32 to vector<2x256xf32>
    %1145 = arith.mulf %1142, %1144 : vector<2x256xf32>
    %1146 = arith.addf %1140, %1145 : vector<2x256xf32>
    %c8_952 = arith.constant 8 : index
    %c0_953 = arith.constant 0 : index
    %c0_954 = arith.constant 0 : index
    %1147 = vector.load %arg7[%c8_952, %c0_953, %c0_954] : memref<36x2x256xf32, #tpu.memory_space<vmem>>, vector<1x2x256xf32>
    %1148 = vector.shape_cast %1147 : vector<1x2x256xf32> to vector<2x256xf32>
    %c4_955 = arith.constant 4 : index
    %c8_956 = arith.constant 8 : index
    %1149 = memref.load %arg2[%c4_955, %c8_956] : memref<8x36xf32, #tpu.memory_space<smem>>
    %1150 = vector.broadcast %1149 : f32 to vector<2x256xf32>
    %1151 = arith.mulf %1148, %1150 : vector<2x256xf32>
    %1152 = arith.addf %1146, %1151 : vector<2x256xf32>
    %c9_957 = arith.constant 9 : index
    %c0_958 = arith.constant 0 : index
    %c0_959 = arith.constant 0 : index
    %1153 = vector.load %arg7[%c9_957, %c0_958, %c0_959] : memref<36x2x256xf32, #tpu.memory_space<vmem>>, vector<1x2x256xf32>
    %1154 = vector.shape_cast %1153 : vector<1x2x256xf32> to vector<2x256xf32>
    %c4_960 = arith.constant 4 : index
    %c9_961 = arith.constant 9 : index
    %1155 = memref.load %arg2[%c4_960, %c9_961] : memref<8x36xf32, #tpu.memory_space<smem>>
    %1156 = vector.broadcast %1155 : f32 to vector<2x256xf32>
    %1157 = arith.mulf %1154, %1156 : vector<2x256xf32>
    %1158 = arith.addf %1152, %1157 : vector<2x256xf32>
    %c10_962 = arith.constant 10 : index
    %c0_963 = arith.constant 0 : index
    %c0_964 = arith.constant 0 : index
    %1159 = vector.load %arg7[%c10_962, %c0_963, %c0_964] : memref<36x2x256xf32, #tpu.memory_space<vmem>>, vector<1x2x256xf32>
    %1160 = vector.shape_cast %1159 : vector<1x2x256xf32> to vector<2x256xf32>
    %c4_965 = arith.constant 4 : index
    %c10_966 = arith.constant 10 : index
    %1161 = memref.load %arg2[%c4_965, %c10_966] : memref<8x36xf32, #tpu.memory_space<smem>>
    %1162 = vector.broadcast %1161 : f32 to vector<2x256xf32>
    %1163 = arith.mulf %1160, %1162 : vector<2x256xf32>
    %1164 = arith.addf %1158, %1163 : vector<2x256xf32>
    %c11_967 = arith.constant 11 : index
    %c0_968 = arith.constant 0 : index
    %c0_969 = arith.constant 0 : index
    %1165 = vector.load %arg7[%c11_967, %c0_968, %c0_969] : memref<36x2x256xf32, #tpu.memory_space<vmem>>, vector<1x2x256xf32>
    %1166 = vector.shape_cast %1165 : vector<1x2x256xf32> to vector<2x256xf32>
    %c4_970 = arith.constant 4 : index
    %c11_971 = arith.constant 11 : index
    %1167 = memref.load %arg2[%c4_970, %c11_971] : memref<8x36xf32, #tpu.memory_space<smem>>
    %1168 = vector.broadcast %1167 : f32 to vector<2x256xf32>
    %1169 = arith.mulf %1166, %1168 : vector<2x256xf32>
    %1170 = arith.addf %1164, %1169 : vector<2x256xf32>
    %c12_972 = arith.constant 12 : index
    %c0_973 = arith.constant 0 : index
    %c0_974 = arith.constant 0 : index
    %1171 = vector.load %arg7[%c12_972, %c0_973, %c0_974] : memref<36x2x256xf32, #tpu.memory_space<vmem>>, vector<1x2x256xf32>
    %1172 = vector.shape_cast %1171 : vector<1x2x256xf32> to vector<2x256xf32>
    %c4_975 = arith.constant 4 : index
    %c12_976 = arith.constant 12 : index
    %1173 = memref.load %arg2[%c4_975, %c12_976] : memref<8x36xf32, #tpu.memory_space<smem>>
    %1174 = vector.broadcast %1173 : f32 to vector<2x256xf32>
    %1175 = arith.mulf %1172, %1174 : vector<2x256xf32>
    %1176 = arith.addf %1170, %1175 : vector<2x256xf32>
    %c13_977 = arith.constant 13 : index
    %c0_978 = arith.constant 0 : index
    %c0_979 = arith.constant 0 : index
    %1177 = vector.load %arg7[%c13_977, %c0_978, %c0_979] : memref<36x2x256xf32, #tpu.memory_space<vmem>>, vector<1x2x256xf32>
    %1178 = vector.shape_cast %1177 : vector<1x2x256xf32> to vector<2x256xf32>
    %c4_980 = arith.constant 4 : index
    %c13_981 = arith.constant 13 : index
    %1179 = memref.load %arg2[%c4_980, %c13_981] : memref<8x36xf32, #tpu.memory_space<smem>>
    %1180 = vector.broadcast %1179 : f32 to vector<2x256xf32>
    %1181 = arith.mulf %1178, %1180 : vector<2x256xf32>
    %1182 = arith.addf %1176, %1181 : vector<2x256xf32>
    %c14_982 = arith.constant 14 : index
    %c0_983 = arith.constant 0 : index
    %c0_984 = arith.constant 0 : index
    %1183 = vector.load %arg7[%c14_982, %c0_983, %c0_984] : memref<36x2x256xf32, #tpu.memory_space<vmem>>, vector<1x2x256xf32>
    %1184 = vector.shape_cast %1183 : vector<1x2x256xf32> to vector<2x256xf32>
    %c4_985 = arith.constant 4 : index
    %c14_986 = arith.constant 14 : index
    %1185 = memref.load %arg2[%c4_985, %c14_986] : memref<8x36xf32, #tpu.memory_space<smem>>
    %1186 = vector.broadcast %1185 : f32 to vector<2x256xf32>
    %1187 = arith.mulf %1184, %1186 : vector<2x256xf32>
    %1188 = arith.addf %1182, %1187 : vector<2x256xf32>
    %c15_987 = arith.constant 15 : index
    %c0_988 = arith.constant 0 : index
    %c0_989 = arith.constant 0 : index
    %1189 = vector.load %arg7[%c15_987, %c0_988, %c0_989] : memref<36x2x256xf32, #tpu.memory_space<vmem>>, vector<1x2x256xf32>
    %1190 = vector.shape_cast %1189 : vector<1x2x256xf32> to vector<2x256xf32>
    %c4_990 = arith.constant 4 : index
    %c15_991 = arith.constant 15 : index
    %1191 = memref.load %arg2[%c4_990, %c15_991] : memref<8x36xf32, #tpu.memory_space<smem>>
    %1192 = vector.broadcast %1191 : f32 to vector<2x256xf32>
    %1193 = arith.mulf %1190, %1192 : vector<2x256xf32>
    %1194 = arith.addf %1188, %1193 : vector<2x256xf32>
    %c16_992 = arith.constant 16 : index
    %c0_993 = arith.constant 0 : index
    %c0_994 = arith.constant 0 : index
    %1195 = vector.load %arg7[%c16_992, %c0_993, %c0_994] : memref<36x2x256xf32, #tpu.memory_space<vmem>>, vector<1x2x256xf32>
    %1196 = vector.shape_cast %1195 : vector<1x2x256xf32> to vector<2x256xf32>
    %c4_995 = arith.constant 4 : index
    %c16_996 = arith.constant 16 : index
    %1197 = memref.load %arg2[%c4_995, %c16_996] : memref<8x36xf32, #tpu.memory_space<smem>>
    %1198 = vector.broadcast %1197 : f32 to vector<2x256xf32>
    %1199 = arith.mulf %1196, %1198 : vector<2x256xf32>
    %1200 = arith.addf %1194, %1199 : vector<2x256xf32>
    %c17_997 = arith.constant 17 : index
    %c0_998 = arith.constant 0 : index
    %c0_999 = arith.constant 0 : index
    %1201 = vector.load %arg7[%c17_997, %c0_998, %c0_999] : memref<36x2x256xf32, #tpu.memory_space<vmem>>, vector<1x2x256xf32>
    %1202 = vector.shape_cast %1201 : vector<1x2x256xf32> to vector<2x256xf32>
    %c4_1000 = arith.constant 4 : index
    %c17_1001 = arith.constant 17 : index
    %1203 = memref.load %arg2[%c4_1000, %c17_1001] : memref<8x36xf32, #tpu.memory_space<smem>>
    %1204 = vector.broadcast %1203 : f32 to vector<2x256xf32>
    %1205 = arith.mulf %1202, %1204 : vector<2x256xf32>
    %1206 = arith.addf %1200, %1205 : vector<2x256xf32>
    %c18_1002 = arith.constant 18 : index
    %c0_1003 = arith.constant 0 : index
    %c0_1004 = arith.constant 0 : index
    %1207 = vector.load %arg7[%c18_1002, %c0_1003, %c0_1004] : memref<36x2x256xf32, #tpu.memory_space<vmem>>, vector<1x2x256xf32>
    %1208 = vector.shape_cast %1207 : vector<1x2x256xf32> to vector<2x256xf32>
    %c4_1005 = arith.constant 4 : index
    %c18_1006 = arith.constant 18 : index
    %1209 = memref.load %arg2[%c4_1005, %c18_1006] : memref<8x36xf32, #tpu.memory_space<smem>>
    %1210 = vector.broadcast %1209 : f32 to vector<2x256xf32>
    %1211 = arith.mulf %1208, %1210 : vector<2x256xf32>
    %1212 = arith.addf %1206, %1211 : vector<2x256xf32>
    %c19_1007 = arith.constant 19 : index
    %c0_1008 = arith.constant 0 : index
    %c0_1009 = arith.constant 0 : index
    %1213 = vector.load %arg7[%c19_1007, %c0_1008, %c0_1009] : memref<36x2x256xf32, #tpu.memory_space<vmem>>, vector<1x2x256xf32>
    %1214 = vector.shape_cast %1213 : vector<1x2x256xf32> to vector<2x256xf32>
    %c4_1010 = arith.constant 4 : index
    %c19_1011 = arith.constant 19 : index
    %1215 = memref.load %arg2[%c4_1010, %c19_1011] : memref<8x36xf32, #tpu.memory_space<smem>>
    %1216 = vector.broadcast %1215 : f32 to vector<2x256xf32>
    %1217 = arith.mulf %1214, %1216 : vector<2x256xf32>
    %1218 = arith.addf %1212, %1217 : vector<2x256xf32>
    %c20_1012 = arith.constant 20 : index
    %c0_1013 = arith.constant 0 : index
    %c0_1014 = arith.constant 0 : index
    %1219 = vector.load %arg7[%c20_1012, %c0_1013, %c0_1014] : memref<36x2x256xf32, #tpu.memory_space<vmem>>, vector<1x2x256xf32>
    %1220 = vector.shape_cast %1219 : vector<1x2x256xf32> to vector<2x256xf32>
    %c4_1015 = arith.constant 4 : index
    %c20_1016 = arith.constant 20 : index
    %1221 = memref.load %arg2[%c4_1015, %c20_1016] : memref<8x36xf32, #tpu.memory_space<smem>>
    %1222 = vector.broadcast %1221 : f32 to vector<2x256xf32>
    %1223 = arith.mulf %1220, %1222 : vector<2x256xf32>
    %1224 = arith.addf %1218, %1223 : vector<2x256xf32>
    %c21_1017 = arith.constant 21 : index
    %c0_1018 = arith.constant 0 : index
    %c0_1019 = arith.constant 0 : index
    %1225 = vector.load %arg7[%c21_1017, %c0_1018, %c0_1019] : memref<36x2x256xf32, #tpu.memory_space<vmem>>, vector<1x2x256xf32>
    %1226 = vector.shape_cast %1225 : vector<1x2x256xf32> to vector<2x256xf32>
    %c4_1020 = arith.constant 4 : index
    %c21_1021 = arith.constant 21 : index
    %1227 = memref.load %arg2[%c4_1020, %c21_1021] : memref<8x36xf32, #tpu.memory_space<smem>>
    %1228 = vector.broadcast %1227 : f32 to vector<2x256xf32>
    %1229 = arith.mulf %1226, %1228 : vector<2x256xf32>
    %1230 = arith.addf %1224, %1229 : vector<2x256xf32>
    %c22_1022 = arith.constant 22 : index
    %c0_1023 = arith.constant 0 : index
    %c0_1024 = arith.constant 0 : index
    %1231 = vector.load %arg7[%c22_1022, %c0_1023, %c0_1024] : memref<36x2x256xf32, #tpu.memory_space<vmem>>, vector<1x2x256xf32>
    %1232 = vector.shape_cast %1231 : vector<1x2x256xf32> to vector<2x256xf32>
    %c4_1025 = arith.constant 4 : index
    %c22_1026 = arith.constant 22 : index
    %1233 = memref.load %arg2[%c4_1025, %c22_1026] : memref<8x36xf32, #tpu.memory_space<smem>>
    %1234 = vector.broadcast %1233 : f32 to vector<2x256xf32>
    %1235 = arith.mulf %1232, %1234 : vector<2x256xf32>
    %1236 = arith.addf %1230, %1235 : vector<2x256xf32>
    %c23_1027 = arith.constant 23 : index
    %c0_1028 = arith.constant 0 : index
    %c0_1029 = arith.constant 0 : index
    %1237 = vector.load %arg7[%c23_1027, %c0_1028, %c0_1029] : memref<36x2x256xf32, #tpu.memory_space<vmem>>, vector<1x2x256xf32>
    %1238 = vector.shape_cast %1237 : vector<1x2x256xf32> to vector<2x256xf32>
    %c4_1030 = arith.constant 4 : index
    %c23_1031 = arith.constant 23 : index
    %1239 = memref.load %arg2[%c4_1030, %c23_1031] : memref<8x36xf32, #tpu.memory_space<smem>>
    %1240 = vector.broadcast %1239 : f32 to vector<2x256xf32>
    %1241 = arith.mulf %1238, %1240 : vector<2x256xf32>
    %1242 = arith.addf %1236, %1241 : vector<2x256xf32>
    %c24_1032 = arith.constant 24 : index
    %c0_1033 = arith.constant 0 : index
    %c0_1034 = arith.constant 0 : index
    %1243 = vector.load %arg7[%c24_1032, %c0_1033, %c0_1034] : memref<36x2x256xf32, #tpu.memory_space<vmem>>, vector<1x2x256xf32>
    %1244 = vector.shape_cast %1243 : vector<1x2x256xf32> to vector<2x256xf32>
    %c4_1035 = arith.constant 4 : index
    %c24_1036 = arith.constant 24 : index
    %1245 = memref.load %arg2[%c4_1035, %c24_1036] : memref<8x36xf32, #tpu.memory_space<smem>>
    %1246 = vector.broadcast %1245 : f32 to vector<2x256xf32>
    %1247 = arith.mulf %1244, %1246 : vector<2x256xf32>
    %1248 = arith.addf %1242, %1247 : vector<2x256xf32>
    %c25_1037 = arith.constant 25 : index
    %c0_1038 = arith.constant 0 : index
    %c0_1039 = arith.constant 0 : index
    %1249 = vector.load %arg7[%c25_1037, %c0_1038, %c0_1039] : memref<36x2x256xf32, #tpu.memory_space<vmem>>, vector<1x2x256xf32>
    %1250 = vector.shape_cast %1249 : vector<1x2x256xf32> to vector<2x256xf32>
    %c4_1040 = arith.constant 4 : index
    %c25_1041 = arith.constant 25 : index
    %1251 = memref.load %arg2[%c4_1040, %c25_1041] : memref<8x36xf32, #tpu.memory_space<smem>>
    %1252 = vector.broadcast %1251 : f32 to vector<2x256xf32>
    %1253 = arith.mulf %1250, %1252 : vector<2x256xf32>
    %1254 = arith.addf %1248, %1253 : vector<2x256xf32>
    %c26_1042 = arith.constant 26 : index
    %c0_1043 = arith.constant 0 : index
    %c0_1044 = arith.constant 0 : index
    %1255 = vector.load %arg7[%c26_1042, %c0_1043, %c0_1044] : memref<36x2x256xf32, #tpu.memory_space<vmem>>, vector<1x2x256xf32>
    %1256 = vector.shape_cast %1255 : vector<1x2x256xf32> to vector<2x256xf32>
    %c4_1045 = arith.constant 4 : index
    %c26_1046 = arith.constant 26 : index
    %1257 = memref.load %arg2[%c4_1045, %c26_1046] : memref<8x36xf32, #tpu.memory_space<smem>>
    %1258 = vector.broadcast %1257 : f32 to vector<2x256xf32>
    %1259 = arith.mulf %1256, %1258 : vector<2x256xf32>
    %1260 = arith.addf %1254, %1259 : vector<2x256xf32>
    %c27_1047 = arith.constant 27 : index
    %c0_1048 = arith.constant 0 : index
    %c0_1049 = arith.constant 0 : index
    %1261 = vector.load %arg7[%c27_1047, %c0_1048, %c0_1049] : memref<36x2x256xf32, #tpu.memory_space<vmem>>, vector<1x2x256xf32>
    %1262 = vector.shape_cast %1261 : vector<1x2x256xf32> to vector<2x256xf32>
    %c4_1050 = arith.constant 4 : index
    %c27_1051 = arith.constant 27 : index
    %1263 = memref.load %arg2[%c4_1050, %c27_1051] : memref<8x36xf32, #tpu.memory_space<smem>>
    %1264 = vector.broadcast %1263 : f32 to vector<2x256xf32>
    %1265 = arith.mulf %1262, %1264 : vector<2x256xf32>
    %1266 = arith.addf %1260, %1265 : vector<2x256xf32>
    %c28_1052 = arith.constant 28 : index
    %c0_1053 = arith.constant 0 : index
    %c0_1054 = arith.constant 0 : index
    %1267 = vector.load %arg7[%c28_1052, %c0_1053, %c0_1054] : memref<36x2x256xf32, #tpu.memory_space<vmem>>, vector<1x2x256xf32>
    %1268 = vector.shape_cast %1267 : vector<1x2x256xf32> to vector<2x256xf32>
    %c4_1055 = arith.constant 4 : index
    %c28_1056 = arith.constant 28 : index
    %1269 = memref.load %arg2[%c4_1055, %c28_1056] : memref<8x36xf32, #tpu.memory_space<smem>>
    %1270 = vector.broadcast %1269 : f32 to vector<2x256xf32>
    %1271 = arith.mulf %1268, %1270 : vector<2x256xf32>
    %1272 = arith.addf %1266, %1271 : vector<2x256xf32>
    %c29_1057 = arith.constant 29 : index
    %c0_1058 = arith.constant 0 : index
    %c0_1059 = arith.constant 0 : index
    %1273 = vector.load %arg7[%c29_1057, %c0_1058, %c0_1059] : memref<36x2x256xf32, #tpu.memory_space<vmem>>, vector<1x2x256xf32>
    %1274 = vector.shape_cast %1273 : vector<1x2x256xf32> to vector<2x256xf32>
    %c4_1060 = arith.constant 4 : index
    %c29_1061 = arith.constant 29 : index
    %1275 = memref.load %arg2[%c4_1060, %c29_1061] : memref<8x36xf32, #tpu.memory_space<smem>>
    %1276 = vector.broadcast %1275 : f32 to vector<2x256xf32>
    %1277 = arith.mulf %1274, %1276 : vector<2x256xf32>
    %1278 = arith.addf %1272, %1277 : vector<2x256xf32>
    %c30_1062 = arith.constant 30 : index
    %c0_1063 = arith.constant 0 : index
    %c0_1064 = arith.constant 0 : index
    %1279 = vector.load %arg7[%c30_1062, %c0_1063, %c0_1064] : memref<36x2x256xf32, #tpu.memory_space<vmem>>, vector<1x2x256xf32>
    %1280 = vector.shape_cast %1279 : vector<1x2x256xf32> to vector<2x256xf32>
    %c4_1065 = arith.constant 4 : index
    %c30_1066 = arith.constant 30 : index
    %1281 = memref.load %arg2[%c4_1065, %c30_1066] : memref<8x36xf32, #tpu.memory_space<smem>>
    %1282 = vector.broadcast %1281 : f32 to vector<2x256xf32>
    %1283 = arith.mulf %1280, %1282 : vector<2x256xf32>
    %1284 = arith.addf %1278, %1283 : vector<2x256xf32>
    %c31_1067 = arith.constant 31 : index
    %c0_1068 = arith.constant 0 : index
    %c0_1069 = arith.constant 0 : index
    %1285 = vector.load %arg7[%c31_1067, %c0_1068, %c0_1069] : memref<36x2x256xf32, #tpu.memory_space<vmem>>, vector<1x2x256xf32>
    %1286 = vector.shape_cast %1285 : vector<1x2x256xf32> to vector<2x256xf32>
    %c4_1070 = arith.constant 4 : index
    %c31_1071 = arith.constant 31 : index
    %1287 = memref.load %arg2[%c4_1070, %c31_1071] : memref<8x36xf32, #tpu.memory_space<smem>>
    %1288 = vector.broadcast %1287 : f32 to vector<2x256xf32>
    %1289 = arith.mulf %1286, %1288 : vector<2x256xf32>
    %1290 = arith.addf %1284, %1289 : vector<2x256xf32>
    %c32_1072 = arith.constant 32 : index
    %c0_1073 = arith.constant 0 : index
    %c0_1074 = arith.constant 0 : index
    %1291 = vector.load %arg7[%c32_1072, %c0_1073, %c0_1074] : memref<36x2x256xf32, #tpu.memory_space<vmem>>, vector<1x2x256xf32>
    %1292 = vector.shape_cast %1291 : vector<1x2x256xf32> to vector<2x256xf32>
    %c4_1075 = arith.constant 4 : index
    %c32_1076 = arith.constant 32 : index
    %1293 = memref.load %arg2[%c4_1075, %c32_1076] : memref<8x36xf32, #tpu.memory_space<smem>>
    %1294 = vector.broadcast %1293 : f32 to vector<2x256xf32>
    %1295 = arith.mulf %1292, %1294 : vector<2x256xf32>
    %1296 = arith.addf %1290, %1295 : vector<2x256xf32>
    %c33_1077 = arith.constant 33 : index
    %c0_1078 = arith.constant 0 : index
    %c0_1079 = arith.constant 0 : index
    %1297 = vector.load %arg7[%c33_1077, %c0_1078, %c0_1079] : memref<36x2x256xf32, #tpu.memory_space<vmem>>, vector<1x2x256xf32>
    %1298 = vector.shape_cast %1297 : vector<1x2x256xf32> to vector<2x256xf32>
    %c4_1080 = arith.constant 4 : index
    %c33_1081 = arith.constant 33 : index
    %1299 = memref.load %arg2[%c4_1080, %c33_1081] : memref<8x36xf32, #tpu.memory_space<smem>>
    %1300 = vector.broadcast %1299 : f32 to vector<2x256xf32>
    %1301 = arith.mulf %1298, %1300 : vector<2x256xf32>
    %1302 = arith.addf %1296, %1301 : vector<2x256xf32>
    %c34_1082 = arith.constant 34 : index
    %c0_1083 = arith.constant 0 : index
    %c0_1084 = arith.constant 0 : index
    %1303 = vector.load %arg7[%c34_1082, %c0_1083, %c0_1084] : memref<36x2x256xf32, #tpu.memory_space<vmem>>, vector<1x2x256xf32>
    %1304 = vector.shape_cast %1303 : vector<1x2x256xf32> to vector<2x256xf32>
    %c4_1085 = arith.constant 4 : index
    %c34_1086 = arith.constant 34 : index
    %1305 = memref.load %arg2[%c4_1085, %c34_1086] : memref<8x36xf32, #tpu.memory_space<smem>>
    %1306 = vector.broadcast %1305 : f32 to vector<2x256xf32>
    %1307 = arith.mulf %1304, %1306 : vector<2x256xf32>
    %1308 = arith.addf %1302, %1307 : vector<2x256xf32>
    %c35_1087 = arith.constant 35 : index
    %c0_1088 = arith.constant 0 : index
    %c0_1089 = arith.constant 0 : index
    %1309 = vector.load %arg7[%c35_1087, %c0_1088, %c0_1089] : memref<36x2x256xf32, #tpu.memory_space<vmem>>, vector<1x2x256xf32>
    %1310 = vector.shape_cast %1309 : vector<1x2x256xf32> to vector<2x256xf32>
    %c4_1090 = arith.constant 4 : index
    %c35_1091 = arith.constant 35 : index
    %1311 = memref.load %arg2[%c4_1090, %c35_1091] : memref<8x36xf32, #tpu.memory_space<smem>>
    %1312 = vector.broadcast %1311 : f32 to vector<2x256xf32>
    %1313 = arith.mulf %1310, %1312 : vector<2x256xf32>
    %1314 = arith.addf %1308, %1313 : vector<2x256xf32>
    %c4_1092 = arith.constant 4 : index
    %1315 = memref.load %arg3[%c4_1092] : memref<8xf32, #tpu.memory_space<smem>>
    %1316 = vector.broadcast %1315 : f32 to vector<2x256xf32>
    %1317 = arith.addf %1314, %1316 : vector<2x256xf32>
    %cst_1093 = arith.constant 0.000000e+00 : f32
    %1318 = vector.broadcast %cst_1093 : f32 to vector<2x256xf32>
    %1319 = arith.maximumf %1317, %1318 : vector<2x256xf32>
    %c0_1094 = arith.constant 0 : index
    %c1024 = arith.constant 1024 : index
    %1320 = vector.load %arg8[%c0_1094, %c1024] : memref<2x2048xf32, #tpu.memory_space<vmem>>, vector<2x256xf32>
    tpu.vector_store %arg8[%c0_1094, %c1024], %1319 {strides = array<i32>} : memref<2x2048xf32, #tpu.memory_space<vmem>>, vector<2x256xf32>,
    %c0_1095 = arith.constant 0 : index
    %c0_1096 = arith.constant 0 : index
    %c0_1097 = arith.constant 0 : index
    %1321 = vector.load %arg7[%c0_1095, %c0_1096, %c0_1097] : memref<36x2x256xf32, #tpu.memory_space<vmem>>, vector<1x2x256xf32>
    %1322 = vector.shape_cast %1321 : vector<1x2x256xf32> to vector<2x256xf32>
    %c5_1098 = arith.constant 5 : index
    %c0_1099 = arith.constant 0 : index
    %1323 = memref.load %arg2[%c5_1098, %c0_1099] : memref<8x36xf32, #tpu.memory_space<smem>>
    %1324 = vector.broadcast %1323 : f32 to vector<2x256xf32>
    %1325 = arith.mulf %1322, %1324 : vector<2x256xf32>
    %c1_1100 = arith.constant 1 : index
    %c0_1101 = arith.constant 0 : index
    %c0_1102 = arith.constant 0 : index
    %1326 = vector.load %arg7[%c1_1100, %c0_1101, %c0_1102] : memref<36x2x256xf32, #tpu.memory_space<vmem>>, vector<1x2x256xf32>
    %1327 = vector.shape_cast %1326 : vector<1x2x256xf32> to vector<2x256xf32>
    %c5_1103 = arith.constant 5 : index
    %c1_1104 = arith.constant 1 : index
    %1328 = memref.load %arg2[%c5_1103, %c1_1104] : memref<8x36xf32, #tpu.memory_space<smem>>
    %1329 = vector.broadcast %1328 : f32 to vector<2x256xf32>
    %1330 = arith.mulf %1327, %1329 : vector<2x256xf32>
    %1331 = arith.addf %1325, %1330 : vector<2x256xf32>
    %c2_1105 = arith.constant 2 : index
    %c0_1106 = arith.constant 0 : index
    %c0_1107 = arith.constant 0 : index
    %1332 = vector.load %arg7[%c2_1105, %c0_1106, %c0_1107] : memref<36x2x256xf32, #tpu.memory_space<vmem>>, vector<1x2x256xf32>
    %1333 = vector.shape_cast %1332 : vector<1x2x256xf32> to vector<2x256xf32>
    %c5_1108 = arith.constant 5 : index
    %c2_1109 = arith.constant 2 : index
    %1334 = memref.load %arg2[%c5_1108, %c2_1109] : memref<8x36xf32, #tpu.memory_space<smem>>
    %1335 = vector.broadcast %1334 : f32 to vector<2x256xf32>
    %1336 = arith.mulf %1333, %1335 : vector<2x256xf32>
    %1337 = arith.addf %1331, %1336 : vector<2x256xf32>
    %c3_1110 = arith.constant 3 : index
    %c0_1111 = arith.constant 0 : index
    %c0_1112 = arith.constant 0 : index
    %1338 = vector.load %arg7[%c3_1110, %c0_1111, %c0_1112] : memref<36x2x256xf32, #tpu.memory_space<vmem>>, vector<1x2x256xf32>
    %1339 = vector.shape_cast %1338 : vector<1x2x256xf32> to vector<2x256xf32>
    %c5_1113 = arith.constant 5 : index
    %c3_1114 = arith.constant 3 : index
    %1340 = memref.load %arg2[%c5_1113, %c3_1114] : memref<8x36xf32, #tpu.memory_space<smem>>
    %1341 = vector.broadcast %1340 : f32 to vector<2x256xf32>
    %1342 = arith.mulf %1339, %1341 : vector<2x256xf32>
    %1343 = arith.addf %1337, %1342 : vector<2x256xf32>
    %c4_1115 = arith.constant 4 : index
    %c0_1116 = arith.constant 0 : index
    %c0_1117 = arith.constant 0 : index
    %1344 = vector.load %arg7[%c4_1115, %c0_1116, %c0_1117] : memref<36x2x256xf32, #tpu.memory_space<vmem>>, vector<1x2x256xf32>
    %1345 = vector.shape_cast %1344 : vector<1x2x256xf32> to vector<2x256xf32>
    %c5_1118 = arith.constant 5 : index
    %c4_1119 = arith.constant 4 : index
    %1346 = memref.load %arg2[%c5_1118, %c4_1119] : memref<8x36xf32, #tpu.memory_space<smem>>
    %1347 = vector.broadcast %1346 : f32 to vector<2x256xf32>
    %1348 = arith.mulf %1345, %1347 : vector<2x256xf32>
    %1349 = arith.addf %1343, %1348 : vector<2x256xf32>
    %c5_1120 = arith.constant 5 : index
    %c0_1121 = arith.constant 0 : index
    %c0_1122 = arith.constant 0 : index
    %1350 = vector.load %arg7[%c5_1120, %c0_1121, %c0_1122] : memref<36x2x256xf32, #tpu.memory_space<vmem>>, vector<1x2x256xf32>
    %1351 = vector.shape_cast %1350 : vector<1x2x256xf32> to vector<2x256xf32>
    %c5_1123 = arith.constant 5 : index
    %c5_1124 = arith.constant 5 : index
    %1352 = memref.load %arg2[%c5_1123, %c5_1124] : memref<8x36xf32, #tpu.memory_space<smem>>
    %1353 = vector.broadcast %1352 : f32 to vector<2x256xf32>
    %1354 = arith.mulf %1351, %1353 : vector<2x256xf32>
    %1355 = arith.addf %1349, %1354 : vector<2x256xf32>
    %c6_1125 = arith.constant 6 : index
    %c0_1126 = arith.constant 0 : index
    %c0_1127 = arith.constant 0 : index
    %1356 = vector.load %arg7[%c6_1125, %c0_1126, %c0_1127] : memref<36x2x256xf32, #tpu.memory_space<vmem>>, vector<1x2x256xf32>
    %1357 = vector.shape_cast %1356 : vector<1x2x256xf32> to vector<2x256xf32>
    %c5_1128 = arith.constant 5 : index
    %c6_1129 = arith.constant 6 : index
    %1358 = memref.load %arg2[%c5_1128, %c6_1129] : memref<8x36xf32, #tpu.memory_space<smem>>
    %1359 = vector.broadcast %1358 : f32 to vector<2x256xf32>
    %1360 = arith.mulf %1357, %1359 : vector<2x256xf32>
    %1361 = arith.addf %1355, %1360 : vector<2x256xf32>
    %c7_1130 = arith.constant 7 : index
    %c0_1131 = arith.constant 0 : index
    %c0_1132 = arith.constant 0 : index
    %1362 = vector.load %arg7[%c7_1130, %c0_1131, %c0_1132] : memref<36x2x256xf32, #tpu.memory_space<vmem>>, vector<1x2x256xf32>
    %1363 = vector.shape_cast %1362 : vector<1x2x256xf32> to vector<2x256xf32>
    %c5_1133 = arith.constant 5 : index
    %c7_1134 = arith.constant 7 : index
    %1364 = memref.load %arg2[%c5_1133, %c7_1134] : memref<8x36xf32, #tpu.memory_space<smem>>
    %1365 = vector.broadcast %1364 : f32 to vector<2x256xf32>
    %1366 = arith.mulf %1363, %1365 : vector<2x256xf32>
    %1367 = arith.addf %1361, %1366 : vector<2x256xf32>
    %c8_1135 = arith.constant 8 : index
    %c0_1136 = arith.constant 0 : index
    %c0_1137 = arith.constant 0 : index
    %1368 = vector.load %arg7[%c8_1135, %c0_1136, %c0_1137] : memref<36x2x256xf32, #tpu.memory_space<vmem>>, vector<1x2x256xf32>
    %1369 = vector.shape_cast %1368 : vector<1x2x256xf32> to vector<2x256xf32>
    %c5_1138 = arith.constant 5 : index
    %c8_1139 = arith.constant 8 : index
    %1370 = memref.load %arg2[%c5_1138, %c8_1139] : memref<8x36xf32, #tpu.memory_space<smem>>
    %1371 = vector.broadcast %1370 : f32 to vector<2x256xf32>
    %1372 = arith.mulf %1369, %1371 : vector<2x256xf32>
    %1373 = arith.addf %1367, %1372 : vector<2x256xf32>
    %c9_1140 = arith.constant 9 : index
    %c0_1141 = arith.constant 0 : index
    %c0_1142 = arith.constant 0 : index
    %1374 = vector.load %arg7[%c9_1140, %c0_1141, %c0_1142] : memref<36x2x256xf32, #tpu.memory_space<vmem>>, vector<1x2x256xf32>
    %1375 = vector.shape_cast %1374 : vector<1x2x256xf32> to vector<2x256xf32>
    %c5_1143 = arith.constant 5 : index
    %c9_1144 = arith.constant 9 : index
    %1376 = memref.load %arg2[%c5_1143, %c9_1144] : memref<8x36xf32, #tpu.memory_space<smem>>
    %1377 = vector.broadcast %1376 : f32 to vector<2x256xf32>
    %1378 = arith.mulf %1375, %1377 : vector<2x256xf32>
    %1379 = arith.addf %1373, %1378 : vector<2x256xf32>
    %c10_1145 = arith.constant 10 : index
    %c0_1146 = arith.constant 0 : index
    %c0_1147 = arith.constant 0 : index
    %1380 = vector.load %arg7[%c10_1145, %c0_1146, %c0_1147] : memref<36x2x256xf32, #tpu.memory_space<vmem>>, vector<1x2x256xf32>
    %1381 = vector.shape_cast %1380 : vector<1x2x256xf32> to vector<2x256xf32>
    %c5_1148 = arith.constant 5 : index
    %c10_1149 = arith.constant 10 : index
    %1382 = memref.load %arg2[%c5_1148, %c10_1149] : memref<8x36xf32, #tpu.memory_space<smem>>
    %1383 = vector.broadcast %1382 : f32 to vector<2x256xf32>
    %1384 = arith.mulf %1381, %1383 : vector<2x256xf32>
    %1385 = arith.addf %1379, %1384 : vector<2x256xf32>
    %c11_1150 = arith.constant 11 : index
    %c0_1151 = arith.constant 0 : index
    %c0_1152 = arith.constant 0 : index
    %1386 = vector.load %arg7[%c11_1150, %c0_1151, %c0_1152] : memref<36x2x256xf32, #tpu.memory_space<vmem>>, vector<1x2x256xf32>
    %1387 = vector.shape_cast %1386 : vector<1x2x256xf32> to vector<2x256xf32>
    %c5_1153 = arith.constant 5 : index
    %c11_1154 = arith.constant 11 : index
    %1388 = memref.load %arg2[%c5_1153, %c11_1154] : memref<8x36xf32, #tpu.memory_space<smem>>
    %1389 = vector.broadcast %1388 : f32 to vector<2x256xf32>
    %1390 = arith.mulf %1387, %1389 : vector<2x256xf32>
    %1391 = arith.addf %1385, %1390 : vector<2x256xf32>
    %c12_1155 = arith.constant 12 : index
    %c0_1156 = arith.constant 0 : index
    %c0_1157 = arith.constant 0 : index
    %1392 = vector.load %arg7[%c12_1155, %c0_1156, %c0_1157] : memref<36x2x256xf32, #tpu.memory_space<vmem>>, vector<1x2x256xf32>
    %1393 = vector.shape_cast %1392 : vector<1x2x256xf32> to vector<2x256xf32>
    %c5_1158 = arith.constant 5 : index
    %c12_1159 = arith.constant 12 : index
    %1394 = memref.load %arg2[%c5_1158, %c12_1159] : memref<8x36xf32, #tpu.memory_space<smem>>
    %1395 = vector.broadcast %1394 : f32 to vector<2x256xf32>
    %1396 = arith.mulf %1393, %1395 : vector<2x256xf32>
    %1397 = arith.addf %1391, %1396 : vector<2x256xf32>
    %c13_1160 = arith.constant 13 : index
    %c0_1161 = arith.constant 0 : index
    %c0_1162 = arith.constant 0 : index
    %1398 = vector.load %arg7[%c13_1160, %c0_1161, %c0_1162] : memref<36x2x256xf32, #tpu.memory_space<vmem>>, vector<1x2x256xf32>
    %1399 = vector.shape_cast %1398 : vector<1x2x256xf32> to vector<2x256xf32>
    %c5_1163 = arith.constant 5 : index
    %c13_1164 = arith.constant 13 : index
    %1400 = memref.load %arg2[%c5_1163, %c13_1164] : memref<8x36xf32, #tpu.memory_space<smem>>
    %1401 = vector.broadcast %1400 : f32 to vector<2x256xf32>
    %1402 = arith.mulf %1399, %1401 : vector<2x256xf32>
    %1403 = arith.addf %1397, %1402 : vector<2x256xf32>
    %c14_1165 = arith.constant 14 : index
    %c0_1166 = arith.constant 0 : index
    %c0_1167 = arith.constant 0 : index
    %1404 = vector.load %arg7[%c14_1165, %c0_1166, %c0_1167] : memref<36x2x256xf32, #tpu.memory_space<vmem>>, vector<1x2x256xf32>
    %1405 = vector.shape_cast %1404 : vector<1x2x256xf32> to vector<2x256xf32>
    %c5_1168 = arith.constant 5 : index
    %c14_1169 = arith.constant 14 : index
    %1406 = memref.load %arg2[%c5_1168, %c14_1169] : memref<8x36xf32, #tpu.memory_space<smem>>
    %1407 = vector.broadcast %1406 : f32 to vector<2x256xf32>
    %1408 = arith.mulf %1405, %1407 : vector<2x256xf32>
    %1409 = arith.addf %1403, %1408 : vector<2x256xf32>
    %c15_1170 = arith.constant 15 : index
    %c0_1171 = arith.constant 0 : index
    %c0_1172 = arith.constant 0 : index
    %1410 = vector.load %arg7[%c15_1170, %c0_1171, %c0_1172] : memref<36x2x256xf32, #tpu.memory_space<vmem>>, vector<1x2x256xf32>
    %1411 = vector.shape_cast %1410 : vector<1x2x256xf32> to vector<2x256xf32>
    %c5_1173 = arith.constant 5 : index
    %c15_1174 = arith.constant 15 : index
    %1412 = memref.load %arg2[%c5_1173, %c15_1174] : memref<8x36xf32, #tpu.memory_space<smem>>
    %1413 = vector.broadcast %1412 : f32 to vector<2x256xf32>
    %1414 = arith.mulf %1411, %1413 : vector<2x256xf32>
    %1415 = arith.addf %1409, %1414 : vector<2x256xf32>
    %c16_1175 = arith.constant 16 : index
    %c0_1176 = arith.constant 0 : index
    %c0_1177 = arith.constant 0 : index
    %1416 = vector.load %arg7[%c16_1175, %c0_1176, %c0_1177] : memref<36x2x256xf32, #tpu.memory_space<vmem>>, vector<1x2x256xf32>
    %1417 = vector.shape_cast %1416 : vector<1x2x256xf32> to vector<2x256xf32>
    %c5_1178 = arith.constant 5 : index
    %c16_1179 = arith.constant 16 : index
    %1418 = memref.load %arg2[%c5_1178, %c16_1179] : memref<8x36xf32, #tpu.memory_space<smem>>
    %1419 = vector.broadcast %1418 : f32 to vector<2x256xf32>
    %1420 = arith.mulf %1417, %1419 : vector<2x256xf32>
    %1421 = arith.addf %1415, %1420 : vector<2x256xf32>
    %c17_1180 = arith.constant 17 : index
    %c0_1181 = arith.constant 0 : index
    %c0_1182 = arith.constant 0 : index
    %1422 = vector.load %arg7[%c17_1180, %c0_1181, %c0_1182] : memref<36x2x256xf32, #tpu.memory_space<vmem>>, vector<1x2x256xf32>
    %1423 = vector.shape_cast %1422 : vector<1x2x256xf32> to vector<2x256xf32>
    %c5_1183 = arith.constant 5 : index
    %c17_1184 = arith.constant 17 : index
    %1424 = memref.load %arg2[%c5_1183, %c17_1184] : memref<8x36xf32, #tpu.memory_space<smem>>
    %1425 = vector.broadcast %1424 : f32 to vector<2x256xf32>
    %1426 = arith.mulf %1423, %1425 : vector<2x256xf32>
    %1427 = arith.addf %1421, %1426 : vector<2x256xf32>
    %c18_1185 = arith.constant 18 : index
    %c0_1186 = arith.constant 0 : index
    %c0_1187 = arith.constant 0 : index
    %1428 = vector.load %arg7[%c18_1185, %c0_1186, %c0_1187] : memref<36x2x256xf32, #tpu.memory_space<vmem>>, vector<1x2x256xf32>
    %1429 = vector.shape_cast %1428 : vector<1x2x256xf32> to vector<2x256xf32>
    %c5_1188 = arith.constant 5 : index
    %c18_1189 = arith.constant 18 : index
    %1430 = memref.load %arg2[%c5_1188, %c18_1189] : memref<8x36xf32, #tpu.memory_space<smem>>
    %1431 = vector.broadcast %1430 : f32 to vector<2x256xf32>
    %1432 = arith.mulf %1429, %1431 : vector<2x256xf32>
    %1433 = arith.addf %1427, %1432 : vector<2x256xf32>
    %c19_1190 = arith.constant 19 : index
    %c0_1191 = arith.constant 0 : index
    %c0_1192 = arith.constant 0 : index
    %1434 = vector.load %arg7[%c19_1190, %c0_1191, %c0_1192] : memref<36x2x256xf32, #tpu.memory_space<vmem>>, vector<1x2x256xf32>
    %1435 = vector.shape_cast %1434 : vector<1x2x256xf32> to vector<2x256xf32>
    %c5_1193 = arith.constant 5 : index
    %c19_1194 = arith.constant 19 : index
    %1436 = memref.load %arg2[%c5_1193, %c19_1194] : memref<8x36xf32, #tpu.memory_space<smem>>
    %1437 = vector.broadcast %1436 : f32 to vector<2x256xf32>
    %1438 = arith.mulf %1435, %1437 : vector<2x256xf32>
    %1439 = arith.addf %1433, %1438 : vector<2x256xf32>
    %c20_1195 = arith.constant 20 : index
    %c0_1196 = arith.constant 0 : index
    %c0_1197 = arith.constant 0 : index
    %1440 = vector.load %arg7[%c20_1195, %c0_1196, %c0_1197] : memref<36x2x256xf32, #tpu.memory_space<vmem>>, vector<1x2x256xf32>
    %1441 = vector.shape_cast %1440 : vector<1x2x256xf32> to vector<2x256xf32>
    %c5_1198 = arith.constant 5 : index
    %c20_1199 = arith.constant 20 : index
    %1442 = memref.load %arg2[%c5_1198, %c20_1199] : memref<8x36xf32, #tpu.memory_space<smem>>
    %1443 = vector.broadcast %1442 : f32 to vector<2x256xf32>
    %1444 = arith.mulf %1441, %1443 : vector<2x256xf32>
    %1445 = arith.addf %1439, %1444 : vector<2x256xf32>
    %c21_1200 = arith.constant 21 : index
    %c0_1201 = arith.constant 0 : index
    %c0_1202 = arith.constant 0 : index
    %1446 = vector.load %arg7[%c21_1200, %c0_1201, %c0_1202] : memref<36x2x256xf32, #tpu.memory_space<vmem>>, vector<1x2x256xf32>
    %1447 = vector.shape_cast %1446 : vector<1x2x256xf32> to vector<2x256xf32>
    %c5_1203 = arith.constant 5 : index
    %c21_1204 = arith.constant 21 : index
    %1448 = memref.load %arg2[%c5_1203, %c21_1204] : memref<8x36xf32, #tpu.memory_space<smem>>
    %1449 = vector.broadcast %1448 : f32 to vector<2x256xf32>
    %1450 = arith.mulf %1447, %1449 : vector<2x256xf32>
    %1451 = arith.addf %1445, %1450 : vector<2x256xf32>
    %c22_1205 = arith.constant 22 : index
    %c0_1206 = arith.constant 0 : index
    %c0_1207 = arith.constant 0 : index
    %1452 = vector.load %arg7[%c22_1205, %c0_1206, %c0_1207] : memref<36x2x256xf32, #tpu.memory_space<vmem>>, vector<1x2x256xf32>
    %1453 = vector.shape_cast %1452 : vector<1x2x256xf32> to vector<2x256xf32>
    %c5_1208 = arith.constant 5 : index
    %c22_1209 = arith.constant 22 : index
    %1454 = memref.load %arg2[%c5_1208, %c22_1209] : memref<8x36xf32, #tpu.memory_space<smem>>
    %1455 = vector.broadcast %1454 : f32 to vector<2x256xf32>
    %1456 = arith.mulf %1453, %1455 : vector<2x256xf32>
    %1457 = arith.addf %1451, %1456 : vector<2x256xf32>
    %c23_1210 = arith.constant 23 : index
    %c0_1211 = arith.constant 0 : index
    %c0_1212 = arith.constant 0 : index
    %1458 = vector.load %arg7[%c23_1210, %c0_1211, %c0_1212] : memref<36x2x256xf32, #tpu.memory_space<vmem>>, vector<1x2x256xf32>
    %1459 = vector.shape_cast %1458 : vector<1x2x256xf32> to vector<2x256xf32>
    %c5_1213 = arith.constant 5 : index
    %c23_1214 = arith.constant 23 : index
    %1460 = memref.load %arg2[%c5_1213, %c23_1214] : memref<8x36xf32, #tpu.memory_space<smem>>
    %1461 = vector.broadcast %1460 : f32 to vector<2x256xf32>
    %1462 = arith.mulf %1459, %1461 : vector<2x256xf32>
    %1463 = arith.addf %1457, %1462 : vector<2x256xf32>
    %c24_1215 = arith.constant 24 : index
    %c0_1216 = arith.constant 0 : index
    %c0_1217 = arith.constant 0 : index
    %1464 = vector.load %arg7[%c24_1215, %c0_1216, %c0_1217] : memref<36x2x256xf32, #tpu.memory_space<vmem>>, vector<1x2x256xf32>
    %1465 = vector.shape_cast %1464 : vector<1x2x256xf32> to vector<2x256xf32>
    %c5_1218 = arith.constant 5 : index
    %c24_1219 = arith.constant 24 : index
    %1466 = memref.load %arg2[%c5_1218, %c24_1219] : memref<8x36xf32, #tpu.memory_space<smem>>
    %1467 = vector.broadcast %1466 : f32 to vector<2x256xf32>
    %1468 = arith.mulf %1465, %1467 : vector<2x256xf32>
    %1469 = arith.addf %1463, %1468 : vector<2x256xf32>
    %c25_1220 = arith.constant 25 : index
    %c0_1221 = arith.constant 0 : index
    %c0_1222 = arith.constant 0 : index
    %1470 = vector.load %arg7[%c25_1220, %c0_1221, %c0_1222] : memref<36x2x256xf32, #tpu.memory_space<vmem>>, vector<1x2x256xf32>
    %1471 = vector.shape_cast %1470 : vector<1x2x256xf32> to vector<2x256xf32>
    %c5_1223 = arith.constant 5 : index
    %c25_1224 = arith.constant 25 : index
    %1472 = memref.load %arg2[%c5_1223, %c25_1224] : memref<8x36xf32, #tpu.memory_space<smem>>
    %1473 = vector.broadcast %1472 : f32 to vector<2x256xf32>
    %1474 = arith.mulf %1471, %1473 : vector<2x256xf32>
    %1475 = arith.addf %1469, %1474 : vector<2x256xf32>
    %c26_1225 = arith.constant 26 : index
    %c0_1226 = arith.constant 0 : index
    %c0_1227 = arith.constant 0 : index
    %1476 = vector.load %arg7[%c26_1225, %c0_1226, %c0_1227] : memref<36x2x256xf32, #tpu.memory_space<vmem>>, vector<1x2x256xf32>
    %1477 = vector.shape_cast %1476 : vector<1x2x256xf32> to vector<2x256xf32>
    %c5_1228 = arith.constant 5 : index
    %c26_1229 = arith.constant 26 : index
    %1478 = memref.load %arg2[%c5_1228, %c26_1229] : memref<8x36xf32, #tpu.memory_space<smem>>
    %1479 = vector.broadcast %1478 : f32 to vector<2x256xf32>
    %1480 = arith.mulf %1477, %1479 : vector<2x256xf32>
    %1481 = arith.addf %1475, %1480 : vector<2x256xf32>
    %c27_1230 = arith.constant 27 : index
    %c0_1231 = arith.constant 0 : index
    %c0_1232 = arith.constant 0 : index
    %1482 = vector.load %arg7[%c27_1230, %c0_1231, %c0_1232] : memref<36x2x256xf32, #tpu.memory_space<vmem>>, vector<1x2x256xf32>
    %1483 = vector.shape_cast %1482 : vector<1x2x256xf32> to vector<2x256xf32>
    %c5_1233 = arith.constant 5 : index
    %c27_1234 = arith.constant 27 : index
    %1484 = memref.load %arg2[%c5_1233, %c27_1234] : memref<8x36xf32, #tpu.memory_space<smem>>
    %1485 = vector.broadcast %1484 : f32 to vector<2x256xf32>
    %1486 = arith.mulf %1483, %1485 : vector<2x256xf32>
    %1487 = arith.addf %1481, %1486 : vector<2x256xf32>
    %c28_1235 = arith.constant 28 : index
    %c0_1236 = arith.constant 0 : index
    %c0_1237 = arith.constant 0 : index
    %1488 = vector.load %arg7[%c28_1235, %c0_1236, %c0_1237] : memref<36x2x256xf32, #tpu.memory_space<vmem>>, vector<1x2x256xf32>
    %1489 = vector.shape_cast %1488 : vector<1x2x256xf32> to vector<2x256xf32>
    %c5_1238 = arith.constant 5 : index
    %c28_1239 = arith.constant 28 : index
    %1490 = memref.load %arg2[%c5_1238, %c28_1239] : memref<8x36xf32, #tpu.memory_space<smem>>
    %1491 = vector.broadcast %1490 : f32 to vector<2x256xf32>
    %1492 = arith.mulf %1489, %1491 : vector<2x256xf32>
    %1493 = arith.addf %1487, %1492 : vector<2x256xf32>
    %c29_1240 = arith.constant 29 : index
    %c0_1241 = arith.constant 0 : index
    %c0_1242 = arith.constant 0 : index
    %1494 = vector.load %arg7[%c29_1240, %c0_1241, %c0_1242] : memref<36x2x256xf32, #tpu.memory_space<vmem>>, vector<1x2x256xf32>
    %1495 = vector.shape_cast %1494 : vector<1x2x256xf32> to vector<2x256xf32>
    %c5_1243 = arith.constant 5 : index
    %c29_1244 = arith.constant 29 : index
    %1496 = memref.load %arg2[%c5_1243, %c29_1244] : memref<8x36xf32, #tpu.memory_space<smem>>
    %1497 = vector.broadcast %1496 : f32 to vector<2x256xf32>
    %1498 = arith.mulf %1495, %1497 : vector<2x256xf32>
    %1499 = arith.addf %1493, %1498 : vector<2x256xf32>
    %c30_1245 = arith.constant 30 : index
    %c0_1246 = arith.constant 0 : index
    %c0_1247 = arith.constant 0 : index
    %1500 = vector.load %arg7[%c30_1245, %c0_1246, %c0_1247] : memref<36x2x256xf32, #tpu.memory_space<vmem>>, vector<1x2x256xf32>
    %1501 = vector.shape_cast %1500 : vector<1x2x256xf32> to vector<2x256xf32>
    %c5_1248 = arith.constant 5 : index
    %c30_1249 = arith.constant 30 : index
    %1502 = memref.load %arg2[%c5_1248, %c30_1249] : memref<8x36xf32, #tpu.memory_space<smem>>
    %1503 = vector.broadcast %1502 : f32 to vector<2x256xf32>
    %1504 = arith.mulf %1501, %1503 : vector<2x256xf32>
    %1505 = arith.addf %1499, %1504 : vector<2x256xf32>
    %c31_1250 = arith.constant 31 : index
    %c0_1251 = arith.constant 0 : index
    %c0_1252 = arith.constant 0 : index
    %1506 = vector.load %arg7[%c31_1250, %c0_1251, %c0_1252] : memref<36x2x256xf32, #tpu.memory_space<vmem>>, vector<1x2x256xf32>
    %1507 = vector.shape_cast %1506 : vector<1x2x256xf32> to vector<2x256xf32>
    %c5_1253 = arith.constant 5 : index
    %c31_1254 = arith.constant 31 : index
    %1508 = memref.load %arg2[%c5_1253, %c31_1254] : memref<8x36xf32, #tpu.memory_space<smem>>
    %1509 = vector.broadcast %1508 : f32 to vector<2x256xf32>
    %1510 = arith.mulf %1507, %1509 : vector<2x256xf32>
    %1511 = arith.addf %1505, %1510 : vector<2x256xf32>
    %c32_1255 = arith.constant 32 : index
    %c0_1256 = arith.constant 0 : index
    %c0_1257 = arith.constant 0 : index
    %1512 = vector.load %arg7[%c32_1255, %c0_1256, %c0_1257] : memref<36x2x256xf32, #tpu.memory_space<vmem>>, vector<1x2x256xf32>
    %1513 = vector.shape_cast %1512 : vector<1x2x256xf32> to vector<2x256xf32>
    %c5_1258 = arith.constant 5 : index
    %c32_1259 = arith.constant 32 : index
    %1514 = memref.load %arg2[%c5_1258, %c32_1259] : memref<8x36xf32, #tpu.memory_space<smem>>
    %1515 = vector.broadcast %1514 : f32 to vector<2x256xf32>
    %1516 = arith.mulf %1513, %1515 : vector<2x256xf32>
    %1517 = arith.addf %1511, %1516 : vector<2x256xf32>
    %c33_1260 = arith.constant 33 : index
    %c0_1261 = arith.constant 0 : index
    %c0_1262 = arith.constant 0 : index
    %1518 = vector.load %arg7[%c33_1260, %c0_1261, %c0_1262] : memref<36x2x256xf32, #tpu.memory_space<vmem>>, vector<1x2x256xf32>
    %1519 = vector.shape_cast %1518 : vector<1x2x256xf32> to vector<2x256xf32>
    %c5_1263 = arith.constant 5 : index
    %c33_1264 = arith.constant 33 : index
    %1520 = memref.load %arg2[%c5_1263, %c33_1264] : memref<8x36xf32, #tpu.memory_space<smem>>
    %1521 = vector.broadcast %1520 : f32 to vector<2x256xf32>
    %1522 = arith.mulf %1519, %1521 : vector<2x256xf32>
    %1523 = arith.addf %1517, %1522 : vector<2x256xf32>
    %c34_1265 = arith.constant 34 : index
    %c0_1266 = arith.constant 0 : index
    %c0_1267 = arith.constant 0 : index
    %1524 = vector.load %arg7[%c34_1265, %c0_1266, %c0_1267] : memref<36x2x256xf32, #tpu.memory_space<vmem>>, vector<1x2x256xf32>
    %1525 = vector.shape_cast %1524 : vector<1x2x256xf32> to vector<2x256xf32>
    %c5_1268 = arith.constant 5 : index
    %c34_1269 = arith.constant 34 : index
    %1526 = memref.load %arg2[%c5_1268, %c34_1269] : memref<8x36xf32, #tpu.memory_space<smem>>
    %1527 = vector.broadcast %1526 : f32 to vector<2x256xf32>
    %1528 = arith.mulf %1525, %1527 : vector<2x256xf32>
    %1529 = arith.addf %1523, %1528 : vector<2x256xf32>
    %c35_1270 = arith.constant 35 : index
    %c0_1271 = arith.constant 0 : index
    %c0_1272 = arith.constant 0 : index
    %1530 = vector.load %arg7[%c35_1270, %c0_1271, %c0_1272] : memref<36x2x256xf32, #tpu.memory_space<vmem>>, vector<1x2x256xf32>
    %1531 = vector.shape_cast %1530 : vector<1x2x256xf32> to vector<2x256xf32>
    %c5_1273 = arith.constant 5 : index
    %c35_1274 = arith.constant 35 : index
    %1532 = memref.load %arg2[%c5_1273, %c35_1274] : memref<8x36xf32, #tpu.memory_space<smem>>
    %1533 = vector.broadcast %1532 : f32 to vector<2x256xf32>
    %1534 = arith.mulf %1531, %1533 : vector<2x256xf32>
    %1535 = arith.addf %1529, %1534 : vector<2x256xf32>
    %c5_1275 = arith.constant 5 : index
    %1536 = memref.load %arg3[%c5_1275] : memref<8xf32, #tpu.memory_space<smem>>
    %1537 = vector.broadcast %1536 : f32 to vector<2x256xf32>
    %1538 = arith.addf %1535, %1537 : vector<2x256xf32>
    %cst_1276 = arith.constant 0.000000e+00 : f32
    %1539 = vector.broadcast %cst_1276 : f32 to vector<2x256xf32>
    %1540 = arith.maximumf %1538, %1539 : vector<2x256xf32>
    %c0_1277 = arith.constant 0 : index
    %c1280 = arith.constant 1280 : index
    %1541 = vector.load %arg8[%c0_1277, %c1280] : memref<2x2048xf32, #tpu.memory_space<vmem>>, vector<2x256xf32>
    tpu.vector_store %arg8[%c0_1277, %c1280], %1540 {strides = array<i32>} : memref<2x2048xf32, #tpu.memory_space<vmem>>, vector<2x256xf32>,
    %c0_1278 = arith.constant 0 : index
    %c0_1279 = arith.constant 0 : index
    %c0_1280 = arith.constant 0 : index
    %1542 = vector.load %arg7[%c0_1278, %c0_1279, %c0_1280] : memref<36x2x256xf32, #tpu.memory_space<vmem>>, vector<1x2x256xf32>
    %1543 = vector.shape_cast %1542 : vector<1x2x256xf32> to vector<2x256xf32>
    %c6_1281 = arith.constant 6 : index
    %c0_1282 = arith.constant 0 : index
    %1544 = memref.load %arg2[%c6_1281, %c0_1282] : memref<8x36xf32, #tpu.memory_space<smem>>
    %1545 = vector.broadcast %1544 : f32 to vector<2x256xf32>
    %1546 = arith.mulf %1543, %1545 : vector<2x256xf32>
    %c1_1283 = arith.constant 1 : index
    %c0_1284 = arith.constant 0 : index
    %c0_1285 = arith.constant 0 : index
    %1547 = vector.load %arg7[%c1_1283, %c0_1284, %c0_1285] : memref<36x2x256xf32, #tpu.memory_space<vmem>>, vector<1x2x256xf32>
    %1548 = vector.shape_cast %1547 : vector<1x2x256xf32> to vector<2x256xf32>
    %c6_1286 = arith.constant 6 : index
    %c1_1287 = arith.constant 1 : index
    %1549 = memref.load %arg2[%c6_1286, %c1_1287] : memref<8x36xf32, #tpu.memory_space<smem>>
    %1550 = vector.broadcast %1549 : f32 to vector<2x256xf32>
    %1551 = arith.mulf %1548, %1550 : vector<2x256xf32>
    %1552 = arith.addf %1546, %1551 : vector<2x256xf32>
    %c2_1288 = arith.constant 2 : index
    %c0_1289 = arith.constant 0 : index
    %c0_1290 = arith.constant 0 : index
    %1553 = vector.load %arg7[%c2_1288, %c0_1289, %c0_1290] : memref<36x2x256xf32, #tpu.memory_space<vmem>>, vector<1x2x256xf32>
    %1554 = vector.shape_cast %1553 : vector<1x2x256xf32> to vector<2x256xf32>
    %c6_1291 = arith.constant 6 : index
    %c2_1292 = arith.constant 2 : index
    %1555 = memref.load %arg2[%c6_1291, %c2_1292] : memref<8x36xf32, #tpu.memory_space<smem>>
    %1556 = vector.broadcast %1555 : f32 to vector<2x256xf32>
    %1557 = arith.mulf %1554, %1556 : vector<2x256xf32>
    %1558 = arith.addf %1552, %1557 : vector<2x256xf32>
    %c3_1293 = arith.constant 3 : index
    %c0_1294 = arith.constant 0 : index
    %c0_1295 = arith.constant 0 : index
    %1559 = vector.load %arg7[%c3_1293, %c0_1294, %c0_1295] : memref<36x2x256xf32, #tpu.memory_space<vmem>>, vector<1x2x256xf32>
    %1560 = vector.shape_cast %1559 : vector<1x2x256xf32> to vector<2x256xf32>
    %c6_1296 = arith.constant 6 : index
    %c3_1297 = arith.constant 3 : index
    %1561 = memref.load %arg2[%c6_1296, %c3_1297] : memref<8x36xf32, #tpu.memory_space<smem>>
    %1562 = vector.broadcast %1561 : f32 to vector<2x256xf32>
    %1563 = arith.mulf %1560, %1562 : vector<2x256xf32>
    %1564 = arith.addf %1558, %1563 : vector<2x256xf32>
    %c4_1298 = arith.constant 4 : index
    %c0_1299 = arith.constant 0 : index
    %c0_1300 = arith.constant 0 : index
    %1565 = vector.load %arg7[%c4_1298, %c0_1299, %c0_1300] : memref<36x2x256xf32, #tpu.memory_space<vmem>>, vector<1x2x256xf32>
    %1566 = vector.shape_cast %1565 : vector<1x2x256xf32> to vector<2x256xf32>
    %c6_1301 = arith.constant 6 : index
    %c4_1302 = arith.constant 4 : index
    %1567 = memref.load %arg2[%c6_1301, %c4_1302] : memref<8x36xf32, #tpu.memory_space<smem>>
    %1568 = vector.broadcast %1567 : f32 to vector<2x256xf32>
    %1569 = arith.mulf %1566, %1568 : vector<2x256xf32>
    %1570 = arith.addf %1564, %1569 : vector<2x256xf32>
    %c5_1303 = arith.constant 5 : index
    %c0_1304 = arith.constant 0 : index
    %c0_1305 = arith.constant 0 : index
    %1571 = vector.load %arg7[%c5_1303, %c0_1304, %c0_1305] : memref<36x2x256xf32, #tpu.memory_space<vmem>>, vector<1x2x256xf32>
    %1572 = vector.shape_cast %1571 : vector<1x2x256xf32> to vector<2x256xf32>
    %c6_1306 = arith.constant 6 : index
    %c5_1307 = arith.constant 5 : index
    %1573 = memref.load %arg2[%c6_1306, %c5_1307] : memref<8x36xf32, #tpu.memory_space<smem>>
    %1574 = vector.broadcast %1573 : f32 to vector<2x256xf32>
    %1575 = arith.mulf %1572, %1574 : vector<2x256xf32>
    %1576 = arith.addf %1570, %1575 : vector<2x256xf32>
    %c6_1308 = arith.constant 6 : index
    %c0_1309 = arith.constant 0 : index
    %c0_1310 = arith.constant 0 : index
    %1577 = vector.load %arg7[%c6_1308, %c0_1309, %c0_1310] : memref<36x2x256xf32, #tpu.memory_space<vmem>>, vector<1x2x256xf32>
    %1578 = vector.shape_cast %1577 : vector<1x2x256xf32> to vector<2x256xf32>
    %c6_1311 = arith.constant 6 : index
    %c6_1312 = arith.constant 6 : index
    %1579 = memref.load %arg2[%c6_1311, %c6_1312] : memref<8x36xf32, #tpu.memory_space<smem>>
    %1580 = vector.broadcast %1579 : f32 to vector<2x256xf32>
    %1581 = arith.mulf %1578, %1580 : vector<2x256xf32>
    %1582 = arith.addf %1576, %1581 : vector<2x256xf32>
    %c7_1313 = arith.constant 7 : index
    %c0_1314 = arith.constant 0 : index
    %c0_1315 = arith.constant 0 : index
    %1583 = vector.load %arg7[%c7_1313, %c0_1314, %c0_1315] : memref<36x2x256xf32, #tpu.memory_space<vmem>>, vector<1x2x256xf32>
    %1584 = vector.shape_cast %1583 : vector<1x2x256xf32> to vector<2x256xf32>
    %c6_1316 = arith.constant 6 : index
    %c7_1317 = arith.constant 7 : index
    %1585 = memref.load %arg2[%c6_1316, %c7_1317] : memref<8x36xf32, #tpu.memory_space<smem>>
    %1586 = vector.broadcast %1585 : f32 to vector<2x256xf32>
    %1587 = arith.mulf %1584, %1586 : vector<2x256xf32>
    %1588 = arith.addf %1582, %1587 : vector<2x256xf32>
    %c8_1318 = arith.constant 8 : index
    %c0_1319 = arith.constant 0 : index
    %c0_1320 = arith.constant 0 : index
    %1589 = vector.load %arg7[%c8_1318, %c0_1319, %c0_1320] : memref<36x2x256xf32, #tpu.memory_space<vmem>>, vector<1x2x256xf32>
    %1590 = vector.shape_cast %1589 : vector<1x2x256xf32> to vector<2x256xf32>
    %c6_1321 = arith.constant 6 : index
    %c8_1322 = arith.constant 8 : index
    %1591 = memref.load %arg2[%c6_1321, %c8_1322] : memref<8x36xf32, #tpu.memory_space<smem>>
    %1592 = vector.broadcast %1591 : f32 to vector<2x256xf32>
    %1593 = arith.mulf %1590, %1592 : vector<2x256xf32>
    %1594 = arith.addf %1588, %1593 : vector<2x256xf32>
    %c9_1323 = arith.constant 9 : index
    %c0_1324 = arith.constant 0 : index
    %c0_1325 = arith.constant 0 : index
    %1595 = vector.load %arg7[%c9_1323, %c0_1324, %c0_1325] : memref<36x2x256xf32, #tpu.memory_space<vmem>>, vector<1x2x256xf32>
    %1596 = vector.shape_cast %1595 : vector<1x2x256xf32> to vector<2x256xf32>
    %c6_1326 = arith.constant 6 : index
    %c9_1327 = arith.constant 9 : index
    %1597 = memref.load %arg2[%c6_1326, %c9_1327] : memref<8x36xf32, #tpu.memory_space<smem>>
    %1598 = vector.broadcast %1597 : f32 to vector<2x256xf32>
    %1599 = arith.mulf %1596, %1598 : vector<2x256xf32>
    %1600 = arith.addf %1594, %1599 : vector<2x256xf32>
    %c10_1328 = arith.constant 10 : index
    %c0_1329 = arith.constant 0 : index
    %c0_1330 = arith.constant 0 : index
    %1601 = vector.load %arg7[%c10_1328, %c0_1329, %c0_1330] : memref<36x2x256xf32, #tpu.memory_space<vmem>>, vector<1x2x256xf32>
    %1602 = vector.shape_cast %1601 : vector<1x2x256xf32> to vector<2x256xf32>
    %c6_1331 = arith.constant 6 : index
    %c10_1332 = arith.constant 10 : index
    %1603 = memref.load %arg2[%c6_1331, %c10_1332] : memref<8x36xf32, #tpu.memory_space<smem>>
    %1604 = vector.broadcast %1603 : f32 to vector<2x256xf32>
    %1605 = arith.mulf %1602, %1604 : vector<2x256xf32>
    %1606 = arith.addf %1600, %1605 : vector<2x256xf32>
    %c11_1333 = arith.constant 11 : index
    %c0_1334 = arith.constant 0 : index
    %c0_1335 = arith.constant 0 : index
    %1607 = vector.load %arg7[%c11_1333, %c0_1334, %c0_1335] : memref<36x2x256xf32, #tpu.memory_space<vmem>>, vector<1x2x256xf32>
    %1608 = vector.shape_cast %1607 : vector<1x2x256xf32> to vector<2x256xf32>
    %c6_1336 = arith.constant 6 : index
    %c11_1337 = arith.constant 11 : index
    %1609 = memref.load %arg2[%c6_1336, %c11_1337] : memref<8x36xf32, #tpu.memory_space<smem>>
    %1610 = vector.broadcast %1609 : f32 to vector<2x256xf32>
    %1611 = arith.mulf %1608, %1610 : vector<2x256xf32>
    %1612 = arith.addf %1606, %1611 : vector<2x256xf32>
    %c12_1338 = arith.constant 12 : index
    %c0_1339 = arith.constant 0 : index
    %c0_1340 = arith.constant 0 : index
    %1613 = vector.load %arg7[%c12_1338, %c0_1339, %c0_1340] : memref<36x2x256xf32, #tpu.memory_space<vmem>>, vector<1x2x256xf32>
    %1614 = vector.shape_cast %1613 : vector<1x2x256xf32> to vector<2x256xf32>
    %c6_1341 = arith.constant 6 : index
    %c12_1342 = arith.constant 12 : index
    %1615 = memref.load %arg2[%c6_1341, %c12_1342] : memref<8x36xf32, #tpu.memory_space<smem>>
    %1616 = vector.broadcast %1615 : f32 to vector<2x256xf32>
    %1617 = arith.mulf %1614, %1616 : vector<2x256xf32>
    %1618 = arith.addf %1612, %1617 : vector<2x256xf32>
    %c13_1343 = arith.constant 13 : index
    %c0_1344 = arith.constant 0 : index
    %c0_1345 = arith.constant 0 : index
    %1619 = vector.load %arg7[%c13_1343, %c0_1344, %c0_1345] : memref<36x2x256xf32, #tpu.memory_space<vmem>>, vector<1x2x256xf32>
    %1620 = vector.shape_cast %1619 : vector<1x2x256xf32> to vector<2x256xf32>
    %c6_1346 = arith.constant 6 : index
    %c13_1347 = arith.constant 13 : index
    %1621 = memref.load %arg2[%c6_1346, %c13_1347] : memref<8x36xf32, #tpu.memory_space<smem>>
    %1622 = vector.broadcast %1621 : f32 to vector<2x256xf32>
    %1623 = arith.mulf %1620, %1622 : vector<2x256xf32>
    %1624 = arith.addf %1618, %1623 : vector<2x256xf32>
    %c14_1348 = arith.constant 14 : index
    %c0_1349 = arith.constant 0 : index
    %c0_1350 = arith.constant 0 : index
    %1625 = vector.load %arg7[%c14_1348, %c0_1349, %c0_1350] : memref<36x2x256xf32, #tpu.memory_space<vmem>>, vector<1x2x256xf32>
    %1626 = vector.shape_cast %1625 : vector<1x2x256xf32> to vector<2x256xf32>
    %c6_1351 = arith.constant 6 : index
    %c14_1352 = arith.constant 14 : index
    %1627 = memref.load %arg2[%c6_1351, %c14_1352] : memref<8x36xf32, #tpu.memory_space<smem>>
    %1628 = vector.broadcast %1627 : f32 to vector<2x256xf32>
    %1629 = arith.mulf %1626, %1628 : vector<2x256xf32>
    %1630 = arith.addf %1624, %1629 : vector<2x256xf32>
    %c15_1353 = arith.constant 15 : index
    %c0_1354 = arith.constant 0 : index
    %c0_1355 = arith.constant 0 : index
    %1631 = vector.load %arg7[%c15_1353, %c0_1354, %c0_1355] : memref<36x2x256xf32, #tpu.memory_space<vmem>>, vector<1x2x256xf32>
    %1632 = vector.shape_cast %1631 : vector<1x2x256xf32> to vector<2x256xf32>
    %c6_1356 = arith.constant 6 : index
    %c15_1357 = arith.constant 15 : index
    %1633 = memref.load %arg2[%c6_1356, %c15_1357] : memref<8x36xf32, #tpu.memory_space<smem>>
    %1634 = vector.broadcast %1633 : f32 to vector<2x256xf32>
    %1635 = arith.mulf %1632, %1634 : vector<2x256xf32>
    %1636 = arith.addf %1630, %1635 : vector<2x256xf32>
    %c16_1358 = arith.constant 16 : index
    %c0_1359 = arith.constant 0 : index
    %c0_1360 = arith.constant 0 : index
    %1637 = vector.load %arg7[%c16_1358, %c0_1359, %c0_1360] : memref<36x2x256xf32, #tpu.memory_space<vmem>>, vector<1x2x256xf32>
    %1638 = vector.shape_cast %1637 : vector<1x2x256xf32> to vector<2x256xf32>
    %c6_1361 = arith.constant 6 : index
    %c16_1362 = arith.constant 16 : index
    %1639 = memref.load %arg2[%c6_1361, %c16_1362] : memref<8x36xf32, #tpu.memory_space<smem>>
    %1640 = vector.broadcast %1639 : f32 to vector<2x256xf32>
    %1641 = arith.mulf %1638, %1640 : vector<2x256xf32>
    %1642 = arith.addf %1636, %1641 : vector<2x256xf32>
    %c17_1363 = arith.constant 17 : index
    %c0_1364 = arith.constant 0 : index
    %c0_1365 = arith.constant 0 : index
    %1643 = vector.load %arg7[%c17_1363, %c0_1364, %c0_1365] : memref<36x2x256xf32, #tpu.memory_space<vmem>>, vector<1x2x256xf32>
    %1644 = vector.shape_cast %1643 : vector<1x2x256xf32> to vector<2x256xf32>
    %c6_1366 = arith.constant 6 : index
    %c17_1367 = arith.constant 17 : index
    %1645 = memref.load %arg2[%c6_1366, %c17_1367] : memref<8x36xf32, #tpu.memory_space<smem>>
    %1646 = vector.broadcast %1645 : f32 to vector<2x256xf32>
    %1647 = arith.mulf %1644, %1646 : vector<2x256xf32>
    %1648 = arith.addf %1642, %1647 : vector<2x256xf32>
    %c18_1368 = arith.constant 18 : index
    %c0_1369 = arith.constant 0 : index
    %c0_1370 = arith.constant 0 : index
    %1649 = vector.load %arg7[%c18_1368, %c0_1369, %c0_1370] : memref<36x2x256xf32, #tpu.memory_space<vmem>>, vector<1x2x256xf32>
    %1650 = vector.shape_cast %1649 : vector<1x2x256xf32> to vector<2x256xf32>
    %c6_1371 = arith.constant 6 : index
    %c18_1372 = arith.constant 18 : index
    %1651 = memref.load %arg2[%c6_1371, %c18_1372] : memref<8x36xf32, #tpu.memory_space<smem>>
    %1652 = vector.broadcast %1651 : f32 to vector<2x256xf32>
    %1653 = arith.mulf %1650, %1652 : vector<2x256xf32>
    %1654 = arith.addf %1648, %1653 : vector<2x256xf32>
    %c19_1373 = arith.constant 19 : index
    %c0_1374 = arith.constant 0 : index
    %c0_1375 = arith.constant 0 : index
    %1655 = vector.load %arg7[%c19_1373, %c0_1374, %c0_1375] : memref<36x2x256xf32, #tpu.memory_space<vmem>>, vector<1x2x256xf32>
    %1656 = vector.shape_cast %1655 : vector<1x2x256xf32> to vector<2x256xf32>
    %c6_1376 = arith.constant 6 : index
    %c19_1377 = arith.constant 19 : index
    %1657 = memref.load %arg2[%c6_1376, %c19_1377] : memref<8x36xf32, #tpu.memory_space<smem>>
    %1658 = vector.broadcast %1657 : f32 to vector<2x256xf32>
    %1659 = arith.mulf %1656, %1658 : vector<2x256xf32>
    %1660 = arith.addf %1654, %1659 : vector<2x256xf32>
    %c20_1378 = arith.constant 20 : index
    %c0_1379 = arith.constant 0 : index
    %c0_1380 = arith.constant 0 : index
    %1661 = vector.load %arg7[%c20_1378, %c0_1379, %c0_1380] : memref<36x2x256xf32, #tpu.memory_space<vmem>>, vector<1x2x256xf32>
    %1662 = vector.shape_cast %1661 : vector<1x2x256xf32> to vector<2x256xf32>
    %c6_1381 = arith.constant 6 : index
    %c20_1382 = arith.constant 20 : index
    %1663 = memref.load %arg2[%c6_1381, %c20_1382] : memref<8x36xf32, #tpu.memory_space<smem>>
    %1664 = vector.broadcast %1663 : f32 to vector<2x256xf32>
    %1665 = arith.mulf %1662, %1664 : vector<2x256xf32>
    %1666 = arith.addf %1660, %1665 : vector<2x256xf32>
    %c21_1383 = arith.constant 21 : index
    %c0_1384 = arith.constant 0 : index
    %c0_1385 = arith.constant 0 : index
    %1667 = vector.load %arg7[%c21_1383, %c0_1384, %c0_1385] : memref<36x2x256xf32, #tpu.memory_space<vmem>>, vector<1x2x256xf32>
    %1668 = vector.shape_cast %1667 : vector<1x2x256xf32> to vector<2x256xf32>
    %c6_1386 = arith.constant 6 : index
    %c21_1387 = arith.constant 21 : index
    %1669 = memref.load %arg2[%c6_1386, %c21_1387] : memref<8x36xf32, #tpu.memory_space<smem>>
    %1670 = vector.broadcast %1669 : f32 to vector<2x256xf32>
    %1671 = arith.mulf %1668, %1670 : vector<2x256xf32>
    %1672 = arith.addf %1666, %1671 : vector<2x256xf32>
    %c22_1388 = arith.constant 22 : index
    %c0_1389 = arith.constant 0 : index
    %c0_1390 = arith.constant 0 : index
    %1673 = vector.load %arg7[%c22_1388, %c0_1389, %c0_1390] : memref<36x2x256xf32, #tpu.memory_space<vmem>>, vector<1x2x256xf32>
    %1674 = vector.shape_cast %1673 : vector<1x2x256xf32> to vector<2x256xf32>
    %c6_1391 = arith.constant 6 : index
    %c22_1392 = arith.constant 22 : index
    %1675 = memref.load %arg2[%c6_1391, %c22_1392] : memref<8x36xf32, #tpu.memory_space<smem>>
    %1676 = vector.broadcast %1675 : f32 to vector<2x256xf32>
    %1677 = arith.mulf %1674, %1676 : vector<2x256xf32>
    %1678 = arith.addf %1672, %1677 : vector<2x256xf32>
    %c23_1393 = arith.constant 23 : index
    %c0_1394 = arith.constant 0 : index
    %c0_1395 = arith.constant 0 : index
    %1679 = vector.load %arg7[%c23_1393, %c0_1394, %c0_1395] : memref<36x2x256xf32, #tpu.memory_space<vmem>>, vector<1x2x256xf32>
    %1680 = vector.shape_cast %1679 : vector<1x2x256xf32> to vector<2x256xf32>
    %c6_1396 = arith.constant 6 : index
    %c23_1397 = arith.constant 23 : index
    %1681 = memref.load %arg2[%c6_1396, %c23_1397] : memref<8x36xf32, #tpu.memory_space<smem>>
    %1682 = vector.broadcast %1681 : f32 to vector<2x256xf32>
    %1683 = arith.mulf %1680, %1682 : vector<2x256xf32>
    %1684 = arith.addf %1678, %1683 : vector<2x256xf32>
    %c24_1398 = arith.constant 24 : index
    %c0_1399 = arith.constant 0 : index
    %c0_1400 = arith.constant 0 : index
    %1685 = vector.load %arg7[%c24_1398, %c0_1399, %c0_1400] : memref<36x2x256xf32, #tpu.memory_space<vmem>>, vector<1x2x256xf32>
    %1686 = vector.shape_cast %1685 : vector<1x2x256xf32> to vector<2x256xf32>
    %c6_1401 = arith.constant 6 : index
    %c24_1402 = arith.constant 24 : index
    %1687 = memref.load %arg2[%c6_1401, %c24_1402] : memref<8x36xf32, #tpu.memory_space<smem>>
    %1688 = vector.broadcast %1687 : f32 to vector<2x256xf32>
    %1689 = arith.mulf %1686, %1688 : vector<2x256xf32>
    %1690 = arith.addf %1684, %1689 : vector<2x256xf32>
    %c25_1403 = arith.constant 25 : index
    %c0_1404 = arith.constant 0 : index
    %c0_1405 = arith.constant 0 : index
    %1691 = vector.load %arg7[%c25_1403, %c0_1404, %c0_1405] : memref<36x2x256xf32, #tpu.memory_space<vmem>>, vector<1x2x256xf32>
    %1692 = vector.shape_cast %1691 : vector<1x2x256xf32> to vector<2x256xf32>
    %c6_1406 = arith.constant 6 : index
    %c25_1407 = arith.constant 25 : index
    %1693 = memref.load %arg2[%c6_1406, %c25_1407] : memref<8x36xf32, #tpu.memory_space<smem>>
    %1694 = vector.broadcast %1693 : f32 to vector<2x256xf32>
    %1695 = arith.mulf %1692, %1694 : vector<2x256xf32>
    %1696 = arith.addf %1690, %1695 : vector<2x256xf32>
    %c26_1408 = arith.constant 26 : index
    %c0_1409 = arith.constant 0 : index
    %c0_1410 = arith.constant 0 : index
    %1697 = vector.load %arg7[%c26_1408, %c0_1409, %c0_1410] : memref<36x2x256xf32, #tpu.memory_space<vmem>>, vector<1x2x256xf32>
    %1698 = vector.shape_cast %1697 : vector<1x2x256xf32> to vector<2x256xf32>
    %c6_1411 = arith.constant 6 : index
    %c26_1412 = arith.constant 26 : index
    %1699 = memref.load %arg2[%c6_1411, %c26_1412] : memref<8x36xf32, #tpu.memory_space<smem>>
    %1700 = vector.broadcast %1699 : f32 to vector<2x256xf32>
    %1701 = arith.mulf %1698, %1700 : vector<2x256xf32>
    %1702 = arith.addf %1696, %1701 : vector<2x256xf32>
    %c27_1413 = arith.constant 27 : index
    %c0_1414 = arith.constant 0 : index
    %c0_1415 = arith.constant 0 : index
    %1703 = vector.load %arg7[%c27_1413, %c0_1414, %c0_1415] : memref<36x2x256xf32, #tpu.memory_space<vmem>>, vector<1x2x256xf32>
    %1704 = vector.shape_cast %1703 : vector<1x2x256xf32> to vector<2x256xf32>
    %c6_1416 = arith.constant 6 : index
    %c27_1417 = arith.constant 27 : index
    %1705 = memref.load %arg2[%c6_1416, %c27_1417] : memref<8x36xf32, #tpu.memory_space<smem>>
    %1706 = vector.broadcast %1705 : f32 to vector<2x256xf32>
    %1707 = arith.mulf %1704, %1706 : vector<2x256xf32>
    %1708 = arith.addf %1702, %1707 : vector<2x256xf32>
    %c28_1418 = arith.constant 28 : index
    %c0_1419 = arith.constant 0 : index
    %c0_1420 = arith.constant 0 : index
    %1709 = vector.load %arg7[%c28_1418, %c0_1419, %c0_1420] : memref<36x2x256xf32, #tpu.memory_space<vmem>>, vector<1x2x256xf32>
    %1710 = vector.shape_cast %1709 : vector<1x2x256xf32> to vector<2x256xf32>
    %c6_1421 = arith.constant 6 : index
    %c28_1422 = arith.constant 28 : index
    %1711 = memref.load %arg2[%c6_1421, %c28_1422] : memref<8x36xf32, #tpu.memory_space<smem>>
    %1712 = vector.broadcast %1711 : f32 to vector<2x256xf32>
    %1713 = arith.mulf %1710, %1712 : vector<2x256xf32>
    %1714 = arith.addf %1708, %1713 : vector<2x256xf32>
    %c29_1423 = arith.constant 29 : index
    %c0_1424 = arith.constant 0 : index
    %c0_1425 = arith.constant 0 : index
    %1715 = vector.load %arg7[%c29_1423, %c0_1424, %c0_1425] : memref<36x2x256xf32, #tpu.memory_space<vmem>>, vector<1x2x256xf32>
    %1716 = vector.shape_cast %1715 : vector<1x2x256xf32> to vector<2x256xf32>
    %c6_1426 = arith.constant 6 : index
    %c29_1427 = arith.constant 29 : index
    %1717 = memref.load %arg2[%c6_1426, %c29_1427] : memref<8x36xf32, #tpu.memory_space<smem>>
    %1718 = vector.broadcast %1717 : f32 to vector<2x256xf32>
    %1719 = arith.mulf %1716, %1718 : vector<2x256xf32>
    %1720 = arith.addf %1714, %1719 : vector<2x256xf32>
    %c30_1428 = arith.constant 30 : index
    %c0_1429 = arith.constant 0 : index
    %c0_1430 = arith.constant 0 : index
    %1721 = vector.load %arg7[%c30_1428, %c0_1429, %c0_1430] : memref<36x2x256xf32, #tpu.memory_space<vmem>>, vector<1x2x256xf32>
    %1722 = vector.shape_cast %1721 : vector<1x2x256xf32> to vector<2x256xf32>
    %c6_1431 = arith.constant 6 : index
    %c30_1432 = arith.constant 30 : index
    %1723 = memref.load %arg2[%c6_1431, %c30_1432] : memref<8x36xf32, #tpu.memory_space<smem>>
    %1724 = vector.broadcast %1723 : f32 to vector<2x256xf32>
    %1725 = arith.mulf %1722, %1724 : vector<2x256xf32>
    %1726 = arith.addf %1720, %1725 : vector<2x256xf32>
    %c31_1433 = arith.constant 31 : index
    %c0_1434 = arith.constant 0 : index
    %c0_1435 = arith.constant 0 : index
    %1727 = vector.load %arg7[%c31_1433, %c0_1434, %c0_1435] : memref<36x2x256xf32, #tpu.memory_space<vmem>>, vector<1x2x256xf32>
    %1728 = vector.shape_cast %1727 : vector<1x2x256xf32> to vector<2x256xf32>
    %c6_1436 = arith.constant 6 : index
    %c31_1437 = arith.constant 31 : index
    %1729 = memref.load %arg2[%c6_1436, %c31_1437] : memref<8x36xf32, #tpu.memory_space<smem>>
    %1730 = vector.broadcast %1729 : f32 to vector<2x256xf32>
    %1731 = arith.mulf %1728, %1730 : vector<2x256xf32>
    %1732 = arith.addf %1726, %1731 : vector<2x256xf32>
    %c32_1438 = arith.constant 32 : index
    %c0_1439 = arith.constant 0 : index
    %c0_1440 = arith.constant 0 : index
    %1733 = vector.load %arg7[%c32_1438, %c0_1439, %c0_1440] : memref<36x2x256xf32, #tpu.memory_space<vmem>>, vector<1x2x256xf32>
    %1734 = vector.shape_cast %1733 : vector<1x2x256xf32> to vector<2x256xf32>
    %c6_1441 = arith.constant 6 : index
    %c32_1442 = arith.constant 32 : index
    %1735 = memref.load %arg2[%c6_1441, %c32_1442] : memref<8x36xf32, #tpu.memory_space<smem>>
    %1736 = vector.broadcast %1735 : f32 to vector<2x256xf32>
    %1737 = arith.mulf %1734, %1736 : vector<2x256xf32>
    %1738 = arith.addf %1732, %1737 : vector<2x256xf32>
    %c33_1443 = arith.constant 33 : index
    %c0_1444 = arith.constant 0 : index
    %c0_1445 = arith.constant 0 : index
    %1739 = vector.load %arg7[%c33_1443, %c0_1444, %c0_1445] : memref<36x2x256xf32, #tpu.memory_space<vmem>>, vector<1x2x256xf32>
    %1740 = vector.shape_cast %1739 : vector<1x2x256xf32> to vector<2x256xf32>
    %c6_1446 = arith.constant 6 : index
    %c33_1447 = arith.constant 33 : index
    %1741 = memref.load %arg2[%c6_1446, %c33_1447] : memref<8x36xf32, #tpu.memory_space<smem>>
    %1742 = vector.broadcast %1741 : f32 to vector<2x256xf32>
    %1743 = arith.mulf %1740, %1742 : vector<2x256xf32>
    %1744 = arith.addf %1738, %1743 : vector<2x256xf32>
    %c34_1448 = arith.constant 34 : index
    %c0_1449 = arith.constant 0 : index
    %c0_1450 = arith.constant 0 : index
    %1745 = vector.load %arg7[%c34_1448, %c0_1449, %c0_1450] : memref<36x2x256xf32, #tpu.memory_space<vmem>>, vector<1x2x256xf32>
    %1746 = vector.shape_cast %1745 : vector<1x2x256xf32> to vector<2x256xf32>
    %c6_1451 = arith.constant 6 : index
    %c34_1452 = arith.constant 34 : index
    %1747 = memref.load %arg2[%c6_1451, %c34_1452] : memref<8x36xf32, #tpu.memory_space<smem>>
    %1748 = vector.broadcast %1747 : f32 to vector<2x256xf32>
    %1749 = arith.mulf %1746, %1748 : vector<2x256xf32>
    %1750 = arith.addf %1744, %1749 : vector<2x256xf32>
    %c35_1453 = arith.constant 35 : index
    %c0_1454 = arith.constant 0 : index
    %c0_1455 = arith.constant 0 : index
    %1751 = vector.load %arg7[%c35_1453, %c0_1454, %c0_1455] : memref<36x2x256xf32, #tpu.memory_space<vmem>>, vector<1x2x256xf32>
    %1752 = vector.shape_cast %1751 : vector<1x2x256xf32> to vector<2x256xf32>
    %c6_1456 = arith.constant 6 : index
    %c35_1457 = arith.constant 35 : index
    %1753 = memref.load %arg2[%c6_1456, %c35_1457] : memref<8x36xf32, #tpu.memory_space<smem>>
    %1754 = vector.broadcast %1753 : f32 to vector<2x256xf32>
    %1755 = arith.mulf %1752, %1754 : vector<2x256xf32>
    %1756 = arith.addf %1750, %1755 : vector<2x256xf32>
    %c6_1458 = arith.constant 6 : index
    %1757 = memref.load %arg3[%c6_1458] : memref<8xf32, #tpu.memory_space<smem>>
    %1758 = vector.broadcast %1757 : f32 to vector<2x256xf32>
    %1759 = arith.addf %1756, %1758 : vector<2x256xf32>
    %cst_1459 = arith.constant 0.000000e+00 : f32
    %1760 = vector.broadcast %cst_1459 : f32 to vector<2x256xf32>
    %1761 = arith.maximumf %1759, %1760 : vector<2x256xf32>
    %c0_1460 = arith.constant 0 : index
    %c1536 = arith.constant 1536 : index
    %1762 = vector.load %arg8[%c0_1460, %c1536] : memref<2x2048xf32, #tpu.memory_space<vmem>>, vector<2x256xf32>
    tpu.vector_store %arg8[%c0_1460, %c1536], %1761 {strides = array<i32>} : memref<2x2048xf32, #tpu.memory_space<vmem>>, vector<2x256xf32>,
    %c0_1461 = arith.constant 0 : index
    %c0_1462 = arith.constant 0 : index
    %c0_1463 = arith.constant 0 : index
    %1763 = vector.load %arg7[%c0_1461, %c0_1462, %c0_1463] : memref<36x2x256xf32, #tpu.memory_space<vmem>>, vector<1x2x256xf32>
    %1764 = vector.shape_cast %1763 : vector<1x2x256xf32> to vector<2x256xf32>
    %c7_1464 = arith.constant 7 : index
    %c0_1465 = arith.constant 0 : index
    %1765 = memref.load %arg2[%c7_1464, %c0_1465] : memref<8x36xf32, #tpu.memory_space<smem>>
    %1766 = vector.broadcast %1765 : f32 to vector<2x256xf32>
    %1767 = arith.mulf %1764, %1766 : vector<2x256xf32>
    %c1_1466 = arith.constant 1 : index
    %c0_1467 = arith.constant 0 : index
    %c0_1468 = arith.constant 0 : index
    %1768 = vector.load %arg7[%c1_1466, %c0_1467, %c0_1468] : memref<36x2x256xf32, #tpu.memory_space<vmem>>, vector<1x2x256xf32>
    %1769 = vector.shape_cast %1768 : vector<1x2x256xf32> to vector<2x256xf32>
    %c7_1469 = arith.constant 7 : index
    %c1_1470 = arith.constant 1 : index
    %1770 = memref.load %arg2[%c7_1469, %c1_1470] : memref<8x36xf32, #tpu.memory_space<smem>>
    %1771 = vector.broadcast %1770 : f32 to vector<2x256xf32>
    %1772 = arith.mulf %1769, %1771 : vector<2x256xf32>
    %1773 = arith.addf %1767, %1772 : vector<2x256xf32>
    %c2_1471 = arith.constant 2 : index
    %c0_1472 = arith.constant 0 : index
    %c0_1473 = arith.constant 0 : index
    %1774 = vector.load %arg7[%c2_1471, %c0_1472, %c0_1473] : memref<36x2x256xf32, #tpu.memory_space<vmem>>, vector<1x2x256xf32>
    %1775 = vector.shape_cast %1774 : vector<1x2x256xf32> to vector<2x256xf32>
    %c7_1474 = arith.constant 7 : index
    %c2_1475 = arith.constant 2 : index
    %1776 = memref.load %arg2[%c7_1474, %c2_1475] : memref<8x36xf32, #tpu.memory_space<smem>>
    %1777 = vector.broadcast %1776 : f32 to vector<2x256xf32>
    %1778 = arith.mulf %1775, %1777 : vector<2x256xf32>
    %1779 = arith.addf %1773, %1778 : vector<2x256xf32>
    %c3_1476 = arith.constant 3 : index
    %c0_1477 = arith.constant 0 : index
    %c0_1478 = arith.constant 0 : index
    %1780 = vector.load %arg7[%c3_1476, %c0_1477, %c0_1478] : memref<36x2x256xf32, #tpu.memory_space<vmem>>, vector<1x2x256xf32>
    %1781 = vector.shape_cast %1780 : vector<1x2x256xf32> to vector<2x256xf32>
    %c7_1479 = arith.constant 7 : index
    %c3_1480 = arith.constant 3 : index
    %1782 = memref.load %arg2[%c7_1479, %c3_1480] : memref<8x36xf32, #tpu.memory_space<smem>>
    %1783 = vector.broadcast %1782 : f32 to vector<2x256xf32>
    %1784 = arith.mulf %1781, %1783 : vector<2x256xf32>
    %1785 = arith.addf %1779, %1784 : vector<2x256xf32>
    %c4_1481 = arith.constant 4 : index
    %c0_1482 = arith.constant 0 : index
    %c0_1483 = arith.constant 0 : index
    %1786 = vector.load %arg7[%c4_1481, %c0_1482, %c0_1483] : memref<36x2x256xf32, #tpu.memory_space<vmem>>, vector<1x2x256xf32>
    %1787 = vector.shape_cast %1786 : vector<1x2x256xf32> to vector<2x256xf32>
    %c7_1484 = arith.constant 7 : index
    %c4_1485 = arith.constant 4 : index
    %1788 = memref.load %arg2[%c7_1484, %c4_1485] : memref<8x36xf32, #tpu.memory_space<smem>>
    %1789 = vector.broadcast %1788 : f32 to vector<2x256xf32>
    %1790 = arith.mulf %1787, %1789 : vector<2x256xf32>
    %1791 = arith.addf %1785, %1790 : vector<2x256xf32>
    %c5_1486 = arith.constant 5 : index
    %c0_1487 = arith.constant 0 : index
    %c0_1488 = arith.constant 0 : index
    %1792 = vector.load %arg7[%c5_1486, %c0_1487, %c0_1488] : memref<36x2x256xf32, #tpu.memory_space<vmem>>, vector<1x2x256xf32>
    %1793 = vector.shape_cast %1792 : vector<1x2x256xf32> to vector<2x256xf32>
    %c7_1489 = arith.constant 7 : index
    %c5_1490 = arith.constant 5 : index
    %1794 = memref.load %arg2[%c7_1489, %c5_1490] : memref<8x36xf32, #tpu.memory_space<smem>>
    %1795 = vector.broadcast %1794 : f32 to vector<2x256xf32>
    %1796 = arith.mulf %1793, %1795 : vector<2x256xf32>
    %1797 = arith.addf %1791, %1796 : vector<2x256xf32>
    %c6_1491 = arith.constant 6 : index
    %c0_1492 = arith.constant 0 : index
    %c0_1493 = arith.constant 0 : index
    %1798 = vector.load %arg7[%c6_1491, %c0_1492, %c0_1493] : memref<36x2x256xf32, #tpu.memory_space<vmem>>, vector<1x2x256xf32>
    %1799 = vector.shape_cast %1798 : vector<1x2x256xf32> to vector<2x256xf32>
    %c7_1494 = arith.constant 7 : index
    %c6_1495 = arith.constant 6 : index
    %1800 = memref.load %arg2[%c7_1494, %c6_1495] : memref<8x36xf32, #tpu.memory_space<smem>>
    %1801 = vector.broadcast %1800 : f32 to vector<2x256xf32>
    %1802 = arith.mulf %1799, %1801 : vector<2x256xf32>
    %1803 = arith.addf %1797, %1802 : vector<2x256xf32>
    %c7_1496 = arith.constant 7 : index
    %c0_1497 = arith.constant 0 : index
    %c0_1498 = arith.constant 0 : index
    %1804 = vector.load %arg7[%c7_1496, %c0_1497, %c0_1498] : memref<36x2x256xf32, #tpu.memory_space<vmem>>, vector<1x2x256xf32>
    %1805 = vector.shape_cast %1804 : vector<1x2x256xf32> to vector<2x256xf32>
    %c7_1499 = arith.constant 7 : index
    %c7_1500 = arith.constant 7 : index
    %1806 = memref.load %arg2[%c7_1499, %c7_1500] : memref<8x36xf32, #tpu.memory_space<smem>>
    %1807 = vector.broadcast %1806 : f32 to vector<2x256xf32>
    %1808 = arith.mulf %1805, %1807 : vector<2x256xf32>
    %1809 = arith.addf %1803, %1808 : vector<2x256xf32>
    %c8_1501 = arith.constant 8 : index
    %c0_1502 = arith.constant 0 : index
    %c0_1503 = arith.constant 0 : index
    %1810 = vector.load %arg7[%c8_1501, %c0_1502, %c0_1503] : memref<36x2x256xf32, #tpu.memory_space<vmem>>, vector<1x2x256xf32>
    %1811 = vector.shape_cast %1810 : vector<1x2x256xf32> to vector<2x256xf32>
    %c7_1504 = arith.constant 7 : index
    %c8_1505 = arith.constant 8 : index
    %1812 = memref.load %arg2[%c7_1504, %c8_1505] : memref<8x36xf32, #tpu.memory_space<smem>>
    %1813 = vector.broadcast %1812 : f32 to vector<2x256xf32>
    %1814 = arith.mulf %1811, %1813 : vector<2x256xf32>
    %1815 = arith.addf %1809, %1814 : vector<2x256xf32>
    %c9_1506 = arith.constant 9 : index
    %c0_1507 = arith.constant 0 : index
    %c0_1508 = arith.constant 0 : index
    %1816 = vector.load %arg7[%c9_1506, %c0_1507, %c0_1508] : memref<36x2x256xf32, #tpu.memory_space<vmem>>, vector<1x2x256xf32>
    %1817 = vector.shape_cast %1816 : vector<1x2x256xf32> to vector<2x256xf32>
    %c7_1509 = arith.constant 7 : index
    %c9_1510 = arith.constant 9 : index
    %1818 = memref.load %arg2[%c7_1509, %c9_1510] : memref<8x36xf32, #tpu.memory_space<smem>>
    %1819 = vector.broadcast %1818 : f32 to vector<2x256xf32>
    %1820 = arith.mulf %1817, %1819 : vector<2x256xf32>
    %1821 = arith.addf %1815, %1820 : vector<2x256xf32>
    %c10_1511 = arith.constant 10 : index
    %c0_1512 = arith.constant 0 : index
    %c0_1513 = arith.constant 0 : index
    %1822 = vector.load %arg7[%c10_1511, %c0_1512, %c0_1513] : memref<36x2x256xf32, #tpu.memory_space<vmem>>, vector<1x2x256xf32>
    %1823 = vector.shape_cast %1822 : vector<1x2x256xf32> to vector<2x256xf32>
    %c7_1514 = arith.constant 7 : index
    %c10_1515 = arith.constant 10 : index
    %1824 = memref.load %arg2[%c7_1514, %c10_1515] : memref<8x36xf32, #tpu.memory_space<smem>>
    %1825 = vector.broadcast %1824 : f32 to vector<2x256xf32>
    %1826 = arith.mulf %1823, %1825 : vector<2x256xf32>
    %1827 = arith.addf %1821, %1826 : vector<2x256xf32>
    %c11_1516 = arith.constant 11 : index
    %c0_1517 = arith.constant 0 : index
    %c0_1518 = arith.constant 0 : index
    %1828 = vector.load %arg7[%c11_1516, %c0_1517, %c0_1518] : memref<36x2x256xf32, #tpu.memory_space<vmem>>, vector<1x2x256xf32>
    %1829 = vector.shape_cast %1828 : vector<1x2x256xf32> to vector<2x256xf32>
    %c7_1519 = arith.constant 7 : index
    %c11_1520 = arith.constant 11 : index
    %1830 = memref.load %arg2[%c7_1519, %c11_1520] : memref<8x36xf32, #tpu.memory_space<smem>>
    %1831 = vector.broadcast %1830 : f32 to vector<2x256xf32>
    %1832 = arith.mulf %1829, %1831 : vector<2x256xf32>
    %1833 = arith.addf %1827, %1832 : vector<2x256xf32>
    %c12_1521 = arith.constant 12 : index
    %c0_1522 = arith.constant 0 : index
    %c0_1523 = arith.constant 0 : index
    %1834 = vector.load %arg7[%c12_1521, %c0_1522, %c0_1523] : memref<36x2x256xf32, #tpu.memory_space<vmem>>, vector<1x2x256xf32>
    %1835 = vector.shape_cast %1834 : vector<1x2x256xf32> to vector<2x256xf32>
    %c7_1524 = arith.constant 7 : index
    %c12_1525 = arith.constant 12 : index
    %1836 = memref.load %arg2[%c7_1524, %c12_1525] : memref<8x36xf32, #tpu.memory_space<smem>>
    %1837 = vector.broadcast %1836 : f32 to vector<2x256xf32>
    %1838 = arith.mulf %1835, %1837 : vector<2x256xf32>
    %1839 = arith.addf %1833, %1838 : vector<2x256xf32>
    %c13_1526 = arith.constant 13 : index
    %c0_1527 = arith.constant 0 : index
    %c0_1528 = arith.constant 0 : index
    %1840 = vector.load %arg7[%c13_1526, %c0_1527, %c0_1528] : memref<36x2x256xf32, #tpu.memory_space<vmem>>, vector<1x2x256xf32>
    %1841 = vector.shape_cast %1840 : vector<1x2x256xf32> to vector<2x256xf32>
    %c7_1529 = arith.constant 7 : index
    %c13_1530 = arith.constant 13 : index
    %1842 = memref.load %arg2[%c7_1529, %c13_1530] : memref<8x36xf32, #tpu.memory_space<smem>>
    %1843 = vector.broadcast %1842 : f32 to vector<2x256xf32>
    %1844 = arith.mulf %1841, %1843 : vector<2x256xf32>
    %1845 = arith.addf %1839, %1844 : vector<2x256xf32>
    %c14_1531 = arith.constant 14 : index
    %c0_1532 = arith.constant 0 : index
    %c0_1533 = arith.constant 0 : index
    %1846 = vector.load %arg7[%c14_1531, %c0_1532, %c0_1533] : memref<36x2x256xf32, #tpu.memory_space<vmem>>, vector<1x2x256xf32>
    %1847 = vector.shape_cast %1846 : vector<1x2x256xf32> to vector<2x256xf32>
    %c7_1534 = arith.constant 7 : index
    %c14_1535 = arith.constant 14 : index
    %1848 = memref.load %arg2[%c7_1534, %c14_1535] : memref<8x36xf32, #tpu.memory_space<smem>>
    %1849 = vector.broadcast %1848 : f32 to vector<2x256xf32>
    %1850 = arith.mulf %1847, %1849 : vector<2x256xf32>
    %1851 = arith.addf %1845, %1850 : vector<2x256xf32>
    %c15_1536 = arith.constant 15 : index
    %c0_1537 = arith.constant 0 : index
    %c0_1538 = arith.constant 0 : index
    %1852 = vector.load %arg7[%c15_1536, %c0_1537, %c0_1538] : memref<36x2x256xf32, #tpu.memory_space<vmem>>, vector<1x2x256xf32>
    %1853 = vector.shape_cast %1852 : vector<1x2x256xf32> to vector<2x256xf32>
    %c7_1539 = arith.constant 7 : index
    %c15_1540 = arith.constant 15 : index
    %1854 = memref.load %arg2[%c7_1539, %c15_1540] : memref<8x36xf32, #tpu.memory_space<smem>>
    %1855 = vector.broadcast %1854 : f32 to vector<2x256xf32>
    %1856 = arith.mulf %1853, %1855 : vector<2x256xf32>
    %1857 = arith.addf %1851, %1856 : vector<2x256xf32>
    %c16_1541 = arith.constant 16 : index
    %c0_1542 = arith.constant 0 : index
    %c0_1543 = arith.constant 0 : index
    %1858 = vector.load %arg7[%c16_1541, %c0_1542, %c0_1543] : memref<36x2x256xf32, #tpu.memory_space<vmem>>, vector<1x2x256xf32>
    %1859 = vector.shape_cast %1858 : vector<1x2x256xf32> to vector<2x256xf32>
    %c7_1544 = arith.constant 7 : index
    %c16_1545 = arith.constant 16 : index
    %1860 = memref.load %arg2[%c7_1544, %c16_1545] : memref<8x36xf32, #tpu.memory_space<smem>>
    %1861 = vector.broadcast %1860 : f32 to vector<2x256xf32>
    %1862 = arith.mulf %1859, %1861 : vector<2x256xf32>
    %1863 = arith.addf %1857, %1862 : vector<2x256xf32>
    %c17_1546 = arith.constant 17 : index
    %c0_1547 = arith.constant 0 : index
    %c0_1548 = arith.constant 0 : index
    %1864 = vector.load %arg7[%c17_1546, %c0_1547, %c0_1548] : memref<36x2x256xf32, #tpu.memory_space<vmem>>, vector<1x2x256xf32>
    %1865 = vector.shape_cast %1864 : vector<1x2x256xf32> to vector<2x256xf32>
    %c7_1549 = arith.constant 7 : index
    %c17_1550 = arith.constant 17 : index
    %1866 = memref.load %arg2[%c7_1549, %c17_1550] : memref<8x36xf32, #tpu.memory_space<smem>>
    %1867 = vector.broadcast %1866 : f32 to vector<2x256xf32>
    %1868 = arith.mulf %1865, %1867 : vector<2x256xf32>
    %1869 = arith.addf %1863, %1868 : vector<2x256xf32>
    %c18_1551 = arith.constant 18 : index
    %c0_1552 = arith.constant 0 : index
    %c0_1553 = arith.constant 0 : index
    %1870 = vector.load %arg7[%c18_1551, %c0_1552, %c0_1553] : memref<36x2x256xf32, #tpu.memory_space<vmem>>, vector<1x2x256xf32>
    %1871 = vector.shape_cast %1870 : vector<1x2x256xf32> to vector<2x256xf32>
    %c7_1554 = arith.constant 7 : index
    %c18_1555 = arith.constant 18 : index
    %1872 = memref.load %arg2[%c7_1554, %c18_1555] : memref<8x36xf32, #tpu.memory_space<smem>>
    %1873 = vector.broadcast %1872 : f32 to vector<2x256xf32>
    %1874 = arith.mulf %1871, %1873 : vector<2x256xf32>
    %1875 = arith.addf %1869, %1874 : vector<2x256xf32>
    %c19_1556 = arith.constant 19 : index
    %c0_1557 = arith.constant 0 : index
    %c0_1558 = arith.constant 0 : index
    %1876 = vector.load %arg7[%c19_1556, %c0_1557, %c0_1558] : memref<36x2x256xf32, #tpu.memory_space<vmem>>, vector<1x2x256xf32>
    %1877 = vector.shape_cast %1876 : vector<1x2x256xf32> to vector<2x256xf32>
    %c7_1559 = arith.constant 7 : index
    %c19_1560 = arith.constant 19 : index
    %1878 = memref.load %arg2[%c7_1559, %c19_1560] : memref<8x36xf32, #tpu.memory_space<smem>>
    %1879 = vector.broadcast %1878 : f32 to vector<2x256xf32>
    %1880 = arith.mulf %1877, %1879 : vector<2x256xf32>
    %1881 = arith.addf %1875, %1880 : vector<2x256xf32>
    %c20_1561 = arith.constant 20 : index
    %c0_1562 = arith.constant 0 : index
    %c0_1563 = arith.constant 0 : index
    %1882 = vector.load %arg7[%c20_1561, %c0_1562, %c0_1563] : memref<36x2x256xf32, #tpu.memory_space<vmem>>, vector<1x2x256xf32>
    %1883 = vector.shape_cast %1882 : vector<1x2x256xf32> to vector<2x256xf32>
    %c7_1564 = arith.constant 7 : index
    %c20_1565 = arith.constant 20 : index
    %1884 = memref.load %arg2[%c7_1564, %c20_1565] : memref<8x36xf32, #tpu.memory_space<smem>>
    %1885 = vector.broadcast %1884 : f32 to vector<2x256xf32>
    %1886 = arith.mulf %1883, %1885 : vector<2x256xf32>
    %1887 = arith.addf %1881, %1886 : vector<2x256xf32>
    %c21_1566 = arith.constant 21 : index
    %c0_1567 = arith.constant 0 : index
    %c0_1568 = arith.constant 0 : index
    %1888 = vector.load %arg7[%c21_1566, %c0_1567, %c0_1568] : memref<36x2x256xf32, #tpu.memory_space<vmem>>, vector<1x2x256xf32>
    %1889 = vector.shape_cast %1888 : vector<1x2x256xf32> to vector<2x256xf32>
    %c7_1569 = arith.constant 7 : index
    %c21_1570 = arith.constant 21 : index
    %1890 = memref.load %arg2[%c7_1569, %c21_1570] : memref<8x36xf32, #tpu.memory_space<smem>>
    %1891 = vector.broadcast %1890 : f32 to vector<2x256xf32>
    %1892 = arith.mulf %1889, %1891 : vector<2x256xf32>
    %1893 = arith.addf %1887, %1892 : vector<2x256xf32>
    %c22_1571 = arith.constant 22 : index
    %c0_1572 = arith.constant 0 : index
    %c0_1573 = arith.constant 0 : index
    %1894 = vector.load %arg7[%c22_1571, %c0_1572, %c0_1573] : memref<36x2x256xf32, #tpu.memory_space<vmem>>, vector<1x2x256xf32>
    %1895 = vector.shape_cast %1894 : vector<1x2x256xf32> to vector<2x256xf32>
    %c7_1574 = arith.constant 7 : index
    %c22_1575 = arith.constant 22 : index
    %1896 = memref.load %arg2[%c7_1574, %c22_1575] : memref<8x36xf32, #tpu.memory_space<smem>>
    %1897 = vector.broadcast %1896 : f32 to vector<2x256xf32>
    %1898 = arith.mulf %1895, %1897 : vector<2x256xf32>
    %1899 = arith.addf %1893, %1898 : vector<2x256xf32>
    %c23_1576 = arith.constant 23 : index
    %c0_1577 = arith.constant 0 : index
    %c0_1578 = arith.constant 0 : index
    %1900 = vector.load %arg7[%c23_1576, %c0_1577, %c0_1578] : memref<36x2x256xf32, #tpu.memory_space<vmem>>, vector<1x2x256xf32>
    %1901 = vector.shape_cast %1900 : vector<1x2x256xf32> to vector<2x256xf32>
    %c7_1579 = arith.constant 7 : index
    %c23_1580 = arith.constant 23 : index
    %1902 = memref.load %arg2[%c7_1579, %c23_1580] : memref<8x36xf32, #tpu.memory_space<smem>>
    %1903 = vector.broadcast %1902 : f32 to vector<2x256xf32>
    %1904 = arith.mulf %1901, %1903 : vector<2x256xf32>
    %1905 = arith.addf %1899, %1904 : vector<2x256xf32>
    %c24_1581 = arith.constant 24 : index
    %c0_1582 = arith.constant 0 : index
    %c0_1583 = arith.constant 0 : index
    %1906 = vector.load %arg7[%c24_1581, %c0_1582, %c0_1583] : memref<36x2x256xf32, #tpu.memory_space<vmem>>, vector<1x2x256xf32>
    %1907 = vector.shape_cast %1906 : vector<1x2x256xf32> to vector<2x256xf32>
    %c7_1584 = arith.constant 7 : index
    %c24_1585 = arith.constant 24 : index
    %1908 = memref.load %arg2[%c7_1584, %c24_1585] : memref<8x36xf32, #tpu.memory_space<smem>>
    %1909 = vector.broadcast %1908 : f32 to vector<2x256xf32>
    %1910 = arith.mulf %1907, %1909 : vector<2x256xf32>
    %1911 = arith.addf %1905, %1910 : vector<2x256xf32>
    %c25_1586 = arith.constant 25 : index
    %c0_1587 = arith.constant 0 : index
    %c0_1588 = arith.constant 0 : index
    %1912 = vector.load %arg7[%c25_1586, %c0_1587, %c0_1588] : memref<36x2x256xf32, #tpu.memory_space<vmem>>, vector<1x2x256xf32>
    %1913 = vector.shape_cast %1912 : vector<1x2x256xf32> to vector<2x256xf32>
    %c7_1589 = arith.constant 7 : index
    %c25_1590 = arith.constant 25 : index
    %1914 = memref.load %arg2[%c7_1589, %c25_1590] : memref<8x36xf32, #tpu.memory_space<smem>>
    %1915 = vector.broadcast %1914 : f32 to vector<2x256xf32>
    %1916 = arith.mulf %1913, %1915 : vector<2x256xf32>
    %1917 = arith.addf %1911, %1916 : vector<2x256xf32>
    %c26_1591 = arith.constant 26 : index
    %c0_1592 = arith.constant 0 : index
    %c0_1593 = arith.constant 0 : index
    %1918 = vector.load %arg7[%c26_1591, %c0_1592, %c0_1593] : memref<36x2x256xf32, #tpu.memory_space<vmem>>, vector<1x2x256xf32>
    %1919 = vector.shape_cast %1918 : vector<1x2x256xf32> to vector<2x256xf32>
    %c7_1594 = arith.constant 7 : index
    %c26_1595 = arith.constant 26 : index
    %1920 = memref.load %arg2[%c7_1594, %c26_1595] : memref<8x36xf32, #tpu.memory_space<smem>>
    %1921 = vector.broadcast %1920 : f32 to vector<2x256xf32>
    %1922 = arith.mulf %1919, %1921 : vector<2x256xf32>
    %1923 = arith.addf %1917, %1922 : vector<2x256xf32>
    %c27_1596 = arith.constant 27 : index
    %c0_1597 = arith.constant 0 : index
    %c0_1598 = arith.constant 0 : index
    %1924 = vector.load %arg7[%c27_1596, %c0_1597, %c0_1598] : memref<36x2x256xf32, #tpu.memory_space<vmem>>, vector<1x2x256xf32>
    %1925 = vector.shape_cast %1924 : vector<1x2x256xf32> to vector<2x256xf32>
    %c7_1599 = arith.constant 7 : index
    %c27_1600 = arith.constant 27 : index
    %1926 = memref.load %arg2[%c7_1599, %c27_1600] : memref<8x36xf32, #tpu.memory_space<smem>>
    %1927 = vector.broadcast %1926 : f32 to vector<2x256xf32>
    %1928 = arith.mulf %1925, %1927 : vector<2x256xf32>
    %1929 = arith.addf %1923, %1928 : vector<2x256xf32>
    %c28_1601 = arith.constant 28 : index
    %c0_1602 = arith.constant 0 : index
    %c0_1603 = arith.constant 0 : index
    %1930 = vector.load %arg7[%c28_1601, %c0_1602, %c0_1603] : memref<36x2x256xf32, #tpu.memory_space<vmem>>, vector<1x2x256xf32>
    %1931 = vector.shape_cast %1930 : vector<1x2x256xf32> to vector<2x256xf32>
    %c7_1604 = arith.constant 7 : index
    %c28_1605 = arith.constant 28 : index
    %1932 = memref.load %arg2[%c7_1604, %c28_1605] : memref<8x36xf32, #tpu.memory_space<smem>>
    %1933 = vector.broadcast %1932 : f32 to vector<2x256xf32>
    %1934 = arith.mulf %1931, %1933 : vector<2x256xf32>
    %1935 = arith.addf %1929, %1934 : vector<2x256xf32>
    %c29_1606 = arith.constant 29 : index
    %c0_1607 = arith.constant 0 : index
    %c0_1608 = arith.constant 0 : index
    %1936 = vector.load %arg7[%c29_1606, %c0_1607, %c0_1608] : memref<36x2x256xf32, #tpu.memory_space<vmem>>, vector<1x2x256xf32>
    %1937 = vector.shape_cast %1936 : vector<1x2x256xf32> to vector<2x256xf32>
    %c7_1609 = arith.constant 7 : index
    %c29_1610 = arith.constant 29 : index
    %1938 = memref.load %arg2[%c7_1609, %c29_1610] : memref<8x36xf32, #tpu.memory_space<smem>>
    %1939 = vector.broadcast %1938 : f32 to vector<2x256xf32>
    %1940 = arith.mulf %1937, %1939 : vector<2x256xf32>
    %1941 = arith.addf %1935, %1940 : vector<2x256xf32>
    %c30_1611 = arith.constant 30 : index
    %c0_1612 = arith.constant 0 : index
    %c0_1613 = arith.constant 0 : index
    %1942 = vector.load %arg7[%c30_1611, %c0_1612, %c0_1613] : memref<36x2x256xf32, #tpu.memory_space<vmem>>, vector<1x2x256xf32>
    %1943 = vector.shape_cast %1942 : vector<1x2x256xf32> to vector<2x256xf32>
    %c7_1614 = arith.constant 7 : index
    %c30_1615 = arith.constant 30 : index
    %1944 = memref.load %arg2[%c7_1614, %c30_1615] : memref<8x36xf32, #tpu.memory_space<smem>>
    %1945 = vector.broadcast %1944 : f32 to vector<2x256xf32>
    %1946 = arith.mulf %1943, %1945 : vector<2x256xf32>
    %1947 = arith.addf %1941, %1946 : vector<2x256xf32>
    %c31_1616 = arith.constant 31 : index
    %c0_1617 = arith.constant 0 : index
    %c0_1618 = arith.constant 0 : index
    %1948 = vector.load %arg7[%c31_1616, %c0_1617, %c0_1618] : memref<36x2x256xf32, #tpu.memory_space<vmem>>, vector<1x2x256xf32>
    %1949 = vector.shape_cast %1948 : vector<1x2x256xf32> to vector<2x256xf32>
    %c7_1619 = arith.constant 7 : index
    %c31_1620 = arith.constant 31 : index
    %1950 = memref.load %arg2[%c7_1619, %c31_1620] : memref<8x36xf32, #tpu.memory_space<smem>>
    %1951 = vector.broadcast %1950 : f32 to vector<2x256xf32>
    %1952 = arith.mulf %1949, %1951 : vector<2x256xf32>
    %1953 = arith.addf %1947, %1952 : vector<2x256xf32>
    %c32_1621 = arith.constant 32 : index
    %c0_1622 = arith.constant 0 : index
    %c0_1623 = arith.constant 0 : index
    %1954 = vector.load %arg7[%c32_1621, %c0_1622, %c0_1623] : memref<36x2x256xf32, #tpu.memory_space<vmem>>, vector<1x2x256xf32>
    %1955 = vector.shape_cast %1954 : vector<1x2x256xf32> to vector<2x256xf32>
    %c7_1624 = arith.constant 7 : index
    %c32_1625 = arith.constant 32 : index
    %1956 = memref.load %arg2[%c7_1624, %c32_1625] : memref<8x36xf32, #tpu.memory_space<smem>>
    %1957 = vector.broadcast %1956 : f32 to vector<2x256xf32>
    %1958 = arith.mulf %1955, %1957 : vector<2x256xf32>
    %1959 = arith.addf %1953, %1958 : vector<2x256xf32>
    %c33_1626 = arith.constant 33 : index
    %c0_1627 = arith.constant 0 : index
    %c0_1628 = arith.constant 0 : index
    %1960 = vector.load %arg7[%c33_1626, %c0_1627, %c0_1628] : memref<36x2x256xf32, #tpu.memory_space<vmem>>, vector<1x2x256xf32>
    %1961 = vector.shape_cast %1960 : vector<1x2x256xf32> to vector<2x256xf32>
    %c7_1629 = arith.constant 7 : index
    %c33_1630 = arith.constant 33 : index
    %1962 = memref.load %arg2[%c7_1629, %c33_1630] : memref<8x36xf32, #tpu.memory_space<smem>>
    %1963 = vector.broadcast %1962 : f32 to vector<2x256xf32>
    %1964 = arith.mulf %1961, %1963 : vector<2x256xf32>
    %1965 = arith.addf %1959, %1964 : vector<2x256xf32>
    %c34_1631 = arith.constant 34 : index
    %c0_1632 = arith.constant 0 : index
    %c0_1633 = arith.constant 0 : index
    %1966 = vector.load %arg7[%c34_1631, %c0_1632, %c0_1633] : memref<36x2x256xf32, #tpu.memory_space<vmem>>, vector<1x2x256xf32>
    %1967 = vector.shape_cast %1966 : vector<1x2x256xf32> to vector<2x256xf32>
    %c7_1634 = arith.constant 7 : index
    %c34_1635 = arith.constant 34 : index
    %1968 = memref.load %arg2[%c7_1634, %c34_1635] : memref<8x36xf32, #tpu.memory_space<smem>>
    %1969 = vector.broadcast %1968 : f32 to vector<2x256xf32>
    %1970 = arith.mulf %1967, %1969 : vector<2x256xf32>
    %1971 = arith.addf %1965, %1970 : vector<2x256xf32>
    %c35_1636 = arith.constant 35 : index
    %c0_1637 = arith.constant 0 : index
    %c0_1638 = arith.constant 0 : index
    %1972 = vector.load %arg7[%c35_1636, %c0_1637, %c0_1638] : memref<36x2x256xf32, #tpu.memory_space<vmem>>, vector<1x2x256xf32>
    %1973 = vector.shape_cast %1972 : vector<1x2x256xf32> to vector<2x256xf32>
    %c7_1639 = arith.constant 7 : index
    %c35_1640 = arith.constant 35 : index
    %1974 = memref.load %arg2[%c7_1639, %c35_1640] : memref<8x36xf32, #tpu.memory_space<smem>>
    %1975 = vector.broadcast %1974 : f32 to vector<2x256xf32>
    %1976 = arith.mulf %1973, %1975 : vector<2x256xf32>
    %1977 = arith.addf %1971, %1976 : vector<2x256xf32>
    %c7_1641 = arith.constant 7 : index
    %1978 = memref.load %arg3[%c7_1641] : memref<8xf32, #tpu.memory_space<smem>>
    %1979 = vector.broadcast %1978 : f32 to vector<2x256xf32>
    %1980 = arith.addf %1977, %1979 : vector<2x256xf32>
    %cst_1642 = arith.constant 0.000000e+00 : f32
    %1981 = vector.broadcast %cst_1642 : f32 to vector<2x256xf32>
    %1982 = arith.maximumf %1980, %1981 : vector<2x256xf32>
    %c0_1643 = arith.constant 0 : index
    %c1792 = arith.constant 1792 : index
    %1983 = vector.load %arg8[%c0_1643, %c1792] : memref<2x2048xf32, #tpu.memory_space<vmem>>, vector<2x256xf32>
    tpu.vector_store %arg8[%c0_1643, %c1792], %1982 {strides = array<i32>} : memref<2x2048xf32, #tpu.memory_space<vmem>>, vector<2x256xf32>,
    %c0_1644 = arith.constant 0 : index
    %c0_1645 = arith.constant 0 : index
    %1984 = vector.load %arg8[%c0_1644, %c0_1645] : memref<2x2048xf32, #tpu.memory_space<vmem>>, vector<2x2048xf32>
    %c0_1646 = arith.constant 0 : index
    %c0_1647 = arith.constant 0 : index
    %1985 = vector.load %arg4[%c0_1646, %c0_1647] : memref<10x2048xf32, #tpu.memory_space<vmem>>, vector<10x2048xf32>
    %cst_1648 = arith.constant dense<0.000000e+00> : vector<2x10xf32>
    %1986 = tpu.matmul %1984, %1985, %cst_1648 {dimension_numbers = #tpu.dot_dimension_numbers<[1], [1], [0], [0], [0, 0, 1, 0], [], []>} : vector<2x2048xf32>, vector<10x2048xf32>, vector<2x10xf32> -> vector<2x10xf32>
    %c0_1649 = arith.constant 0 : index
    %c0_1650 = arith.constant 0 : index
    %1987 = vector.load %arg5[%c0_1649, %c0_1650] : memref<1x10xf32, #tpu.memory_space<vmem>>, vector<1x10xf32>
    %1988 = vector.broadcast %1987 : vector<1x10xf32> to vector<2x10xf32>
    %1989 = arith.addf %1986, %1988 : vector<2x10xf32>
    %c0_1651 = arith.constant 0 : index
    %c0_1652 = arith.constant 0 : index
    %1990 = vector.load %arg6[%c0_1651, %c0_1652] : memref<2x10xf32, #tpu.memory_space<vmem>>, vector<2x10xf32>
    tpu.vector_store %arg6[%c0_1651, %c0_1652], %1989 {strides = array<i32>} : memref<2x10xf32, #tpu.memory_space<vmem>>, vector<2x10xf32>,
    return
  }
  func.func @transform_0(%arg0: i32) -> (i32, i32, i32) {
    %c0_i32 = arith.constant 0 : i32
    %c0_i32_0 = arith.constant 0 : i32
    %c0_i32_1 = arith.constant 0 : i32
    return %c0_i32, %arg0, %c0_i32_0 : i32, i32, i32
  }
  func.func @transform_1(%arg0: i32) -> (i32, i32) {
    %c0_i32 = arith.constant 0 : i32
    %c0_i32_0 = arith.constant 0 : i32
    %c0_i32_1 = arith.constant 0 : i32
    return %c0_i32, %c0_i32_0 : i32, i32
  }
  func.func @transform_2(%arg0: i32) -> i32 {
    %c0_i32 = arith.constant 0 : i32
    %c0_i32_0 = arith.constant 0 : i32
    return %c0_i32 : i32
  }
  func.func @transform_3(%arg0: i32) -> (i32, i32) {
    %c0_i32 = arith.constant 0 : i32
    %c0_i32_0 = arith.constant 0 : i32
    %c0_i32_1 = arith.constant 0 : i32
    return %c0_i32, %c0_i32_0 : i32, i32
  }
  func.func @transform_4(%arg0: i32) -> (i32, i32) {
    %c0_i32 = arith.constant 0 : i32
    %c0_i32_0 = arith.constant 0 : i32
    %c0_i32_1 = arith.constant 0 : i32
    return %c0_i32, %c0_i32_0 : i32, i32
  }
  func.func @transform_5(%arg0: i32) -> (i32, i32) {
    %c0_i32 = arith.constant 0 : i32
    %c0_i32_0 = arith.constant 0 : i32
    return %arg0, %c0_i32 : i32, i32
  }
}

</mosaic_0001>

<llo_original>
// kernel: pretrained_model_forward.1
$region0: #{pretrained_model_forward.1}
  #allocation0 [shape = 'u32[]', space=smem, size = 0x4, offset = 0x4, fixed_abs, tag = 'smem constant byte address 0x4 - core index']
  #allocation1 [shape = 'u32[144,128]{1,0:T(1,128)}', space=vmem, size = 0x12000, scoped, tag = 'internal scratch']
  #allocation2 [shape = 'f32[36,2,256]{2,1,0:T(2,128)}', space=vmem, size = 0x12000, scoped, tag = 'scratch operand']
  #allocation3 [shape = 'f32[2,2048]{1,0:T(2,128)}', space=vmem, size = 0x4000, scoped, tag = 'scratch operand']
  %s0 = inlined_call_operand.vmem [shape: bf16[36,2,256], index: 0, kind: input, shape index: {}]
  %s1 = inlined_call_operand.vmem [shape: f32[8,36], index: 1, kind: input, shape index: {}]
  %s2 = inlined_call_operand.vmem [shape: f32[8], index: 2, kind: input, shape index: {}]
  %s3 = inlined_call_operand.vmem [shape: f32[10,2048], index: 3, kind: input, shape index: {}]
  %s4 = inlined_call_operand.vmem [shape: f32[1,10], index: 4, kind: input, shape index: {}]
  %s5 = inlined_call_operand.hbm [shape: f32[2,10], index: 5, kind: output, shape index: {}]
  %s6 = sld [smem:[#allocation0]]
  $region38: #{pretrained_model_forward.1} parent=0
    _
  %s8 = ssub.s32 1, %s6
  %s9 = scalar_select 0, %s8, %s6
  $region1: #{pretrained_model_forward.1} parent=0
    #allocation4 [shape = 'u8[4096]{0}', space=smem, size = 0x1000, scoped, tag = 'input window, operand 1, single buffered']
    #allocation5 [shape = 's32[1]{0}', space=sflag, size = 0x4, scoped, tag = 'scoped memory for pretrained_model_forward.1']
    #allocation6 [shape = 's32[1]{0}', space=sflag, size = 0x4, scoped, tag = 'scoped memory for pretrained_model_forward.1']
    #allocation7 [shape = 'u8[512]{0}', space=smem, size = 0x200, scoped, tag = 'input window, operand 2, single buffered']
    #allocation8 [shape = 's32[1]{0}', space=sflag, size = 0x4, scoped, tag = 'scoped memory for pretrained_model_forward.1']
    #allocation9 [shape = 'u8[1024]{0}', space=vmem, size = 0x400, scoped, tag = 'output window, operand 0, single buffered']
    %10 = vsyncpa [#allocation6], 0
    %11 = vsyncpa [#allocation8], 0
    %12 = vsyncpa [#allocation5], 0
    // Predicated region
    $region2: #{pretrained_model_forward.1} parent=1 // pred_check
      _
    $region3: #{pretrained_model_forward.1} parent=1 // pred_check_branch
      %14 = sbr.rel (0) target = $region5
    $region4: #{pretrained_model_forward.1} parent=1 // pred_region
      _
    $region5: #{pretrained_model_forward.1} parent=1 // pred_fallthru
      _
    // Predicated region
    $region6: #{pretrained_model_forward.1} parent=1 // pred_check
      _
    $region7: #{pretrained_model_forward.1} parent=1 // pred_check_branch
      %16 = sbr.rel (0) target = $region9
    $region8: #{pretrained_model_forward.1} parent=1 // pred_region
      %s18 = ssub.s32 128, 128
      %19 = vsyncadd [#allocation6], %s18
      %s21 = sshll.u32 %s1, 4
      %s22 = int_to_ptr.vmem [resolvable:$true] %s21
      %24 = dma.vmem_to_smem %s22, 128, [#allocation4], [#allocation6]
    $region9: #{pretrained_model_forward.1} parent=1 // pred_fallthru
      _
    // Predicated region
    $region10: #{pretrained_model_forward.1} parent=1 // pred_check
      _
    $region11: #{pretrained_model_forward.1} parent=1 // pred_check_branch
      %26 = sbr.rel (0) target = $region13
    $region12: #{pretrained_model_forward.1} parent=1 // pred_region
      %s28 = ssub.s32 16, 16
      %29 = vsyncadd [#allocation8], %s28
      %s31 = sshll.u32 %s2, 4
      %s32 = int_to_ptr.vmem [resolvable:$true] %s31
      %34 = dma.vmem_to_smem %s32, 16, [#allocation7], [#allocation8]
    $region13: #{pretrained_model_forward.1} parent=1 // pred_fallthru
      _
    // Predicated region
    $region14: #{pretrained_model_forward.1} parent=1 // pred_check
      _
    $region15: #{pretrained_model_forward.1} parent=1 // pred_check_branch
      %36 = sbr.rel (0) target = $region17
    $region16: #{pretrained_model_forward.1} parent=1 // pred_region
      _
    $region17: #{pretrained_model_forward.1} parent=1 // pred_fallthru
      _
    // Predicated region
    $region18: #{pretrained_model_forward.1} parent=1 // pred_check
      _
    $region19: #{pretrained_model_forward.1} parent=1 // pred_check_branch
      %38 = sbr.rel (0) target = $region21
    $region20: #{pretrained_model_forward.1} parent=1 // pred_region
      _
    $region21: #{pretrained_model_forward.1} parent=1 // pred_fallthru
      _
    // Predicated region
    $region22: #{pretrained_model_forward.1} parent=1 // pred_check
      _
    $region23: #{pretrained_model_forward.1} parent=1 // pred_check_branch
      %40 = sbr.rel (0) target = $region25
    $region24: #{pretrained_model_forward.1} parent=1 // pred_region
      %41 = dma.done [#allocation6], 128
    $region25: #{pretrained_model_forward.1} parent=1 // pred_fallthru
      _
    // Predicated region
    $region26: #{pretrained_model_forward.1} parent=1 // pred_check
      _
    $region27: #{pretrained_model_forward.1} parent=1 // pred_check_branch
      %43 = sbr.rel (0) target = $region29
    $region28: #{pretrained_model_forward.1} parent=1 // pred_region
      %44 = dma.done [#allocation8], 16
    $region29: #{pretrained_model_forward.1} parent=1 // pred_fallthru
      _
    %45 = sfence
    %v46 = vld [vmem:[%s0] sm:$0x3]
    %v47 = vunpack.c.l.bf16 %v46
    %48 = vst [vmem:[#allocation2] sm:$0xf] %v47
    %s49 = scalar_lea.vmem %s0, 2
    %v50 = vld [vmem:[%s49] sm:$0x3]
    %v51 = vunpack.c.l.bf16 %v50
    %s52 = scalar_lea.vmem [#allocation2], 4
    %53 = vst [vmem:[%s52] sm:$0xf] %v51
    %s54 = scalar_lea.vmem %s0, 4
    %v55 = vld [vmem:[%s54] sm:$0x3]
    %v56 = vunpack.c.l.bf16 %v55
    %s57 = scalar_lea.vmem [#allocation2], 8
    %58 = vst [vmem:[%s57] sm:$0xf] %v56
    %s59 = scalar_lea.vmem %s0, 6
    %v60 = vld [vmem:[%s59] sm:$0x3]
    %v61 = vunpack.c.l.bf16 %v60
    %s62 = scalar_lea.vmem [#allocation2], 12
    %63 = vst [vmem:[%s62] sm:$0xf] %v61
    %s64 = scalar_lea.vmem %s0, 8
    %v65 = vld [vmem:[%s64] sm:$0x3]
    %v66 = vunpack.c.l.bf16 %v65
    %s67 = scalar_lea.vmem [#allocation2], 16
    %68 = vst [vmem:[%s67] sm:$0xf] %v66
    %s69 = scalar_lea.vmem %s0, 10
    %v70 = vld [vmem:[%s69] sm:$0x3]
    %v71 = vunpack.c.l.bf16 %v70
    %s72 = scalar_lea.vmem [#allocation2], 20
    %73 = vst [vmem:[%s72] sm:$0xf] %v71
    %s74 = scalar_lea.vmem %s0, 12
    %v75 = vld [vmem:[%s74] sm:$0x3]
    %v76 = vunpack.c.l.bf16 %v75
    %s77 = scalar_lea.vmem [#allocation2], 24
    %78 = vst [vmem:[%s77] sm:$0xf] %v76
    %s79 = scalar_lea.vmem %s0, 14
    %v80 = vld [vmem:[%s79] sm:$0x3]
    %v81 = vunpack.c.l.bf16 %v80
    %s82 = scalar_lea.vmem [#allocation2], 28
    %83 = vst [vmem:[%s82] sm:$0xf] %v81
    %s84 = scalar_lea.vmem %s0, 16
    %v85 = vld [vmem:[%s84] sm:$0x3]
    %v86 = vunpack.c.l.bf16 %v85
    %s87 = scalar_lea.vmem [#allocation2], 32
    %88 = vst [vmem:[%s87] sm:$0xf] %v86
    %s89 = scalar_lea.vmem %s0, 18
    %v90 = vld [vmem:[%s89] sm:$0x3]
    %v91 = vunpack.c.l.bf16 %v90
    %s92 = scalar_lea.vmem [#allocation2], 36
    %93 = vst [vmem:[%s92] sm:$0xf] %v91
    %s94 = scalar_lea.vmem %s0, 20
    %v95 = vld [vmem:[%s94] sm:$0x3]
    %v96 = vunpack.c.l.bf16 %v95
    %s97 = scalar_lea.vmem [#allocation2], 40
    %98 = vst [vmem:[%s97] sm:$0xf] %v96
    %s99 = scalar_lea.vmem %s0, 22
    %v100 = vld [vmem:[%s99] sm:$0x3]
    %v101 = vunpack.c.l.bf16 %v100
    %s102 = scalar_lea.vmem [#allocation2], 44
    %103 = vst [vmem:[%s102] sm:$0xf] %v101
    %s104 = scalar_lea.vmem %s0, 24
    %v105 = vld [vmem:[%s104] sm:$0x3]
    %v106 = vunpack.c.l.bf16 %v105
    %s107 = scalar_lea.vmem [#allocation2], 48
    %108 = vst [vmem:[%s107] sm:$0xf] %v106
    %s109 = scalar_lea.vmem %s0, 26
    %v110 = vld [vmem:[%s109] sm:$0x3]
    %v111 = vunpack.c.l.bf16 %v110
    %s112 = scalar_lea.vmem [#allocation2], 52
    %113 = vst [vmem:[%s112] sm:$0xf] %v111
    %s114 = scalar_lea.vmem %s0, 28
    %v115 = vld [vmem:[%s114] sm:$0x3]
    %v116 = vunpack.c.l.bf16 %v115
    %s117 = scalar_lea.vmem [#allocation2], 56
    %118 = vst [vmem:[%s117] sm:$0xf] %v116
    %s119 = scalar_lea.vmem %s0, 30
    %v120 = vld [vmem:[%s119] sm:$0x3]
    %v121 = vunpack.c.l.bf16 %v120
    %s122 = scalar_lea.vmem [#allocation2], 60
    %123 = vst [vmem:[%s122] sm:$0xf] %v121
    %s124 = scalar_lea.vmem %s0, 32
    %v125 = vld [vmem:[%s124] sm:$0x3]
    %v126 = vunpack.c.l.bf16 %v125
    %s127 = scalar_lea.vmem [#allocation2], 64
    %128 = vst [vmem:[%s127] sm:$0xf] %v126
    %s129 = scalar_lea.vmem %s0, 34
    %v130 = vld [vmem:[%s129] sm:$0x3]
    %v131 = vunpack.c.l.bf16 %v130
    %s132 = scalar_lea.vmem [#allocation2], 68
    %133 = vst [vmem:[%s132] sm:$0xf] %v131
    %s134 = scalar_lea.vmem %s0, 36
    %v135 = vld [vmem:[%s134] sm:$0x3]
    %v136 = vunpack.c.l.bf16 %v135
    %s137 = scalar_lea.vmem [#allocation2], 72
    %138 = vst [vmem:[%s137] sm:$0xf] %v136
    %s139 = scalar_lea.vmem %s0, 38
    %v140 = vld [vmem:[%s139] sm:$0x3]
    %v141 = vunpack.c.l.bf16 %v140
    %s142 = scalar_lea.vmem [#allocation2], 76
    %143 = vst [vmem:[%s142] sm:$0xf] %v141
    %s144 = scalar_lea.vmem %s0, 40
    %v145 = vld [vmem:[%s144] sm:$0x3]
    %v146 = vunpack.c.l.bf16 %v145
    %s147 = scalar_lea.vmem [#allocation2], 80
    %148 = vst [vmem:[%s147] sm:$0xf] %v146
    %s149 = scalar_lea.vmem %s0, 42
    %v150 = vld [vmem:[%s149] sm:$0x3]
    %v151 = vunpack.c.l.bf16 %v150
    %s152 = scalar_lea.vmem [#allocation2], 84
    %153 = vst [vmem:[%s152] sm:$0xf] %v151
    %s154 = scalar_lea.vmem %s0, 44
    %v155 = vld [vmem:[%s154] sm:$0x3]
    %v156 = vunpack.c.l.bf16 %v155
    %s157 = scalar_lea.vmem [#allocation2], 88
    %158 = vst [vmem:[%s157] sm:$0xf] %v156
    %s159 = scalar_lea.vmem %s0, 46
    %v160 = vld [vmem:[%s159] sm:$0x3]
    %v161 = vunpack.c.l.bf16 %v160
    %s162 = scalar_lea.vmem [#allocation2], 92
    %163 = vst [vmem:[%s162] sm:$0xf] %v161
    %s164 = scalar_lea.vmem %s0, 48
    %v165 = vld [vmem:[%s164] sm:$0x3]
    %v166 = vunpack.c.l.bf16 %v165
    %s167 = scalar_lea.vmem [#allocation2], 96
    %168 = vst [vmem:[%s167] sm:$0xf] %v166
    %s169 = scalar_lea.vmem %s0, 50
    %v170 = vld [vmem:[%s169] sm:$0x3]
    %v171 = vunpack.c.l.bf16 %v170
    %s172 = scalar_lea.vmem [#allocation2], 100
    %173 = vst [vmem:[%s172] sm:$0xf] %v171
    %s174 = scalar_lea.vmem %s0, 52
    %v175 = vld [vmem:[%s174] sm:$0x3]
    %v176 = vunpack.c.l.bf16 %v175
    %s177 = scalar_lea.vmem [#allocation2], 104
    %178 = vst [vmem:[%s177] sm:$0xf] %v176
    %s179 = scalar_lea.vmem %s0, 54
    %v180 = vld [vmem:[%s179] sm:$0x3]
    %v181 = vunpack.c.l.bf16 %v180
    %s182 = scalar_lea.vmem [#allocation2], 108
    %183 = vst [vmem:[%s182] sm:$0xf] %v181
    %s184 = scalar_lea.vmem %s0, 56
    %v185 = vld [vmem:[%s184] sm:$0x3]
    %v186 = vunpack.c.l.bf16 %v185
    %s187 = scalar_lea.vmem [#allocation2], 112
    %188 = vst [vmem:[%s187] sm:$0xf] %v186
    %s189 = scalar_lea.vmem %s0, 58
    %v190 = vld [vmem:[%s189] sm:$0x3]
    %v191 = vunpack.c.l.bf16 %v190
    %s192 = scalar_lea.vmem [#allocation2], 116
    %193 = vst [vmem:[%s192] sm:$0xf] %v191
    %s194 = scalar_lea.vmem %s0, 60
    %v195 = vld [vmem:[%s194] sm:$0x3]
    %v196 = vunpack.c.l.bf16 %v195
    %s197 = scalar_lea.vmem [#allocation2], 120
    %198 = vst [vmem:[%s197] sm:$0xf] %v196
    %s199 = scalar_lea.vmem %s0, 62
    %v200 = vld [vmem:[%s199] sm:$0x3]
    %v201 = vunpack.c.l.bf16 %v200
    %s202 = scalar_lea.vmem [#allocation2], 124
    %203 = vst [vmem:[%s202] sm:$0xf] %v201
    %s204 = scalar_lea.vmem %s0, 64
    %v205 = vld [vmem:[%s204] sm:$0x3]
    %v206 = vunpack.c.l.bf16 %v205
    %s207 = scalar_lea.vmem [#allocation2], 128
    %208 = vst [vmem:[%s207] sm:$0xf] %v206
    %s209 = scalar_lea.vmem %s0, 66
    %v210 = vld [vmem:[%s209] sm:$0x3]
    %v211 = vunpack.c.l.bf16 %v210
    %s212 = scalar_lea.vmem [#allocation2], 132
    %213 = vst [vmem:[%s212] sm:$0xf] %v211
    %s214 = scalar_lea.vmem %s0, 68
    %v215 = vld [vmem:[%s214] sm:$0x3]
    %v216 = vunpack.c.l.bf16 %v215
    %s217 = scalar_lea.vmem [#allocation2], 136
    %218 = vst [vmem:[%s217] sm:$0xf] %v216
    %s219 = scalar_lea.vmem %s0, 70
    %v220 = vld [vmem:[%s219] sm:$0x3]
    %v221 = vunpack.c.l.bf16 %v220
    %s222 = scalar_lea.vmem [#allocation2], 140
    %223 = vst [vmem:[%s222] sm:$0xf] %v221
    %v224 = vld [vmem:[#allocation2] sm:$0xf]
    %s225 = sld [smem:[#allocation4]]
    %v226 = vstv %s225
    %v227 = vmul.f32 %v224, %v226
    %v228 = vld [vmem:[%s52] sm:$0xf]
    %s229 = sld [smem:[#allocation4 + $0x1]]
    %v230 = vstv %s229
    %v231 = vmul.f32 %v228, %v230
    %v232 = vadd.f32 %v227, %v231
    %v233 = vld [vmem:[%s57] sm:$0xf]
    %s234 = sld [smem:[#allocation4 + $0x2]]
    %v235 = vstv %s234
    %v236 = vmul.f32 %v233, %v235
    %v237 = vadd.f32 %v232, %v236
    %v238 = vld [vmem:[%s62] sm:$0xf]
    %s239 = sld [smem:[#allocation4 + $0x3]]
    %v240 = vstv %s239
    %v241 = vmul.f32 %v238, %v240
    %v242 = vadd.f32 %v237, %v241
    %v243 = vld [vmem:[%s67] sm:$0xf]
    %s244 = sld [smem:[#allocation4 + $0x4]]
    %v245 = vstv %s244
    %v246 = vmul.f32 %v243, %v245
    %v247 = vadd.f32 %v242, %v246
    %v248 = vld [vmem:[%s72] sm:$0xf]
    %s249 = sld [smem:[#allocation4 + $0x5]]
    %v250 = vstv %s249
    %v251 = vmul.f32 %v248, %v250
    %v252 = vadd.f32 %v247, %v251
    %v253 = vld [vmem:[%s77] sm:$0xf]
    %s254 = sld [smem:[#allocation4 + $0x6]]
    %v255 = vstv %s254
    %v256 = vmul.f32 %v253, %v255
    %v257 = vadd.f32 %v252, %v256
    %v258 = vld [vmem:[%s82] sm:$0xf]
    %s259 = sld [smem:[#allocation4 + $0x7]]
    %v260 = vstv %s259
    %v261 = vmul.f32 %v258, %v260
    %v262 = vadd.f32 %v257, %v261
    %v263 = vld [vmem:[%s87] sm:$0xf]
    %s264 = sld [smem:[#allocation4 + $0x8]]
    %v265 = vstv %s264
    %v266 = vmul.f32 %v263, %v265
    %v267 = vadd.f32 %v262, %v266
    %v268 = vld [vmem:[%s92] sm:$0xf]
    %s269 = sld [smem:[#allocation4 + $0x9]]
    %v270 = vstv %s269
    %v271 = vmul.f32 %v268, %v270
    %v272 = vadd.f32 %v267, %v271
    %v273 = vld [vmem:[%s97] sm:$0xf]
    %s274 = sld [smem:[#allocation4 + $0xa]]
    %v275 = vstv %s274
    %v276 = vmul.f32 %v273, %v275
    %v277 = vadd.f32 %v272, %v276
    %v278 = vld [vmem:[%s102] sm:$0xf]
    %s279 = sld [smem:[#allocation4 + $0xb]]
    %v280 = vstv %s279
    %v281 = vmul.f32 %v278, %v280
    %v282 = vadd.f32 %v277, %v281
    %v283 = vld [vmem:[%s107] sm:$0xf]
    %s284 = sld [smem:[#allocation4 + $0xc]]
    %v285 = vstv %s284
    %v286 = vmul.f32 %v283, %v285
    %v287 = vadd.f32 %v282, %v286
    %v288 = vld [vmem:[%s112] sm:$0xf]
    %s289 = sld [smem:[#allocation4 + $0xd]]
    %v290 = vstv %s289
    %v291 = vmul.f32 %v288, %v290
    %v292 = vadd.f32 %v287, %v291
    %v293 = vld [vmem:[%s117] sm:$0xf]
    %s294 = sld [smem:[#allocation4 + $0xe]]
    %v295 = vstv %s294
    %v296 = vmul.f32 %v293, %v295
    %v297 = vadd.f32 %v292, %v296
    %v298 = vld [vmem:[%s122] sm:$0xf]
    %s299 = sld [smem:[#allocation4 + $0xf]]
    %v300 = vstv %s299
    %v301 = vmul.f32 %v298, %v300
    %v302 = vadd.f32 %v297, %v301
    %v303 = vld [vmem:[%s127] sm:$0xf]
    %s304 = sld [smem:[#allocation4 + $0x10]]
    %v305 = vstv %s304
    %v306 = vmul.f32 %v303, %v305
    %v307 = vadd.f32 %v302, %v306
    %v308 = vld [vmem:[%s132] sm:$0xf]
    %s309 = sld [smem:[#allocation4 + $0x11]]
    %v310 = vstv %s309
    %v311 = vmul.f32 %v308, %v310
    %v312 = vadd.f32 %v307, %v311
    %v313 = vld [vmem:[%s137] sm:$0xf]
    %s314 = sld [smem:[#allocation4 + $0x12]]
    %v315 = vstv %s314
    %v316 = vmul.f32 %v313, %v315
    %v317 = vadd.f32 %v312, %v316
    %v318 = vld [vmem:[%s142] sm:$0xf]
    %s319 = sld [smem:[#allocation4 + $0x13]]
    %v320 = vstv %s319
    %v321 = vmul.f32 %v318, %v320
    %v322 = vadd.f32 %v317, %v321
    %v323 = vld [vmem:[%s147] sm:$0xf]
    %s324 = sld [smem:[#allocation4 + $0x14]]
    %v325 = vstv %s324
    %v326 = vmul.f32 %v323, %v325
    %v327 = vadd.f32 %v322, %v326
    %v328 = vld [vmem:[%s152] sm:$0xf]
    %s329 = sld [smem:[#allocation4 + $0x15]]
    %v330 = vstv %s329
    %v331 = vmul.f32 %v328, %v330
    %v332 = vadd.f32 %v327, %v331
    %v333 = vld [vmem:[%s157] sm:$0xf]
    %s334 = sld [smem:[#allocation4 + $0x16]]
    %v335 = vstv %s334
    %v336 = vmul.f32 %v333, %v335
    %v337 = vadd.f32 %v332, %v336
    %v338 = vld [vmem:[%s162] sm:$0xf]
    %s339 = sld [smem:[#allocation4 + $0x17]]
    %v340 = vstv %s339
    %v341 = vmul.f32 %v338, %v340
    %v342 = vadd.f32 %v337, %v341
    %v343 = vld [vmem:[%s167] sm:$0xf]
    %s344 = sld [smem:[#allocation4 + $0x18]]
    %v345 = vstv %s344
    %v346 = vmul.f32 %v343, %v345
    %v347 = vadd.f32 %v342, %v346
    %v348 = vld [vmem:[%s172] sm:$0xf]
    %s349 = sld [smem:[#allocation4 + $0x19]]
    %v350 = vstv %s349
    %v351 = vmul.f32 %v348, %v350
    %v352 = vadd.f32 %v347, %v351
    %v353 = vld [vmem:[%s177] sm:$0xf]
    %s354 = sld [smem:[#allocation4 + $0x1a]]
    %v355 = vstv %s354
    %v356 = vmul.f32 %v353, %v355
    %v357 = vadd.f32 %v352, %v356
    %v358 = vld [vmem:[%s182] sm:$0xf]
    %s359 = sld [smem:[#allocation4 + $0x1b]]
    %v360 = vstv %s359
    %v361 = vmul.f32 %v358, %v360
    %v362 = vadd.f32 %v357, %v361
    %v363 = vld [vmem:[%s187] sm:$0xf]
    %s364 = sld [smem:[#allocation4 + $0x1c]]
    %v365 = vstv %s364
    %v366 = vmul.f32 %v363, %v365
    %v367 = vadd.f32 %v362, %v366
    %v368 = vld [vmem:[%s192] sm:$0xf]
    %s369 = sld [smem:[#allocation4 + $0x1d]]
    %v370 = vstv %s369
    %v371 = vmul.f32 %v368, %v370
    %v372 = vadd.f32 %v367, %v371
    %v373 = vld [vmem:[%s197] sm:$0xf]
    %s374 = sld [smem:[#allocation4 + $0x1e]]
    %v375 = vstv %s374
    %v376 = vmul.f32 %v373, %v375
    %v377 = vadd.f32 %v372, %v376
    %v378 = vld [vmem:[%s202] sm:$0xf]
    %s379 = sld [smem:[#allocation4 + $0x1f]]
    %v380 = vstv %s379
    %v381 = vmul.f32 %v378, %v380
    %v382 = vadd.f32 %v377, %v381
    %v383 = vld [vmem:[%s207] sm:$0xf]
    %s384 = sld [smem:[#allocation4 + $0x20]]
    %v385 = vstv %s384
    %v386 = vmul.f32 %v383, %v385
    %v387 = vadd.f32 %v382, %v386
    %v388 = vld [vmem:[%s212] sm:$0xf]
    %s389 = sld [smem:[#allocation4 + $0x21]]
    %v390 = vstv %s389
    %v391 = vmul.f32 %v388, %v390
    %v392 = vadd.f32 %v387, %v391
    %v393 = vld [vmem:[%s217] sm:$0xf]
    %s394 = sld [smem:[#allocation4 + $0x22]]
    %v395 = vstv %s394
    %v396 = vmul.f32 %v393, %v395
    %v397 = vadd.f32 %v392, %v396
    %v398 = vld [vmem:[%s222] sm:$0xf]
    %s399 = sld [smem:[#allocation4 + $0x23]]
    %v400 = vstv %s399
    %v401 = vmul.f32 %v398, %v400
    %v402 = vadd.f32 %v397, %v401
    %s403 = sld [smem:[#allocation7]]
    %v404 = vstv %s403
    %v405 = vadd.f32 %v402, %v404
    %v406 = vmax.f32 %v405, 0.0
    %407 = vst [vmem:[#allocation3] sm:$0xf] %v406
    %v408 = vld [vmem:[#allocation2] sm:$0xf]
    %s409 = sld [smem:[#allocation4 + $0x80]]
    %v410 = vstv %s409
    %v411 = vmul.f32 %v408, %v410
    %v412 = vld [vmem:[%s52] sm:$0xf]
    %s413 = sld [smem:[#allocation4 + $0x81]]
    %v414 = vstv %s413
    %v415 = vmul.f32 %v412, %v414
    %v416 = vadd.f32 %v411, %v415
    %v417 = vld [vmem:[%s57] sm:$0xf]
    %s418 = sld [smem:[#allocation4 + $0x82]]
    %v419 = vstv %s418
    %v420 = vmul.f32 %v417, %v419
    %v421 = vadd.f32 %v416, %v420
    %v422 = vld [vmem:[%s62] sm:$0xf]
    %s423 = sld [smem:[#allocation4 + $0x83]]
    %v424 = vstv %s423
    %v425 = vmul.f32 %v422, %v424
    %v426 = vadd.f32 %v421, %v425
    %v427 = vld [vmem:[%s67] sm:$0xf]
    %s428 = sld [smem:[#allocation4 + $0x84]]
    %v429 = vstv %s428
    %v430 = vmul.f32 %v427, %v429
    %v431 = vadd.f32 %v426, %v430
    %v432 = vld [vmem:[%s72] sm:$0xf]
    %s433 = sld [smem:[#allocation4 + $0x85]]
    %v434 = vstv %s433
    %v435 = vmul.f32 %v432, %v434
    %v436 = vadd.f32 %v431, %v435
    %v437 = vld [vmem:[%s77] sm:$0xf]
    %s438 = sld [smem:[#allocation4 + $0x86]]
    %v439 = vstv %s438
    %v440 = vmul.f32 %v437, %v439
    %v441 = vadd.f32 %v436, %v440
    %v442 = vld [vmem:[%s82] sm:$0xf]
    %s443 = sld [smem:[#allocation4 + $0x87]]
    %v444 = vstv %s443
    %v445 = vmul.f32 %v442, %v444
    %v446 = vadd.f32 %v441, %v445
    %v447 = vld [vmem:[%s87] sm:$0xf]
    %s448 = sld [smem:[#allocation4 + $0x88]]
    %v449 = vstv %s448
    %v450 = vmul.f32 %v447, %v449
    %v451 = vadd.f32 %v446, %v450
    %v452 = vld [vmem:[%s92] sm:$0xf]
    %s453 = sld [smem:[#allocation4 + $0x89]]
    %v454 = vstv %s453
    %v455 = vmul.f32 %v452, %v454
    %v456 = vadd.f32 %v451, %v455
    %v457 = vld [vmem:[%s97] sm:$0xf]
    %s458 = sld [smem:[#allocation4 + $0x8a]]
    %v459 = vstv %s458
    %v460 = vmul.f32 %v457, %v459
    %v461 = vadd.f32 %v456, %v460
    %v462 = vld [vmem:[%s102] sm:$0xf]
    %s463 = sld [smem:[#allocation4 + $0x8b]]
    %v464 = vstv %s463
    %v465 = vmul.f32 %v462, %v464
    %v466 = vadd.f32 %v461, %v465
    %v467 = vld [vmem:[%s107] sm:$0xf]
    %s468 = sld [smem:[#allocation4 + $0x8c]]
    %v469 = vstv %s468
    %v470 = vmul.f32 %v467, %v469
    %v471 = vadd.f32 %v466, %v470
    %v472 = vld [vmem:[%s112] sm:$0xf]
    %s473 = sld [smem:[#allocation4 + $0x8d]]
    %v474 = vstv %s473
    %v475 = vmul.f32 %v472, %v474
    %v476 = vadd.f32 %v471, %v475
    %v477 = vld [vmem:[%s117] sm:$0xf]
    %s478 = sld [smem:[#allocation4 + $0x8e]]
    %v479 = vstv %s478
    %v480 = vmul.f32 %v477, %v479
    %v481 = vadd.f32 %v476, %v480
    %v482 = vld [vmem:[%s122] sm:$0xf]
    %s483 = sld [smem:[#allocation4 + $0x8f]]
    %v484 = vstv %s483
    %v485 = vmul.f32 %v482, %v484
    %v486 = vadd.f32 %v481, %v485
    %v487 = vld [vmem:[%s127] sm:$0xf]
    %s488 = sld [smem:[#allocation4 + $0x90]]
    %v489 = vstv %s488
    %v490 = vmul.f32 %v487, %v489
    %v491 = vadd.f32 %v486, %v490
    %v492 = vld [vmem:[%s132] sm:$0xf]
    %s493 = sld [smem:[#allocation4 + $0x91]]
    %v494 = vstv %s493
    %v495 = vmul.f32 %v492, %v494
    %v496 = vadd.f32 %v491, %v495
    %v497 = vld [vmem:[%s137] sm:$0xf]
    %s498 = sld [smem:[#allocation4 + $0x92]]
    %v499 = vstv %s498
    %v500 = vmul.f32 %v497, %v499
    %v501 = vadd.f32 %v496, %v500
    %v502 = vld [vmem:[%s142] sm:$0xf]
    %s503 = sld [smem:[#allocation4 + $0x93]]
    %v504 = vstv %s503
    %v505 = vmul.f32 %v502, %v504
    %v506 = vadd.f32 %v501, %v505
    %v507 = vld [vmem:[%s147] sm:$0xf]
    %s508 = sld [smem:[#allocation4 + $0x94]]
    %v509 = vstv %s508
    %v510 = vmul.f32 %v507, %v509
    %v511 = vadd.f32 %v506, %v510
    %v512 = vld [vmem:[%s152] sm:$0xf]
    %s513 = sld [smem:[#allocation4 + $0x95]]
    %v514 = vstv %s513
    %v515 = vmul.f32 %v512, %v514
    %v516 = vadd.f32 %v511, %v515
    %v517 = vld [vmem:[%s157] sm:$0xf]
    %s518 = sld [smem:[#allocation4 + $0x96]]
    %v519 = vstv %s518
    %v520 = vmul.f32 %v517, %v519
    %v521 = vadd.f32 %v516, %v520
    %v522 = vld [vmem:[%s162] sm:$0xf]
    %s523 = sld [smem:[#allocation4 + $0x97]]
    %v524 = vstv %s523
    %v525 = vmul.f32 %v522, %v524
    %v526 = vadd.f32 %v521, %v525
    %v527 = vld [vmem:[%s167] sm:$0xf]
    %s528 = sld [smem:[#allocation4 + $0x98]]
    %v529 = vstv %s528
    %v530 = vmul.f32 %v527, %v529
    %v531 = vadd.f32 %v526, %v530
    %v532 = vld [vmem:[%s172] sm:$0xf]
    %s533 = sld [smem:[#allocation4 + $0x99]]
    %v534 = vstv %s533
    %v535 = vmul.f32 %v532, %v534
    %v536 = vadd.f32 %v531, %v535
    %v537 = vld [vmem:[%s177] sm:$0xf]
    %s538 = sld [smem:[#allocation4 + $0x9a]]
    %v539 = vstv %s538
    %v540 = vmul.f32 %v537, %v539
    %v541 = vadd.f32 %v536, %v540
    %v542 = vld [vmem:[%s182] sm:$0xf]
    %s543 = sld [smem:[#allocation4 + $0x9b]]
    %v544 = vstv %s543
    %v545 = vmul.f32 %v542, %v544
    %v546 = vadd.f32 %v541, %v545
    %v547 = vld [vmem:[%s187] sm:$0xf]
    %s548 = sld [smem:[#allocation4 + $0x9c]]
    %v549 = vstv %s548
    %v550 = vmul.f32 %v547, %v549
    %v551 = vadd.f32 %v546, %v550
    %v552 = vld [vmem:[%s192] sm:$0xf]
    %s553 = sld [smem:[#allocation4 + $0x9d]]
    %v554 = vstv %s553
    %v555 = vmul.f32 %v552, %v554
    %v556 = vadd.f32 %v551, %v555
    %v557 = vld [vmem:[%s197] sm:$0xf]
    %s558 = sld [smem:[#allocation4 + $0x9e]]
    %v559 = vstv %s558
    %v560 = vmul.f32 %v557, %v559
    %v561 = vadd.f32 %v556, %v560
    %v562 = vld [vmem:[%s202] sm:$0xf]
    %s563 = sld [smem:[#allocation4 + $0x9f]]
    %v564 = vstv %s563
    %v565 = vmul.f32 %v562, %v564
    %v566 = vadd.f32 %v561, %v565
    %v567 = vld [vmem:[%s207] sm:$0xf]
    %s568 = sld [smem:[#allocation4 + $0xa0]]
    %v569 = vstv %s568
    %v570 = vmul.f32 %v567, %v569
    %v571 = vadd.f32 %v566, %v570
    %v572 = vld [vmem:[%s212] sm:$0xf]
    %s573 = sld [smem:[#allocation4 + $0xa1]]
    %v574 = vstv %s573
    %v575 = vmul.f32 %v572, %v574
    %v576 = vadd.f32 %v571, %v575
    %v577 = vld [vmem:[%s217] sm:$0xf]
    %s578 = sld [smem:[#allocation4 + $0xa2]]
    %v579 = vstv %s578
    %v580 = vmul.f32 %v577, %v579
    %v581 = vadd.f32 %v576, %v580
    %v582 = vld [vmem:[%s222] sm:$0xf]
    %s583 = sld [smem:[#allocation4 + $0xa3]]
    %v584 = vstv %s583
    %v585 = vmul.f32 %v582, %v584
    %v586 = vadd.f32 %v581, %v585
    %s587 = sld [smem:[#allocation7 + $0x1]]
    %v588 = vstv %s587
    %v589 = vadd.f32 %v586, %v588
    %v590 = vmax.f32 %v589, 0.0
    %591 = vst [vmem:[#allocation3 + $0x4] sm:$0xf] %v590
    %v592 = vld [vmem:[#allocation2] sm:$0xf]
    %s593 = sld [smem:[#allocation4 + $0x100]]
    %v594 = vstv %s593
    %v595 = vmul.f32 %v592, %v594
    %v596 = vld [vmem:[%s52] sm:$0xf]
    %s597 = sld [smem:[#allocation4 + $0x101]]
    %v598 = vstv %s597
    %v599 = vmul.f32 %v596, %v598
    %v600 = vadd.f32 %v595, %v599
    %v601 = vld [vmem:[%s57] sm:$0xf]
    %s602 = sld [smem:[#allocation4 + $0x102]]
    %v603 = vstv %s602
    %v604 = vmul.f32 %v601, %v603
    %v605 = vadd.f32 %v600, %v604
    %v606 = vld [vmem:[%s62] sm:$0xf]
    %s607 = sld [smem:[#allocation4 + $0x103]]
    %v608 = vstv %s607
    %v609 = vmul.f32 %v606, %v608
    %v610 = vadd.f32 %v605, %v609
    %v611 = vld [vmem:[%s67] sm:$0xf]
    %s612 = sld [smem:[#allocation4 + $0x104]]
    %v613 = vstv %s612
    %v614 = vmul.f32 %v611, %v613
    %v615 = vadd.f32 %v610, %v614
    %v616 = vld [vmem:[%s72] sm:$0xf]
    %s617 = sld [smem:[#allocation4 + $0x105]]
    %v618 = vstv %s617
    %v619 = vmul.f32 %v616, %v618
    %v620 = vadd.f32 %v615, %v619
    %v621 = vld [vmem:[%s77] sm:$0xf]
    %s622 = sld [smem:[#allocation4 + $0x106]]
    %v623 = vstv %s622
    %v624 = vmul.f32 %v621, %v623
    %v625 = vadd.f32 %v620, %v624
    %v626 = vld [vmem:[%s82] sm:$0xf]
    %s627 = sld [smem:[#allocation4 + $0x107]]
    %v628 = vstv %s627
    %v629 = vmul.f32 %v626, %v628
    %v630 = vadd.f32 %v625, %v629
    %v631 = vld [vmem:[%s87] sm:$0xf]
    %s632 = sld [smem:[#allocation4 + $0x108]]
    %v633 = vstv %s632
    %v634 = vmul.f32 %v631, %v633
    %v635 = vadd.f32 %v630, %v634
    %v636 = vld [vmem:[%s92] sm:$0xf]
    %s637 = sld [smem:[#allocation4 + $0x109]]
    %v638 = vstv %s637
    %v639 = vmul.f32 %v636, %v638
    %v640 = vadd.f32 %v635, %v639
    %v641 = vld [vmem:[%s97] sm:$0xf]
    %s642 = sld [smem:[#allocation4 + $0x10a]]
    %v643 = vstv %s642
    %v644 = vmul.f32 %v641, %v643
    %v645 = vadd.f32 %v640, %v644
    %v646 = vld [vmem:[%s102] sm:$0xf]
    %s647 = sld [smem:[#allocation4 + $0x10b]]
    %v648 = vstv %s647
    %v649 = vmul.f32 %v646, %v648
    %v650 = vadd.f32 %v645, %v649
    %v651 = vld [vmem:[%s107] sm:$0xf]
    %s652 = sld [smem:[#allocation4 + $0x10c]]
    %v653 = vstv %s652
    %v654 = vmul.f32 %v651, %v653
    %v655 = vadd.f32 %v650, %v654
    %v656 = vld [vmem:[%s112] sm:$0xf]
    %s657 = sld [smem:[#allocation4 + $0x10d]]
    %v658 = vstv %s657
    %v659 = vmul.f32 %v656, %v658
    %v660 = vadd.f32 %v655, %v659
    %v661 = vld [vmem:[%s117] sm:$0xf]
    %s662 = sld [smem:[#allocation4 + $0x10e]]
    %v663 = vstv %s662
    %v664 = vmul.f32 %v661, %v663
    %v665 = vadd.f32 %v660, %v664
    %v666 = vld [vmem:[%s122] sm:$0xf]
    %s667 = sld [smem:[#allocation4 + $0x10f]]
    %v668 = vstv %s667
    %v669 = vmul.f32 %v666, %v668
    %v670 = vadd.f32 %v665, %v669
    %v671 = vld [vmem:[%s127] sm:$0xf]
    %s672 = sld [smem:[#allocation4 + $0x110]]
    %v673 = vstv %s672
    %v674 = vmul.f32 %v671, %v673
    %v675 = vadd.f32 %v670, %v674
    %v676 = vld [vmem:[%s132] sm:$0xf]
    %s677 = sld [smem:[#allocation4 + $0x111]]
    %v678 = vstv %s677
    %v679 = vmul.f32 %v676, %v678
    %v680 = vadd.f32 %v675, %v679
    %v681 = vld [vmem:[%s137] sm:$0xf]
    %s682 = sld [smem:[#allocation4 + $0x112]]
    %v683 = vstv %s682
    %v684 = vmul.f32 %v681, %v683
    %v685 = vadd.f32 %v680, %v684
    %v686 = vld [vmem:[%s142] sm:$0xf]
    %s687 = sld [smem:[#allocation4 + $0x113]]
    %v688 = vstv %s687
    %v689 = vmul.f32 %v686, %v688
    %v690 = vadd.f32 %v685, %v689
    %v691 = vld [vmem:[%s147] sm:$0xf]
    %s692 = sld [smem:[#allocation4 + $0x114]]
    %v693 = vstv %s692
    %v694 = vmul.f32 %v691, %v693
    %v695 = vadd.f32 %v690, %v694
    %v696 = vld [vmem:[%s152] sm:$0xf]
    %s697 = sld [smem:[#allocation4 + $0x115]]
    %v698 = vstv %s697
    %v699 = vmul.f32 %v696, %v698
    %v700 = vadd.f32 %v695, %v699
    %v701 = vld [vmem:[%s157] sm:$0xf]
    %s702 = sld [smem:[#allocation4 + $0x116]]
    %v703 = vstv %s702
    %v704 = vmul.f32 %v701, %v703
    %v705 = vadd.f32 %v700, %v704
    %v706 = vld [vmem:[%s162] sm:$0xf]
    %s707 = sld [smem:[#allocation4 + $0x117]]
    %v708 = vstv %s707
    %v709 = vmul.f32 %v706, %v708
    %v710 = vadd.f32 %v705, %v709
    %v711 = vld [vmem:[%s167] sm:$0xf]
    %s712 = sld [smem:[#allocation4 + $0x118]]
    %v713 = vstv %s712
    %v714 = vmul.f32 %v711, %v713
    %v715 = vadd.f32 %v710, %v714
    %v716 = vld [vmem:[%s172] sm:$0xf]
    %s717 = sld [smem:[#allocation4 + $0x119]]
    %v718 = vstv %s717
    %v719 = vmul.f32 %v716, %v718
    %v720 = vadd.f32 %v715, %v719
    %v721 = vld [vmem:[%s177] sm:$0xf]
    %s722 = sld [smem:[#allocation4 + $0x11a]]
    %v723 = vstv %s722
    %v724 = vmul.f32 %v721, %v723
    %v725 = vadd.f32 %v720, %v724
    %v726 = vld [vmem:[%s182] sm:$0xf]
    %s727 = sld [smem:[#allocation4 + $0x11b]]
    %v728 = vstv %s727
    %v729 = vmul.f32 %v726, %v728
    %v730 = vadd.f32 %v725, %v729
    %v731 = vld [vmem:[%s187] sm:$0xf]
    %s732 = sld [smem:[#allocation4 + $0x11c]]
    %v733 = vstv %s732
    %v734 = vmul.f32 %v731, %v733
    %v735 = vadd.f32 %v730, %v734
    %v736 = vld [vmem:[%s192] sm:$0xf]
    %s737 = sld [smem:[#allocation4 + $0x11d]]
    %v738 = vstv %s737
    %v739 = vmul.f32 %v736, %v738
    %v740 = vadd.f32 %v735, %v739
    %v741 = vld [vmem:[%s197] sm:$0xf]
    %s742 = sld [smem:[#allocation4 + $0x11e]]
    %v743 = vstv %s742
    %v744 = vmul.f32 %v741, %v743
    %v745 = vadd.f32 %v740, %v744
    %v746 = vld [vmem:[%s202] sm:$0xf]
    %s747 = sld [smem:[#allocation4 + $0x11f]]
    %v748 = vstv %s747
    %v749 = vmul.f32 %v746, %v748
    %v750 = vadd.f32 %v745, %v749
    %v751 = vld [vmem:[%s207] sm:$0xf]
    %s752 = sld [smem:[#allocation4 + $0x120]]
    %v753 = vstv %s752
    %v754 = vmul.f32 %v751, %v753
    %v755 = vadd.f32 %v750, %v754
    %v756 = vld [vmem:[%s212] sm:$0xf]
    %s757 = sld [smem:[#allocation4 + $0x121]]
    %v758 = vstv %s757
    %v759 = vmul.f32 %v756, %v758
    %v760 = vadd.f32 %v755, %v759
    %v761 = vld [vmem:[%s217] sm:$0xf]
    %s762 = sld [smem:[#allocation4 + $0x122]]
    %v763 = vstv %s762
    %v764 = vmul.f32 %v761, %v763
    %v765 = vadd.f32 %v760, %v764
    %v766 = vld [vmem:[%s222] sm:$0xf]
    %s767 = sld [smem:[#allocation4 + $0x123]]
    %v768 = vstv %s767
    %v769 = vmul.f32 %v766, %v768
    %v770 = vadd.f32 %v765, %v769
    %s771 = sld [smem:[#allocation7 + $0x2]]
    %v772 = vstv %s771
    %v773 = vadd.f32 %v770, %v772
    %v774 = vmax.f32 %v773, 0.0
    %775 = vst [vmem:[#allocation3 + $0x8] sm:$0xf] %v774
    %v776 = vld [vmem:[#allocation2] sm:$0xf]
    %s777 = sld [smem:[#allocation4 + $0x180]]
    %v778 = vstv %s777
    %v779 = vmul.f32 %v776, %v778
    %v780 = vld [vmem:[%s52] sm:$0xf]
    %s781 = sld [smem:[#allocation4 + $0x181]]
    %v782 = vstv %s781
    %v783 = vmul.f32 %v780, %v782
    %v784 = vadd.f32 %v779, %v783
    %v785 = vld [vmem:[%s57] sm:$0xf]
    %s786 = sld [smem:[#allocation4 + $0x182]]
    %v787 = vstv %s786
    %v788 = vmul.f32 %v785, %v787
    %v789 = vadd.f32 %v784, %v788
    %v790 = vld [vmem:[%s62] sm:$0xf]
    %s791 = sld [smem:[#allocation4 + $0x183]]
    %v792 = vstv %s791
    %v793 = vmul.f32 %v790, %v792
    %v794 = vadd.f32 %v789, %v793
    %v795 = vld [vmem:[%s67] sm:$0xf]
    %s796 = sld [smem:[#allocation4 + $0x184]]
    %v797 = vstv %s796
    %v798 = vmul.f32 %v795, %v797
    %v799 = vadd.f32 %v794, %v798
    %v800 = vld [vmem:[%s72] sm:$0xf]
    %s801 = sld [smem:[#allocation4 + $0x185]]
    %v802 = vstv %s801
    %v803 = vmul.f32 %v800, %v802
    %v804 = vadd.f32 %v799, %v803
    %v805 = vld [vmem:[%s77] sm:$0xf]
    %s806 = sld [smem:[#allocation4 + $0x186]]
    %v807 = vstv %s806
    %v808 = vmul.f32 %v805, %v807
    %v809 = vadd.f32 %v804, %v808
    %v810 = vld [vmem:[%s82] sm:$0xf]
    %s811 = sld [smem:[#allocation4 + $0x187]]
    %v812 = vstv %s811
    %v813 = vmul.f32 %v810, %v812
    %v814 = vadd.f32 %v809, %v813
    %v815 = vld [vmem:[%s87] sm:$0xf]
    %s816 = sld [smem:[#allocation4 + $0x188]]
    %v817 = vstv %s816
    %v818 = vmul.f32 %v815, %v817
    %v819 = vadd.f32 %v814, %v818
    %v820 = vld [vmem:[%s92] sm:$0xf]
    %s821 = sld [smem:[#allocation4 + $0x189]]
    %v822 = vstv %s821
    %v823 = vmul.f32 %v820, %v822
    %v824 = vadd.f32 %v819, %v823
    %v825 = vld [vmem:[%s97] sm:$0xf]
    %s826 = sld [smem:[#allocation4 + $0x18a]]
    %v827 = vstv %s826
    %v828 = vmul.f32 %v825, %v827
    %v829 = vadd.f32 %v824, %v828
    %v830 = vld [vmem:[%s102] sm:$0xf]
    %s831 = sld [smem:[#allocation4 + $0x18b]]
    %v832 = vstv %s831
    %v833 = vmul.f32 %v830, %v832
    %v834 = vadd.f32 %v829, %v833
    %v835 = vld [vmem:[%s107] sm:$0xf]
    %s836 = sld [smem:[#allocation4 + $0x18c]]
    %v837 = vstv %s836
    %v838 = vmul.f32 %v835, %v837
    %v839 = vadd.f32 %v834, %v838
    %v840 = vld [vmem:[%s112] sm:$0xf]
    %s841 = sld [smem:[#allocation4 + $0x18d]]
    %v842 = vstv %s841
    %v843 = vmul.f32 %v840, %v842
    %v844 = vadd.f32 %v839, %v843
    %v845 = vld [vmem:[%s117] sm:$0xf]
    %s846 = sld [smem:[#allocation4 + $0x18e]]
    %v847 = vstv %s846
    %v848 = vmul.f32 %v845, %v847
    %v849 = vadd.f32 %v844, %v848
    %v850 = vld [vmem:[%s122] sm:$0xf]
    %s851 = sld [smem:[#allocation4 + $0x18f]]
    %v852 = vstv %s851
    %v853 = vmul.f32 %v850, %v852
    %v854 = vadd.f32 %v849, %v853
    %v855 = vld [vmem:[%s127] sm:$0xf]
    %s856 = sld [smem:[#allocation4 + $0x190]]
    %v857 = vstv %s856
    %v858 = vmul.f32 %v855, %v857
    %v859 = vadd.f32 %v854, %v858
    %v860 = vld [vmem:[%s132] sm:$0xf]
    %s861 = sld [smem:[#allocation4 + $0x191]]
    %v862 = vstv %s861
    %v863 = vmul.f32 %v860, %v862
    %v864 = vadd.f32 %v859, %v863
    %v865 = vld [vmem:[%s137] sm:$0xf]
    %s866 = sld [smem:[#allocation4 + $0x192]]
    %v867 = vstv %s866
    %v868 = vmul.f32 %v865, %v867
    %v869 = vadd.f32 %v864, %v868
    %v870 = vld [vmem:[%s142] sm:$0xf]
    %s871 = sld [smem:[#allocation4 + $0x193]]
    %v872 = vstv %s871
    %v873 = vmul.f32 %v870, %v872
    %v874 = vadd.f32 %v869, %v873
    %v875 = vld [vmem:[%s147] sm:$0xf]
    %s876 = sld [smem:[#allocation4 + $0x194]]
    %v877 = vstv %s876
    %v878 = vmul.f32 %v875, %v877
    %v879 = vadd.f32 %v874, %v878
    %v880 = vld [vmem:[%s152] sm:$0xf]
    %s881 = sld [smem:[#allocation4 + $0x195]]
    %v882 = vstv %s881
    %v883 = vmul.f32 %v880, %v882
    %v884 = vadd.f32 %v879, %v883
    %v885 = vld [vmem:[%s157] sm:$0xf]
    %s886 = sld [smem:[#allocation4 + $0x196]]
    %v887 = vstv %s886
    %v888 = vmul.f32 %v885, %v887
    %v889 = vadd.f32 %v884, %v888
    %v890 = vld [vmem:[%s162] sm:$0xf]
    %s891 = sld [smem:[#allocation4 + $0x197]]
    %v892 = vstv %s891
    %v893 = vmul.f32 %v890, %v892
    %v894 = vadd.f32 %v889, %v893
    %v895 = vld [vmem:[%s167] sm:$0xf]
    %s896 = sld [smem:[#allocation4 + $0x198]]
    %v897 = vstv %s896
    %v898 = vmul.f32 %v895, %v897
    %v899 = vadd.f32 %v894, %v898
    %v900 = vld [vmem:[%s172] sm:$0xf]
    %s901 = sld [smem:[#allocation4 + $0x199]]
    %v902 = vstv %s901
    %v903 = vmul.f32 %v900, %v902
    %v904 = vadd.f32 %v899, %v903
    %v905 = vld [vmem:[%s177] sm:$0xf]
    %s906 = sld [smem:[#allocation4 + $0x19a]]
    %v907 = vstv %s906
    %v908 = vmul.f32 %v905, %v907
    %v909 = vadd.f32 %v904, %v908
    %v910 = vld [vmem:[%s182] sm:$0xf]
    %s911 = sld [smem:[#allocation4 + $0x19b]]
    %v912 = vstv %s911
    %v913 = vmul.f32 %v910, %v912
    %v914 = vadd.f32 %v909, %v913
    %v915 = vld [vmem:[%s187] sm:$0xf]
    %s916 = sld [smem:[#allocation4 + $0x19c]]
    %v917 = vstv %s916
    %v918 = vmul.f32 %v915, %v917
    %v919 = vadd.f32 %v914, %v918
    %v920 = vld [vmem:[%s192] sm:$0xf]
    %s921 = sld [smem:[#allocation4 + $0x19d]]
    %v922 = vstv %s921
    %v923 = vmul.f32 %v920, %v922
    %v924 = vadd.f32 %v919, %v923
    %v925 = vld [vmem:[%s197] sm:$0xf]
    %s926 = sld [smem:[#allocation4 + $0x19e]]
    %v927 = vstv %s926
    %v928 = vmul.f32 %v925, %v927
    %v929 = vadd.f32 %v924, %v928
    %v930 = vld [vmem:[%s202] sm:$0xf]
    %s931 = sld [smem:[#allocation4 + $0x19f]]
    %v932 = vstv %s931
    %v933 = vmul.f32 %v930, %v932
    %v934 = vadd.f32 %v929, %v933
    %v935 = vld [vmem:[%s207] sm:$0xf]
    %s936 = sld [smem:[#allocation4 + $0x1a0]]
    %v937 = vstv %s936
    %v938 = vmul.f32 %v935, %v937
    %v939 = vadd.f32 %v934, %v938
    %v940 = vld [vmem:[%s212] sm:$0xf]
    %s941 = sld [smem:[#allocation4 + $0x1a1]]
    %v942 = vstv %s941
    %v943 = vmul.f32 %v940, %v942
    %v944 = vadd.f32 %v939, %v943
    %v945 = vld [vmem:[%s217] sm:$0xf]
    %s946 = sld [smem:[#allocation4 + $0x1a2]]
    %v947 = vstv %s946
    %v948 = vmul.f32 %v945, %v947
    %v949 = vadd.f32 %v944, %v948
    %v950 = vld [vmem:[%s222] sm:$0xf]
    %s951 = sld [smem:[#allocation4 + $0x1a3]]
    %v952 = vstv %s951
    %v953 = vmul.f32 %v950, %v952
    %v954 = vadd.f32 %v949, %v953
    %s955 = sld [smem:[#allocation7 + $0x3]]
    %v956 = vstv %s955
    %v957 = vadd.f32 %v954, %v956
    %v958 = vmax.f32 %v957, 0.0
    %959 = vst [vmem:[#allocation3 + $0xc] sm:$0xf] %v958
    %v960 = vld [vmem:[#allocation2] sm:$0xf]
    %s961 = sld [smem:[#allocation4 + $0x200]]
    %v962 = vstv %s961
    %v963 = vmul.f32 %v960, %v962
    %v964 = vld [vmem:[%s52] sm:$0xf]
    %s965 = sld [smem:[#allocation4 + $0x201]]
    %v966 = vstv %s965
    %v967 = vmul.f32 %v964, %v966
    %v968 = vadd.f32 %v963, %v967
    %v969 = vld [vmem:[%s57] sm:$0xf]
    %s970 = sld [smem:[#allocation4 + $0x202]]
    %v971 = vstv %s970
    %v972 = vmul.f32 %v969, %v971
    %v973 = vadd.f32 %v968, %v972
    %v974 = vld [vmem:[%s62] sm:$0xf]
    %s975 = sld [smem:[#allocation4 + $0x203]]
    %v976 = vstv %s975
    %v977 = vmul.f32 %v974, %v976
    %v978 = vadd.f32 %v973, %v977
    %v979 = vld [vmem:[%s67] sm:$0xf]
    %s980 = sld [smem:[#allocation4 + $0x204]]
    %v981 = vstv %s980
    %v982 = vmul.f32 %v979, %v981
    %v983 = vadd.f32 %v978, %v982
    %v984 = vld [vmem:[%s72] sm:$0xf]
    %s985 = sld [smem:[#allocation4 + $0x205]]
    %v986 = vstv %s985
    %v987 = vmul.f32 %v984, %v986
    %v988 = vadd.f32 %v983, %v987
    %v989 = vld [vmem:[%s77] sm:$0xf]
    %s990 = sld [smem:[#allocation4 + $0x206]]
    %v991 = vstv %s990
    %v992 = vmul.f32 %v989, %v991
    %v993 = vadd.f32 %v988, %v992
    %v994 = vld [vmem:[%s82] sm:$0xf]
    %s995 = sld [smem:[#allocation4 + $0x207]]
    %v996 = vstv %s995
    %v997 = vmul.f32 %v994, %v996
    %v998 = vadd.f32 %v993, %v997
    %v999 = vld [vmem:[%s87] sm:$0xf]
    %s1000 = sld [smem:[#allocation4 + $0x208]]
    %v1001 = vstv %s1000
    %v1002 = vmul.f32 %v999, %v1001
    %v1003 = vadd.f32 %v998, %v1002
    %v1004 = vld [vmem:[%s92] sm:$0xf]
    %s1005 = sld [smem:[#allocation4 + $0x209]]
    %v1006 = vstv %s1005
    %v1007 = vmul.f32 %v1004, %v1006
    %v1008 = vadd.f32 %v1003, %v1007
    %v1009 = vld [vmem:[%s97] sm:$0xf]
    %s1010 = sld [smem:[#allocation4 + $0x20a]]
    %v1011 = vstv %s1010
    %v1012 = vmul.f32 %v1009, %v1011
    %v1013 = vadd.f32 %v1008, %v1012
    %v1014 = vld [vmem:[%s102] sm:$0xf]
    %s1015 = sld [smem:[#allocation4 + $0x20b]]
    %v1016 = vstv %s1015
    %v1017 = vmul.f32 %v1014, %v1016
    %v1018 = vadd.f32 %v1013, %v1017
    %v1019 = vld [vmem:[%s107] sm:$0xf]
    %s1020 = sld [smem:[#allocation4 + $0x20c]]
    %v1021 = vstv %s1020
    %v1022 = vmul.f32 %v1019, %v1021
    %v1023 = vadd.f32 %v1018, %v1022
    %v1024 = vld [vmem:[%s112] sm:$0xf]
    %s1025 = sld [smem:[#allocation4 + $0x20d]]
    %v1026 = vstv %s1025
    %v1027 = vmul.f32 %v1024, %v1026
    %v1028 = vadd.f32 %v1023, %v1027
    %v1029 = vld [vmem:[%s117] sm:$0xf]
    %s1030 = sld [smem:[#allocation4 + $0x20e]]
    %v1031 = vstv %s1030
    %v1032 = vmul.f32 %v1029, %v1031
    %v1033 = vadd.f32 %v1028, %v1032
    %v1034 = vld [vmem:[%s122] sm:$0xf]
    %s1035 = sld [smem:[#allocation4 + $0x20f]]
    %v1036 = vstv %s1035
    %v1037 = vmul.f32 %v1034, %v1036
    %v1038 = vadd.f32 %v1033, %v1037
    %v1039 = vld [vmem:[%s127] sm:$0xf]
    %s1040 = sld [smem:[#allocation4 + $0x210]]
    %v1041 = vstv %s1040
    %v1042 = vmul.f32 %v1039, %v1041
    %v1043 = vadd.f32 %v1038, %v1042
    %v1044 = vld [vmem:[%s132] sm:$0xf]
    %s1045 = sld [smem:[#allocation4 + $0x211]]
    %v1046 = vstv %s1045
    %v1047 = vmul.f32 %v1044, %v1046
    %v1048 = vadd.f32 %v1043, %v1047
    %v1049 = vld [vmem:[%s137] sm:$0xf]
    %s1050 = sld [smem:[#allocation4 + $0x212]]
    %v1051 = vstv %s1050
    %v1052 = vmul.f32 %v1049, %v1051
    %v1053 = vadd.f32 %v1048, %v1052
    %v1054 = vld [vmem:[%s142] sm:$0xf]
    %s1055 = sld [smem:[#allocation4 + $0x213]]
    %v1056 = vstv %s1055
    %v1057 = vmul.f32 %v1054, %v1056
    %v1058 = vadd.f32 %v1053, %v1057
    %v1059 = vld [vmem:[%s147] sm:$0xf]
    %s1060 = sld [smem:[#allocation4 + $0x214]]
    %v1061 = vstv %s1060
    %v1062 = vmul.f32 %v1059, %v1061
    %v1063 = vadd.f32 %v1058, %v1062
    %v1064 = vld [vmem:[%s152] sm:$0xf]
    %s1065 = sld [smem:[#allocation4 + $0x215]]
    %v1066 = vstv %s1065
    %v1067 = vmul.f32 %v1064, %v1066
    %v1068 = vadd.f32 %v1063, %v1067
    %v1069 = vld [vmem:[%s157] sm:$0xf]
    %s1070 = sld [smem:[#allocation4 + $0x216]]
    %v1071 = vstv %s1070
    %v1072 = vmul.f32 %v1069, %v1071
    %v1073 = vadd.f32 %v1068, %v1072
    %v1074 = vld [vmem:[%s162] sm:$0xf]
    %s1075 = sld [smem:[#allocation4 + $0x217]]
    %v1076 = vstv %s1075
    %v1077 = vmul.f32 %v1074, %v1076
    %v1078 = vadd.f32 %v1073, %v1077
    %v1079 = vld [vmem:[%s167] sm:$0xf]
    %s1080 = sld [smem:[#allocation4 + $0x218]]
    %v1081 = vstv %s1080
    %v1082 = vmul.f32 %v1079, %v1081
    %v1083 = vadd.f32 %v1078, %v1082
    %v1084 = vld [vmem:[%s172] sm:$0xf]
    %s1085 = sld [smem:[#allocation4 + $0x219]]
    %v1086 = vstv %s1085
    %v1087 = vmul.f32 %v1084, %v1086
    %v1088 = vadd.f32 %v1083, %v1087
    %v1089 = vld [vmem:[%s177] sm:$0xf]
    %s1090 = sld [smem:[#allocation4 + $0x21a]]
    %v1091 = vstv %s1090
    %v1092 = vmul.f32 %v1089, %v1091
    %v1093 = vadd.f32 %v1088, %v1092
    %v1094 = vld [vmem:[%s182] sm:$0xf]
    %s1095 = sld [smem:[#allocation4 + $0x21b]]
    %v1096 = vstv %s1095
    %v1097 = vmul.f32 %v1094, %v1096
    %v1098 = vadd.f32 %v1093, %v1097
    %v1099 = vld [vmem:[%s187] sm:$0xf]
    %s1100 = sld [smem:[#allocation4 + $0x21c]]
    %v1101 = vstv %s1100
    %v1102 = vmul.f32 %v1099, %v1101
    %v1103 = vadd.f32 %v1098, %v1102
    %v1104 = vld [vmem:[%s192] sm:$0xf]
    %s1105 = sld [smem:[#allocation4 + $0x21d]]
    %v1106 = vstv %s1105
    %v1107 = vmul.f32 %v1104, %v1106
    %v1108 = vadd.f32 %v1103, %v1107
    %v1109 = vld [vmem:[%s197] sm:$0xf]
    %s1110 = sld [smem:[#allocation4 + $0x21e]]
    %v1111 = vstv %s1110
    %v1112 = vmul.f32 %v1109, %v1111
    %v1113 = vadd.f32 %v1108, %v1112
    %v1114 = vld [vmem:[%s202] sm:$0xf]
    %s1115 = sld [smem:[#allocation4 + $0x21f]]
    %v1116 = vstv %s1115
    %v1117 = vmul.f32 %v1114, %v1116
    %v1118 = vadd.f32 %v1113, %v1117
    %v1119 = vld [vmem:[%s207] sm:$0xf]
    %s1120 = sld [smem:[#allocation4 + $0x220]]
    %v1121 = vstv %s1120
    %v1122 = vmul.f32 %v1119, %v1121
    %v1123 = vadd.f32 %v1118, %v1122
    %v1124 = vld [vmem:[%s212] sm:$0xf]
    %s1125 = sld [smem:[#allocation4 + $0x221]]
    %v1126 = vstv %s1125
    %v1127 = vmul.f32 %v1124, %v1126
    %v1128 = vadd.f32 %v1123, %v1127
    %v1129 = vld [vmem:[%s217] sm:$0xf]
    %s1130 = sld [smem:[#allocation4 + $0x222]]
    %v1131 = vstv %s1130
    %v1132 = vmul.f32 %v1129, %v1131
    %v1133 = vadd.f32 %v1128, %v1132
    %v1134 = vld [vmem:[%s222] sm:$0xf]
    %s1135 = sld [smem:[#allocation4 + $0x223]]
    %v1136 = vstv %s1135
    %v1137 = vmul.f32 %v1134, %v1136
    %v1138 = vadd.f32 %v1133, %v1137
    %s1139 = sld [smem:[#allocation7 + $0x4]]
    %v1140 = vstv %s1139
    %v1141 = vadd.f32 %v1138, %v1140
    %v1142 = vmax.f32 %v1141, 0.0
    %1143 = vst [vmem:[#allocation3 + $0x10] sm:$0xf] %v1142
    %v1144 = vld [vmem:[#allocation2] sm:$0xf]
    %s1145 = sld [smem:[#allocation4 + $0x280]]
    %v1146 = vstv %s1145
    %v1147 = vmul.f32 %v1144, %v1146
    %v1148 = vld [vmem:[%s52] sm:$0xf]
    %s1149 = sld [smem:[#allocation4 + $0x281]]
    %v1150 = vstv %s1149
    %v1151 = vmul.f32 %v1148, %v1150
    %v1152 = vadd.f32 %v1147, %v1151
    %v1153 = vld [vmem:[%s57] sm:$0xf]
    %s1154 = sld [smem:[#allocation4 + $0x282]]
    %v1155 = vstv %s1154
    %v1156 = vmul.f32 %v1153, %v1155
    %v1157 = vadd.f32 %v1152, %v1156
    %v1158 = vld [vmem:[%s62] sm:$0xf]
    %s1159 = sld [smem:[#allocation4 + $0x283]]
    %v1160 = vstv %s1159
    %v1161 = vmul.f32 %v1158, %v1160
    %v1162 = vadd.f32 %v1157, %v1161
    %v1163 = vld [vmem:[%s67] sm:$0xf]
    %s1164 = sld [smem:[#allocation4 + $0x284]]
    %v1165 = vstv %s1164
    %v1166 = vmul.f32 %v1163, %v1165
    %v1167 = vadd.f32 %v1162, %v1166
    %v1168 = vld [vmem:[%s72] sm:$0xf]
    %s1169 = sld [smem:[#allocation4 + $0x285]]
    %v1170 = vstv %s1169
    %v1171 = vmul.f32 %v1168, %v1170
    %v1172 = vadd.f32 %v1167, %v1171
    %v1173 = vld [vmem:[%s77] sm:$0xf]
    %s1174 = sld [smem:[#allocation4 + $0x286]]
    %v1175 = vstv %s1174
    %v1176 = vmul.f32 %v1173, %v1175
    %v1177 = vadd.f32 %v1172, %v1176
    %v1178 = vld [vmem:[%s82] sm:$0xf]
    %s1179 = sld [smem:[#allocation4 + $0x287]]
    %v1180 = vstv %s1179
    %v1181 = vmul.f32 %v1178, %v1180
    %v1182 = vadd.f32 %v1177, %v1181
    %v1183 = vld [vmem:[%s87] sm:$0xf]
    %s1184 = sld [smem:[#allocation4 + $0x288]]
    %v1185 = vstv %s1184
    %v1186 = vmul.f32 %v1183, %v1185
    %v1187 = vadd.f32 %v1182, %v1186
    %v1188 = vld [vmem:[%s92] sm:$0xf]
    %s1189 = sld [smem:[#allocation4 + $0x289]]
    %v1190 = vstv %s1189
    %v1191 = vmul.f32 %v1188, %v1190
    %v1192 = vadd.f32 %v1187, %v1191
    %v1193 = vld [vmem:[%s97] sm:$0xf]
    %s1194 = sld [smem:[#allocation4 + $0x28a]]
    %v1195 = vstv %s1194
    %v1196 = vmul.f32 %v1193, %v1195
    %v1197 = vadd.f32 %v1192, %v1196
    %v1198 = vld [vmem:[%s102] sm:$0xf]
    %s1199 = sld [smem:[#allocation4 + $0x28b]]
    %v1200 = vstv %s1199
    %v1201 = vmul.f32 %v1198, %v1200
    %v1202 = vadd.f32 %v1197, %v1201
    %v1203 = vld [vmem:[%s107] sm:$0xf]
    %s1204 = sld [smem:[#allocation4 + $0x28c]]
    %v1205 = vstv %s1204
    %v1206 = vmul.f32 %v1203, %v1205
    %v1207 = vadd.f32 %v1202, %v1206
    %v1208 = vld [vmem:[%s112] sm:$0xf]
    %s1209 = sld [smem:[#allocation4 + $0x28d]]
    %v1210 = vstv %s1209
    %v1211 = vmul.f32 %v1208, %v1210
    %v1212 = vadd.f32 %v1207, %v1211
    %v1213 = vld [vmem:[%s117] sm:$0xf]
    %s1214 = sld [smem:[#allocation4 + $0x28e]]
    %v1215 = vstv %s1214
    %v1216 = vmul.f32 %v1213, %v1215
    %v1217 = vadd.f32 %v1212, %v1216
    %v1218 = vld [vmem:[%s122] sm:$0xf]
    %s1219 = sld [smem:[#allocation4 + $0x28f]]
    %v1220 = vstv %s1219
    %v1221 = vmul.f32 %v1218, %v1220
    %v1222 = vadd.f32 %v1217, %v1221
    %v1223 = vld [vmem:[%s127] sm:$0xf]
    %s1224 = sld [smem:[#allocation4 + $0x290]]
    %v1225 = vstv %s1224
    %v1226 = vmul.f32 %v1223, %v1225
    %v1227 = vadd.f32 %v1222, %v1226
    %v1228 = vld [vmem:[%s132] sm:$0xf]
    %s1229 = sld [smem:[#allocation4 + $0x291]]
    %v1230 = vstv %s1229
    %v1231 = vmul.f32 %v1228, %v1230
    %v1232 = vadd.f32 %v1227, %v1231
    %v1233 = vld [vmem:[%s137] sm:$0xf]
    %s1234 = sld [smem:[#allocation4 + $0x292]]
    %v1235 = vstv %s1234
    %v1236 = vmul.f32 %v1233, %v1235
    %v1237 = vadd.f32 %v1232, %v1236
    %v1238 = vld [vmem:[%s142] sm:$0xf]
    %s1239 = sld [smem:[#allocation4 + $0x293]]
    %v1240 = vstv %s1239
    %v1241 = vmul.f32 %v1238, %v1240
    %v1242 = vadd.f32 %v1237, %v1241
    %v1243 = vld [vmem:[%s147] sm:$0xf]
    %s1244 = sld [smem:[#allocation4 + $0x294]]
    %v1245 = vstv %s1244
    %v1246 = vmul.f32 %v1243, %v1245
    %v1247 = vadd.f32 %v1242, %v1246
    %v1248 = vld [vmem:[%s152] sm:$0xf]
    %s1249 = sld [smem:[#allocation4 + $0x295]]
    %v1250 = vstv %s1249
    %v1251 = vmul.f32 %v1248, %v1250
    %v1252 = vadd.f32 %v1247, %v1251
    %v1253 = vld [vmem:[%s157] sm:$0xf]
    %s1254 = sld [smem:[#allocation4 + $0x296]]
    %v1255 = vstv %s1254
    %v1256 = vmul.f32 %v1253, %v1255
    %v1257 = vadd.f32 %v1252, %v1256
    %v1258 = vld [vmem:[%s162] sm:$0xf]
    %s1259 = sld [smem:[#allocation4 + $0x297]]
    %v1260 = vstv %s1259
    %v1261 = vmul.f32 %v1258, %v1260
    %v1262 = vadd.f32 %v1257, %v1261
    %v1263 = vld [vmem:[%s167] sm:$0xf]
    %s1264 = sld [smem:[#allocation4 + $0x298]]
    %v1265 = vstv %s1264
    %v1266 = vmul.f32 %v1263, %v1265
    %v1267 = vadd.f32 %v1262, %v1266
    %v1268 = vld [vmem:[%s172] sm:$0xf]
    %s1269 = sld [smem:[#allocation4 + $0x299]]
    %v1270 = vstv %s1269
    %v1271 = vmul.f32 %v1268, %v1270
    %v1272 = vadd.f32 %v1267, %v1271
    %v1273 = vld [vmem:[%s177] sm:$0xf]
    %s1274 = sld [smem:[#allocation4 + $0x29a]]
    %v1275 = vstv %s1274
    %v1276 = vmul.f32 %v1273, %v1275
    %v1277 = vadd.f32 %v1272, %v1276
    %v1278 = vld [vmem:[%s182] sm:$0xf]
    %s1279 = sld [smem:[#allocation4 + $0x29b]]
    %v1280 = vstv %s1279
    %v1281 = vmul.f32 %v1278, %v1280
    %v1282 = vadd.f32 %v1277, %v1281
    %v1283 = vld [vmem:[%s187] sm:$0xf]
    %s1284 = sld [smem:[#allocation4 + $0x29c]]
    %v1285 = vstv %s1284
    %v1286 = vmul.f32 %v1283, %v1285
    %v1287 = vadd.f32 %v1282, %v1286
    %v1288 = vld [vmem:[%s192] sm:$0xf]
    %s1289 = sld [smem:[#allocation4 + $0x29d]]
    %v1290 = vstv %s1289
    %v1291 = vmul.f32 %v1288, %v1290
    %v1292 = vadd.f32 %v1287, %v1291
    %v1293 = vld [vmem:[%s197] sm:$0xf]
    %s1294 = sld [smem:[#allocation4 + $0x29e]]
    %v1295 = vstv %s1294
    %v1296 = vmul.f32 %v1293, %v1295
    %v1297 = vadd.f32 %v1292, %v1296
    %v1298 = vld [vmem:[%s202] sm:$0xf]
    %s1299 = sld [smem:[#allocation4 + $0x29f]]
    %v1300 = vstv %s1299
    %v1301 = vmul.f32 %v1298, %v1300
    %v1302 = vadd.f32 %v1297, %v1301
    %v1303 = vld [vmem:[%s207] sm:$0xf]
    %s1304 = sld [smem:[#allocation4 + $0x2a0]]
    %v1305 = vstv %s1304
    %v1306 = vmul.f32 %v1303, %v1305
    %v1307 = vadd.f32 %v1302, %v1306
    %v1308 = vld [vmem:[%s212] sm:$0xf]
    %s1309 = sld [smem:[#allocation4 + $0x2a1]]
    %v1310 = vstv %s1309
    %v1311 = vmul.f32 %v1308, %v1310
    %v1312 = vadd.f32 %v1307, %v1311
    %v1313 = vld [vmem:[%s217] sm:$0xf]
    %s1314 = sld [smem:[#allocation4 + $0x2a2]]
    %v1315 = vstv %s1314
    %v1316 = vmul.f32 %v1313, %v1315
    %v1317 = vadd.f32 %v1312, %v1316
    %v1318 = vld [vmem:[%s222] sm:$0xf]
    %s1319 = sld [smem:[#allocation4 + $0x2a3]]
    %v1320 = vstv %s1319
    %v1321 = vmul.f32 %v1318, %v1320
    %v1322 = vadd.f32 %v1317, %v1321
    %s1323 = sld [smem:[#allocation7 + $0x5]]
    %v1324 = vstv %s1323
    %v1325 = vadd.f32 %v1322, %v1324
    %v1326 = vmax.f32 %v1325, 0.0
    %1327 = vst [vmem:[#allocation3 + $0x14] sm:$0xf] %v1326
    %v1328 = vld [vmem:[#allocation2] sm:$0xf]
    %s1329 = sld [smem:[#allocation4 + $0x300]]
    %v1330 = vstv %s1329
    %v1331 = vmul.f32 %v1328, %v1330
    %v1332 = vld [vmem:[%s52] sm:$0xf]
    %s1333 = sld [smem:[#allocation4 + $0x301]]
    %v1334 = vstv %s1333
    %v1335 = vmul.f32 %v1332, %v1334
    %v1336 = vadd.f32 %v1331, %v1335
    %v1337 = vld [vmem:[%s57] sm:$0xf]
    %s1338 = sld [smem:[#allocation4 + $0x302]]
    %v1339 = vstv %s1338
    %v1340 = vmul.f32 %v1337, %v1339
    %v1341 = vadd.f32 %v1336, %v1340
    %v1342 = vld [vmem:[%s62] sm:$0xf]
    %s1343 = sld [smem:[#allocation4 + $0x303]]
    %v1344 = vstv %s1343
    %v1345 = vmul.f32 %v1342, %v1344
    %v1346 = vadd.f32 %v1341, %v1345
    %v1347 = vld [vmem:[%s67] sm:$0xf]
    %s1348 = sld [smem:[#allocation4 + $0x304]]
    %v1349 = vstv %s1348
    %v1350 = vmul.f32 %v1347, %v1349
    %v1351 = vadd.f32 %v1346, %v1350
    %v1352 = vld [vmem:[%s72] sm:$0xf]
    %s1353 = sld [smem:[#allocation4 + $0x305]]
    %v1354 = vstv %s1353
    %v1355 = vmul.f32 %v1352, %v1354
    %v1356 = vadd.f32 %v1351, %v1355
    %v1357 = vld [vmem:[%s77] sm:$0xf]
    %s1358 = sld [smem:[#allocation4 + $0x306]]
    %v1359 = vstv %s1358
    %v1360 = vmul.f32 %v1357, %v1359
    %v1361 = vadd.f32 %v1356, %v1360
    %v1362 = vld [vmem:[%s82] sm:$0xf]
    %s1363 = sld [smem:[#allocation4 + $0x307]]
    %v1364 = vstv %s1363
    %v1365 = vmul.f32 %v1362, %v1364
    %v1366 = vadd.f32 %v1361, %v1365
    %v1367 = vld [vmem:[%s87] sm:$0xf]
    %s1368 = sld [smem:[#allocation4 + $0x308]]
    %v1369 = vstv %s1368
    %v1370 = vmul.f32 %v1367, %v1369
    %v1371 = vadd.f32 %v1366, %v1370
    %v1372 = vld [vmem:[%s92] sm:$0xf]
    %s1373 = sld [smem:[#allocation4 + $0x309]]
    %v1374 = vstv %s1373
    %v1375 = vmul.f32 %v1372, %v1374
    %v1376 = vadd.f32 %v1371, %v1375
    %v1377 = vld [vmem:[%s97] sm:$0xf]
    %s1378 = sld [smem:[#allocation4 + $0x30a]]
    %v1379 = vstv %s1378
    %v1380 = vmul.f32 %v1377, %v1379
    %v1381 = vadd.f32 %v1376, %v1380
    %v1382 = vld [vmem:[%s102] sm:$0xf]
    %s1383 = sld [smem:[#allocation4 + $0x30b]]
    %v1384 = vstv %s1383
    %v1385 = vmul.f32 %v1382, %v1384
    %v1386 = vadd.f32 %v1381, %v1385
    %v1387 = vld [vmem:[%s107] sm:$0xf]
    %s1388 = sld [smem:[#allocation4 + $0x30c]]
    %v1389 = vstv %s1388
    %v1390 = vmul.f32 %v1387, %v1389
    %v1391 = vadd.f32 %v1386, %v1390
    %v1392 = vld [vmem:[%s112] sm:$0xf]
    %s1393 = sld [smem:[#allocation4 + $0x30d]]
    %v1394 = vstv %s1393
    %v1395 = vmul.f32 %v1392, %v1394
    %v1396 = vadd.f32 %v1391, %v1395
    %v1397 = vld [vmem:[%s117] sm:$0xf]
    %s1398 = sld [smem:[#allocation4 + $0x30e]]
    %v1399 = vstv %s1398
    %v1400 = vmul.f32 %v1397, %v1399
    %v1401 = vadd.f32 %v1396, %v1400
    %v1402 = vld [vmem:[%s122] sm:$0xf]
    %s1403 = sld [smem:[#allocation4 + $0x30f]]
    %v1404 = vstv %s1403
    %v1405 = vmul.f32 %v1402, %v1404
    %v1406 = vadd.f32 %v1401, %v1405
    %v1407 = vld [vmem:[%s127] sm:$0xf]
    %s1408 = sld [smem:[#allocation4 + $0x310]]
    %v1409 = vstv %s1408
    %v1410 = vmul.f32 %v1407, %v1409
    %v1411 = vadd.f32 %v1406, %v1410
    %v1412 = vld [vmem:[%s132] sm:$0xf]
    %s1413 = sld [smem:[#allocation4 + $0x311]]
    %v1414 = vstv %s1413
    %v1415 = vmul.f32 %v1412, %v1414
    %v1416 = vadd.f32 %v1411, %v1415
    %v1417 = vld [vmem:[%s137] sm:$0xf]
    %s1418 = sld [smem:[#allocation4 + $0x312]]
    %v1419 = vstv %s1418
    %v1420 = vmul.f32 %v1417, %v1419
    %v1421 = vadd.f32 %v1416, %v1420
    %v1422 = vld [vmem:[%s142] sm:$0xf]
    %s1423 = sld [smem:[#allocation4 + $0x313]]
    %v1424 = vstv %s1423
    %v1425 = vmul.f32 %v1422, %v1424
    %v1426 = vadd.f32 %v1421, %v1425
    %v1427 = vld [vmem:[%s147] sm:$0xf]
    %s1428 = sld [smem:[#allocation4 + $0x314]]
    %v1429 = vstv %s1428
    %v1430 = vmul.f32 %v1427, %v1429
    %v1431 = vadd.f32 %v1426, %v1430
    %v1432 = vld [vmem:[%s152] sm:$0xf]
    %s1433 = sld [smem:[#allocation4 + $0x315]]
    %v1434 = vstv %s1433
    %v1435 = vmul.f32 %v1432, %v1434
    %v1436 = vadd.f32 %v1431, %v1435
    %v1437 = vld [vmem:[%s157] sm:$0xf]
    %s1438 = sld [smem:[#allocation4 + $0x316]]
    %v1439 = vstv %s1438
    %v1440 = vmul.f32 %v1437, %v1439
    %v1441 = vadd.f32 %v1436, %v1440
    %v1442 = vld [vmem:[%s162] sm:$0xf]
    %s1443 = sld [smem:[#allocation4 + $0x317]]
    %v1444 = vstv %s1443
    %v1445 = vmul.f32 %v1442, %v1444
    %v1446 = vadd.f32 %v1441, %v1445
    %v1447 = vld [vmem:[%s167] sm:$0xf]
    %s1448 = sld [smem:[#allocation4 + $0x318]]
    %v1449 = vstv %s1448
    %v1450 = vmul.f32 %v1447, %v1449
    %v1451 = vadd.f32 %v1446, %v1450
    %v1452 = vld [vmem:[%s172] sm:$0xf]
    %s1453 = sld [smem:[#allocation4 + $0x319]]
    %v1454 = vstv %s1453
    %v1455 = vmul.f32 %v1452, %v1454
    %v1456 = vadd.f32 %v1451, %v1455
    %v1457 = vld [vmem:[%s177] sm:$0xf]
    %s1458 = sld [smem:[#allocation4 + $0x31a]]
    %v1459 = vstv %s1458
    %v1460 = vmul.f32 %v1457, %v1459
    %v1461 = vadd.f32 %v1456, %v1460
    %v1462 = vld [vmem:[%s182] sm:$0xf]
    %s1463 = sld [smem:[#allocation4 + $0x31b]]
    %v1464 = vstv %s1463
    %v1465 = vmul.f32 %v1462, %v1464
    %v1466 = vadd.f32 %v1461, %v1465
    %v1467 = vld [vmem:[%s187] sm:$0xf]
    %s1468 = sld [smem:[#allocation4 + $0x31c]]
    %v1469 = vstv %s1468
    %v1470 = vmul.f32 %v1467, %v1469
    %v1471 = vadd.f32 %v1466, %v1470
    %v1472 = vld [vmem:[%s192] sm:$0xf]
    %s1473 = sld [smem:[#allocation4 + $0x31d]]
    %v1474 = vstv %s1473
    %v1475 = vmul.f32 %v1472, %v1474
    %v1476 = vadd.f32 %v1471, %v1475
    %v1477 = vld [vmem:[%s197] sm:$0xf]
    %s1478 = sld [smem:[#allocation4 + $0x31e]]
    %v1479 = vstv %s1478
    %v1480 = vmul.f32 %v1477, %v1479
    %v1481 = vadd.f32 %v1476, %v1480
    %v1482 = vld [vmem:[%s202] sm:$0xf]
    %s1483 = sld [smem:[#allocation4 + $0x31f]]
    %v1484 = vstv %s1483
    %v1485 = vmul.f32 %v1482, %v1484
    %v1486 = vadd.f32 %v1481, %v1485
    %v1487 = vld [vmem:[%s207] sm:$0xf]
    %s1488 = sld [smem:[#allocation4 + $0x320]]
    %v1489 = vstv %s1488
    %v1490 = vmul.f32 %v1487, %v1489
    %v1491 = vadd.f32 %v1486, %v1490
    %v1492 = vld [vmem:[%s212] sm:$0xf]
    %s1493 = sld [smem:[#allocation4 + $0x321]]
    %v1494 = vstv %s1493
    %v1495 = vmul.f32 %v1492, %v1494
    %v1496 = vadd.f32 %v1491, %v1495
    %v1497 = vld [vmem:[%s217] sm:$0xf]
    %s1498 = sld [smem:[#allocation4 + $0x322]]
    %v1499 = vstv %s1498
    %v1500 = vmul.f32 %v1497, %v1499
    %v1501 = vadd.f32 %v1496, %v1500
    %v1502 = vld [vmem:[%s222] sm:$0xf]
    %s1503 = sld [smem:[#allocation4 + $0x323]]
    %v1504 = vstv %s1503
    %v1505 = vmul.f32 %v1502, %v1504
    %v1506 = vadd.f32 %v1501, %v1505
    %s1507 = sld [smem:[#allocation7 + $0x6]]
    %v1508 = vstv %s1507
    %v1509 = vadd.f32 %v1506, %v1508
    %v1510 = vmax.f32 %v1509, 0.0
    %1511 = vst [vmem:[#allocation3 + $0x18] sm:$0xf] %v1510
    %v1512 = vld [vmem:[#allocation2] sm:$0xf]
    %s1513 = sld [smem:[#allocation4 + $0x380]]
    %v1514 = vstv %s1513
    %v1515 = vmul.f32 %v1512, %v1514
    %v1516 = vld [vmem:[%s52] sm:$0xf]
    %s1517 = sld [smem:[#allocation4 + $0x381]]
    %v1518 = vstv %s1517
    %v1519 = vmul.f32 %v1516, %v1518
    %v1520 = vadd.f32 %v1515, %v1519
    %v1521 = vld [vmem:[%s57] sm:$0xf]
    %s1522 = sld [smem:[#allocation4 + $0x382]]
    %v1523 = vstv %s1522
    %v1524 = vmul.f32 %v1521, %v1523
    %v1525 = vadd.f32 %v1520, %v1524
    %v1526 = vld [vmem:[%s62] sm:$0xf]
    %s1527 = sld [smem:[#allocation4 + $0x383]]
    %v1528 = vstv %s1527
    %v1529 = vmul.f32 %v1526, %v1528
    %v1530 = vadd.f32 %v1525, %v1529
    %v1531 = vld [vmem:[%s67] sm:$0xf]
    %s1532 = sld [smem:[#allocation4 + $0x384]]
    %v1533 = vstv %s1532
    %v1534 = vmul.f32 %v1531, %v1533
    %v1535 = vadd.f32 %v1530, %v1534
    %v1536 = vld [vmem:[%s72] sm:$0xf]
    %s1537 = sld [smem:[#allocation4 + $0x385]]
    %v1538 = vstv %s1537
    %v1539 = vmul.f32 %v1536, %v1538
    %v1540 = vadd.f32 %v1535, %v1539
    %v1541 = vld [vmem:[%s77] sm:$0xf]
    %s1542 = sld [smem:[#allocation4 + $0x386]]
    %v1543 = vstv %s1542
    %v1544 = vmul.f32 %v1541, %v1543
    %v1545 = vadd.f32 %v1540, %v1544
    %v1546 = vld [vmem:[%s82] sm:$0xf]
    %s1547 = sld [smem:[#allocation4 + $0x387]]
    %v1548 = vstv %s1547
    %v1549 = vmul.f32 %v1546, %v1548
    %v1550 = vadd.f32 %v1545, %v1549
    %v1551 = vld [vmem:[%s87] sm:$0xf]
    %s1552 = sld [smem:[#allocation4 + $0x388]]
    %v1553 = vstv %s1552
    %v1554 = vmul.f32 %v1551, %v1553
    %v1555 = vadd.f32 %v1550, %v1554
    %v1556 = vld [vmem:[%s92] sm:$0xf]
    %s1557 = sld [smem:[#allocation4 + $0x389]]
    %v1558 = vstv %s1557
    %v1559 = vmul.f32 %v1556, %v1558
    %v1560 = vadd.f32 %v1555, %v1559
    %v1561 = vld [vmem:[%s97] sm:$0xf]
    %s1562 = sld [smem:[#allocation4 + $0x38a]]
    %v1563 = vstv %s1562
    %v1564 = vmul.f32 %v1561, %v1563
    %v1565 = vadd.f32 %v1560, %v1564
    %v1566 = vld [vmem:[%s102] sm:$0xf]
    %s1567 = sld [smem:[#allocation4 + $0x38b]]
    %v1568 = vstv %s1567
    %v1569 = vmul.f32 %v1566, %v1568
    %v1570 = vadd.f32 %v1565, %v1569
    %v1571 = vld [vmem:[%s107] sm:$0xf]
    %s1572 = sld [smem:[#allocation4 + $0x38c]]
    %v1573 = vstv %s1572
    %v1574 = vmul.f32 %v1571, %v1573
    %v1575 = vadd.f32 %v1570, %v1574
    %v1576 = vld [vmem:[%s112] sm:$0xf]
    %s1577 = sld [smem:[#allocation4 + $0x38d]]
    %v1578 = vstv %s1577
    %v1579 = vmul.f32 %v1576, %v1578
    %v1580 = vadd.f32 %v1575, %v1579
    %v1581 = vld [vmem:[%s117] sm:$0xf]
    %s1582 = sld [smem:[#allocation4 + $0x38e]]
    %v1583 = vstv %s1582
    %v1584 = vmul.f32 %v1581, %v1583
    %v1585 = vadd.f32 %v1580, %v1584
    %v1586 = vld [vmem:[%s122] sm:$0xf]
    %s1587 = sld [smem:[#allocation4 + $0x38f]]
    %v1588 = vstv %s1587
    %v1589 = vmul.f32 %v1586, %v1588
    %v1590 = vadd.f32 %v1585, %v1589
    %v1591 = vld [vmem:[%s127] sm:$0xf]
    %s1592 = sld [smem:[#allocation4 + $0x390]]
    %v1593 = vstv %s1592
    %v1594 = vmul.f32 %v1591, %v1593
    %v1595 = vadd.f32 %v1590, %v1594
    %v1596 = vld [vmem:[%s132] sm:$0xf]
    %s1597 = sld [smem:[#allocation4 + $0x391]]
    %v1598 = vstv %s1597
    %v1599 = vmul.f32 %v1596, %v1598
    %v1600 = vadd.f32 %v1595, %v1599
    %v1601 = vld [vmem:[%s137] sm:$0xf]
    %s1602 = sld [smem:[#allocation4 + $0x392]]
    %v1603 = vstv %s1602
    %v1604 = vmul.f32 %v1601, %v1603
    %v1605 = vadd.f32 %v1600, %v1604
    %v1606 = vld [vmem:[%s142] sm:$0xf]
    %s1607 = sld [smem:[#allocation4 + $0x393]]
    %v1608 = vstv %s1607
    %v1609 = vmul.f32 %v1606, %v1608
    %v1610 = vadd.f32 %v1605, %v1609
    %v1611 = vld [vmem:[%s147] sm:$0xf]
    %s1612 = sld [smem:[#allocation4 + $0x394]]
    %v1613 = vstv %s1612
    %v1614 = vmul.f32 %v1611, %v1613
    %v1615 = vadd.f32 %v1610, %v1614
    %v1616 = vld [vmem:[%s152] sm:$0xf]
    %s1617 = sld [smem:[#allocation4 + $0x395]]
    %v1618 = vstv %s1617
    %v1619 = vmul.f32 %v1616, %v1618
    %v1620 = vadd.f32 %v1615, %v1619
    %v1621 = vld [vmem:[%s157] sm:$0xf]
    %s1622 = sld [smem:[#allocation4 + $0x396]]
    %v1623 = vstv %s1622
    %v1624 = vmul.f32 %v1621, %v1623
    %v1625 = vadd.f32 %v1620, %v1624
    %v1626 = vld [vmem:[%s162] sm:$0xf]
    %s1627 = sld [smem:[#allocation4 + $0x397]]
    %v1628 = vstv %s1627
    %v1629 = vmul.f32 %v1626, %v1628
    %v1630 = vadd.f32 %v1625, %v1629
    %v1631 = vld [vmem:[%s167] sm:$0xf]
    %s1632 = sld [smem:[#allocation4 + $0x398]]
    %v1633 = vstv %s1632
    %v1634 = vmul.f32 %v1631, %v1633
    %v1635 = vadd.f32 %v1630, %v1634
    %v1636 = vld [vmem:[%s172] sm:$0xf]
    %s1637 = sld [smem:[#allocation4 + $0x399]]
    %v1638 = vstv %s1637
    %v1639 = vmul.f32 %v1636, %v1638
    %v1640 = vadd.f32 %v1635, %v1639
    %v1641 = vld [vmem:[%s177] sm:$0xf]
    %s1642 = sld [smem:[#allocation4 + $0x39a]]
    %v1643 = vstv %s1642
    %v1644 = vmul.f32 %v1641, %v1643
    %v1645 = vadd.f32 %v1640, %v1644
    %v1646 = vld [vmem:[%s182] sm:$0xf]
    %s1647 = sld [smem:[#allocation4 + $0x39b]]
    %v1648 = vstv %s1647
    %v1649 = vmul.f32 %v1646, %v1648
    %v1650 = vadd.f32 %v1645, %v1649
    %v1651 = vld [vmem:[%s187] sm:$0xf]
    %s1652 = sld [smem:[#allocation4 + $0x39c]]
    %v1653 = vstv %s1652
    %v1654 = vmul.f32 %v1651, %v1653
    %v1655 = vadd.f32 %v1650, %v1654
    %v1656 = vld [vmem:[%s192] sm:$0xf]
    %s1657 = sld [smem:[#allocation4 + $0x39d]]
    %v1658 = vstv %s1657
    %v1659 = vmul.f32 %v1656, %v1658
    %v1660 = vadd.f32 %v1655, %v1659
    %v1661 = vld [vmem:[%s197] sm:$0xf]
    %s1662 = sld [smem:[#allocation4 + $0x39e]]
    %v1663 = vstv %s1662
    %v1664 = vmul.f32 %v1661, %v1663
    %v1665 = vadd.f32 %v1660, %v1664
    %v1666 = vld [vmem:[%s202] sm:$0xf]
    %s1667 = sld [smem:[#allocation4 + $0x39f]]
    %v1668 = vstv %s1667
    %v1669 = vmul.f32 %v1666, %v1668
    %v1670 = vadd.f32 %v1665, %v1669
    %v1671 = vld [vmem:[%s207] sm:$0xf]
    %s1672 = sld [smem:[#allocation4 + $0x3a0]]
    %v1673 = vstv %s1672
    %v1674 = vmul.f32 %v1671, %v1673
    %v1675 = vadd.f32 %v1670, %v1674
    %v1676 = vld [vmem:[%s212] sm:$0xf]
    %s1677 = sld [smem:[#allocation4 + $0x3a1]]
    %v1678 = vstv %s1677
    %v1679 = vmul.f32 %v1676, %v1678
    %v1680 = vadd.f32 %v1675, %v1679
    %v1681 = vld [vmem:[%s217] sm:$0xf]
    %s1682 = sld [smem:[#allocation4 + $0x3a2]]
    %v1683 = vstv %s1682
    %v1684 = vmul.f32 %v1681, %v1683
    %v1685 = vadd.f32 %v1680, %v1684
    %v1686 = vld [vmem:[%s222] sm:$0xf]
    %s1687 = sld [smem:[#allocation4 + $0x3a3]]
    %v1688 = vstv %s1687
    %v1689 = vmul.f32 %v1686, %v1688
    %v1690 = vadd.f32 %v1685, %v1689
    %s1691 = sld [smem:[#allocation7 + $0x7]]
    %v1692 = vstv %s1691
    %v1693 = vadd.f32 %v1690, %v1692
    %v1694 = vmax.f32 %v1693, 0.0
    %1695 = vst [vmem:[#allocation3 + $0x1c] sm:$0xf] %v1694
    %v1696 = vld [vmem:[#allocation3] sm:$0xff]
    %v1697 = vld [vmem:[#allocation3 + $0x8] sm:$0xff]
    %v1698 = vld [vmem:[#allocation3 + $0x10] sm:$0xff]
    %v1699 = vld [vmem:[#allocation3 + $0x18] sm:$0xff]
    %v1700 = vld [vmem:[%s3] sm:$0xff]
    %v1701 = vld [vmem:[%s3 + $0x8] sm:$0xff]
    %v1702 = vld [vmem:[%s3 + $0x10] sm:$0xff]
    %v1703 = vld [vmem:[%s3 + $0x18] sm:$0xff]
    %v1704 = vld [vmem:[%s3 + $0x20] sm:$0xff]
    %v1705 = vld [vmem:[%s3 + $0x28] sm:$0xff]
    %v1706 = vld [vmem:[%s3 + $0x30] sm:$0xff]
    %v1707 = vld [vmem:[%s3 + $0x38] sm:$0xff]
    %v1708 = vld [vmem:[%s3 + $0x40] sm:$0xff]
    %v1709 = vld [vmem:[%s3 + $0x48] sm:$0xff]
    %v1710 = vld [vmem:[%s3 + $0x50] sm:$0xff]
    %v1711 = vld [vmem:[%s3 + $0x58] sm:$0xff]
    %v1712 = vld [vmem:[%s3 + $0x60] sm:$0xff]
    %v1713 = vld [vmem:[%s3 + $0x68] sm:$0xff]
    %v1714 = vld [vmem:[%s3 + $0x70] sm:$0xff]
    %v1715 = vld [vmem:[%s3 + $0x78] sm:$0xff]
    %v1716 = vld [vmem:[%s3 + $0x80] sm:$0x3]
    %v1717 = vld [vmem:[%s3 + $0x88] sm:$0x3]
    %v1718 = vld [vmem:[%s3 + $0x90] sm:$0x3]
    %v1719 = vld [vmem:[%s3 + $0x98] sm:$0x3]
    %v1720 = vld [vmem:[%s3 + $0xa0] sm:$0x3]
    %v1721 = vld [vmem:[%s3 + $0xa8] sm:$0x3]
    %v1722 = vld [vmem:[%s3 + $0xb0] sm:$0x3]
    %v1723 = vld [vmem:[%s3 + $0xb8] sm:$0x3]
    %v1724 = vld [vmem:[%s3 + $0xc0] sm:$0x3]
    %v1725 = vld [vmem:[%s3 + $0xc8] sm:$0x3]
    %v1726 = vld [vmem:[%s3 + $0xd0] sm:$0x3]
    %v1727 = vld [vmem:[%s3 + $0xd8] sm:$0x3]
    %v1728 = vld [vmem:[%s3 + $0xe0] sm:$0x3]
    %v1729 = vld [vmem:[%s3 + $0xe8] sm:$0x3]
    %v1730 = vld [vmem:[%s3 + $0xf0] sm:$0x3]
    %v1731 = vld [vmem:[%s3 + $0xf8] sm:$0x3]
    %v1732 = vld [vmem:[%s4] sm:$0x1]
    %v1734 = vlaneseq
    %v1735 = vshrl.u32 %v1734, 7
    %v1736 = vsub.s32 0, %v1735
    %v1737 = vrot.slane %v1732, %v1736
    %v1743 = vcombine.high %v1696, %v1696
    %v1745 = vunpack.c.l.s4 1983009808
    %v1746 = vunpack.c.0.s8 %v1745
    %v1747 = vlaneseq
    %v1748 = vshrl.u32 %v1747, 7
    %v1749 = vsub.s32 %v1746, %v1748
    %v1750 = vrot.slane %v1696, %v1749
    %v1752 = vunpack.c.l.s4 1983009808
    %v1753 = vunpack.c.0.s8 %v1752
    %v1754 = vlaneseq
    %v1755 = vshrl.u32 %v1754, 7
    %v1756 = vsub.s32 %v1753, %v1755
    %v1757 = vrot.slane %v1743, %v1756
    %v1758 = vcombine.high %v1750, %v1750
    %v1759 = vcombine.high %v1757, %v1757
    %v1760 = vcombine.high %v1697, %v1697
    %v1762 = vunpack.c.l.s4 1983009808
    %v1763 = vunpack.c.0.s8 %v1762
    %v1764 = vlaneseq
    %v1765 = vshrl.u32 %v1764, 7
    %v1766 = vsub.s32 %v1763, %v1765
    %v1767 = vrot.slane %v1697, %v1766
    %v1769 = vunpack.c.l.s4 1983009808
    %v1770 = vunpack.c.0.s8 %v1769
    %v1771 = vlaneseq
    %v1772 = vshrl.u32 %v1771, 7
    %v1773 = vsub.s32 %v1770, %v1772
    %v1774 = vrot.slane %v1760, %v1773
    %v1775 = vcombine.high %v1767, %v1767
    %v1776 = vcombine.high %v1774, %v1774
    %v1777 = vcombine.high %v1698, %v1698
    %v1779 = vunpack.c.l.s4 1983009808
    %v1780 = vunpack.c.0.s8 %v1779
    %v1781 = vlaneseq
    %v1782 = vshrl.u32 %v1781, 7
    %v1783 = vsub.s32 %v1780, %v1782
    %v1784 = vrot.slane %v1698, %v1783
    %v1786 = vunpack.c.l.s4 1983009808
    %v1787 = vunpack.c.0.s8 %v1786
    %v1788 = vlaneseq
    %v1789 = vshrl.u32 %v1788, 7
    %v1790 = vsub.s32 %v1787, %v1789
    %v1791 = vrot.slane %v1777, %v1790
    %v1792 = vcombine.high %v1784, %v1784
    %v1793 = vcombine.high %v1791, %v1791
    %v1794 = vcombine.high %v1699, %v1699
    %v1796 = vunpack.c.l.s4 1983009808
    %v1797 = vunpack.c.0.s8 %v1796
    %v1798 = vlaneseq
    %v1799 = vshrl.u32 %v1798, 7
    %v1800 = vsub.s32 %v1797, %v1799
    %v1801 = vrot.slane %v1699, %v1800
    %v1803 = vunpack.c.l.s4 1983009808
    %v1804 = vunpack.c.0.s8 %v1803
    %v1805 = vlaneseq
    %v1806 = vshrl.u32 %v1805, 7
    %v1807 = vsub.s32 %v1804, %v1806
    %v1808 = vrot.slane %v1794, %v1807
    %v1809 = vcombine.high %v1801, %v1801
    %v1810 = vcombine.high %v1808, %v1808
    %1827 = vmatprep.subr.mxu0 0.0
    %1828 = vmatpush1.xpose.msra.mxu0 0.0
    %1829 = vmatprep.subr.mxu0 0.0
    %1830 = vmatpush1.xpose.msra.mxu0 0.0
    %1831 = vmatprep.subr.mxu0 0.0
    %1832 = vmatpush1.xpose.msra.mxu0 0.0
    %1833 = vmatprep.subr.mxu0 0.0
    %1834 = vmatpush1.xpose.msra.mxu0 0.0
    %1835 = vmatprep.subr.mxu0 0.0
    %1836 = vmatpush1.xpose.msra.mxu0 0.0
    %1837 = vmatprep.subr.mxu0 0.0
    %1838 = vmatpush1.xpose.msra.mxu0 0.0
    %1839 = vmatprep.subr.mxu0 0.0
    %1840 = vmatpush1.xpose.msra.mxu0 0.0
    %1841 = vmatprep.subr.mxu0 0.0
    %1842 = vmatpush1.xpose.msra.mxu0 0.0
    %1843 = vmatprep.subr.mxu0 0.0
    %1844 = vmatpush1.xpose.msra.mxu0 0.0
    %1845 = vmatprep.subr.mxu0 0.0
    %1846 = vmatpush1.xpose.msra.mxu0 0.0
    %1847 = vmatprep.subr.mxu0 0.0
    %1848 = vmatpush1.xpose.msra.mxu0 0.0
    %1849 = vmatprep.subr.mxu0 0.0
    %1850 = vmatpush1.xpose.msra.mxu0 0.0
    %1851 = vmatprep.subr.mxu0 0.0
    %1852 = vmatpush1.xpose.msra.mxu0 0.0
    %1853 = vmatprep.subr.mxu0 0.0
    %1854 = vmatpush1.xpose.msra.mxu0 0.0
    %1855 = vmatprep.subr.mxu0 %v1717
    %1856 = vmatpush1.xpose.msra.mxu0 %v1716
    %1857 = vmatprep.subr.mxu0 %v1701
    %1858 = vmatpush1.xpose.msra.mxu0 %v1700
    %1859 = vmatprep.subr.mxu0 0.0
    %1860 = vmatpush2.xpose.msra.mxu0 0.0
    %1861 = vmatprep.subr.mxu0 0.0
    %1862 = vmatpush2.xpose.msra.mxu0 0.0
    %1863 = vmatprep.subr.mxu0 0.0
    %1864 = vmatpush2.xpose.msra.mxu0 0.0
    %1865 = vmatprep.subr.mxu0 0.0
    %1866 = vmatpush2.xpose.msra.mxu0 0.0
    %1867 = vmatprep.subr.mxu0 0.0
    %1868 = vmatpush2.xpose.msra.mxu0 0.0
    %1869 = vmatprep.subr.mxu0 0.0
    %1870 = vmatpush2.xpose.msra.mxu0 0.0
    %1871 = vmatprep.subr.mxu0 0.0
    %1872 = vmatpush2.xpose.msra.mxu0 0.0
    %1873 = vmatprep.subr.mxu0 0.0
    %1874 = vmatpush2.xpose.msra.mxu0 0.0
    %1875 = vmatprep.subr.mxu0 0.0
    %1876 = vmatpush2.xpose.msra.mxu0 0.0
    %1877 = vmatprep.subr.mxu0 0.0
    %1878 = vmatpush2.xpose.msra.mxu0 0.0
    %1879 = vmatprep.subr.mxu0 0.0
    %1880 = vmatpush2.xpose.msra.mxu0 0.0
    %1881 = vmatprep.subr.mxu0 0.0
    %1882 = vmatpush2.xpose.msra.mxu0 0.0
    %1883 = vmatprep.subr.mxu0 0.0
    %1884 = vmatpush2.xpose.msra.mxu0 0.0
    %1885 = vmatprep.subr.mxu0 0.0
    %1886 = vmatpush2.xpose.msra.mxu0 0.0
    %1887 = vmatprep.subr.mxu0 0.0
    %1888 = vmatpush2.xpose.msra.mxu0 0.0
    %1889 = vmatprep.subr.mxu0 0.0
    %1890 = vmatpush2.xpose.msra.mxu0 0.0
    %1891 = vmatprep.mubr.f32.mxu0 %v1758
    %1892 = vmatmul.mubr.f32.gmra.mxu0 %v1750
    %v1893 = vpop.f32.mrf.mxu0
    %v1894 = vadd.f32 %v1737, %v1893
    %v1895 = vpop.f32.mrf.mxu0
    %1896 = vdwg.mxu0
    %1897 = vmatprep.subr.mxu0 0.0
    %1898 = vmatpush1.xpose.msra.mxu0 0.0
    %1899 = vmatprep.subr.mxu0 0.0
    %1900 = vmatpush1.xpose.msra.mxu0 0.0
    %1901 = vmatprep.subr.mxu0 0.0
    %1902 = vmatpush1.xpose.msra.mxu0 0.0
    %1903 = vmatprep.subr.mxu0 0.0
    %1904 = vmatpush1.xpose.msra.mxu0 0.0
    %1905 = vmatprep.subr.mxu0 0.0
    %1906 = vmatpush1.xpose.msra.mxu0 0.0
    %1907 = vmatprep.subr.mxu0 0.0
    %1908 = vmatpush1.xpose.msra.mxu0 0.0
    %1909 = vmatprep.subr.mxu0 0.0
    %1910 = vmatpush1.xpose.msra.mxu0 0.0
    %1911 = vmatprep.subr.mxu0 0.0
    %1912 = vmatpush1.xpose.msra.mxu0 0.0
    %1913 = vmatprep.subr.mxu0 0.0
    %1914 = vmatpush1.xpose.msra.mxu0 0.0
    %1915 = vmatprep.subr.mxu0 0.0
    %1916 = vmatpush1.xpose.msra.mxu0 0.0
    %1917 = vmatprep.subr.mxu0 0.0
    %1918 = vmatpush1.xpose.msra.mxu0 0.0
    %1919 = vmatprep.subr.mxu0 0.0
    %1920 = vmatpush1.xpose.msra.mxu0 0.0
    %1921 = vmatprep.subr.mxu0 0.0
    %1922 = vmatpush1.xpose.msra.mxu0 0.0
    %1923 = vmatprep.subr.mxu0 0.0
    %1924 = vmatpush1.xpose.msra.mxu0 0.0
    %1925 = vmatprep.subr.mxu0 %v1719
    %1926 = vmatpush1.xpose.msra.mxu0 %v1718
    %1927 = vmatprep.subr.mxu0 %v1703
    %1928 = vmatpush1.xpose.msra.mxu0 %v1702
    %1929 = vmatprep.subr.mxu0 0.0
    %1930 = vmatpush2.xpose.msra.mxu0 0.0
    %1931 = vmatprep.subr.mxu0 0.0
    %1932 = vmatpush2.xpose.msra.mxu0 0.0
    %1933 = vmatprep.subr.mxu0 0.0
    %1934 = vmatpush2.xpose.msra.mxu0 0.0
    %1935 = vmatprep.subr.mxu0 0.0
    %1936 = vmatpush2.xpose.msra.mxu0 0.0
    %1937 = vmatprep.subr.mxu0 0.0
    %1938 = vmatpush2.xpose.msra.mxu0 0.0
    %1939 = vmatprep.subr.mxu0 0.0
    %1940 = vmatpush2.xpose.msra.mxu0 0.0
    %1941 = vmatprep.subr.mxu0 0.0
    %1942 = vmatpush2.xpose.msra.mxu0 0.0
    %1943 = vmatprep.subr.mxu0 0.0
    %1944 = vmatpush2.xpose.msra.mxu0 0.0
    %1945 = vmatprep.subr.mxu0 0.0
    %1946 = vmatpush2.xpose.msra.mxu0 0.0
    %1947 = vmatprep.subr.mxu0 0.0
    %1948 = vmatpush2.xpose.msra.mxu0 0.0
    %1949 = vmatprep.subr.mxu0 0.0
    %1950 = vmatpush2.xpose.msra.mxu0 0.0
    %1951 = vmatprep.subr.mxu0 0.0
    %1952 = vmatpush2.xpose.msra.mxu0 0.0
    %1953 = vmatprep.subr.mxu0 0.0
    %1954 = vmatpush2.xpose.msra.mxu0 0.0
    %1955 = vmatprep.subr.mxu0 0.0
    %1956 = vmatpush2.xpose.msra.mxu0 0.0
    %1957 = vmatprep.subr.mxu0 0.0
    %1958 = vmatpush2.xpose.msra.mxu0 0.0
    %1959 = vmatprep.subr.mxu0 0.0
    %1960 = vmatpush2.xpose.msra.mxu0 0.0
    %1961 = vmatprep.mubr.f32.mxu0 %v1759
    %1962 = vmatmul.mubr.f32.gmra.mxu0 %v1757
    %v1963 = vpop.f32.mrf.mxu0
    %v1964 = vadd.f32 %v1894, %v1963
    %v1965 = vpop.f32.mrf.mxu0
    %1966 = vdwg.mxu0
    %1967 = vmatprep.subr.mxu0 0.0
    %1968 = vmatpush1.xpose.msra.mxu0 0.0
    %1969 = vmatprep.subr.mxu0 0.0
    %1970 = vmatpush1.xpose.msra.mxu0 0.0
    %1971 = vmatprep.subr.mxu0 0.0
    %1972 = vmatpush1.xpose.msra.mxu0 0.0
    %1973 = vmatprep.subr.mxu0 0.0
    %1974 = vmatpush1.xpose.msra.mxu0 0.0
    %1975 = vmatprep.subr.mxu0 0.0
    %1976 = vmatpush1.xpose.msra.mxu0 0.0
    %1977 = vmatprep.subr.mxu0 0.0
    %1978 = vmatpush1.xpose.msra.mxu0 0.0
    %1979 = vmatprep.subr.mxu0 0.0
    %1980 = vmatpush1.xpose.msra.mxu0 0.0
    %1981 = vmatprep.subr.mxu0 0.0
    %1982 = vmatpush1.xpose.msra.mxu0 0.0
    %1983 = vmatprep.subr.mxu0 0.0
    %1984 = vmatpush1.xpose.msra.mxu0 0.0
    %1985 = vmatprep.subr.mxu0 0.0
    %1986 = vmatpush1.xpose.msra.mxu0 0.0
    %1987 = vmatprep.subr.mxu0 0.0
    %1988 = vmatpush1.xpose.msra.mxu0 0.0
    %1989 = vmatprep.subr.mxu0 0.0
    %1990 = vmatpush1.xpose.msra.mxu0 0.0
    %1991 = vmatprep.subr.mxu0 0.0
    %1992 = vmatpush1.xpose.msra.mxu0 0.0
    %1993 = vmatprep.subr.mxu0 0.0
    %1994 = vmatpush1.xpose.msra.mxu0 0.0
    %1995 = vmatprep.subr.mxu0 %v1721
    %1996 = vmatpush1.xpose.msra.mxu0 %v1720
    %1997 = vmatprep.subr.mxu0 %v1705
    %1998 = vmatpush1.xpose.msra.mxu0 %v1704
    %1999 = vmatprep.subr.mxu0 0.0
    %2000 = vmatpush2.xpose.msra.mxu0 0.0
    %2001 = vmatprep.subr.mxu0 0.0
    %2002 = vmatpush2.xpose.msra.mxu0 0.0
    %2003 = vmatprep.subr.mxu0 0.0
    %2004 = vmatpush2.xpose.msra.mxu0 0.0
    %2005 = vmatprep.subr.mxu0 0.0
    %2006 = vmatpush2.xpose.msra.mxu0 0.0
    %2007 = vmatprep.subr.mxu0 0.0
    %2008 = vmatpush2.xpose.msra.mxu0 0.0
    %2009 = vmatprep.subr.mxu0 0.0
    %2010 = vmatpush2.xpose.msra.mxu0 0.0
    %2011 = vmatprep.subr.mxu0 0.0
    %2012 = vmatpush2.xpose.msra.mxu0 0.0
    %2013 = vmatprep.subr.mxu0 0.0
    %2014 = vmatpush2.xpose.msra.mxu0 0.0
    %2015 = vmatprep.subr.mxu0 0.0
    %2016 = vmatpush2.xpose.msra.mxu0 0.0
    %2017 = vmatprep.subr.mxu0 0.0
    %2018 = vmatpush2.xpose.msra.mxu0 0.0
    %2019 = vmatprep.subr.mxu0 0.0
    %2020 = vmatpush2.xpose.msra.mxu0 0.0
    %2021 = vmatprep.subr.mxu0 0.0
    %2022 = vmatpush2.xpose.msra.mxu0 0.0
    %2023 = vmatprep.subr.mxu0 0.0
    %2024 = vmatpush2.xpose.msra.mxu0 0.0
    %2025 = vmatprep.subr.mxu0 0.0
    %2026 = vmatpush2.xpose.msra.mxu0 0.0
    %2027 = vmatprep.subr.mxu0 0.0
    %2028 = vmatpush2.xpose.msra.mxu0 0.0
    %2029 = vmatprep.subr.mxu0 0.0
    %2030 = vmatpush2.xpose.msra.mxu0 0.0
    %2031 = vmatprep.mubr.f32.mxu0 %v1775
    %2032 = vmatmul.mubr.f32.gmra.mxu0 %v1767
    %v2033 = vpop.f32.mrf.mxu0
    %v2034 = vadd.f32 %v1964, %v2033
    %v2035 = vpop.f32.mrf.mxu0
    %2036 = vdwg.mxu0
    %2037 = vmatprep.subr.mxu0 0.0
    %2038 = vmatpush1.xpose.msra.mxu0 0.0
    %2039 = vmatprep.subr.mxu0 0.0
    %2040 = vmatpush1.xpose.msra.mxu0 0.0
    %2041 = vmatprep.subr.mxu0 0.0
    %2042 = vmatpush1.xpose.msra.mxu0 0.0
    %2043 = vmatprep.subr.mxu0 0.0
    %2044 = vmatpush1.xpose.msra.mxu0 0.0
    %2045 = vmatprep.subr.mxu0 0.0
    %2046 = vmatpush1.xpose.msra.mxu0 0.0
    %2047 = vmatprep.subr.mxu0 0.0
    %2048 = vmatpush1.xpose.msra.mxu0 0.0
    %2049 = vmatprep.subr.mxu0 0.0
    %2050 = vmatpush1.xpose.msra.mxu0 0.0
    %2051 = vmatprep.subr.mxu0 0.0
    %2052 = vmatpush1.xpose.msra.mxu0 0.0
    %2053 = vmatprep.subr.mxu0 0.0
    %2054 = vmatpush1.xpose.msra.mxu0 0.0
    %2055 = vmatprep.subr.mxu0 0.0
    %2056 = vmatpush1.xpose.msra.mxu0 0.0
    %2057 = vmatprep.subr.mxu0 0.0
    %2058 = vmatpush1.xpose.msra.mxu0 0.0
    %2059 = vmatprep.subr.mxu0 0.0
    %2060 = vmatpush1.xpose.msra.mxu0 0.0
    %2061 = vmatprep.subr.mxu0 0.0
    %2062 = vmatpush1.xpose.msra.mxu0 0.0
    %2063 = vmatprep.subr.mxu0 0.0
    %2064 = vmatpush1.xpose.msra.mxu0 0.0
    %2065 = vmatprep.subr.mxu0 %v1723
    %2066 = vmatpush1.xpose.msra.mxu0 %v1722
    %2067 = vmatprep.subr.mxu0 %v1707
    %2068 = vmatpush1.xpose.msra.mxu0 %v1706
    %2069 = vmatprep.subr.mxu0 0.0
    %2070 = vmatpush2.xpose.msra.mxu0 0.0
    %2071 = vmatprep.subr.mxu0 0.0
    %2072 = vmatpush2.xpose.msra.mxu0 0.0
    %2073 = vmatprep.subr.mxu0 0.0
    %2074 = vmatpush2.xpose.msra.mxu0 0.0
    %2075 = vmatprep.subr.mxu0 0.0
    %2076 = vmatpush2.xpose.msra.mxu0 0.0
    %2077 = vmatprep.subr.mxu0 0.0
    %2078 = vmatpush2.xpose.msra.mxu0 0.0
    %2079 = vmatprep.subr.mxu0 0.0
    %2080 = vmatpush2.xpose.msra.mxu0 0.0
    %2081 = vmatprep.subr.mxu0 0.0
    %2082 = vmatpush2.xpose.msra.mxu0 0.0
    %2083 = vmatprep.subr.mxu0 0.0
    %2084 = vmatpush2.xpose.msra.mxu0 0.0
    %2085 = vmatprep.subr.mxu0 0.0
    %2086 = vmatpush2.xpose.msra.mxu0 0.0
    %2087 = vmatprep.subr.mxu0 0.0
    %2088 = vmatpush2.xpose.msra.mxu0 0.0
    %2089 = vmatprep.subr.mxu0 0.0
    %2090 = vmatpush2.xpose.msra.mxu0 0.0
    %2091 = vmatprep.subr.mxu0 0.0
    %2092 = vmatpush2.xpose.msra.mxu0 0.0
    %2093 = vmatprep.subr.mxu0 0.0
    %2094 = vmatpush2.xpose.msra.mxu0 0.0
    %2095 = vmatprep.subr.mxu0 0.0
    %2096 = vmatpush2.xpose.msra.mxu0 0.0
    %2097 = vmatprep.subr.mxu0 0.0
    %2098 = vmatpush2.xpose.msra.mxu0 0.0
    %2099 = vmatprep.subr.mxu0 0.0
    %2100 = vmatpush2.xpose.msra.mxu0 0.0
    %2101 = vmatprep.mubr.f32.mxu0 %v1776
    %2102 = vmatmul.mubr.f32.gmra.mxu0 %v1774
    %v2103 = vpop.f32.mrf.mxu0
    %v2104 = vadd.f32 %v2034, %v2103
    %v2105 = vpop.f32.mrf.mxu0
    %2106 = vdwg.mxu0
    %2107 = vmatprep.subr.mxu0 0.0
    %2108 = vmatpush1.xpose.msra.mxu0 0.0
    %2109 = vmatprep.subr.mxu0 0.0
    %2110 = vmatpush1.xpose.msra.mxu0 0.0
    %2111 = vmatprep.subr.mxu0 0.0
    %2112 = vmatpush1.xpose.msra.mxu0 0.0
    %2113 = vmatprep.subr.mxu0 0.0
    %2114 = vmatpush1.xpose.msra.mxu0 0.0
    %2115 = vmatprep.subr.mxu0 0.0
    %2116 = vmatpush1.xpose.msra.mxu0 0.0
    %2117 = vmatprep.subr.mxu0 0.0
    %2118 = vmatpush1.xpose.msra.mxu0 0.0
    %2119 = vmatprep.subr.mxu0 0.0
    %2120 = vmatpush1.xpose.msra.mxu0 0.0
    %2121 = vmatprep.subr.mxu0 0.0
    %2122 = vmatpush1.xpose.msra.mxu0 0.0
    %2123 = vmatprep.subr.mxu0 0.0
    %2124 = vmatpush1.xpose.msra.mxu0 0.0
    %2125 = vmatprep.subr.mxu0 0.0
    %2126 = vmatpush1.xpose.msra.mxu0 0.0
    %2127 = vmatprep.subr.mxu0 0.0
    %2128 = vmatpush1.xpose.msra.mxu0 0.0
    %2129 = vmatprep.subr.mxu0 0.0
    %2130 = vmatpush1.xpose.msra.mxu0 0.0
    %2131 = vmatprep.subr.mxu0 0.0
    %2132 = vmatpush1.xpose.msra.mxu0 0.0
    %2133 = vmatprep.subr.mxu0 0.0
    %2134 = vmatpush1.xpose.msra.mxu0 0.0
    %2135 = vmatprep.subr.mxu0 %v1725
    %2136 = vmatpush1.xpose.msra.mxu0 %v1724
    %2137 = vmatprep.subr.mxu0 %v1709
    %2138 = vmatpush1.xpose.msra.mxu0 %v1708
    %2139 = vmatprep.subr.mxu0 0.0
    %2140 = vmatpush2.xpose.msra.mxu0 0.0
    %2141 = vmatprep.subr.mxu0 0.0
    %2142 = vmatpush2.xpose.msra.mxu0 0.0
    %2143 = vmatprep.subr.mxu0 0.0
    %2144 = vmatpush2.xpose.msra.mxu0 0.0
    %2145 = vmatprep.subr.mxu0 0.0
    %2146 = vmatpush2.xpose.msra.mxu0 0.0
    %2147 = vmatprep.subr.mxu0 0.0
    %2148 = vmatpush2.xpose.msra.mxu0 0.0
    %2149 = vmatprep.subr.mxu0 0.0
    %2150 = vmatpush2.xpose.msra.mxu0 0.0
    %2151 = vmatprep.subr.mxu0 0.0
    %2152 = vmatpush2.xpose.msra.mxu0 0.0
    %2153 = vmatprep.subr.mxu0 0.0
    %2154 = vmatpush2.xpose.msra.mxu0 0.0
    %2155 = vmatprep.subr.mxu0 0.0
    %2156 = vmatpush2.xpose.msra.mxu0 0.0
    %2157 = vmatprep.subr.mxu0 0.0
    %2158 = vmatpush2.xpose.msra.mxu0 0.0
    %2159 = vmatprep.subr.mxu0 0.0
    %2160 = vmatpush2.xpose.msra.mxu0 0.0
    %2161 = vmatprep.subr.mxu0 0.0
    %2162 = vmatpush2.xpose.msra.mxu0 0.0
    %2163 = vmatprep.subr.mxu0 0.0
    %2164 = vmatpush2.xpose.msra.mxu0 0.0
    %2165 = vmatprep.subr.mxu0 0.0
    %2166 = vmatpush2.xpose.msra.mxu0 0.0
    %2167 = vmatprep.subr.mxu0 0.0
    %2168 = vmatpush2.xpose.msra.mxu0 0.0
    %2169 = vmatprep.subr.mxu0 0.0
    %2170 = vmatpush2.xpose.msra.mxu0 0.0
    %2171 = vmatprep.mubr.f32.mxu0 %v1792
    %2172 = vmatmul.mubr.f32.gmra.mxu0 %v1784
    %v2173 = vpop.f32.mrf.mxu0
    %v2174 = vadd.f32 %v2104, %v2173
    %v2175 = vpop.f32.mrf.mxu0
    %2176 = vdwg.mxu0
    %2177 = vmatprep.subr.mxu0 0.0
    %2178 = vmatpush1.xpose.msra.mxu0 0.0
    %2179 = vmatprep.subr.mxu0 0.0
    %2180 = vmatpush1.xpose.msra.mxu0 0.0
    %2181 = vmatprep.subr.mxu0 0.0
    %2182 = vmatpush1.xpose.msra.mxu0 0.0
    %2183 = vmatprep.subr.mxu0 0.0
    %2184 = vmatpush1.xpose.msra.mxu0 0.0
    %2185 = vmatprep.subr.mxu0 0.0
    %2186 = vmatpush1.xpose.msra.mxu0 0.0
    %2187 = vmatprep.subr.mxu0 0.0
    %2188 = vmatpush1.xpose.msra.mxu0 0.0
    %2189 = vmatprep.subr.mxu0 0.0
    %2190 = vmatpush1.xpose.msra.mxu0 0.0
    %2191 = vmatprep.subr.mxu0 0.0
    %2192 = vmatpush1.xpose.msra.mxu0 0.0
    %2193 = vmatprep.subr.mxu0 0.0
    %2194 = vmatpush1.xpose.msra.mxu0 0.0
    %2195 = vmatprep.subr.mxu0 0.0
    %2196 = vmatpush1.xpose.msra.mxu0 0.0
    %2197 = vmatprep.subr.mxu0 0.0
    %2198 = vmatpush1.xpose.msra.mxu0 0.0
    %2199 = vmatprep.subr.mxu0 0.0
    %2200 = vmatpush1.xpose.msra.mxu0 0.0
    %2201 = vmatprep.subr.mxu0 0.0
    %2202 = vmatpush1.xpose.msra.mxu0 0.0
    %2203 = vmatprep.subr.mxu0 0.0
    %2204 = vmatpush1.xpose.msra.mxu0 0.0
    %2205 = vmatprep.subr.mxu0 %v1727
    %2206 = vmatpush1.xpose.msra.mxu0 %v1726
    %2207 = vmatprep.subr.mxu0 %v1711
    %2208 = vmatpush1.xpose.msra.mxu0 %v1710
    %2209 = vmatprep.subr.mxu0 0.0
    %2210 = vmatpush2.xpose.msra.mxu0 0.0
    %2211 = vmatprep.subr.mxu0 0.0
    %2212 = vmatpush2.xpose.msra.mxu0 0.0
    %2213 = vmatprep.subr.mxu0 0.0
    %2214 = vmatpush2.xpose.msra.mxu0 0.0
    %2215 = vmatprep.subr.mxu0 0.0
    %2216 = vmatpush2.xpose.msra.mxu0 0.0
    %2217 = vmatprep.subr.mxu0 0.0
    %2218 = vmatpush2.xpose.msra.mxu0 0.0
    %2219 = vmatprep.subr.mxu0 0.0
    %2220 = vmatpush2.xpose.msra.mxu0 0.0
    %2221 = vmatprep.subr.mxu0 0.0
    %2222 = vmatpush2.xpose.msra.mxu0 0.0
    %2223 = vmatprep.subr.mxu0 0.0
    %2224 = vmatpush2.xpose.msra.mxu0 0.0
    %2225 = vmatprep.subr.mxu0 0.0
    %2226 = vmatpush2.xpose.msra.mxu0 0.0
    %2227 = vmatprep.subr.mxu0 0.0
    %2228 = vmatpush2.xpose.msra.mxu0 0.0
    %2229 = vmatprep.subr.mxu0 0.0
    %2230 = vmatpush2.xpose.msra.mxu0 0.0
    %2231 = vmatprep.subr.mxu0 0.0
    %2232 = vmatpush2.xpose.msra.mxu0 0.0
    %2233 = vmatprep.subr.mxu0 0.0
    %2234 = vmatpush2.xpose.msra.mxu0 0.0
    %2235 = vmatprep.subr.mxu0 0.0
    %2236 = vmatpush2.xpose.msra.mxu0 0.0
    %2237 = vmatprep.subr.mxu0 0.0
    %2238 = vmatpush2.xpose.msra.mxu0 0.0
    %2239 = vmatprep.subr.mxu0 0.0
    %2240 = vmatpush2.xpose.msra.mxu0 0.0
    %2241 = vmatprep.mubr.f32.mxu0 %v1793
    %2242 = vmatmul.mubr.f32.gmra.mxu0 %v1791
    %v2243 = vpop.f32.mrf.mxu0
    %v2244 = vadd.f32 %v2174, %v2243
    %v2245 = vpop.f32.mrf.mxu0
    %2246 = vdwg.mxu0
    %2247 = vmatprep.subr.mxu0 0.0
    %2248 = vmatpush1.xpose.msra.mxu0 0.0
    %2249 = vmatprep.subr.mxu0 0.0
    %2250 = vmatpush1.xpose.msra.mxu0 0.0
    %2251 = vmatprep.subr.mxu0 0.0
    %2252 = vmatpush1.xpose.msra.mxu0 0.0
    %2253 = vmatprep.subr.mxu0 0.0
    %2254 = vmatpush1.xpose.msra.mxu0 0.0
    %2255 = vmatprep.subr.mxu0 0.0
    %2256 = vmatpush1.xpose.msra.mxu0 0.0
    %2257 = vmatprep.subr.mxu0 0.0
    %2258 = vmatpush1.xpose.msra.mxu0 0.0
    %2259 = vmatprep.subr.mxu0 0.0
    %2260 = vmatpush1.xpose.msra.mxu0 0.0
    %2261 = vmatprep.subr.mxu0 0.0
    %2262 = vmatpush1.xpose.msra.mxu0 0.0
    %2263 = vmatprep.subr.mxu0 0.0
    %2264 = vmatpush1.xpose.msra.mxu0 0.0
    %2265 = vmatprep.subr.mxu0 0.0
    %2266 = vmatpush1.xpose.msra.mxu0 0.0
    %2267 = vmatprep.subr.mxu0 0.0
    %2268 = vmatpush1.xpose.msra.mxu0 0.0
    %2269 = vmatprep.subr.mxu0 0.0
    %2270 = vmatpush1.xpose.msra.mxu0 0.0
    %2271 = vmatprep.subr.mxu0 0.0
    %2272 = vmatpush1.xpose.msra.mxu0 0.0
    %2273 = vmatprep.subr.mxu0 0.0
    %2274 = vmatpush1.xpose.msra.mxu0 0.0
    %2275 = vmatprep.subr.mxu0 %v1729
    %2276 = vmatpush1.xpose.msra.mxu0 %v1728
    %2277 = vmatprep.subr.mxu0 %v1713
    %2278 = vmatpush1.xpose.msra.mxu0 %v1712
    %2279 = vmatprep.subr.mxu0 0.0
    %2280 = vmatpush2.xpose.msra.mxu0 0.0
    %2281 = vmatprep.subr.mxu0 0.0
    %2282 = vmatpush2.xpose.msra.mxu0 0.0
    %2283 = vmatprep.subr.mxu0 0.0
    %2284 = vmatpush2.xpose.msra.mxu0 0.0
    %2285 = vmatprep.subr.mxu0 0.0
    %2286 = vmatpush2.xpose.msra.mxu0 0.0
    %2287 = vmatprep.subr.mxu0 0.0
    %2288 = vmatpush2.xpose.msra.mxu0 0.0
    %2289 = vmatprep.subr.mxu0 0.0
    %2290 = vmatpush2.xpose.msra.mxu0 0.0
    %2291 = vmatprep.subr.mxu0 0.0
    %2292 = vmatpush2.xpose.msra.mxu0 0.0
    %2293 = vmatprep.subr.mxu0 0.0
    %2294 = vmatpush2.xpose.msra.mxu0 0.0
    %2295 = vmatprep.subr.mxu0 0.0
    %2296 = vmatpush2.xpose.msra.mxu0 0.0
    %2297 = vmatprep.subr.mxu0 0.0
    %2298 = vmatpush2.xpose.msra.mxu0 0.0
    %2299 = vmatprep.subr.mxu0 0.0
    %2300 = vmatpush2.xpose.msra.mxu0 0.0
    %2301 = vmatprep.subr.mxu0 0.0
    %2302 = vmatpush2.xpose.msra.mxu0 0.0
    %2303 = vmatprep.subr.mxu0 0.0
    %2304 = vmatpush2.xpose.msra.mxu0 0.0
    %2305 = vmatprep.subr.mxu0 0.0
    %2306 = vmatpush2.xpose.msra.mxu0 0.0
    %2307 = vmatprep.subr.mxu0 0.0
    %2308 = vmatpush2.xpose.msra.mxu0 0.0
    %2309 = vmatprep.subr.mxu0 0.0
    %2310 = vmatpush2.xpose.msra.mxu0 0.0
    %2311 = vmatprep.mubr.f32.mxu0 %v1809
    %2312 = vmatmul.mubr.f32.gmra.mxu0 %v1801
    %v2313 = vpop.f32.mrf.mxu0
    %v2314 = vadd.f32 %v2244, %v2313
    %v2315 = vpop.f32.mrf.mxu0
    %2316 = vdwg.mxu0
    %2317 = vmatprep.subr.mxu0 0.0
    %2318 = vmatpush1.xpose.msra.mxu0 0.0
    %2319 = vmatprep.subr.mxu0 0.0
    %2320 = vmatpush1.xpose.msra.mxu0 0.0
    %2321 = vmatprep.subr.mxu0 0.0
    %2322 = vmatpush1.xpose.msra.mxu0 0.0
    %2323 = vmatprep.subr.mxu0 0.0
    %2324 = vmatpush1.xpose.msra.mxu0 0.0
    %2325 = vmatprep.subr.mxu0 0.0
    %2326 = vmatpush1.xpose.msra.mxu0 0.0
    %2327 = vmatprep.subr.mxu0 0.0
    %2328 = vmatpush1.xpose.msra.mxu0 0.0
    %2329 = vmatprep.subr.mxu0 0.0
    %2330 = vmatpush1.xpose.msra.mxu0 0.0
    %2331 = vmatprep.subr.mxu0 0.0
    %2332 = vmatpush1.xpose.msra.mxu0 0.0
    %2333 = vmatprep.subr.mxu0 0.0
    %2334 = vmatpush1.xpose.msra.mxu0 0.0
    %2335 = vmatprep.subr.mxu0 0.0
    %2336 = vmatpush1.xpose.msra.mxu0 0.0
    %2337 = vmatprep.subr.mxu0 0.0
    %2338 = vmatpush1.xpose.msra.mxu0 0.0
    %2339 = vmatprep.subr.mxu0 0.0
    %2340 = vmatpush1.xpose.msra.mxu0 0.0
    %2341 = vmatprep.subr.mxu0 0.0
    %2342 = vmatpush1.xpose.msra.mxu0 0.0
    %2343 = vmatprep.subr.mxu0 0.0
    %2344 = vmatpush1.xpose.msra.mxu0 0.0
    %2345 = vmatprep.subr.mxu0 %v1731
    %2346 = vmatpush1.xpose.msra.mxu0 %v1730
    %2347 = vmatprep.subr.mxu0 %v1715
    %2348 = vmatpush1.xpose.msra.mxu0 %v1714
    %2349 = vmatprep.subr.mxu0 0.0
    %2350 = vmatpush2.xpose.msra.mxu0 0.0
    %2351 = vmatprep.subr.mxu0 0.0
    %2352 = vmatpush2.xpose.msra.mxu0 0.0
    %2353 = vmatprep.subr.mxu0 0.0
    %2354 = vmatpush2.xpose.msra.mxu0 0.0
    %2355 = vmatprep.subr.mxu0 0.0
    %2356 = vmatpush2.xpose.msra.mxu0 0.0
    %2357 = vmatprep.subr.mxu0 0.0
    %2358 = vmatpush2.xpose.msra.mxu0 0.0
    %2359 = vmatprep.subr.mxu0 0.0
    %2360 = vmatpush2.xpose.msra.mxu0 0.0
    %2361 = vmatprep.subr.mxu0 0.0
    %2362 = vmatpush2.xpose.msra.mxu0 0.0
    %2363 = vmatprep.subr.mxu0 0.0
    %2364 = vmatpush2.xpose.msra.mxu0 0.0
    %2365 = vmatprep.subr.mxu0 0.0
    %2366 = vmatpush2.xpose.msra.mxu0 0.0
    %2367 = vmatprep.subr.mxu0 0.0
    %2368 = vmatpush2.xpose.msra.mxu0 0.0
    %2369 = vmatprep.subr.mxu0 0.0
    %2370 = vmatpush2.xpose.msra.mxu0 0.0
    %2371 = vmatprep.subr.mxu0 0.0
    %2372 = vmatpush2.xpose.msra.mxu0 0.0
    %2373 = vmatprep.subr.mxu0 0.0
    %2374 = vmatpush2.xpose.msra.mxu0 0.0
    %2375 = vmatprep.subr.mxu0 0.0
    %2376 = vmatpush2.xpose.msra.mxu0 0.0
    %2377 = vmatprep.subr.mxu0 0.0
    %2378 = vmatpush2.xpose.msra.mxu0 0.0
    %2379 = vmatprep.subr.mxu0 0.0
    %2380 = vmatpush2.xpose.msra.mxu0 0.0
    %2381 = vmatprep.mubr.f32.mxu0 %v1810
    %2382 = vmatmul.mubr.f32.gmra.mxu0 %v1808
    %v2383 = vpop.f32.mrf.mxu0
    %v2384 = vadd.f32 %v2314, %v2383
    %v2385 = vpop.f32.mrf.mxu0
    %2386 = vdwg.mxu0
    %vm2387 = vcmask 74752
    %2388 = vst.msk [vmem:[#allocation9] sm:$0x3] %vm2387, %v2384
    // Predicated region
    $region30: #{pretrained_model_forward.1} parent=1 // pred_check
      _
    $region31: #{pretrained_model_forward.1} parent=1 // pred_check_branch
      %2390 = sbr.rel (0) target = $region33
    $region32: #{pretrained_model_forward.1} parent=1 // pred_region
      %s2392 = ssub.s32 32, 32
      %2393 = vsyncadd [#allocation5], %s2392
      %s2395 = sshll.u32 [#allocation9], 4
      %s2396 = int_to_ptr.vmem [resolvable:$true] %s2395
      %2398 = dma.vmem_to_hbm [thread:$0]  %s2396, 32, %s5, [#allocation5]
    $region33: #{pretrained_model_forward.1} parent=1 // pred_fallthru
      _
    // Predicated region
    $region34: #{pretrained_model_forward.1} parent=1 // pred_check
      _
    $region35: #{pretrained_model_forward.1} parent=1 // pred_check_branch
      %2400 = sbr.rel (0) target = $region37
    $region36: #{pretrained_model_forward.1} parent=1 // pred_region
      %2401 = dma.done [#allocation5], 32
    $region37: #{pretrained_model_forward.1} parent=1 // pred_fallthru
      _
    %2402 = vsyncpa [#allocation5], 1
    %2403 = vsyncpa [#allocation6], 1
    %2404 = vsyncpa [#allocation8], 1

</llo_original>
